<compile_context>
chip_gen: v7x
topology: tpu7x:2x2x1
jax: 0.10.0
libtpu: 0.0.40
codegen_flags: <defaults>
</compile_context>

<pallas_src>
import functools

import jax
import jax.numpy as jnp
from jax.experimental import pallas as pl
from jax.experimental.pallas import tpu as pltpu

NEG_SLOPE = 0.01     # F.leaky_relu default negative_slope
D = 512              # padded feature width (lane-dense, multiple of 128)
N_SLABS = 15         # fc1..fc6, fc7_mu, fc7_logvar, dc1..dc7


def _round_up(x, m):
    return ((x + m - 1) // m) * m


# ------------------------------- fused kernel --------------------------------

def _vae_kernel(x_ref, eps_ref, w_ref, b_ref, recon_ref, mu_ref, lv_ref):
    """Whole VAE forward for one batch tile.

    x_ref   : (TILE, D) bf16  zero-padded input
    eps_ref : (TILE, D) f32   N(0,1) noise, zero beyond latent_dim
    w_ref   : (N_SLABS, D, D) bf16  zero-padded, pre-transposed [in, out] weights
    b_ref   : (N_SLABS, 1, D) f32   zero-padded biases
    outputs : (TILE, D) f32   recon / mu / logvar (padded; wrapper slices)
    """

    def dense(h, idx, act=True):
        # bf16 x bf16 on the MXU, f32 accumulation; bias + activation in f32.
        y = jnp.dot(h.astype(jnp.bfloat16), w_ref[idx],
                    preferred_element_type=jnp.float32)
        y = y + b_ref[idx]
        if act:
            y = jnp.maximum(y, NEG_SLOPE * y)      # leaky_relu: one vmul + vmax
        return y

    # --- encoder ---
    h = dense(x_ref[...], 0)           # fc1
    h = dense(h, 1)                    # fc2
    h = dense(h, 2)                    # fc3
    h = dense(h, 3) + h                # fc4 + residual
    h = dense(h, 4) + h                # fc5 + residual
    h = dense(h, 5) + h                # fc6 + residual
    mu = dense(h, 6, act=False)        # fc7 (mu columns);   zero beyond latent_dim
    lv = dense(h, 7, act=False)        # fc7 (logvar cols);  zero beyond latent_dim

    # --- reparametrize (lane-dense; eps is zero in padded lanes so z stays zero) ---
    z = mu + eps_ref[...] * jnp.exp(0.5 * lv)

    # --- decoder ---
    d = dense(z, 8)                    # dc1
    d = dense(d, 9)                    # dc2
    d = dense(d, 10)                   # dc3
    d = dense(d, 11) + d               # dc4 + residual
    d = dense(d, 12) + d               # dc5 + residual
    d = dense(d, 13) + d               # dc6 + residual
    d = dense(d, 14, act=False)        # dc7

    recon_ref[...] = d
    mu_ref[...] = mu
    lv_ref[...] = lv


# --------------------------------- wrapper ------------------------------------

@functools.partial(jax.jit, static_argnames=("latent_dim", "input_dim"))
def network_forward(w_stack, b_stack, x, eps, *, latent_dim, input_dim):
    """(recon, mu, logvar) — one pallas_call for the whole network."""
    batch = x.shape[0]
    tile = min(256, _round_up(max(batch, 1), 8))
    b_pad = _round_up(batch, tile)
    n_tiles = b_pad // tile

    # Lane-dense, zero-padded activations (bf16 input avoids an in-kernel re-cast).
    x_pad = jnp.zeros((b_pad, D), jnp.bfloat16).at[:batch, :input_dim].set(
        x.astype(jnp.bfloat16))
    eps_pad = jnp.zeros((b_pad, D), jnp.float32).at[:batch, :latent_dim].set(
        eps.astype(jnp.float32))

    act_spec = pl.BlockSpec((tile, D), lambda i: (i, 0))

    recon_p, mu_p, lv_p = pl.pallas_call(
        _vae_kernel,
        out_shape=(
            jax.ShapeDtypeStruct((b_pad, D), jnp.float32),
            jax.ShapeDtypeStruct((b_pad, D), jnp.float32),
            jax.ShapeDtypeStruct((b_pad, D), jnp.float32),
        ),
        grid=(n_tiles,),
        in_specs=[
            act_spec,                                            # x tile
            act_spec,                                            # eps tile
            pl.BlockSpec((N_SLABS, D, D), lambda i: (0, 0, 0)),  # weights (resident)
            pl.BlockSpec((N_SLABS, 1, D), lambda i: (0, 0, 0)),  # biases  (resident)
        ],
        out_specs=(act_spec, act_spec, act_spec),
        compiler_params=pltpu.CompilerParams(
            dimension_semantics=("parallel",),
            vmem_limit_bytes=48 * 1024 * 1024,
        ),
    )(x_pad, eps_pad, w_stack, b_stack)

    return (recon_p[:batch, :input_dim],
            mu_p[:batch, :latent_dim],
            lv_p[:batch, :latent_dim])


# --------------------------- parameter construction ---------------------------

def init_network_params(key, input_dim, latent_dim):
    """Torch-nn.Linear-style init (U(-1/sqrt(in), 1/sqrt(in))), packed into
    zero-padded lane-dense stacks: weights (N_SLABS, D, D) bf16, biases (N_SLABS, 1, D) f32.
    fc7 is split into separate mu / logvar slabs so both land on lanes [0, latent_dim)."""
    assert input_dim <= D and 2 * latent_dim <= D and latent_dim >= 1

    torch_layers = [
        (input_dim, 256), (256, 512), (512, 512), (512, 512), (512, 512),
        (512, 512), (512, 2 * latent_dim),                       # fc1..fc7
        (latent_dim, 256), (256, 512), (512, 512), (512, 512), (512, 512),
        (512, 512), (512, input_dim),                            # dc1..dc7
    ]
    keys = jax.random.split(key, len(torch_layers))
    raw = []
    for k, (fi, fo) in zip(keys, torch_layers):
        kw, kb = jax.random.split(k)
        bound = 1.0 / float(fi) ** 0.5
        w = jax.random.uniform(kw, (fi, fo), jnp.float32, minval=-bound, maxval=bound)
        b = jax.random.uniform(kb, (fo,), jnp.float32, minval=-bound, maxval=bound)
        raw.append((w, b))

    # Split fc7 (index 6) into mu / logvar halves (lane-aligned reparametrize).
    w7, b7 = raw[6]
    slabs = (raw[:6]
             + [(w7[:, :latent_dim], b7[:latent_dim]),
                (w7[:, latent_dim:], b7[latent_dim:])]
             + raw[7:])
    assert len(slabs) == N_SLABS

    w_stack = jnp.zeros((N_SLABS, D, D), jnp.float32)
    b_stack = jnp.zeros((N_SLABS, 1, D), jnp.float32)
    for i, (w, b) in enumerate(slabs):
        fi, fo = w.shape
        w_stack = w_stack.at[i, :fi, :fo].set(w)
        b_stack = b_stack.at[i, 0, :fo].set(b)
    return w_stack.astype(jnp.bfloat16), b_stack


# ------------------------- pure-JAX reference (parity) ------------------------

def reference_forward(w_stack, b_stack, x, eps, *, latent_dim, input_dim):
    """Same math as the kernel (bf16 weights/activations, f32 accumulation)."""
    batch = x.shape[0]
    x_pad = jnp.zeros((batch, D), jnp.bfloat16).at[:, :input_dim].set(
        x.astype(jnp.bfloat16))
    eps_pad = jnp.zeros((batch, D), jnp.float32).at[:, :latent_dim].set(eps)

    def dense(h, idx, act=True):
        y = jnp.dot(h.astype(jnp.bfloat16), w_stack[idx],
                    preferred_element_type=jnp.float32) + b_stack[idx]
        return jnp.maximum(y, NEG_SLOPE * y) if act else y

    h = dense(x_pad, 0); h = dense(h, 1); h = dense(h, 2)
    h = dense(h, 3) + h; h = dense(h, 4) + h; h = dense(h, 5) + h
    mu = dense(h, 6, act=False); lv = dense(h, 7, act=False)
    z = mu + eps_pad * jnp.exp(0.5 * lv)
    d = dense(z, 8); d = dense(d, 9); d = dense(d, 10)
    d = dense(d, 11) + d; d = dense(d, 12) + d; d = dense(d, 13) + d
    d = dense(d, 14, act=False)
    return d[:, :input_dim], mu[:, :latent_dim], lv[:, :latent_dim]


# ----------------------------------- main --------------------------------------

if __name__ == "__main__":
    INPUT_DIM = 32
    LATENT_DIM = 16
    BATCH = 8

    root = jax.random.PRNGKey(0)
    k_params, k_x, k_eps = jax.random.split(root, 3)

    w_stack, b_stack = init_network_params(k_params, INPUT_DIM, LATENT_DIM)
    x = jax.random.normal(k_x, (BATCH, INPUT_DIM), jnp.float32)
    # torch.randn_like equivalent, passed in explicitly for determinism.
    eps = jax.random.normal(k_eps, (BATCH, LATENT_DIM), jnp.float32)

    recon, mu, logvar = network_forward(
        w_stack, b_stack, x, eps, latent_dim=LATENT_DIM, input_dim=INPUT_DIM)
    jax.block_until_ready((recon, mu, logvar))

    assert recon.shape == (BATCH, INPUT_DIM)
    assert mu.shape == (BATCH, LATENT_DIM)
    assert logvar.shape == (BATCH, LATENT_DIM)

    r_ref, m_ref, l_ref = reference_forward(
        w_stack, b_stack, x, eps, latent_dim=LATENT_DIM, input_dim=INPUT_DIM)
    for got, want in ((recon, r_ref), (mu, m_ref), (logvar, l_ref)):
        assert bool(jnp.all(jnp.isfinite(got)))
        assert bool(jnp.allclose(got, want, atol=2e-2, rtol=2e-2)), (
            "max abs diff: %g" % float(jnp.max(jnp.abs(got - want))))

    print("KERNEL_OK")
</pallas_src>

<mosaic_0001>
module attributes {stable_mosaic.version = 11 : i64} {
  func.func @_vae_kernel(%arg0: i32, %arg1: memref<8x512xbf16, #tpu.memory_space<vmem>>, %arg2: memref<8x512xf32, #tpu.memory_space<vmem>>, %arg3: memref<15x512x512xbf16, #tpu.memory_space<vmem>>, %arg4: memref<15x1x512xf32, #tpu.memory_space<vmem>>, %arg5: memref<8x512xf32, #tpu.memory_space<vmem>>, %arg6: memref<8x512xf32, #tpu.memory_space<vmem>>, %arg7: memref<8x512xf32, #tpu.memory_space<vmem>>) attributes {dimension_semantics = [#tpu.dimension_semantics<parallel>], iteration_bounds = array<i64: 1>, scalar_prefetch = 0 : i64, scratch_operands = 0 : i64, tpu.core_type = #tpu.core_type<tc>, window_params = [{transform_indices = @transform_0, window_bounds = array<i64: 8, 512>}, {transform_indices = @transform_1, window_bounds = array<i64: 8, 512>}, {pipeline_mode = #tpu.pipeline_mode<synchronous>, transform_indices = @transform_2, window_bounds = array<i64: 15, 512, 512>}, {pipeline_mode = #tpu.pipeline_mode<synchronous>, transform_indices = @transform_3, window_bounds = array<i64: 15, 1, 512>}, {transform_indices = @transform_4, window_bounds = array<i64: 8, 512>}, {transform_indices = @transform_5, window_bounds = array<i64: 8, 512>}, {transform_indices = @transform_6, window_bounds = array<i64: 8, 512>}]} {
    %c0 = arith.constant 0 : index
    %c0_0 = arith.constant 0 : index
    %0 = vector.load %arg1[%c0, %c0_0] : memref<8x512xbf16, #tpu.memory_space<vmem>>, vector<8x512xbf16>
    %c0_1 = arith.constant 0 : index
    %c0_2 = arith.constant 0 : index
    %c0_3 = arith.constant 0 : index
    %1 = vector.load %arg3[%c0_1, %c0_2, %c0_3] : memref<15x512x512xbf16, #tpu.memory_space<vmem>>, vector<1x512x512xbf16>
    %2 = vector.shape_cast %1 : vector<1x512x512xbf16> to vector<512x512xbf16>
    %cst = arith.constant dense<0.000000e+00> : vector<8x512xf32>
    %3 = tpu.matmul %0, %2, %cst {dimension_numbers = #tpu.dot_dimension_numbers<[1], [0], [0], [1], [0, 0, 1, 1], [], []>} : vector<8x512xbf16>, vector<512x512xbf16>, vector<8x512xf32> -> vector<8x512xf32>
    %c0_4 = arith.constant 0 : index
    %c0_5 = arith.constant 0 : index
    %c0_6 = arith.constant 0 : index
    %4 = vector.load %arg4[%c0_4, %c0_5, %c0_6] : memref<15x1x512xf32, #tpu.memory_space<vmem>>, vector<1x1x512xf32>
    %5 = vector.shape_cast %4 : vector<1x1x512xf32> to vector<1x512xf32>
    %6 = vector.broadcast %5 : vector<1x512xf32> to vector<8x512xf32>
    %7 = arith.addf %3, %6 : vector<8x512xf32>
    %cst_7 = arith.constant 0.00999999977 : f32
    %8 = vector.broadcast %cst_7 : f32 to vector<8x512xf32>
    %9 = arith.mulf %8, %7 : vector<8x512xf32>
    %10 = arith.maximumf %7, %9 : vector<8x512xf32>
    %11 = arith.truncf %10 : vector<8x512xf32> to vector<8x512xbf16>
    %c1 = arith.constant 1 : index
    %c0_8 = arith.constant 0 : index
    %c0_9 = arith.constant 0 : index
    %12 = vector.load %arg3[%c1, %c0_8, %c0_9] : memref<15x512x512xbf16, #tpu.memory_space<vmem>>, vector<1x512x512xbf16>
    %13 = vector.shape_cast %12 : vector<1x512x512xbf16> to vector<512x512xbf16>
    %cst_10 = arith.constant dense<0.000000e+00> : vector<8x512xf32>
    %14 = tpu.matmul %11, %13, %cst_10 {dimension_numbers = #tpu.dot_dimension_numbers<[1], [0], [0], [1], [0, 0, 1, 1], [], []>} : vector<8x512xbf16>, vector<512x512xbf16>, vector<8x512xf32> -> vector<8x512xf32>
    %c1_11 = arith.constant 1 : index
    %c0_12 = arith.constant 0 : index
    %c0_13 = arith.constant 0 : index
    %15 = vector.load %arg4[%c1_11, %c0_12, %c0_13] : memref<15x1x512xf32, #tpu.memory_space<vmem>>, vector<1x1x512xf32>
    %16 = vector.shape_cast %15 : vector<1x1x512xf32> to vector<1x512xf32>
    %17 = vector.broadcast %16 : vector<1x512xf32> to vector<8x512xf32>
    %18 = arith.addf %14, %17 : vector<8x512xf32>
    %cst_14 = arith.constant 0.00999999977 : f32
    %19 = vector.broadcast %cst_14 : f32 to vector<8x512xf32>
    %20 = arith.mulf %19, %18 : vector<8x512xf32>
    %21 = arith.maximumf %18, %20 : vector<8x512xf32>
    %22 = arith.truncf %21 : vector<8x512xf32> to vector<8x512xbf16>
    %c2 = arith.constant 2 : index
    %c0_15 = arith.constant 0 : index
    %c0_16 = arith.constant 0 : index
    %23 = vector.load %arg3[%c2, %c0_15, %c0_16] : memref<15x512x512xbf16, #tpu.memory_space<vmem>>, vector<1x512x512xbf16>
    %24 = vector.shape_cast %23 : vector<1x512x512xbf16> to vector<512x512xbf16>
    %cst_17 = arith.constant dense<0.000000e+00> : vector<8x512xf32>
    %25 = tpu.matmul %22, %24, %cst_17 {dimension_numbers = #tpu.dot_dimension_numbers<[1], [0], [0], [1], [0, 0, 1, 1], [], []>} : vector<8x512xbf16>, vector<512x512xbf16>, vector<8x512xf32> -> vector<8x512xf32>
    %c2_18 = arith.constant 2 : index
    %c0_19 = arith.constant 0 : index
    %c0_20 = arith.constant 0 : index
    %26 = vector.load %arg4[%c2_18, %c0_19, %c0_20] : memref<15x1x512xf32, #tpu.memory_space<vmem>>, vector<1x1x512xf32>
    %27 = vector.shape_cast %26 : vector<1x1x512xf32> to vector<1x512xf32>
    %28 = vector.broadcast %27 : vector<1x512xf32> to vector<8x512xf32>
    %29 = arith.addf %25, %28 : vector<8x512xf32>
    %cst_21 = arith.constant 0.00999999977 : f32
    %30 = vector.broadcast %cst_21 : f32 to vector<8x512xf32>
    %31 = arith.mulf %30, %29 : vector<8x512xf32>
    %32 = arith.maximumf %29, %31 : vector<8x512xf32>
    %33 = arith.truncf %32 : vector<8x512xf32> to vector<8x512xbf16>
    %c3 = arith.constant 3 : index
    %c0_22 = arith.constant 0 : index
    %c0_23 = arith.constant 0 : index
    %34 = vector.load %arg3[%c3, %c0_22, %c0_23] : memref<15x512x512xbf16, #tpu.memory_space<vmem>>, vector<1x512x512xbf16>
    %35 = vector.shape_cast %34 : vector<1x512x512xbf16> to vector<512x512xbf16>
    %cst_24 = arith.constant dense<0.000000e+00> : vector<8x512xf32>
    %36 = tpu.matmul %33, %35, %cst_24 {dimension_numbers = #tpu.dot_dimension_numbers<[1], [0], [0], [1], [0, 0, 1, 1], [], []>} : vector<8x512xbf16>, vector<512x512xbf16>, vector<8x512xf32> -> vector<8x512xf32>
    %c3_25 = arith.constant 3 : index
    %c0_26 = arith.constant 0 : index
    %c0_27 = arith.constant 0 : index
    %37 = vector.load %arg4[%c3_25, %c0_26, %c0_27] : memref<15x1x512xf32, #tpu.memory_space<vmem>>, vector<1x1x512xf32>
    %38 = vector.shape_cast %37 : vector<1x1x512xf32> to vector<1x512xf32>
    %39 = vector.broadcast %38 : vector<1x512xf32> to vector<8x512xf32>
    %40 = arith.addf %36, %39 : vector<8x512xf32>
    %cst_28 = arith.constant 0.00999999977 : f32
    %41 = vector.broadcast %cst_28 : f32 to vector<8x512xf32>
    %42 = arith.mulf %41, %40 : vector<8x512xf32>
    %43 = arith.maximumf %40, %42 : vector<8x512xf32>
    %44 = arith.addf %43, %32 : vector<8x512xf32>
    %45 = arith.truncf %44 : vector<8x512xf32> to vector<8x512xbf16>
    %c4 = arith.constant 4 : index
    %c0_29 = arith.constant 0 : index
    %c0_30 = arith.constant 0 : index
    %46 = vector.load %arg3[%c4, %c0_29, %c0_30] : memref<15x512x512xbf16, #tpu.memory_space<vmem>>, vector<1x512x512xbf16>
    %47 = vector.shape_cast %46 : vector<1x512x512xbf16> to vector<512x512xbf16>
    %cst_31 = arith.constant dense<0.000000e+00> : vector<8x512xf32>
    %48 = tpu.matmul %45, %47, %cst_31 {dimension_numbers = #tpu.dot_dimension_numbers<[1], [0], [0], [1], [0, 0, 1, 1], [], []>} : vector<8x512xbf16>, vector<512x512xbf16>, vector<8x512xf32> -> vector<8x512xf32>
    %c4_32 = arith.constant 4 : index
    %c0_33 = arith.constant 0 : index
    %c0_34 = arith.constant 0 : index
    %49 = vector.load %arg4[%c4_32, %c0_33, %c0_34] : memref<15x1x512xf32, #tpu.memory_space<vmem>>, vector<1x1x512xf32>
    %50 = vector.shape_cast %49 : vector<1x1x512xf32> to vector<1x512xf32>
    %51 = vector.broadcast %50 : vector<1x512xf32> to vector<8x512xf32>
    %52 = arith.addf %48, %51 : vector<8x512xf32>
    %cst_35 = arith.constant 0.00999999977 : f32
    %53 = vector.broadcast %cst_35 : f32 to vector<8x512xf32>
    %54 = arith.mulf %53, %52 : vector<8x512xf32>
    %55 = arith.maximumf %52, %54 : vector<8x512xf32>
    %56 = arith.addf %55, %44 : vector<8x512xf32>
    %57 = arith.truncf %56 : vector<8x512xf32> to vector<8x512xbf16>
    %c5 = arith.constant 5 : index
    %c0_36 = arith.constant 0 : index
    %c0_37 = arith.constant 0 : index
    %58 = vector.load %arg3[%c5, %c0_36, %c0_37] : memref<15x512x512xbf16, #tpu.memory_space<vmem>>, vector<1x512x512xbf16>
    %59 = vector.shape_cast %58 : vector<1x512x512xbf16> to vector<512x512xbf16>
    %cst_38 = arith.constant dense<0.000000e+00> : vector<8x512xf32>
    %60 = tpu.matmul %57, %59, %cst_38 {dimension_numbers = #tpu.dot_dimension_numbers<[1], [0], [0], [1], [0, 0, 1, 1], [], []>} : vector<8x512xbf16>, vector<512x512xbf16>, vector<8x512xf32> -> vector<8x512xf32>
    %c5_39 = arith.constant 5 : index
    %c0_40 = arith.constant 0 : index
    %c0_41 = arith.constant 0 : index
    %61 = vector.load %arg4[%c5_39, %c0_40, %c0_41] : memref<15x1x512xf32, #tpu.memory_space<vmem>>, vector<1x1x512xf32>
    %62 = vector.shape_cast %61 : vector<1x1x512xf32> to vector<1x512xf32>
    %63 = vector.broadcast %62 : vector<1x512xf32> to vector<8x512xf32>
    %64 = arith.addf %60, %63 : vector<8x512xf32>
    %cst_42 = arith.constant 0.00999999977 : f32
    %65 = vector.broadcast %cst_42 : f32 to vector<8x512xf32>
    %66 = arith.mulf %65, %64 : vector<8x512xf32>
    %67 = arith.maximumf %64, %66 : vector<8x512xf32>
    %68 = arith.addf %67, %56 : vector<8x512xf32>
    %69 = arith.truncf %68 : vector<8x512xf32> to vector<8x512xbf16>
    %c6 = arith.constant 6 : index
    %c0_43 = arith.constant 0 : index
    %c0_44 = arith.constant 0 : index
    %70 = vector.load %arg3[%c6, %c0_43, %c0_44] : memref<15x512x512xbf16, #tpu.memory_space<vmem>>, vector<1x512x512xbf16>
    %71 = vector.shape_cast %70 : vector<1x512x512xbf16> to vector<512x512xbf16>
    %cst_45 = arith.constant dense<0.000000e+00> : vector<8x512xf32>
    %72 = tpu.matmul %69, %71, %cst_45 {dimension_numbers = #tpu.dot_dimension_numbers<[1], [0], [0], [1], [0, 0, 1, 1], [], []>} : vector<8x512xbf16>, vector<512x512xbf16>, vector<8x512xf32> -> vector<8x512xf32>
    %c6_46 = arith.constant 6 : index
    %c0_47 = arith.constant 0 : index
    %c0_48 = arith.constant 0 : index
    %73 = vector.load %arg4[%c6_46, %c0_47, %c0_48] : memref<15x1x512xf32, #tpu.memory_space<vmem>>, vector<1x1x512xf32>
    %74 = vector.shape_cast %73 : vector<1x1x512xf32> to vector<1x512xf32>
    %75 = vector.broadcast %74 : vector<1x512xf32> to vector<8x512xf32>
    %76 = arith.addf %72, %75 : vector<8x512xf32>
    %77 = arith.truncf %68 : vector<8x512xf32> to vector<8x512xbf16>
    %c7 = arith.constant 7 : index
    %c0_49 = arith.constant 0 : index
    %c0_50 = arith.constant 0 : index
    %78 = vector.load %arg3[%c7, %c0_49, %c0_50] : memref<15x512x512xbf16, #tpu.memory_space<vmem>>, vector<1x512x512xbf16>
    %79 = vector.shape_cast %78 : vector<1x512x512xbf16> to vector<512x512xbf16>
    %cst_51 = arith.constant dense<0.000000e+00> : vector<8x512xf32>
    %80 = tpu.matmul %77, %79, %cst_51 {dimension_numbers = #tpu.dot_dimension_numbers<[1], [0], [0], [1], [0, 0, 1, 1], [], []>} : vector<8x512xbf16>, vector<512x512xbf16>, vector<8x512xf32> -> vector<8x512xf32>
    %c7_52 = arith.constant 7 : index
    %c0_53 = arith.constant 0 : index
    %c0_54 = arith.constant 0 : index
    %81 = vector.load %arg4[%c7_52, %c0_53, %c0_54] : memref<15x1x512xf32, #tpu.memory_space<vmem>>, vector<1x1x512xf32>
    %82 = vector.shape_cast %81 : vector<1x1x512xf32> to vector<1x512xf32>
    %83 = vector.broadcast %82 : vector<1x512xf32> to vector<8x512xf32>
    %84 = arith.addf %80, %83 : vector<8x512xf32>
    %c0_55 = arith.constant 0 : index
    %c0_56 = arith.constant 0 : index
    %85 = vector.load %arg2[%c0_55, %c0_56] : memref<8x512xf32, #tpu.memory_space<vmem>>, vector<8x512xf32>
    %cst_57 = arith.constant 5.000000e-01 : f32
    %86 = vector.broadcast %cst_57 : f32 to vector<8x512xf32>
    %87 = arith.mulf %86, %84 : vector<8x512xf32>
    %88 = math.exp %87 : vector<8x512xf32>
    %89 = arith.mulf %85, %88 : vector<8x512xf32>
    %90 = arith.addf %76, %89 : vector<8x512xf32>
    %91 = arith.truncf %90 : vector<8x512xf32> to vector<8x512xbf16>
    %c8 = arith.constant 8 : index
    %c0_58 = arith.constant 0 : index
    %c0_59 = arith.constant 0 : index
    %92 = vector.load %arg3[%c8, %c0_58, %c0_59] : memref<15x512x512xbf16, #tpu.memory_space<vmem>>, vector<1x512x512xbf16>
    %93 = vector.shape_cast %92 : vector<1x512x512xbf16> to vector<512x512xbf16>
    %cst_60 = arith.constant dense<0.000000e+00> : vector<8x512xf32>
    %94 = tpu.matmul %91, %93, %cst_60 {dimension_numbers = #tpu.dot_dimension_numbers<[1], [0], [0], [1], [0, 0, 1, 1], [], []>} : vector<8x512xbf16>, vector<512x512xbf16>, vector<8x512xf32> -> vector<8x512xf32>
    %c8_61 = arith.constant 8 : index
    %c0_62 = arith.constant 0 : index
    %c0_63 = arith.constant 0 : index
    %95 = vector.load %arg4[%c8_61, %c0_62, %c0_63] : memref<15x1x512xf32, #tpu.memory_space<vmem>>, vector<1x1x512xf32>
    %96 = vector.shape_cast %95 : vector<1x1x512xf32> to vector<1x512xf32>
    %97 = vector.broadcast %96 : vector<1x512xf32> to vector<8x512xf32>
    %98 = arith.addf %94, %97 : vector<8x512xf32>
    %cst_64 = arith.constant 0.00999999977 : f32
    %99 = vector.broadcast %cst_64 : f32 to vector<8x512xf32>
    %100 = arith.mulf %99, %98 : vector<8x512xf32>
    %101 = arith.maximumf %98, %100 : vector<8x512xf32>
    %102 = arith.truncf %101 : vector<8x512xf32> to vector<8x512xbf16>
    %c9 = arith.constant 9 : index
    %c0_65 = arith.constant 0 : index
    %c0_66 = arith.constant 0 : index
    %103 = vector.load %arg3[%c9, %c0_65, %c0_66] : memref<15x512x512xbf16, #tpu.memory_space<vmem>>, vector<1x512x512xbf16>
    %104 = vector.shape_cast %103 : vector<1x512x512xbf16> to vector<512x512xbf16>
    %cst_67 = arith.constant dense<0.000000e+00> : vector<8x512xf32>
    %105 = tpu.matmul %102, %104, %cst_67 {dimension_numbers = #tpu.dot_dimension_numbers<[1], [0], [0], [1], [0, 0, 1, 1], [], []>} : vector<8x512xbf16>, vector<512x512xbf16>, vector<8x512xf32> -> vector<8x512xf32>
    %c9_68 = arith.constant 9 : index
    %c0_69 = arith.constant 0 : index
    %c0_70 = arith.constant 0 : index
    %106 = vector.load %arg4[%c9_68, %c0_69, %c0_70] : memref<15x1x512xf32, #tpu.memory_space<vmem>>, vector<1x1x512xf32>
    %107 = vector.shape_cast %106 : vector<1x1x512xf32> to vector<1x512xf32>
    %108 = vector.broadcast %107 : vector<1x512xf32> to vector<8x512xf32>
    %109 = arith.addf %105, %108 : vector<8x512xf32>
    %cst_71 = arith.constant 0.00999999977 : f32
    %110 = vector.broadcast %cst_71 : f32 to vector<8x512xf32>
    %111 = arith.mulf %110, %109 : vector<8x512xf32>
    %112 = arith.maximumf %109, %111 : vector<8x512xf32>
    %113 = arith.truncf %112 : vector<8x512xf32> to vector<8x512xbf16>
    %c10 = arith.constant 10 : index
    %c0_72 = arith.constant 0 : index
    %c0_73 = arith.constant 0 : index
    %114 = vector.load %arg3[%c10, %c0_72, %c0_73] : memref<15x512x512xbf16, #tpu.memory_space<vmem>>, vector<1x512x512xbf16>
    %115 = vector.shape_cast %114 : vector<1x512x512xbf16> to vector<512x512xbf16>
    %cst_74 = arith.constant dense<0.000000e+00> : vector<8x512xf32>
    %116 = tpu.matmul %113, %115, %cst_74 {dimension_numbers = #tpu.dot_dimension_numbers<[1], [0], [0], [1], [0, 0, 1, 1], [], []>} : vector<8x512xbf16>, vector<512x512xbf16>, vector<8x512xf32> -> vector<8x512xf32>
    %c10_75 = arith.constant 10 : index
    %c0_76 = arith.constant 0 : index
    %c0_77 = arith.constant 0 : index
    %117 = vector.load %arg4[%c10_75, %c0_76, %c0_77] : memref<15x1x512xf32, #tpu.memory_space<vmem>>, vector<1x1x512xf32>
    %118 = vector.shape_cast %117 : vector<1x1x512xf32> to vector<1x512xf32>
    %119 = vector.broadcast %118 : vector<1x512xf32> to vector<8x512xf32>
    %120 = arith.addf %116, %119 : vector<8x512xf32>
    %cst_78 = arith.constant 0.00999999977 : f32
    %121 = vector.broadcast %cst_78 : f32 to vector<8x512xf32>
    %122 = arith.mulf %121, %120 : vector<8x512xf32>
    %123 = arith.maximumf %120, %122 : vector<8x512xf32>
    %124 = arith.truncf %123 : vector<8x512xf32> to vector<8x512xbf16>
    %c11 = arith.constant 11 : index
    %c0_79 = arith.constant 0 : index
    %c0_80 = arith.constant 0 : index
    %125 = vector.load %arg3[%c11, %c0_79, %c0_80] : memref<15x512x512xbf16, #tpu.memory_space<vmem>>, vector<1x512x512xbf16>
    %126 = vector.shape_cast %125 : vector<1x512x512xbf16> to vector<512x512xbf16>
    %cst_81 = arith.constant dense<0.000000e+00> : vector<8x512xf32>
    %127 = tpu.matmul %124, %126, %cst_81 {dimension_numbers = #tpu.dot_dimension_numbers<[1], [0], [0], [1], [0, 0, 1, 1], [], []>} : vector<8x512xbf16>, vector<512x512xbf16>, vector<8x512xf32> -> vector<8x512xf32>
    %c11_82 = arith.constant 11 : index
    %c0_83 = arith.constant 0 : index
    %c0_84 = arith.constant 0 : index
    %128 = vector.load %arg4[%c11_82, %c0_83, %c0_84] : memref<15x1x512xf32, #tpu.memory_space<vmem>>, vector<1x1x512xf32>
    %129 = vector.shape_cast %128 : vector<1x1x512xf32> to vector<1x512xf32>
    %130 = vector.broadcast %129 : vector<1x512xf32> to vector<8x512xf32>
    %131 = arith.addf %127, %130 : vector<8x512xf32>
    %cst_85 = arith.constant 0.00999999977 : f32
    %132 = vector.broadcast %cst_85 : f32 to vector<8x512xf32>
    %133 = arith.mulf %132, %131 : vector<8x512xf32>
    %134 = arith.maximumf %131, %133 : vector<8x512xf32>
    %135 = arith.addf %134, %123 : vector<8x512xf32>
    %136 = arith.truncf %135 : vector<8x512xf32> to vector<8x512xbf16>
    %c12 = arith.constant 12 : index
    %c0_86 = arith.constant 0 : index
    %c0_87 = arith.constant 0 : index
    %137 = vector.load %arg3[%c12, %c0_86, %c0_87] : memref<15x512x512xbf16, #tpu.memory_space<vmem>>, vector<1x512x512xbf16>
    %138 = vector.shape_cast %137 : vector<1x512x512xbf16> to vector<512x512xbf16>
    %cst_88 = arith.constant dense<0.000000e+00> : vector<8x512xf32>
    %139 = tpu.matmul %136, %138, %cst_88 {dimension_numbers = #tpu.dot_dimension_numbers<[1], [0], [0], [1], [0, 0, 1, 1], [], []>} : vector<8x512xbf16>, vector<512x512xbf16>, vector<8x512xf32> -> vector<8x512xf32>
    %c12_89 = arith.constant 12 : index
    %c0_90 = arith.constant 0 : index
    %c0_91 = arith.constant 0 : index
    %140 = vector.load %arg4[%c12_89, %c0_90, %c0_91] : memref<15x1x512xf32, #tpu.memory_space<vmem>>, vector<1x1x512xf32>
    %141 = vector.shape_cast %140 : vector<1x1x512xf32> to vector<1x512xf32>
    %142 = vector.broadcast %141 : vector<1x512xf32> to vector<8x512xf32>
    %143 = arith.addf %139, %142 : vector<8x512xf32>
    %cst_92 = arith.constant 0.00999999977 : f32
    %144 = vector.broadcast %cst_92 : f32 to vector<8x512xf32>
    %145 = arith.mulf %144, %143 : vector<8x512xf32>
    %146 = arith.maximumf %143, %145 : vector<8x512xf32>
    %147 = arith.addf %146, %135 : vector<8x512xf32>
    %148 = arith.truncf %147 : vector<8x512xf32> to vector<8x512xbf16>
    %c13 = arith.constant 13 : index
    %c0_93 = arith.constant 0 : index
    %c0_94 = arith.constant 0 : index
    %149 = vector.load %arg3[%c13, %c0_93, %c0_94] : memref<15x512x512xbf16, #tpu.memory_space<vmem>>, vector<1x512x512xbf16>
    %150 = vector.shape_cast %149 : vector<1x512x512xbf16> to vector<512x512xbf16>
    %cst_95 = arith.constant dense<0.000000e+00> : vector<8x512xf32>
    %151 = tpu.matmul %148, %150, %cst_95 {dimension_numbers = #tpu.dot_dimension_numbers<[1], [0], [0], [1], [0, 0, 1, 1], [], []>} : vector<8x512xbf16>, vector<512x512xbf16>, vector<8x512xf32> -> vector<8x512xf32>
    %c13_96 = arith.constant 13 : index
    %c0_97 = arith.constant 0 : index
    %c0_98 = arith.constant 0 : index
    %152 = vector.load %arg4[%c13_96, %c0_97, %c0_98] : memref<15x1x512xf32, #tpu.memory_space<vmem>>, vector<1x1x512xf32>
    %153 = vector.shape_cast %152 : vector<1x1x512xf32> to vector<1x512xf32>
    %154 = vector.broadcast %153 : vector<1x512xf32> to vector<8x512xf32>
    %155 = arith.addf %151, %154 : vector<8x512xf32>
    %cst_99 = arith.constant 0.00999999977 : f32
    %156 = vector.broadcast %cst_99 : f32 to vector<8x512xf32>
    %157 = arith.mulf %156, %155 : vector<8x512xf32>
    %158 = arith.maximumf %155, %157 : vector<8x512xf32>
    %159 = arith.addf %158, %147 : vector<8x512xf32>
    %160 = arith.truncf %159 : vector<8x512xf32> to vector<8x512xbf16>
    %c14 = arith.constant 14 : index
    %c0_100 = arith.constant 0 : index
    %c0_101 = arith.constant 0 : index
    %161 = vector.load %arg3[%c14, %c0_100, %c0_101] : memref<15x512x512xbf16, #tpu.memory_space<vmem>>, vector<1x512x512xbf16>
    %162 = vector.shape_cast %161 : vector<1x512x512xbf16> to vector<512x512xbf16>
    %cst_102 = arith.constant dense<0.000000e+00> : vector<8x512xf32>
    %163 = tpu.matmul %160, %162, %cst_102 {dimension_numbers = #tpu.dot_dimension_numbers<[1], [0], [0], [1], [0, 0, 1, 1], [], []>} : vector<8x512xbf16>, vector<512x512xbf16>, vector<8x512xf32> -> vector<8x512xf32>
    %c14_103 = arith.constant 14 : index
    %c0_104 = arith.constant 0 : index
    %c0_105 = arith.constant 0 : index
    %164 = vector.load %arg4[%c14_103, %c0_104, %c0_105] : memref<15x1x512xf32, #tpu.memory_space<vmem>>, vector<1x1x512xf32>
    %165 = vector.shape_cast %164 : vector<1x1x512xf32> to vector<1x512xf32>
    %166 = vector.broadcast %165 : vector<1x512xf32> to vector<8x512xf32>
    %167 = arith.addf %163, %166 : vector<8x512xf32>
    %c0_106 = arith.constant 0 : index
    %c0_107 = arith.constant 0 : index
    %168 = vector.load %arg5[%c0_106, %c0_107] : memref<8x512xf32, #tpu.memory_space<vmem>>, vector<8x512xf32>
    tpu.vector_store %arg5[%c0_106, %c0_107], %167 {strides = array<i32>} : memref<8x512xf32, #tpu.memory_space<vmem>>, vector<8x512xf32>,
    %c0_108 = arith.constant 0 : index
    %c0_109 = arith.constant 0 : index
    %169 = vector.load %arg6[%c0_108, %c0_109] : memref<8x512xf32, #tpu.memory_space<vmem>>, vector<8x512xf32>
    tpu.vector_store %arg6[%c0_108, %c0_109], %76 {strides = array<i32>} : memref<8x512xf32, #tpu.memory_space<vmem>>, vector<8x512xf32>,
    %c0_110 = arith.constant 0 : index
    %c0_111 = arith.constant 0 : index
    %170 = vector.load %arg7[%c0_110, %c0_111] : memref<8x512xf32, #tpu.memory_space<vmem>>, vector<8x512xf32>
    tpu.vector_store %arg7[%c0_110, %c0_111], %84 {strides = array<i32>} : memref<8x512xf32, #tpu.memory_space<vmem>>, vector<8x512xf32>,
    return
  }
  func.func @transform_0(%arg0: i32) -> (i32, i32) {
    %c0_i32 = arith.constant 0 : i32
    %c0_i32_0 = arith.constant 0 : i32
    return %arg0, %c0_i32 : i32, i32
  }
  func.func @transform_1(%arg0: i32) -> (i32, i32) {
    %c0_i32 = arith.constant 0 : i32
    %c0_i32_0 = arith.constant 0 : i32
    return %arg0, %c0_i32 : i32, i32
  }
  func.func @transform_2(%arg0: i32) -> (i32, i32, i32) {
    %c0_i32 = arith.constant 0 : i32
    %c0_i32_0 = arith.constant 0 : i32
    %c0_i32_1 = arith.constant 0 : i32
    %c0_i32_2 = arith.constant 0 : i32
    return %c0_i32, %c0_i32_0, %c0_i32_1 : i32, i32, i32
  }
  func.func @transform_3(%arg0: i32) -> (i32, i32, i32) {
    %c0_i32 = arith.constant 0 : i32
    %c0_i32_0 = arith.constant 0 : i32
    %c0_i32_1 = arith.constant 0 : i32
    %c0_i32_2 = arith.constant 0 : i32
    return %c0_i32, %c0_i32_0, %c0_i32_1 : i32, i32, i32
  }
  func.func @transform_4(%arg0: i32) -> (i32, i32) {
    %c0_i32 = arith.constant 0 : i32
    %c0_i32_0 = arith.constant 0 : i32
    return %arg0, %c0_i32 : i32, i32
  }
  func.func @transform_5(%arg0: i32) -> (i32, i32) {
    %c0_i32 = arith.constant 0 : i32
    %c0_i32_0 = arith.constant 0 : i32
    return %arg0, %c0_i32 : i32, i32
  }
  func.func @transform_6(%arg0: i32) -> (i32, i32) {
    %c0_i32 = arith.constant 0 : i32
    %c0_i32_0 = arith.constant 0 : i32
    return %arg0, %c0_i32 : i32, i32
  }
}

</mosaic_0001>

<llo_original>
// kernel: network_forward.1
$region0: #{network_forward.1}
  #allocation0 [shape = 'u32[]', space=smem, size = 0x4, offset = 0x4, fixed_abs, tag = 'smem constant byte address 0x4 - core index']
  #allocation1 [shape = 'u32[144,128]{1,0:T(1,128)}', space=vmem, size = 0x12000, scoped, tag = 'internal scratch']
  %s0 = inlined_call_operand.vmem [shape: bf16[8,512], index: 0, kind: input, shape index: {}]
  %s1 = inlined_call_operand.vmem [shape: f32[8,512], index: 1, kind: input, shape index: {}]
  %s2 = inlined_call_operand.hbm [shape: bf16[15,512,512], index: 2, kind: input, shape index: {}]
  %s3 = inlined_call_operand.hbm [shape: f32[15,1,512], index: 3, kind: input, shape index: {}]
  %s4 = inlined_call_operand.vmem [shape: f32[8,512], index: 4, kind: output, shape index: {0}]
  %s5 = inlined_call_operand.vmem [shape: f32[8,512], index: 5, kind: output, shape index: {1}]
  %s6 = inlined_call_operand.vmem [shape: f32[8,512], index: 6, kind: output, shape index: {2}]
  %7 = xla_tuple %s4, %s5, %s6
  %s8 = sld [smem:[#allocation0]]
  $region50: #{network_forward.1} parent=0
    _
  %s10 = ssub.s32 1, %s8
  %s11 = scalar_select 0, %s10, %s8
  $region1: #{network_forward.1} parent=0
    #allocation2 [shape = 'u8[7864320]{0}', space=vmem, size = 0x780000, scoped, tag = 'input window, operand 2, single buffered']
    #allocation3 [shape = 's32[1]{0}', space=sflag, size = 0x4, scoped, tag = 'scoped memory for network_forward.1']
    #allocation4 [shape = 'u8[30720]{0}', space=vmem, size = 0x7800, scoped, tag = 'input window, operand 3, single buffered']
    #allocation5 [shape = 's32[1]{0}', space=sflag, size = 0x4, scoped, tag = 'scoped memory for network_forward.1']
    %12 = vsyncpa [#allocation3], 0
    %13 = vsyncpa [#allocation5], 0
    // Predicated region
    $region2: #{network_forward.1} parent=1 // pred_check
      _
    $region3: #{network_forward.1} parent=1 // pred_check_branch
      %15 = sbr.rel (0) target = $region5
    $region4: #{network_forward.1} parent=1 // pred_region
      _
    $region5: #{network_forward.1} parent=1 // pred_fallthru
      _
    // Predicated region
    $region6: #{network_forward.1} parent=1 // pred_check
      _
    $region7: #{network_forward.1} parent=1 // pred_check_branch
      %17 = sbr.rel (0) target = $region9
    $region8: #{network_forward.1} parent=1 // pred_region
      _
    $region9: #{network_forward.1} parent=1 // pred_fallthru
      _
    // Predicated region
    $region10: #{network_forward.1} parent=1 // pred_check
      _
    $region11: #{network_forward.1} parent=1 // pred_check_branch
      %19 = sbr.rel (0) target = $region13
    $region12: #{network_forward.1} parent=1 // pred_region
      %s21 = ssub.s32 245760, 245760
      %22 = vsyncadd [#allocation3], %s21
      %s23 = sshll.u32 [#allocation2], 4
      %s24 = int_to_ptr.vmem [resolvable:$true] %s23
      %29 = dma.hbm_to_vmem [thread:$0]  %s2, 245760, %s24, [#allocation3], 256, 256, 16
    $region13: #{network_forward.1} parent=1 // pred_fallthru
      _
    // Predicated region
    $region14: #{network_forward.1} parent=1 // pred_check
      _
    $region15: #{network_forward.1} parent=1 // pred_check_branch
      %31 = sbr.rel (0) target = $region17
    $region16: #{network_forward.1} parent=1 // pred_region
      %s33 = ssub.s32 960, 960
      %34 = vsyncadd [#allocation5], %s33
      %s35 = sshll.u32 [#allocation4], 4
      %s36 = int_to_ptr.vmem [resolvable:$true] %s35
      %41 = dma.hbm_to_vmem [thread:$0]  %s3, 960, %s36, [#allocation5], 64, 64, 4
    $region17: #{network_forward.1} parent=1 // pred_fallthru
      _
    // Predicated region
    $region18: #{network_forward.1} parent=1 // pred_check
      _
    $region19: #{network_forward.1} parent=1 // pred_check_branch
      %43 = sbr.rel (0) target = $region21
    $region20: #{network_forward.1} parent=1 // pred_region
      %44 = dma.done [#allocation3], 245760
    $region21: #{network_forward.1} parent=1 // pred_fallthru
      _
    // Predicated region
    $region22: #{network_forward.1} parent=1 // pred_check
      _
    $region23: #{network_forward.1} parent=1 // pred_check_branch
      %46 = sbr.rel (0) target = $region25
    $region24: #{network_forward.1} parent=1 // pred_region
      %47 = dma.done [#allocation5], 960
    $region25: #{network_forward.1} parent=1 // pred_fallthru
      _
    %v48 = vld [vmem:[%s0] sm:$0xff]
    %v49 = vld [vmem:[%s0 + $0x8] sm:$0xff]
    %v50 = vld [vmem:[#allocation2] sm:$0xff]
    %v51 = vld [vmem:[#allocation2 + $0x8] sm:$0xff]
    %v52 = vld [vmem:[#allocation2 + $0x10] sm:$0xff]
    %v53 = vld [vmem:[#allocation2 + $0x18] sm:$0xff]
    %v54 = vld [vmem:[#allocation2 + $0x20] sm:$0xff]
    %v55 = vld [vmem:[#allocation2 + $0x28] sm:$0xff]
    %v56 = vld [vmem:[#allocation2 + $0x30] sm:$0xff]
    %v57 = vld [vmem:[#allocation2 + $0x38] sm:$0xff]
    %v58 = vld [vmem:[#allocation2 + $0x40] sm:$0xff]
    %v59 = vld [vmem:[#allocation2 + $0x48] sm:$0xff]
    %v60 = vld [vmem:[#allocation2 + $0x50] sm:$0xff]
    %v61 = vld [vmem:[#allocation2 + $0x58] sm:$0xff]
    %v62 = vld [vmem:[#allocation2 + $0x60] sm:$0xff]
    %v63 = vld [vmem:[#allocation2 + $0x68] sm:$0xff]
    %v64 = vld [vmem:[#allocation2 + $0x70] sm:$0xff]
    %v65 = vld [vmem:[#allocation2 + $0x78] sm:$0xff]
    %v66 = vld [vmem:[#allocation2 + $0x80] sm:$0xff]
    %v67 = vld [vmem:[#allocation2 + $0x88] sm:$0xff]
    %v68 = vld [vmem:[#allocation2 + $0x90] sm:$0xff]
    %v69 = vld [vmem:[#allocation2 + $0x98] sm:$0xff]
    %v70 = vld [vmem:[#allocation2 + $0xa0] sm:$0xff]
    %v71 = vld [vmem:[#allocation2 + $0xa8] sm:$0xff]
    %v72 = vld [vmem:[#allocation2 + $0xb0] sm:$0xff]
    %v73 = vld [vmem:[#allocation2 + $0xb8] sm:$0xff]
    %v74 = vld [vmem:[#allocation2 + $0xc0] sm:$0xff]
    %v75 = vld [vmem:[#allocation2 + $0xc8] sm:$0xff]
    %v76 = vld [vmem:[#allocation2 + $0xd0] sm:$0xff]
    %v77 = vld [vmem:[#allocation2 + $0xd8] sm:$0xff]
    %v78 = vld [vmem:[#allocation2 + $0xe0] sm:$0xff]
    %v79 = vld [vmem:[#allocation2 + $0xe8] sm:$0xff]
    %v80 = vld [vmem:[#allocation2 + $0xf0] sm:$0xff]
    %v81 = vld [vmem:[#allocation2 + $0xf8] sm:$0xff]
    %v82 = vld [vmem:[#allocation2 + $0x100] sm:$0xff]
    %v83 = vld [vmem:[#allocation2 + $0x108] sm:$0xff]
    %v84 = vld [vmem:[#allocation2 + $0x110] sm:$0xff]
    %v85 = vld [vmem:[#allocation2 + $0x118] sm:$0xff]
    %v86 = vld [vmem:[#allocation2 + $0x120] sm:$0xff]
    %v87 = vld [vmem:[#allocation2 + $0x128] sm:$0xff]
    %v88 = vld [vmem:[#allocation2 + $0x130] sm:$0xff]
    %v89 = vld [vmem:[#allocation2 + $0x138] sm:$0xff]
    %v90 = vld [vmem:[#allocation2 + $0x140] sm:$0xff]
    %v91 = vld [vmem:[#allocation2 + $0x148] sm:$0xff]
    %v92 = vld [vmem:[#allocation2 + $0x150] sm:$0xff]
    %v93 = vld [vmem:[#allocation2 + $0x158] sm:$0xff]
    %v94 = vld [vmem:[#allocation2 + $0x160] sm:$0xff]
    %v95 = vld [vmem:[#allocation2 + $0x168] sm:$0xff]
    %v96 = vld [vmem:[#allocation2 + $0x170] sm:$0xff]
    %v97 = vld [vmem:[#allocation2 + $0x178] sm:$0xff]
    %v98 = vld [vmem:[#allocation2 + $0x180] sm:$0xff]
    %v99 = vld [vmem:[#allocation2 + $0x188] sm:$0xff]
    %v100 = vld [vmem:[#allocation2 + $0x190] sm:$0xff]
    %v101 = vld [vmem:[#allocation2 + $0x198] sm:$0xff]
    %v102 = vld [vmem:[#allocation2 + $0x1a0] sm:$0xff]
    %v103 = vld [vmem:[#allocation2 + $0x1a8] sm:$0xff]
    %v104 = vld [vmem:[#allocation2 + $0x1b0] sm:$0xff]
    %v105 = vld [vmem:[#allocation2 + $0x1b8] sm:$0xff]
    %v106 = vld [vmem:[#allocation2 + $0x1c0] sm:$0xff]
    %v107 = vld [vmem:[#allocation2 + $0x1c8] sm:$0xff]
    %v108 = vld [vmem:[#allocation2 + $0x1d0] sm:$0xff]
    %v109 = vld [vmem:[#allocation2 + $0x1d8] sm:$0xff]
    %v110 = vld [vmem:[#allocation2 + $0x1e0] sm:$0xff]
    %v111 = vld [vmem:[#allocation2 + $0x1e8] sm:$0xff]
    %v112 = vld [vmem:[#allocation2 + $0x1f0] sm:$0xff]
    %v113 = vld [vmem:[#allocation2 + $0x1f8] sm:$0xff]
    %v114 = vld [vmem:[#allocation2 + $0x200] sm:$0xff]
    %v115 = vld [vmem:[#allocation2 + $0x208] sm:$0xff]
    %v116 = vld [vmem:[#allocation2 + $0x210] sm:$0xff]
    %v117 = vld [vmem:[#allocation2 + $0x218] sm:$0xff]
    %v118 = vld [vmem:[#allocation2 + $0x220] sm:$0xff]
    %v119 = vld [vmem:[#allocation2 + $0x228] sm:$0xff]
    %v120 = vld [vmem:[#allocation2 + $0x230] sm:$0xff]
    %v121 = vld [vmem:[#allocation2 + $0x238] sm:$0xff]
    %v122 = vld [vmem:[#allocation2 + $0x240] sm:$0xff]
    %v123 = vld [vmem:[#allocation2 + $0x248] sm:$0xff]
    %v124 = vld [vmem:[#allocation2 + $0x250] sm:$0xff]
    %v125 = vld [vmem:[#allocation2 + $0x258] sm:$0xff]
    %v126 = vld [vmem:[#allocation2 + $0x260] sm:$0xff]
    %v127 = vld [vmem:[#allocation2 + $0x268] sm:$0xff]
    %v128 = vld [vmem:[#allocation2 + $0x270] sm:$0xff]
    %v129 = vld [vmem:[#allocation2 + $0x278] sm:$0xff]
    %v130 = vld [vmem:[#allocation2 + $0x280] sm:$0xff]
    %v131 = vld [vmem:[#allocation2 + $0x288] sm:$0xff]
    %v132 = vld [vmem:[#allocation2 + $0x290] sm:$0xff]
    %v133 = vld [vmem:[#allocation2 + $0x298] sm:$0xff]
    %v134 = vld [vmem:[#allocation2 + $0x2a0] sm:$0xff]
    %v135 = vld [vmem:[#allocation2 + $0x2a8] sm:$0xff]
    %v136 = vld [vmem:[#allocation2 + $0x2b0] sm:$0xff]
    %v137 = vld [vmem:[#allocation2 + $0x2b8] sm:$0xff]
    %v138 = vld [vmem:[#allocation2 + $0x2c0] sm:$0xff]
    %v139 = vld [vmem:[#allocation2 + $0x2c8] sm:$0xff]
    %v140 = vld [vmem:[#allocation2 + $0x2d0] sm:$0xff]
    %v141 = vld [vmem:[#allocation2 + $0x2d8] sm:$0xff]
    %v142 = vld [vmem:[#allocation2 + $0x2e0] sm:$0xff]
    %v143 = vld [vmem:[#allocation2 + $0x2e8] sm:$0xff]
    %v144 = vld [vmem:[#allocation2 + $0x2f0] sm:$0xff]
    %v145 = vld [vmem:[#allocation2 + $0x2f8] sm:$0xff]
    %v146 = vld [vmem:[#allocation2 + $0x300] sm:$0xff]
    %v147 = vld [vmem:[#allocation2 + $0x308] sm:$0xff]
    %v148 = vld [vmem:[#allocation2 + $0x310] sm:$0xff]
    %v149 = vld [vmem:[#allocation2 + $0x318] sm:$0xff]
    %v150 = vld [vmem:[#allocation2 + $0x320] sm:$0xff]
    %v151 = vld [vmem:[#allocation2 + $0x328] sm:$0xff]
    %v152 = vld [vmem:[#allocation2 + $0x330] sm:$0xff]
    %v153 = vld [vmem:[#allocation2 + $0x338] sm:$0xff]
    %v154 = vld [vmem:[#allocation2 + $0x340] sm:$0xff]
    %v155 = vld [vmem:[#allocation2 + $0x348] sm:$0xff]
    %v156 = vld [vmem:[#allocation2 + $0x350] sm:$0xff]
    %v157 = vld [vmem:[#allocation2 + $0x358] sm:$0xff]
    %v158 = vld [vmem:[#allocation2 + $0x360] sm:$0xff]
    %v159 = vld [vmem:[#allocation2 + $0x368] sm:$0xff]
    %v160 = vld [vmem:[#allocation2 + $0x370] sm:$0xff]
    %v161 = vld [vmem:[#allocation2 + $0x378] sm:$0xff]
    %v162 = vld [vmem:[#allocation2 + $0x380] sm:$0xff]
    %v163 = vld [vmem:[#allocation2 + $0x388] sm:$0xff]
    %v164 = vld [vmem:[#allocation2 + $0x390] sm:$0xff]
    %v165 = vld [vmem:[#allocation2 + $0x398] sm:$0xff]
    %v166 = vld [vmem:[#allocation2 + $0x3a0] sm:$0xff]
    %v167 = vld [vmem:[#allocation2 + $0x3a8] sm:$0xff]
    %v168 = vld [vmem:[#allocation2 + $0x3b0] sm:$0xff]
    %v169 = vld [vmem:[#allocation2 + $0x3b8] sm:$0xff]
    %v170 = vld [vmem:[#allocation2 + $0x3c0] sm:$0xff]
    %v171 = vld [vmem:[#allocation2 + $0x3c8] sm:$0xff]
    %v172 = vld [vmem:[#allocation2 + $0x3d0] sm:$0xff]
    %v173 = vld [vmem:[#allocation2 + $0x3d8] sm:$0xff]
    %v174 = vld [vmem:[#allocation2 + $0x3e0] sm:$0xff]
    %v175 = vld [vmem:[#allocation2 + $0x3e8] sm:$0xff]
    %v176 = vld [vmem:[#allocation2 + $0x3f0] sm:$0xff]
    %v177 = vld [vmem:[#allocation2 + $0x3f8] sm:$0xff]
    %v178 = vld [vmem:[#allocation4] sm:$0xf]
    %v180 = vlaneseq
    %v181 = vshrl.u32 %v180, 7
    %v182 = vsub.s32 0, %v181
    %v183 = vrot.slane %v178, %v182
    %v184 = vlaneseq
    %v185 = vshrl.u32 %v184, 7
    %v186 = vsub.s32 1, %v185
    %v187 = vrot.slane %v178, %v186
    %v188 = vlaneseq
    %v189 = vshrl.u32 %v188, 7
    %v190 = vsub.s32 2, %v189
    %v191 = vrot.slane %v178, %v190
    %v192 = vlaneseq
    %v193 = vshrl.u32 %v192, 7
    %v194 = vsub.s32 3, %v193
    %v195 = vrot.slane %v178, %v194
    %v202 = vunpack.c.l.b16 %v48
    %v203 = vunpack.c.h.b16 %v48
    %v204 = vunpack.c.l.b16 %v49
    %v205 = vunpack.c.h.b16 %v49
    %v206 = vpack.c.b16 %v202, %v202
    %v207 = vpack.c.b16 %v203, %v203
    %v208 = vpack.c.b16 %v204, %v204
    %v209 = vpack.c.b16 %v205, %v205
    %v342 = vunpack.c.l.b16 %v50
    %v343 = vunpack.c.h.b16 %v50
    %v344 = vunpack.c.l.b16 %v51
    %v345 = vunpack.c.h.b16 %v51
    %v346 = vunpack.c.l.b16 %v52
    %v347 = vunpack.c.h.b16 %v52
    %v348 = vunpack.c.l.b16 %v53
    %v349 = vunpack.c.h.b16 %v53
    %v350 = vunpack.c.l.b16 %v54
    %v351 = vunpack.c.h.b16 %v54
    %v352 = vunpack.c.l.b16 %v55
    %v353 = vunpack.c.h.b16 %v55
    %v354 = vunpack.c.l.b16 %v56
    %v355 = vunpack.c.h.b16 %v56
    %v356 = vunpack.c.l.b16 %v57
    %v357 = vunpack.c.h.b16 %v57
    %v358 = vunpack.c.l.b16 %v58
    %v359 = vunpack.c.h.b16 %v58
    %v360 = vunpack.c.l.b16 %v59
    %v361 = vunpack.c.h.b16 %v59
    %v362 = vunpack.c.l.b16 %v60
    %v363 = vunpack.c.h.b16 %v60
    %v364 = vunpack.c.l.b16 %v61
    %v365 = vunpack.c.h.b16 %v61
    %v366 = vunpack.c.l.b16 %v62
    %v367 = vunpack.c.h.b16 %v62
    %v368 = vunpack.c.l.b16 %v63
    %v369 = vunpack.c.h.b16 %v63
    %v370 = vunpack.c.l.b16 %v64
    %v371 = vunpack.c.h.b16 %v64
    %v372 = vunpack.c.l.b16 %v65
    %v373 = vunpack.c.h.b16 %v65
    %v374 = vunpack.c.l.b16 %v66
    %v375 = vunpack.c.h.b16 %v66
    %v376 = vunpack.c.l.b16 %v67
    %v377 = vunpack.c.h.b16 %v67
    %v378 = vunpack.c.l.b16 %v68
    %v379 = vunpack.c.h.b16 %v68
    %v380 = vunpack.c.l.b16 %v69
    %v381 = vunpack.c.h.b16 %v69
    %v382 = vunpack.c.l.b16 %v70
    %v383 = vunpack.c.h.b16 %v70
    %v384 = vunpack.c.l.b16 %v71
    %v385 = vunpack.c.h.b16 %v71
    %v386 = vunpack.c.l.b16 %v72
    %v387 = vunpack.c.h.b16 %v72
    %v388 = vunpack.c.l.b16 %v73
    %v389 = vunpack.c.h.b16 %v73
    %v390 = vunpack.c.l.b16 %v74
    %v391 = vunpack.c.h.b16 %v74
    %v392 = vunpack.c.l.b16 %v75
    %v393 = vunpack.c.h.b16 %v75
    %v394 = vunpack.c.l.b16 %v76
    %v395 = vunpack.c.h.b16 %v76
    %v396 = vunpack.c.l.b16 %v77
    %v397 = vunpack.c.h.b16 %v77
    %v398 = vunpack.c.l.b16 %v78
    %v399 = vunpack.c.h.b16 %v78
    %v400 = vunpack.c.l.b16 %v79
    %v401 = vunpack.c.h.b16 %v79
    %v402 = vunpack.c.l.b16 %v80
    %v403 = vunpack.c.h.b16 %v80
    %v404 = vunpack.c.l.b16 %v81
    %v405 = vunpack.c.h.b16 %v81
    %v406 = vunpack.c.l.b16 %v82
    %v407 = vunpack.c.h.b16 %v82
    %v408 = vunpack.c.l.b16 %v83
    %v409 = vunpack.c.h.b16 %v83
    %v410 = vunpack.c.l.b16 %v84
    %v411 = vunpack.c.h.b16 %v84
    %v412 = vunpack.c.l.b16 %v85
    %v413 = vunpack.c.h.b16 %v85
    %v414 = vunpack.c.l.b16 %v86
    %v415 = vunpack.c.h.b16 %v86
    %v416 = vunpack.c.l.b16 %v87
    %v417 = vunpack.c.h.b16 %v87
    %v418 = vunpack.c.l.b16 %v88
    %v419 = vunpack.c.h.b16 %v88
    %v420 = vunpack.c.l.b16 %v89
    %v421 = vunpack.c.h.b16 %v89
    %v422 = vunpack.c.l.b16 %v90
    %v423 = vunpack.c.h.b16 %v90
    %v424 = vunpack.c.l.b16 %v91
    %v425 = vunpack.c.h.b16 %v91
    %v426 = vunpack.c.l.b16 %v92
    %v427 = vunpack.c.h.b16 %v92
    %v428 = vunpack.c.l.b16 %v93
    %v429 = vunpack.c.h.b16 %v93
    %v430 = vunpack.c.l.b16 %v94
    %v431 = vunpack.c.h.b16 %v94
    %v432 = vunpack.c.l.b16 %v95
    %v433 = vunpack.c.h.b16 %v95
    %v434 = vunpack.c.l.b16 %v96
    %v435 = vunpack.c.h.b16 %v96
    %v436 = vunpack.c.l.b16 %v97
    %v437 = vunpack.c.h.b16 %v97
    %v438 = vunpack.c.l.b16 %v98
    %v439 = vunpack.c.h.b16 %v98
    %v440 = vunpack.c.l.b16 %v99
    %v441 = vunpack.c.h.b16 %v99
    %v442 = vunpack.c.l.b16 %v100
    %v443 = vunpack.c.h.b16 %v100
    %v444 = vunpack.c.l.b16 %v101
    %v445 = vunpack.c.h.b16 %v101
    %v446 = vunpack.c.l.b16 %v102
    %v447 = vunpack.c.h.b16 %v102
    %v448 = vunpack.c.l.b16 %v103
    %v449 = vunpack.c.h.b16 %v103
    %v450 = vunpack.c.l.b16 %v104
    %v451 = vunpack.c.h.b16 %v104
    %v452 = vunpack.c.l.b16 %v105
    %v453 = vunpack.c.h.b16 %v105
    %v454 = vunpack.c.l.b16 %v106
    %v455 = vunpack.c.h.b16 %v106
    %v456 = vunpack.c.l.b16 %v107
    %v457 = vunpack.c.h.b16 %v107
    %v458 = vunpack.c.l.b16 %v108
    %v459 = vunpack.c.h.b16 %v108
    %v460 = vunpack.c.l.b16 %v109
    %v461 = vunpack.c.h.b16 %v109
    %v462 = vunpack.c.l.b16 %v110
    %v463 = vunpack.c.h.b16 %v110
    %v464 = vunpack.c.l.b16 %v111
    %v465 = vunpack.c.h.b16 %v111
    %v466 = vunpack.c.l.b16 %v112
    %v467 = vunpack.c.h.b16 %v112
    %v468 = vunpack.c.l.b16 %v113
    %v469 = vunpack.c.h.b16 %v113
    %v470 = vunpack.c.l.b16 %v114
    %v471 = vunpack.c.h.b16 %v114
    %v472 = vunpack.c.l.b16 %v115
    %v473 = vunpack.c.h.b16 %v115
    %v474 = vunpack.c.l.b16 %v116
    %v475 = vunpack.c.h.b16 %v116
    %v476 = vunpack.c.l.b16 %v117
    %v477 = vunpack.c.h.b16 %v117
    %v478 = vunpack.c.l.b16 %v118
    %v479 = vunpack.c.h.b16 %v118
    %v480 = vunpack.c.l.b16 %v119
    %v481 = vunpack.c.h.b16 %v119
    %v482 = vunpack.c.l.b16 %v120
    %v483 = vunpack.c.h.b16 %v120
    %v484 = vunpack.c.l.b16 %v121
    %v485 = vunpack.c.h.b16 %v121
    %v486 = vunpack.c.l.b16 %v122
    %v487 = vunpack.c.h.b16 %v122
    %v488 = vunpack.c.l.b16 %v123
    %v489 = vunpack.c.h.b16 %v123
    %v490 = vunpack.c.l.b16 %v124
    %v491 = vunpack.c.h.b16 %v124
    %v492 = vunpack.c.l.b16 %v125
    %v493 = vunpack.c.h.b16 %v125
    %v494 = vunpack.c.l.b16 %v126
    %v495 = vunpack.c.h.b16 %v126
    %v496 = vunpack.c.l.b16 %v127
    %v497 = vunpack.c.h.b16 %v127
    %v498 = vunpack.c.l.b16 %v128
    %v499 = vunpack.c.h.b16 %v128
    %v500 = vunpack.c.l.b16 %v129
    %v501 = vunpack.c.h.b16 %v129
    %v502 = vunpack.c.l.b16 %v130
    %v503 = vunpack.c.h.b16 %v130
    %v504 = vunpack.c.l.b16 %v131
    %v505 = vunpack.c.h.b16 %v131
    %v506 = vunpack.c.l.b16 %v132
    %v507 = vunpack.c.h.b16 %v132
    %v508 = vunpack.c.l.b16 %v133
    %v509 = vunpack.c.h.b16 %v133
    %v510 = vunpack.c.l.b16 %v134
    %v511 = vunpack.c.h.b16 %v134
    %v512 = vunpack.c.l.b16 %v135
    %v513 = vunpack.c.h.b16 %v135
    %v514 = vunpack.c.l.b16 %v136
    %v515 = vunpack.c.h.b16 %v136
    %v516 = vunpack.c.l.b16 %v137
    %v517 = vunpack.c.h.b16 %v137
    %v518 = vunpack.c.l.b16 %v138
    %v519 = vunpack.c.h.b16 %v138
    %v520 = vunpack.c.l.b16 %v139
    %v521 = vunpack.c.h.b16 %v139
    %v522 = vunpack.c.l.b16 %v140
    %v523 = vunpack.c.h.b16 %v140
    %v524 = vunpack.c.l.b16 %v141
    %v525 = vunpack.c.h.b16 %v141
    %v526 = vunpack.c.l.b16 %v142
    %v527 = vunpack.c.h.b16 %v142
    %v528 = vunpack.c.l.b16 %v143
    %v529 = vunpack.c.h.b16 %v143
    %v530 = vunpack.c.l.b16 %v144
    %v531 = vunpack.c.h.b16 %v144
    %v532 = vunpack.c.l.b16 %v145
    %v533 = vunpack.c.h.b16 %v145
    %v534 = vunpack.c.l.b16 %v146
    %v535 = vunpack.c.h.b16 %v146
    %v536 = vunpack.c.l.b16 %v147
    %v537 = vunpack.c.h.b16 %v147
    %v538 = vunpack.c.l.b16 %v148
    %v539 = vunpack.c.h.b16 %v148
    %v540 = vunpack.c.l.b16 %v149
    %v541 = vunpack.c.h.b16 %v149
    %v542 = vunpack.c.l.b16 %v150
    %v543 = vunpack.c.h.b16 %v150
    %v544 = vunpack.c.l.b16 %v151
    %v545 = vunpack.c.h.b16 %v151
    %v546 = vunpack.c.l.b16 %v152
    %v547 = vunpack.c.h.b16 %v152
    %v548 = vunpack.c.l.b16 %v153
    %v549 = vunpack.c.h.b16 %v153
    %v550 = vunpack.c.l.b16 %v154
    %v551 = vunpack.c.h.b16 %v154
    %v552 = vunpack.c.l.b16 %v155
    %v553 = vunpack.c.h.b16 %v155
    %v554 = vunpack.c.l.b16 %v156
    %v555 = vunpack.c.h.b16 %v156
    %v556 = vunpack.c.l.b16 %v157
    %v557 = vunpack.c.h.b16 %v157
    %v558 = vunpack.c.l.b16 %v158
    %v559 = vunpack.c.h.b16 %v158
    %v560 = vunpack.c.l.b16 %v159
    %v561 = vunpack.c.h.b16 %v159
    %v562 = vunpack.c.l.b16 %v160
    %v563 = vunpack.c.h.b16 %v160
    %v564 = vunpack.c.l.b16 %v161
    %v565 = vunpack.c.h.b16 %v161
    %v566 = vunpack.c.l.b16 %v162
    %v567 = vunpack.c.h.b16 %v162
    %v568 = vunpack.c.l.b16 %v163
    %v569 = vunpack.c.h.b16 %v163
    %v570 = vunpack.c.l.b16 %v164
    %v571 = vunpack.c.h.b16 %v164
    %v572 = vunpack.c.l.b16 %v165
    %v573 = vunpack.c.h.b16 %v165
    %v574 = vunpack.c.l.b16 %v166
    %v575 = vunpack.c.h.b16 %v166
    %v576 = vunpack.c.l.b16 %v167
    %v577 = vunpack.c.h.b16 %v167
    %v578 = vunpack.c.l.b16 %v168
    %v579 = vunpack.c.h.b16 %v168
    %v580 = vunpack.c.l.b16 %v169
    %v581 = vunpack.c.h.b16 %v169
    %v582 = vunpack.c.l.b16 %v170
    %v583 = vunpack.c.h.b16 %v170
    %v584 = vunpack.c.l.b16 %v171
    %v585 = vunpack.c.h.b16 %v171
    %v586 = vunpack.c.l.b16 %v172
    %v587 = vunpack.c.h.b16 %v172
    %v588 = vunpack.c.l.b16 %v173
    %v589 = vunpack.c.h.b16 %v173
    %v590 = vunpack.c.l.b16 %v174
    %v591 = vunpack.c.h.b16 %v174
    %v592 = vunpack.c.l.b16 %v175
    %v593 = vunpack.c.h.b16 %v175
    %v594 = vunpack.c.l.b16 %v176
    %v595 = vunpack.c.h.b16 %v176
    %v596 = vunpack.c.l.b16 %v177
    %v597 = vunpack.c.h.b16 %v177
    %v598 = vpack.c.b16 %v346, %v342
    %v599 = vpack.c.b16 %v347, %v343
    %v600 = vpack.c.b16 %v348, %v344
    %v601 = vpack.c.b16 %v349, %v345
    %v602 = vpack.c.b16 %v354, %v350
    %v603 = vpack.c.b16 %v355, %v351
    %v604 = vpack.c.b16 %v356, %v352
    %v605 = vpack.c.b16 %v357, %v353
    %v606 = vpack.c.b16 %v362, %v358
    %v607 = vpack.c.b16 %v363, %v359
    %v608 = vpack.c.b16 %v364, %v360
    %v609 = vpack.c.b16 %v365, %v361
    %v610 = vpack.c.b16 %v370, %v366
    %v611 = vpack.c.b16 %v371, %v367
    %v612 = vpack.c.b16 %v372, %v368
    %v613 = vpack.c.b16 %v373, %v369
    %v614 = vpack.c.b16 %v378, %v374
    %v615 = vpack.c.b16 %v379, %v375
    %v616 = vpack.c.b16 %v380, %v376
    %v617 = vpack.c.b16 %v381, %v377
    %v618 = vpack.c.b16 %v386, %v382
    %v619 = vpack.c.b16 %v387, %v383
    %v620 = vpack.c.b16 %v388, %v384
    %v621 = vpack.c.b16 %v389, %v385
    %v622 = vpack.c.b16 %v394, %v390
    %v623 = vpack.c.b16 %v395, %v391
    %v624 = vpack.c.b16 %v396, %v392
    %v625 = vpack.c.b16 %v397, %v393
    %v626 = vpack.c.b16 %v402, %v398
    %v627 = vpack.c.b16 %v403, %v399
    %v628 = vpack.c.b16 %v404, %v400
    %v629 = vpack.c.b16 %v405, %v401
    %v630 = vpack.c.b16 %v410, %v406
    %v631 = vpack.c.b16 %v411, %v407
    %v632 = vpack.c.b16 %v412, %v408
    %v633 = vpack.c.b16 %v413, %v409
    %v634 = vpack.c.b16 %v418, %v414
    %v635 = vpack.c.b16 %v419, %v415
    %v636 = vpack.c.b16 %v420, %v416
    %v637 = vpack.c.b16 %v421, %v417
    %v638 = vpack.c.b16 %v426, %v422
    %v639 = vpack.c.b16 %v427, %v423
    %v640 = vpack.c.b16 %v428, %v424
    %v641 = vpack.c.b16 %v429, %v425
    %v642 = vpack.c.b16 %v434, %v430
    %v643 = vpack.c.b16 %v435, %v431
    %v644 = vpack.c.b16 %v436, %v432
    %v645 = vpack.c.b16 %v437, %v433
    %v646 = vpack.c.b16 %v442, %v438
    %v647 = vpack.c.b16 %v443, %v439
    %v648 = vpack.c.b16 %v444, %v440
    %v649 = vpack.c.b16 %v445, %v441
    %v650 = vpack.c.b16 %v450, %v446
    %v651 = vpack.c.b16 %v451, %v447
    %v652 = vpack.c.b16 %v452, %v448
    %v653 = vpack.c.b16 %v453, %v449
    %v654 = vpack.c.b16 %v458, %v454
    %v655 = vpack.c.b16 %v459, %v455
    %v656 = vpack.c.b16 %v460, %v456
    %v657 = vpack.c.b16 %v461, %v457
    %v658 = vpack.c.b16 %v466, %v462
    %v659 = vpack.c.b16 %v467, %v463
    %v660 = vpack.c.b16 %v468, %v464
    %v661 = vpack.c.b16 %v469, %v465
    %v662 = vpack.c.b16 %v474, %v470
    %v663 = vpack.c.b16 %v475, %v471
    %v664 = vpack.c.b16 %v476, %v472
    %v665 = vpack.c.b16 %v477, %v473
    %v666 = vpack.c.b16 %v482, %v478
    %v667 = vpack.c.b16 %v483, %v479
    %v668 = vpack.c.b16 %v484, %v480
    %v669 = vpack.c.b16 %v485, %v481
    %v670 = vpack.c.b16 %v490, %v486
    %v671 = vpack.c.b16 %v491, %v487
    %v672 = vpack.c.b16 %v492, %v488
    %v673 = vpack.c.b16 %v493, %v489
    %v674 = vpack.c.b16 %v498, %v494
    %v675 = vpack.c.b16 %v499, %v495
    %v676 = vpack.c.b16 %v500, %v496
    %v677 = vpack.c.b16 %v501, %v497
    %v678 = vpack.c.b16 %v506, %v502
    %v679 = vpack.c.b16 %v507, %v503
    %v680 = vpack.c.b16 %v508, %v504
    %v681 = vpack.c.b16 %v509, %v505
    %v682 = vpack.c.b16 %v514, %v510
    %v683 = vpack.c.b16 %v515, %v511
    %v684 = vpack.c.b16 %v516, %v512
    %v685 = vpack.c.b16 %v517, %v513
    %v686 = vpack.c.b16 %v522, %v518
    %v687 = vpack.c.b16 %v523, %v519
    %v688 = vpack.c.b16 %v524, %v520
    %v689 = vpack.c.b16 %v525, %v521
    %v690 = vpack.c.b16 %v530, %v526
    %v691 = vpack.c.b16 %v531, %v527
    %v692 = vpack.c.b16 %v532, %v528
    %v693 = vpack.c.b16 %v533, %v529
    %v694 = vpack.c.b16 %v538, %v534
    %v695 = vpack.c.b16 %v539, %v535
    %v696 = vpack.c.b16 %v540, %v536
    %v697 = vpack.c.b16 %v541, %v537
    %v698 = vpack.c.b16 %v546, %v542
    %v699 = vpack.c.b16 %v547, %v543
    %v700 = vpack.c.b16 %v548, %v544
    %v701 = vpack.c.b16 %v549, %v545
    %v702 = vpack.c.b16 %v554, %v550
    %v703 = vpack.c.b16 %v555, %v551
    %v704 = vpack.c.b16 %v556, %v552
    %v705 = vpack.c.b16 %v557, %v553
    %v706 = vpack.c.b16 %v562, %v558
    %v707 = vpack.c.b16 %v563, %v559
    %v708 = vpack.c.b16 %v564, %v560
    %v709 = vpack.c.b16 %v565, %v561
    %v710 = vpack.c.b16 %v570, %v566
    %v711 = vpack.c.b16 %v571, %v567
    %v712 = vpack.c.b16 %v572, %v568
    %v713 = vpack.c.b16 %v573, %v569
    %v714 = vpack.c.b16 %v578, %v574
    %v715 = vpack.c.b16 %v579, %v575
    %v716 = vpack.c.b16 %v580, %v576
    %v717 = vpack.c.b16 %v581, %v577
    %v718 = vpack.c.b16 %v586, %v582
    %v719 = vpack.c.b16 %v587, %v583
    %v720 = vpack.c.b16 %v588, %v584
    %v721 = vpack.c.b16 %v589, %v585
    %v722 = vpack.c.b16 %v594, %v590
    %v723 = vpack.c.b16 %v595, %v591
    %v724 = vpack.c.b16 %v596, %v592
    %v725 = vpack.c.b16 %v597, %v593
    %854 = vmatprep.subr.bf16.mxu0 %v599
    %855 = vmatpush1.bf16.msra.mxu0 %v598
    %856 = vmatprep.subr.bf16.mxu0 %v603
    %857 = vmatpush1.bf16.msra.mxu0 %v602
    %858 = vmatprep.subr.bf16.mxu0 %v607
    %859 = vmatpush1.bf16.msra.mxu0 %v606
    %860 = vmatprep.subr.bf16.mxu0 %v611
    %861 = vmatpush1.bf16.msra.mxu0 %v610
    %862 = vmatprep.subr.bf16.mxu0 %v615
    %863 = vmatpush1.bf16.msra.mxu0 %v614
    %864 = vmatprep.subr.bf16.mxu0 %v619
    %865 = vmatpush1.bf16.msra.mxu0 %v618
    %866 = vmatprep.subr.bf16.mxu0 %v623
    %867 = vmatpush1.bf16.msra.mxu0 %v622
    %868 = vmatprep.subr.bf16.mxu0 %v627
    %869 = vmatpush1.bf16.msra.mxu0 %v626
    %870 = vmatprep.subr.bf16.mxu0 %v631
    %871 = vmatpush1.bf16.msra.mxu0 %v630
    %872 = vmatprep.subr.bf16.mxu0 %v635
    %873 = vmatpush1.bf16.msra.mxu0 %v634
    %874 = vmatprep.subr.bf16.mxu0 %v639
    %875 = vmatpush1.bf16.msra.mxu0 %v638
    %876 = vmatprep.subr.bf16.mxu0 %v643
    %877 = vmatpush1.bf16.msra.mxu0 %v642
    %878 = vmatprep.subr.bf16.mxu0 %v647
    %879 = vmatpush1.bf16.msra.mxu0 %v646
    %880 = vmatprep.subr.bf16.mxu0 %v651
    %881 = vmatpush1.bf16.msra.mxu0 %v650
    %882 = vmatprep.subr.bf16.mxu0 %v655
    %883 = vmatpush1.bf16.msra.mxu0 %v654
    %884 = vmatprep.subr.bf16.mxu0 %v659
    %885 = vmatpush1.bf16.msra.mxu0 %v658
    %886 = vmatprep.mubr.bf16.mxu0 %v207
    %887 = vmatmul.mubr.bf16.gmra.mrb[0].mxu0 %v206
    %v888 = vpop.f32.mrb[0].mxu0
    %v889 = vadd.f32 %v183, %v888
    %v890 = vpop.f32.mrb[0].mxu0
    %v891 = vadd.f32 %v187, %v890
    %v892 = vpop.f32.mrb[0].mxu0
    %v893 = vpop.f32.mrb[0].mxu0
    %894 = vdwg.mxu0
    %895 = vmatprep.subr.bf16.mxu0 %v663
    %896 = vmatpush1.bf16.msra.mxu0 %v662
    %897 = vmatprep.subr.bf16.mxu0 %v667
    %898 = vmatpush1.bf16.msra.mxu0 %v666
    %899 = vmatprep.subr.bf16.mxu0 %v671
    %900 = vmatpush1.bf16.msra.mxu0 %v670
    %901 = vmatprep.subr.bf16.mxu0 %v675
    %902 = vmatpush1.bf16.msra.mxu0 %v674
    %903 = vmatprep.subr.bf16.mxu0 %v679
    %904 = vmatpush1.bf16.msra.mxu0 %v678
    %905 = vmatprep.subr.bf16.mxu0 %v683
    %906 = vmatpush1.bf16.msra.mxu0 %v682
    %907 = vmatprep.subr.bf16.mxu0 %v687
    %908 = vmatpush1.bf16.msra.mxu0 %v686
    %909 = vmatprep.subr.bf16.mxu0 %v691
    %910 = vmatpush1.bf16.msra.mxu0 %v690
    %911 = vmatprep.subr.bf16.mxu0 %v695
    %912 = vmatpush1.bf16.msra.mxu0 %v694
    %913 = vmatprep.subr.bf16.mxu0 %v699
    %914 = vmatpush1.bf16.msra.mxu0 %v698
    %915 = vmatprep.subr.bf16.mxu0 %v703
    %916 = vmatpush1.bf16.msra.mxu0 %v702
    %917 = vmatprep.subr.bf16.mxu0 %v707
    %918 = vmatpush1.bf16.msra.mxu0 %v706
    %919 = vmatprep.subr.bf16.mxu0 %v711
    %920 = vmatpush1.bf16.msra.mxu0 %v710
    %921 = vmatprep.subr.bf16.mxu0 %v715
    %922 = vmatpush1.bf16.msra.mxu0 %v714
    %923 = vmatprep.subr.bf16.mxu0 %v719
    %924 = vmatpush1.bf16.msra.mxu0 %v718
    %925 = vmatprep.subr.bf16.mxu0 %v723
    %926 = vmatpush1.bf16.msra.mxu0 %v722
    %927 = vmatprep.mubr.bf16.mxu0 %v209
    %928 = vmatmul.mubr.bf16.gmra.mrb[0].mxu0 %v208
    %v929 = vpop.f32.mrb[0].mxu0
    %v930 = vadd.f32 %v889, %v929
    %v931 = vpop.f32.mrb[0].mxu0
    %v932 = vadd.f32 %v891, %v931
    %v933 = vpop.f32.mrb[0].mxu0
    %v934 = vpop.f32.mrb[0].mxu0
    %935 = vdwg.mxu0
    %936 = vmatprep.subr.bf16.mxu0 %v601
    %937 = vmatpush1.bf16.msra.mxu0 %v600
    %938 = vmatprep.subr.bf16.mxu0 %v605
    %939 = vmatpush1.bf16.msra.mxu0 %v604
    %940 = vmatprep.subr.bf16.mxu0 %v609
    %941 = vmatpush1.bf16.msra.mxu0 %v608
    %942 = vmatprep.subr.bf16.mxu0 %v613
    %943 = vmatpush1.bf16.msra.mxu0 %v612
    %944 = vmatprep.subr.bf16.mxu0 %v617
    %945 = vmatpush1.bf16.msra.mxu0 %v616
    %946 = vmatprep.subr.bf16.mxu0 %v621
    %947 = vmatpush1.bf16.msra.mxu0 %v620
    %948 = vmatprep.subr.bf16.mxu0 %v625
    %949 = vmatpush1.bf16.msra.mxu0 %v624
    %950 = vmatprep.subr.bf16.mxu0 %v629
    %951 = vmatpush1.bf16.msra.mxu0 %v628
    %952 = vmatprep.subr.bf16.mxu0 %v633
    %953 = vmatpush1.bf16.msra.mxu0 %v632
    %954 = vmatprep.subr.bf16.mxu0 %v637
    %955 = vmatpush1.bf16.msra.mxu0 %v636
    %956 = vmatprep.subr.bf16.mxu0 %v641
    %957 = vmatpush1.bf16.msra.mxu0 %v640
    %958 = vmatprep.subr.bf16.mxu0 %v645
    %959 = vmatpush1.bf16.msra.mxu0 %v644
    %960 = vmatprep.subr.bf16.mxu0 %v649
    %961 = vmatpush1.bf16.msra.mxu0 %v648
    %962 = vmatprep.subr.bf16.mxu0 %v653
    %963 = vmatpush1.bf16.msra.mxu0 %v652
    %964 = vmatprep.subr.bf16.mxu0 %v657
    %965 = vmatpush1.bf16.msra.mxu0 %v656
    %966 = vmatprep.subr.bf16.mxu0 %v661
    %967 = vmatpush1.bf16.msra.mxu0 %v660
    %968 = vmatprep.mubr.bf16.mxu0 %v207
    %969 = vmatmul.mubr.bf16.gmra.mrb[0].mxu0 %v206
    %v970 = vpop.f32.mrb[0].mxu0
    %v971 = vadd.f32 %v191, %v970
    %v972 = vpop.f32.mrb[0].mxu0
    %v973 = vadd.f32 %v195, %v972
    %v974 = vpop.f32.mrb[0].mxu0
    %v975 = vpop.f32.mrb[0].mxu0
    %976 = vdwg.mxu0
    %977 = vmatprep.subr.bf16.mxu0 %v665
    %978 = vmatpush1.bf16.msra.mxu0 %v664
    %979 = vmatprep.subr.bf16.mxu0 %v669
    %980 = vmatpush1.bf16.msra.mxu0 %v668
    %981 = vmatprep.subr.bf16.mxu0 %v673
    %982 = vmatpush1.bf16.msra.mxu0 %v672
    %983 = vmatprep.subr.bf16.mxu0 %v677
    %984 = vmatpush1.bf16.msra.mxu0 %v676
    %985 = vmatprep.subr.bf16.mxu0 %v681
    %986 = vmatpush1.bf16.msra.mxu0 %v680
    %987 = vmatprep.subr.bf16.mxu0 %v685
    %988 = vmatpush1.bf16.msra.mxu0 %v684
    %989 = vmatprep.subr.bf16.mxu0 %v689
    %990 = vmatpush1.bf16.msra.mxu0 %v688
    %991 = vmatprep.subr.bf16.mxu0 %v693
    %992 = vmatpush1.bf16.msra.mxu0 %v692
    %993 = vmatprep.subr.bf16.mxu0 %v697
    %994 = vmatpush1.bf16.msra.mxu0 %v696
    %995 = vmatprep.subr.bf16.mxu0 %v701
    %996 = vmatpush1.bf16.msra.mxu0 %v700
    %997 = vmatprep.subr.bf16.mxu0 %v705
    %998 = vmatpush1.bf16.msra.mxu0 %v704
    %999 = vmatprep.subr.bf16.mxu0 %v709
    %1000 = vmatpush1.bf16.msra.mxu0 %v708
    %1001 = vmatprep.subr.bf16.mxu0 %v713
    %1002 = vmatpush1.bf16.msra.mxu0 %v712
    %1003 = vmatprep.subr.bf16.mxu0 %v717
    %1004 = vmatpush1.bf16.msra.mxu0 %v716
    %1005 = vmatprep.subr.bf16.mxu0 %v721
    %1006 = vmatpush1.bf16.msra.mxu0 %v720
    %1007 = vmatprep.subr.bf16.mxu0 %v725
    %1008 = vmatpush1.bf16.msra.mxu0 %v724
    %1009 = vmatprep.mubr.bf16.mxu0 %v209
    %1010 = vmatmul.mubr.bf16.gmra.mrb[0].mxu0 %v208
    %v1011 = vpop.f32.mrb[0].mxu0
    %v1012 = vadd.f32 %v971, %v1011
    %v1013 = vpop.f32.mrb[0].mxu0
    %v1014 = vadd.f32 %v973, %v1013
    %v1015 = vpop.f32.mrb[0].mxu0
    %v1016 = vpop.f32.mrb[0].mxu0
    %1017 = vdwg.mxu0
    %v1018 = vmul.f32 %v930, 0.01
    %v1019 = vmul.f32 %v932, 0.01
    %v1020 = vmul.f32 %v1012, 0.01
    %v1021 = vmul.f32 %v1014, 0.01
    %v1022 = vmax.f32 %v930, %v1018
    %v1023 = vmax.f32 %v932, %v1019
    %v1024 = vmax.f32 %v1012, %v1020
    %v1025 = vmax.f32 %v1014, %v1021
    %v1026 = vpack.c.bf16 %v1022, %v1022
    %v1027 = vpack.c.bf16 %v1023, %v1023
    %v1028 = vpack.c.bf16 %v1024, %v1024
    %v1029 = vpack.c.bf16 %v1025, %v1025
    %s1030 = scalar_lea.vmem [#allocation2], 1024
    %v1031 = vld [vmem:[%s1030] sm:$0xff]
    %v1032 = vld [vmem:[%s1030 + $0x8] sm:$0xff]
    %v1033 = vld [vmem:[%s1030 + $0x10] sm:$0xff]
    %v1034 = vld [vmem:[%s1030 + $0x18] sm:$0xff]
    %v1035 = vld [vmem:[%s1030 + $0x20] sm:$0xff]
    %v1036 = vld [vmem:[%s1030 + $0x28] sm:$0xff]
    %v1037 = vld [vmem:[%s1030 + $0x30] sm:$0xff]
    %v1038 = vld [vmem:[%s1030 + $0x38] sm:$0xff]
    %v1039 = vld [vmem:[%s1030 + $0x40] sm:$0xff]
    %v1040 = vld [vmem:[%s1030 + $0x48] sm:$0xff]
    %v1041 = vld [vmem:[%s1030 + $0x50] sm:$0xff]
    %v1042 = vld [vmem:[%s1030 + $0x58] sm:$0xff]
    %v1043 = vld [vmem:[%s1030 + $0x60] sm:$0xff]
    %v1044 = vld [vmem:[%s1030 + $0x68] sm:$0xff]
    %v1045 = vld [vmem:[%s1030 + $0x70] sm:$0xff]
    %v1046 = vld [vmem:[%s1030 + $0x78] sm:$0xff]
    %v1047 = vld [vmem:[%s1030 + $0x80] sm:$0xff]
    %v1048 = vld [vmem:[%s1030 + $0x88] sm:$0xff]
    %v1049 = vld [vmem:[%s1030 + $0x90] sm:$0xff]
    %v1050 = vld [vmem:[%s1030 + $0x98] sm:$0xff]
    %v1051 = vld [vmem:[%s1030 + $0xa0] sm:$0xff]
    %v1052 = vld [vmem:[%s1030 + $0xa8] sm:$0xff]
    %v1053 = vld [vmem:[%s1030 + $0xb0] sm:$0xff]
    %v1054 = vld [vmem:[%s1030 + $0xb8] sm:$0xff]
    %v1055 = vld [vmem:[%s1030 + $0xc0] sm:$0xff]
    %v1056 = vld [vmem:[%s1030 + $0xc8] sm:$0xff]
    %v1057 = vld [vmem:[%s1030 + $0xd0] sm:$0xff]
    %v1058 = vld [vmem:[%s1030 + $0xd8] sm:$0xff]
    %v1059 = vld [vmem:[%s1030 + $0xe0] sm:$0xff]
    %v1060 = vld [vmem:[%s1030 + $0xe8] sm:$0xff]
    %v1061 = vld [vmem:[%s1030 + $0xf0] sm:$0xff]
    %v1062 = vld [vmem:[%s1030 + $0xf8] sm:$0xff]
    %v1063 = vld [vmem:[%s1030 + $0x100] sm:$0xff]
    %v1064 = vld [vmem:[%s1030 + $0x108] sm:$0xff]
    %v1065 = vld [vmem:[%s1030 + $0x110] sm:$0xff]
    %v1066 = vld [vmem:[%s1030 + $0x118] sm:$0xff]
    %v1067 = vld [vmem:[%s1030 + $0x120] sm:$0xff]
    %v1068 = vld [vmem:[%s1030 + $0x128] sm:$0xff]
    %v1069 = vld [vmem:[%s1030 + $0x130] sm:$0xff]
    %v1070 = vld [vmem:[%s1030 + $0x138] sm:$0xff]
    %v1071 = vld [vmem:[%s1030 + $0x140] sm:$0xff]
    %v1072 = vld [vmem:[%s1030 + $0x148] sm:$0xff]
    %v1073 = vld [vmem:[%s1030 + $0x150] sm:$0xff]
    %v1074 = vld [vmem:[%s1030 + $0x158] sm:$0xff]
    %v1075 = vld [vmem:[%s1030 + $0x160] sm:$0xff]
    %v1076 = vld [vmem:[%s1030 + $0x168] sm:$0xff]
    %v1077 = vld [vmem:[%s1030 + $0x170] sm:$0xff]
    %v1078 = vld [vmem:[%s1030 + $0x178] sm:$0xff]
    %v1079 = vld [vmem:[%s1030 + $0x180] sm:$0xff]
    %v1080 = vld [vmem:[%s1030 + $0x188] sm:$0xff]
    %v1081 = vld [vmem:[%s1030 + $0x190] sm:$0xff]
    %v1082 = vld [vmem:[%s1030 + $0x198] sm:$0xff]
    %v1083 = vld [vmem:[%s1030 + $0x1a0] sm:$0xff]
    %v1084 = vld [vmem:[%s1030 + $0x1a8] sm:$0xff]
    %v1085 = vld [vmem:[%s1030 + $0x1b0] sm:$0xff]
    %v1086 = vld [vmem:[%s1030 + $0x1b8] sm:$0xff]
    %v1087 = vld [vmem:[%s1030 + $0x1c0] sm:$0xff]
    %v1088 = vld [vmem:[%s1030 + $0x1c8] sm:$0xff]
    %v1089 = vld [vmem:[%s1030 + $0x1d0] sm:$0xff]
    %v1090 = vld [vmem:[%s1030 + $0x1d8] sm:$0xff]
    %v1091 = vld [vmem:[%s1030 + $0x1e0] sm:$0xff]
    %v1092 = vld [vmem:[%s1030 + $0x1e8] sm:$0xff]
    %v1093 = vld [vmem:[%s1030 + $0x1f0] sm:$0xff]
    %v1094 = vld [vmem:[%s1030 + $0x1f8] sm:$0xff]
    %v1095 = vld [vmem:[%s1030 + $0x200] sm:$0xff]
    %v1096 = vld [vmem:[%s1030 + $0x208] sm:$0xff]
    %v1097 = vld [vmem:[%s1030 + $0x210] sm:$0xff]
    %v1098 = vld [vmem:[%s1030 + $0x218] sm:$0xff]
    %v1099 = vld [vmem:[%s1030 + $0x220] sm:$0xff]
    %v1100 = vld [vmem:[%s1030 + $0x228] sm:$0xff]
    %v1101 = vld [vmem:[%s1030 + $0x230] sm:$0xff]
    %v1102 = vld [vmem:[%s1030 + $0x238] sm:$0xff]
    %v1103 = vld [vmem:[%s1030 + $0x240] sm:$0xff]
    %v1104 = vld [vmem:[%s1030 + $0x248] sm:$0xff]
    %v1105 = vld [vmem:[%s1030 + $0x250] sm:$0xff]
    %v1106 = vld [vmem:[%s1030 + $0x258] sm:$0xff]
    %v1107 = vld [vmem:[%s1030 + $0x260] sm:$0xff]
    %v1108 = vld [vmem:[%s1030 + $0x268] sm:$0xff]
    %v1109 = vld [vmem:[%s1030 + $0x270] sm:$0xff]
    %v1110 = vld [vmem:[%s1030 + $0x278] sm:$0xff]
    %v1111 = vld [vmem:[%s1030 + $0x280] sm:$0xff]
    %v1112 = vld [vmem:[%s1030 + $0x288] sm:$0xff]
    %v1113 = vld [vmem:[%s1030 + $0x290] sm:$0xff]
    %v1114 = vld [vmem:[%s1030 + $0x298] sm:$0xff]
    %v1115 = vld [vmem:[%s1030 + $0x2a0] sm:$0xff]
    %v1116 = vld [vmem:[%s1030 + $0x2a8] sm:$0xff]
    %v1117 = vld [vmem:[%s1030 + $0x2b0] sm:$0xff]
    %v1118 = vld [vmem:[%s1030 + $0x2b8] sm:$0xff]
    %v1119 = vld [vmem:[%s1030 + $0x2c0] sm:$0xff]
    %v1120 = vld [vmem:[%s1030 + $0x2c8] sm:$0xff]
    %v1121 = vld [vmem:[%s1030 + $0x2d0] sm:$0xff]
    %v1122 = vld [vmem:[%s1030 + $0x2d8] sm:$0xff]
    %v1123 = vld [vmem:[%s1030 + $0x2e0] sm:$0xff]
    %v1124 = vld [vmem:[%s1030 + $0x2e8] sm:$0xff]
    %v1125 = vld [vmem:[%s1030 + $0x2f0] sm:$0xff]
    %v1126 = vld [vmem:[%s1030 + $0x2f8] sm:$0xff]
    %v1127 = vld [vmem:[%s1030 + $0x300] sm:$0xff]
    %v1128 = vld [vmem:[%s1030 + $0x308] sm:$0xff]
    %v1129 = vld [vmem:[%s1030 + $0x310] sm:$0xff]
    %v1130 = vld [vmem:[%s1030 + $0x318] sm:$0xff]
    %v1131 = vld [vmem:[%s1030 + $0x320] sm:$0xff]
    %v1132 = vld [vmem:[%s1030 + $0x328] sm:$0xff]
    %v1133 = vld [vmem:[%s1030 + $0x330] sm:$0xff]
    %v1134 = vld [vmem:[%s1030 + $0x338] sm:$0xff]
    %v1135 = vld [vmem:[%s1030 + $0x340] sm:$0xff]
    %v1136 = vld [vmem:[%s1030 + $0x348] sm:$0xff]
    %v1137 = vld [vmem:[%s1030 + $0x350] sm:$0xff]
    %v1138 = vld [vmem:[%s1030 + $0x358] sm:$0xff]
    %v1139 = vld [vmem:[%s1030 + $0x360] sm:$0xff]
    %v1140 = vld [vmem:[%s1030 + $0x368] sm:$0xff]
    %v1141 = vld [vmem:[%s1030 + $0x370] sm:$0xff]
    %v1142 = vld [vmem:[%s1030 + $0x378] sm:$0xff]
    %v1143 = vld [vmem:[%s1030 + $0x380] sm:$0xff]
    %v1144 = vld [vmem:[%s1030 + $0x388] sm:$0xff]
    %v1145 = vld [vmem:[%s1030 + $0x390] sm:$0xff]
    %v1146 = vld [vmem:[%s1030 + $0x398] sm:$0xff]
    %v1147 = vld [vmem:[%s1030 + $0x3a0] sm:$0xff]
    %v1148 = vld [vmem:[%s1030 + $0x3a8] sm:$0xff]
    %v1149 = vld [vmem:[%s1030 + $0x3b0] sm:$0xff]
    %v1150 = vld [vmem:[%s1030 + $0x3b8] sm:$0xff]
    %v1151 = vld [vmem:[%s1030 + $0x3c0] sm:$0xff]
    %v1152 = vld [vmem:[%s1030 + $0x3c8] sm:$0xff]
    %v1153 = vld [vmem:[%s1030 + $0x3d0] sm:$0xff]
    %v1154 = vld [vmem:[%s1030 + $0x3d8] sm:$0xff]
    %v1155 = vld [vmem:[%s1030 + $0x3e0] sm:$0xff]
    %v1156 = vld [vmem:[%s1030 + $0x3e8] sm:$0xff]
    %v1157 = vld [vmem:[%s1030 + $0x3f0] sm:$0xff]
    %v1158 = vld [vmem:[%s1030 + $0x3f8] sm:$0xff]
    %s1159 = scalar_lea.vmem [#allocation4], 4
    %v1160 = vld [vmem:[%s1159] sm:$0xf]
    %v1162 = vlaneseq
    %v1163 = vshrl.u32 %v1162, 7
    %v1164 = vsub.s32 0, %v1163
    %v1165 = vrot.slane %v1160, %v1164
    %v1166 = vlaneseq
    %v1167 = vshrl.u32 %v1166, 7
    %v1168 = vsub.s32 1, %v1167
    %v1169 = vrot.slane %v1160, %v1168
    %v1170 = vlaneseq
    %v1171 = vshrl.u32 %v1170, 7
    %v1172 = vsub.s32 2, %v1171
    %v1173 = vrot.slane %v1160, %v1172
    %v1174 = vlaneseq
    %v1175 = vshrl.u32 %v1174, 7
    %v1176 = vsub.s32 3, %v1175
    %v1177 = vrot.slane %v1160, %v1176
    %v1310 = vunpack.c.l.b16 %v1031
    %v1311 = vunpack.c.h.b16 %v1031
    %v1312 = vunpack.c.l.b16 %v1032
    %v1313 = vunpack.c.h.b16 %v1032
    %v1314 = vunpack.c.l.b16 %v1033
    %v1315 = vunpack.c.h.b16 %v1033
    %v1316 = vunpack.c.l.b16 %v1034
    %v1317 = vunpack.c.h.b16 %v1034
    %v1318 = vunpack.c.l.b16 %v1035
    %v1319 = vunpack.c.h.b16 %v1035
    %v1320 = vunpack.c.l.b16 %v1036
    %v1321 = vunpack.c.h.b16 %v1036
    %v1322 = vunpack.c.l.b16 %v1037
    %v1323 = vunpack.c.h.b16 %v1037
    %v1324 = vunpack.c.l.b16 %v1038
    %v1325 = vunpack.c.h.b16 %v1038
    %v1326 = vunpack.c.l.b16 %v1039
    %v1327 = vunpack.c.h.b16 %v1039
    %v1328 = vunpack.c.l.b16 %v1040
    %v1329 = vunpack.c.h.b16 %v1040
    %v1330 = vunpack.c.l.b16 %v1041
    %v1331 = vunpack.c.h.b16 %v1041
    %v1332 = vunpack.c.l.b16 %v1042
    %v1333 = vunpack.c.h.b16 %v1042
    %v1334 = vunpack.c.l.b16 %v1043
    %v1335 = vunpack.c.h.b16 %v1043
    %v1336 = vunpack.c.l.b16 %v1044
    %v1337 = vunpack.c.h.b16 %v1044
    %v1338 = vunpack.c.l.b16 %v1045
    %v1339 = vunpack.c.h.b16 %v1045
    %v1340 = vunpack.c.l.b16 %v1046
    %v1341 = vunpack.c.h.b16 %v1046
    %v1342 = vunpack.c.l.b16 %v1047
    %v1343 = vunpack.c.h.b16 %v1047
    %v1344 = vunpack.c.l.b16 %v1048
    %v1345 = vunpack.c.h.b16 %v1048
    %v1346 = vunpack.c.l.b16 %v1049
    %v1347 = vunpack.c.h.b16 %v1049
    %v1348 = vunpack.c.l.b16 %v1050
    %v1349 = vunpack.c.h.b16 %v1050
    %v1350 = vunpack.c.l.b16 %v1051
    %v1351 = vunpack.c.h.b16 %v1051
    %v1352 = vunpack.c.l.b16 %v1052
    %v1353 = vunpack.c.h.b16 %v1052
    %v1354 = vunpack.c.l.b16 %v1053
    %v1355 = vunpack.c.h.b16 %v1053
    %v1356 = vunpack.c.l.b16 %v1054
    %v1357 = vunpack.c.h.b16 %v1054
    %v1358 = vunpack.c.l.b16 %v1055
    %v1359 = vunpack.c.h.b16 %v1055
    %v1360 = vunpack.c.l.b16 %v1056
    %v1361 = vunpack.c.h.b16 %v1056
    %v1362 = vunpack.c.l.b16 %v1057
    %v1363 = vunpack.c.h.b16 %v1057
    %v1364 = vunpack.c.l.b16 %v1058
    %v1365 = vunpack.c.h.b16 %v1058
    %v1366 = vunpack.c.l.b16 %v1059
    %v1367 = vunpack.c.h.b16 %v1059
    %v1368 = vunpack.c.l.b16 %v1060
    %v1369 = vunpack.c.h.b16 %v1060
    %v1370 = vunpack.c.l.b16 %v1061
    %v1371 = vunpack.c.h.b16 %v1061
    %v1372 = vunpack.c.l.b16 %v1062
    %v1373 = vunpack.c.h.b16 %v1062
    %v1374 = vunpack.c.l.b16 %v1063
    %v1375 = vunpack.c.h.b16 %v1063
    %v1376 = vunpack.c.l.b16 %v1064
    %v1377 = vunpack.c.h.b16 %v1064
    %v1378 = vunpack.c.l.b16 %v1065
    %v1379 = vunpack.c.h.b16 %v1065
    %v1380 = vunpack.c.l.b16 %v1066
    %v1381 = vunpack.c.h.b16 %v1066
    %v1382 = vunpack.c.l.b16 %v1067
    %v1383 = vunpack.c.h.b16 %v1067
    %v1384 = vunpack.c.l.b16 %v1068
    %v1385 = vunpack.c.h.b16 %v1068
    %v1386 = vunpack.c.l.b16 %v1069
    %v1387 = vunpack.c.h.b16 %v1069
    %v1388 = vunpack.c.l.b16 %v1070
    %v1389 = vunpack.c.h.b16 %v1070
    %v1390 = vunpack.c.l.b16 %v1071
    %v1391 = vunpack.c.h.b16 %v1071
    %v1392 = vunpack.c.l.b16 %v1072
    %v1393 = vunpack.c.h.b16 %v1072
    %v1394 = vunpack.c.l.b16 %v1073
    %v1395 = vunpack.c.h.b16 %v1073
    %v1396 = vunpack.c.l.b16 %v1074
    %v1397 = vunpack.c.h.b16 %v1074
    %v1398 = vunpack.c.l.b16 %v1075
    %v1399 = vunpack.c.h.b16 %v1075
    %v1400 = vunpack.c.l.b16 %v1076
    %v1401 = vunpack.c.h.b16 %v1076
    %v1402 = vunpack.c.l.b16 %v1077
    %v1403 = vunpack.c.h.b16 %v1077
    %v1404 = vunpack.c.l.b16 %v1078
    %v1405 = vunpack.c.h.b16 %v1078
    %v1406 = vunpack.c.l.b16 %v1079
    %v1407 = vunpack.c.h.b16 %v1079
    %v1408 = vunpack.c.l.b16 %v1080
    %v1409 = vunpack.c.h.b16 %v1080
    %v1410 = vunpack.c.l.b16 %v1081
    %v1411 = vunpack.c.h.b16 %v1081
    %v1412 = vunpack.c.l.b16 %v1082
    %v1413 = vunpack.c.h.b16 %v1082
    %v1414 = vunpack.c.l.b16 %v1083
    %v1415 = vunpack.c.h.b16 %v1083
    %v1416 = vunpack.c.l.b16 %v1084
    %v1417 = vunpack.c.h.b16 %v1084
    %v1418 = vunpack.c.l.b16 %v1085
    %v1419 = vunpack.c.h.b16 %v1085
    %v1420 = vunpack.c.l.b16 %v1086
    %v1421 = vunpack.c.h.b16 %v1086
    %v1422 = vunpack.c.l.b16 %v1087
    %v1423 = vunpack.c.h.b16 %v1087
    %v1424 = vunpack.c.l.b16 %v1088
    %v1425 = vunpack.c.h.b16 %v1088
    %v1426 = vunpack.c.l.b16 %v1089
    %v1427 = vunpack.c.h.b16 %v1089
    %v1428 = vunpack.c.l.b16 %v1090
    %v1429 = vunpack.c.h.b16 %v1090
    %v1430 = vunpack.c.l.b16 %v1091
    %v1431 = vunpack.c.h.b16 %v1091
    %v1432 = vunpack.c.l.b16 %v1092
    %v1433 = vunpack.c.h.b16 %v1092
    %v1434 = vunpack.c.l.b16 %v1093
    %v1435 = vunpack.c.h.b16 %v1093
    %v1436 = vunpack.c.l.b16 %v1094
    %v1437 = vunpack.c.h.b16 %v1094
    %v1438 = vunpack.c.l.b16 %v1095
    %v1439 = vunpack.c.h.b16 %v1095
    %v1440 = vunpack.c.l.b16 %v1096
    %v1441 = vunpack.c.h.b16 %v1096
    %v1442 = vunpack.c.l.b16 %v1097
    %v1443 = vunpack.c.h.b16 %v1097
    %v1444 = vunpack.c.l.b16 %v1098
    %v1445 = vunpack.c.h.b16 %v1098
    %v1446 = vunpack.c.l.b16 %v1099
    %v1447 = vunpack.c.h.b16 %v1099
    %v1448 = vunpack.c.l.b16 %v1100
    %v1449 = vunpack.c.h.b16 %v1100
    %v1450 = vunpack.c.l.b16 %v1101
    %v1451 = vunpack.c.h.b16 %v1101
    %v1452 = vunpack.c.l.b16 %v1102
    %v1453 = vunpack.c.h.b16 %v1102
    %v1454 = vunpack.c.l.b16 %v1103
    %v1455 = vunpack.c.h.b16 %v1103
    %v1456 = vunpack.c.l.b16 %v1104
    %v1457 = vunpack.c.h.b16 %v1104
    %v1458 = vunpack.c.l.b16 %v1105
    %v1459 = vunpack.c.h.b16 %v1105
    %v1460 = vunpack.c.l.b16 %v1106
    %v1461 = vunpack.c.h.b16 %v1106
    %v1462 = vunpack.c.l.b16 %v1107
    %v1463 = vunpack.c.h.b16 %v1107
    %v1464 = vunpack.c.l.b16 %v1108
    %v1465 = vunpack.c.h.b16 %v1108
    %v1466 = vunpack.c.l.b16 %v1109
    %v1467 = vunpack.c.h.b16 %v1109
    %v1468 = vunpack.c.l.b16 %v1110
    %v1469 = vunpack.c.h.b16 %v1110
    %v1470 = vunpack.c.l.b16 %v1111
    %v1471 = vunpack.c.h.b16 %v1111
    %v1472 = vunpack.c.l.b16 %v1112
    %v1473 = vunpack.c.h.b16 %v1112
    %v1474 = vunpack.c.l.b16 %v1113
    %v1475 = vunpack.c.h.b16 %v1113
    %v1476 = vunpack.c.l.b16 %v1114
    %v1477 = vunpack.c.h.b16 %v1114
    %v1478 = vunpack.c.l.b16 %v1115
    %v1479 = vunpack.c.h.b16 %v1115
    %v1480 = vunpack.c.l.b16 %v1116
    %v1481 = vunpack.c.h.b16 %v1116
    %v1482 = vunpack.c.l.b16 %v1117
    %v1483 = vunpack.c.h.b16 %v1117
    %v1484 = vunpack.c.l.b16 %v1118
    %v1485 = vunpack.c.h.b16 %v1118
    %v1486 = vunpack.c.l.b16 %v1119
    %v1487 = vunpack.c.h.b16 %v1119
    %v1488 = vunpack.c.l.b16 %v1120
    %v1489 = vunpack.c.h.b16 %v1120
    %v1490 = vunpack.c.l.b16 %v1121
    %v1491 = vunpack.c.h.b16 %v1121
    %v1492 = vunpack.c.l.b16 %v1122
    %v1493 = vunpack.c.h.b16 %v1122
    %v1494 = vunpack.c.l.b16 %v1123
    %v1495 = vunpack.c.h.b16 %v1123
    %v1496 = vunpack.c.l.b16 %v1124
    %v1497 = vunpack.c.h.b16 %v1124
    %v1498 = vunpack.c.l.b16 %v1125
    %v1499 = vunpack.c.h.b16 %v1125
    %v1500 = vunpack.c.l.b16 %v1126
    %v1501 = vunpack.c.h.b16 %v1126
    %v1502 = vunpack.c.l.b16 %v1127
    %v1503 = vunpack.c.h.b16 %v1127
    %v1504 = vunpack.c.l.b16 %v1128
    %v1505 = vunpack.c.h.b16 %v1128
    %v1506 = vunpack.c.l.b16 %v1129
    %v1507 = vunpack.c.h.b16 %v1129
    %v1508 = vunpack.c.l.b16 %v1130
    %v1509 = vunpack.c.h.b16 %v1130
    %v1510 = vunpack.c.l.b16 %v1131
    %v1511 = vunpack.c.h.b16 %v1131
    %v1512 = vunpack.c.l.b16 %v1132
    %v1513 = vunpack.c.h.b16 %v1132
    %v1514 = vunpack.c.l.b16 %v1133
    %v1515 = vunpack.c.h.b16 %v1133
    %v1516 = vunpack.c.l.b16 %v1134
    %v1517 = vunpack.c.h.b16 %v1134
    %v1518 = vunpack.c.l.b16 %v1135
    %v1519 = vunpack.c.h.b16 %v1135
    %v1520 = vunpack.c.l.b16 %v1136
    %v1521 = vunpack.c.h.b16 %v1136
    %v1522 = vunpack.c.l.b16 %v1137
    %v1523 = vunpack.c.h.b16 %v1137
    %v1524 = vunpack.c.l.b16 %v1138
    %v1525 = vunpack.c.h.b16 %v1138
    %v1526 = vunpack.c.l.b16 %v1139
    %v1527 = vunpack.c.h.b16 %v1139
    %v1528 = vunpack.c.l.b16 %v1140
    %v1529 = vunpack.c.h.b16 %v1140
    %v1530 = vunpack.c.l.b16 %v1141
    %v1531 = vunpack.c.h.b16 %v1141
    %v1532 = vunpack.c.l.b16 %v1142
    %v1533 = vunpack.c.h.b16 %v1142
    %v1534 = vunpack.c.l.b16 %v1143
    %v1535 = vunpack.c.h.b16 %v1143
    %v1536 = vunpack.c.l.b16 %v1144
    %v1537 = vunpack.c.h.b16 %v1144
    %v1538 = vunpack.c.l.b16 %v1145
    %v1539 = vunpack.c.h.b16 %v1145
    %v1540 = vunpack.c.l.b16 %v1146
    %v1541 = vunpack.c.h.b16 %v1146
    %v1542 = vunpack.c.l.b16 %v1147
    %v1543 = vunpack.c.h.b16 %v1147
    %v1544 = vunpack.c.l.b16 %v1148
    %v1545 = vunpack.c.h.b16 %v1148
    %v1546 = vunpack.c.l.b16 %v1149
    %v1547 = vunpack.c.h.b16 %v1149
    %v1548 = vunpack.c.l.b16 %v1150
    %v1549 = vunpack.c.h.b16 %v1150
    %v1550 = vunpack.c.l.b16 %v1151
    %v1551 = vunpack.c.h.b16 %v1151
    %v1552 = vunpack.c.l.b16 %v1152
    %v1553 = vunpack.c.h.b16 %v1152
    %v1554 = vunpack.c.l.b16 %v1153
    %v1555 = vunpack.c.h.b16 %v1153
    %v1556 = vunpack.c.l.b16 %v1154
    %v1557 = vunpack.c.h.b16 %v1154
    %v1558 = vunpack.c.l.b16 %v1155
    %v1559 = vunpack.c.h.b16 %v1155
    %v1560 = vunpack.c.l.b16 %v1156
    %v1561 = vunpack.c.h.b16 %v1156
    %v1562 = vunpack.c.l.b16 %v1157
    %v1563 = vunpack.c.h.b16 %v1157
    %v1564 = vunpack.c.l.b16 %v1158
    %v1565 = vunpack.c.h.b16 %v1158
    %v1566 = vpack.c.b16 %v1314, %v1310
    %v1567 = vpack.c.b16 %v1315, %v1311
    %v1568 = vpack.c.b16 %v1316, %v1312
    %v1569 = vpack.c.b16 %v1317, %v1313
    %v1570 = vpack.c.b16 %v1322, %v1318
    %v1571 = vpack.c.b16 %v1323, %v1319
    %v1572 = vpack.c.b16 %v1324, %v1320
    %v1573 = vpack.c.b16 %v1325, %v1321
    %v1574 = vpack.c.b16 %v1330, %v1326
    %v1575 = vpack.c.b16 %v1331, %v1327
    %v1576 = vpack.c.b16 %v1332, %v1328
    %v1577 = vpack.c.b16 %v1333, %v1329
    %v1578 = vpack.c.b16 %v1338, %v1334
    %v1579 = vpack.c.b16 %v1339, %v1335
    %v1580 = vpack.c.b16 %v1340, %v1336
    %v1581 = vpack.c.b16 %v1341, %v1337
    %v1582 = vpack.c.b16 %v1346, %v1342
    %v1583 = vpack.c.b16 %v1347, %v1343
    %v1584 = vpack.c.b16 %v1348, %v1344
    %v1585 = vpack.c.b16 %v1349, %v1345
    %v1586 = vpack.c.b16 %v1354, %v1350
    %v1587 = vpack.c.b16 %v1355, %v1351
    %v1588 = vpack.c.b16 %v1356, %v1352
    %v1589 = vpack.c.b16 %v1357, %v1353
    %v1590 = vpack.c.b16 %v1362, %v1358
    %v1591 = vpack.c.b16 %v1363, %v1359
    %v1592 = vpack.c.b16 %v1364, %v1360
    %v1593 = vpack.c.b16 %v1365, %v1361
    %v1594 = vpack.c.b16 %v1370, %v1366
    %v1595 = vpack.c.b16 %v1371, %v1367
    %v1596 = vpack.c.b16 %v1372, %v1368
    %v1597 = vpack.c.b16 %v1373, %v1369
    %v1598 = vpack.c.b16 %v1378, %v1374
    %v1599 = vpack.c.b16 %v1379, %v1375
    %v1600 = vpack.c.b16 %v1380, %v1376
    %v1601 = vpack.c.b16 %v1381, %v1377
    %v1602 = vpack.c.b16 %v1386, %v1382
    %v1603 = vpack.c.b16 %v1387, %v1383
    %v1604 = vpack.c.b16 %v1388, %v1384
    %v1605 = vpack.c.b16 %v1389, %v1385
    %v1606 = vpack.c.b16 %v1394, %v1390
    %v1607 = vpack.c.b16 %v1395, %v1391
    %v1608 = vpack.c.b16 %v1396, %v1392
    %v1609 = vpack.c.b16 %v1397, %v1393
    %v1610 = vpack.c.b16 %v1402, %v1398
    %v1611 = vpack.c.b16 %v1403, %v1399
    %v1612 = vpack.c.b16 %v1404, %v1400
    %v1613 = vpack.c.b16 %v1405, %v1401
    %v1614 = vpack.c.b16 %v1410, %v1406
    %v1615 = vpack.c.b16 %v1411, %v1407
    %v1616 = vpack.c.b16 %v1412, %v1408
    %v1617 = vpack.c.b16 %v1413, %v1409
    %v1618 = vpack.c.b16 %v1418, %v1414
    %v1619 = vpack.c.b16 %v1419, %v1415
    %v1620 = vpack.c.b16 %v1420, %v1416
    %v1621 = vpack.c.b16 %v1421, %v1417
    %v1622 = vpack.c.b16 %v1426, %v1422
    %v1623 = vpack.c.b16 %v1427, %v1423
    %v1624 = vpack.c.b16 %v1428, %v1424
    %v1625 = vpack.c.b16 %v1429, %v1425
    %v1626 = vpack.c.b16 %v1434, %v1430
    %v1627 = vpack.c.b16 %v1435, %v1431
    %v1628 = vpack.c.b16 %v1436, %v1432
    %v1629 = vpack.c.b16 %v1437, %v1433
    %v1630 = vpack.c.b16 %v1442, %v1438
    %v1631 = vpack.c.b16 %v1443, %v1439
    %v1632 = vpack.c.b16 %v1444, %v1440
    %v1633 = vpack.c.b16 %v1445, %v1441
    %v1634 = vpack.c.b16 %v1450, %v1446
    %v1635 = vpack.c.b16 %v1451, %v1447
    %v1636 = vpack.c.b16 %v1452, %v1448
    %v1637 = vpack.c.b16 %v1453, %v1449
    %v1638 = vpack.c.b16 %v1458, %v1454
    %v1639 = vpack.c.b16 %v1459, %v1455
    %v1640 = vpack.c.b16 %v1460, %v1456
    %v1641 = vpack.c.b16 %v1461, %v1457
    %v1642 = vpack.c.b16 %v1466, %v1462
    %v1643 = vpack.c.b16 %v1467, %v1463
    %v1644 = vpack.c.b16 %v1468, %v1464
    %v1645 = vpack.c.b16 %v1469, %v1465
    %v1646 = vpack.c.b16 %v1474, %v1470
    %v1647 = vpack.c.b16 %v1475, %v1471
    %v1648 = vpack.c.b16 %v1476, %v1472
    %v1649 = vpack.c.b16 %v1477, %v1473
    %v1650 = vpack.c.b16 %v1482, %v1478
    %v1651 = vpack.c.b16 %v1483, %v1479
    %v1652 = vpack.c.b16 %v1484, %v1480
    %v1653 = vpack.c.b16 %v1485, %v1481
    %v1654 = vpack.c.b16 %v1490, %v1486
    %v1655 = vpack.c.b16 %v1491, %v1487
    %v1656 = vpack.c.b16 %v1492, %v1488
    %v1657 = vpack.c.b16 %v1493, %v1489
    %v1658 = vpack.c.b16 %v1498, %v1494
    %v1659 = vpack.c.b16 %v1499, %v1495
    %v1660 = vpack.c.b16 %v1500, %v1496
    %v1661 = vpack.c.b16 %v1501, %v1497
    %v1662 = vpack.c.b16 %v1506, %v1502
    %v1663 = vpack.c.b16 %v1507, %v1503
    %v1664 = vpack.c.b16 %v1508, %v1504
    %v1665 = vpack.c.b16 %v1509, %v1505
    %v1666 = vpack.c.b16 %v1514, %v1510
    %v1667 = vpack.c.b16 %v1515, %v1511
    %v1668 = vpack.c.b16 %v1516, %v1512
    %v1669 = vpack.c.b16 %v1517, %v1513
    %v1670 = vpack.c.b16 %v1522, %v1518
    %v1671 = vpack.c.b16 %v1523, %v1519
    %v1672 = vpack.c.b16 %v1524, %v1520
    %v1673 = vpack.c.b16 %v1525, %v1521
    %v1674 = vpack.c.b16 %v1530, %v1526
    %v1675 = vpack.c.b16 %v1531, %v1527
    %v1676 = vpack.c.b16 %v1532, %v1528
    %v1677 = vpack.c.b16 %v1533, %v1529
    %v1678 = vpack.c.b16 %v1538, %v1534
    %v1679 = vpack.c.b16 %v1539, %v1535
    %v1680 = vpack.c.b16 %v1540, %v1536
    %v1681 = vpack.c.b16 %v1541, %v1537
    %v1682 = vpack.c.b16 %v1546, %v1542
    %v1683 = vpack.c.b16 %v1547, %v1543
    %v1684 = vpack.c.b16 %v1548, %v1544
    %v1685 = vpack.c.b16 %v1549, %v1545
    %v1686 = vpack.c.b16 %v1554, %v1550
    %v1687 = vpack.c.b16 %v1555, %v1551
    %v1688 = vpack.c.b16 %v1556, %v1552
    %v1689 = vpack.c.b16 %v1557, %v1553
    %v1690 = vpack.c.b16 %v1562, %v1558
    %v1691 = vpack.c.b16 %v1563, %v1559
    %v1692 = vpack.c.b16 %v1564, %v1560
    %v1693 = vpack.c.b16 %v1565, %v1561
    %1822 = vmatprep.subr.bf16.mxu0 %v1567
    %1823 = vmatpush1.bf16.msra.mxu0 %v1566
    %1824 = vmatprep.subr.bf16.mxu0 %v1571
    %1825 = vmatpush1.bf16.msra.mxu0 %v1570
    %1826 = vmatprep.subr.bf16.mxu0 %v1575
    %1827 = vmatpush1.bf16.msra.mxu0 %v1574
    %1828 = vmatprep.subr.bf16.mxu0 %v1579
    %1829 = vmatpush1.bf16.msra.mxu0 %v1578
    %1830 = vmatprep.subr.bf16.mxu0 %v1583
    %1831 = vmatpush1.bf16.msra.mxu0 %v1582
    %1832 = vmatprep.subr.bf16.mxu0 %v1587
    %1833 = vmatpush1.bf16.msra.mxu0 %v1586
    %1834 = vmatprep.subr.bf16.mxu0 %v1591
    %1835 = vmatpush1.bf16.msra.mxu0 %v1590
    %1836 = vmatprep.subr.bf16.mxu0 %v1595
    %1837 = vmatpush1.bf16.msra.mxu0 %v1594
    %1838 = vmatprep.subr.bf16.mxu0 %v1599
    %1839 = vmatpush1.bf16.msra.mxu0 %v1598
    %1840 = vmatprep.subr.bf16.mxu0 %v1603
    %1841 = vmatpush1.bf16.msra.mxu0 %v1602
    %1842 = vmatprep.subr.bf16.mxu0 %v1607
    %1843 = vmatpush1.bf16.msra.mxu0 %v1606
    %1844 = vmatprep.subr.bf16.mxu0 %v1611
    %1845 = vmatpush1.bf16.msra.mxu0 %v1610
    %1846 = vmatprep.subr.bf16.mxu0 %v1615
    %1847 = vmatpush1.bf16.msra.mxu0 %v1614
    %1848 = vmatprep.subr.bf16.mxu0 %v1619
    %1849 = vmatpush1.bf16.msra.mxu0 %v1618
    %1850 = vmatprep.subr.bf16.mxu0 %v1623
    %1851 = vmatpush1.bf16.msra.mxu0 %v1622
    %1852 = vmatprep.subr.bf16.mxu0 %v1627
    %1853 = vmatpush1.bf16.msra.mxu0 %v1626
    %1854 = vmatprep.mubr.bf16.mxu0 %v1027
    %1855 = vmatmul.mubr.bf16.gmra.mrb[0].mxu0 %v1026
    %v1856 = vpop.f32.mrb[0].mxu0
    %v1857 = vadd.f32 %v1165, %v1856
    %v1858 = vpop.f32.mrb[0].mxu0
    %v1859 = vadd.f32 %v1169, %v1858
    %v1860 = vpop.f32.mrb[0].mxu0
    %v1861 = vpop.f32.mrb[0].mxu0
    %1862 = vdwg.mxu0
    %1863 = vmatprep.subr.bf16.mxu0 %v1631
    %1864 = vmatpush1.bf16.msra.mxu0 %v1630
    %1865 = vmatprep.subr.bf16.mxu0 %v1635
    %1866 = vmatpush1.bf16.msra.mxu0 %v1634
    %1867 = vmatprep.subr.bf16.mxu0 %v1639
    %1868 = vmatpush1.bf16.msra.mxu0 %v1638
    %1869 = vmatprep.subr.bf16.mxu0 %v1643
    %1870 = vmatpush1.bf16.msra.mxu0 %v1642
    %1871 = vmatprep.subr.bf16.mxu0 %v1647
    %1872 = vmatpush1.bf16.msra.mxu0 %v1646
    %1873 = vmatprep.subr.bf16.mxu0 %v1651
    %1874 = vmatpush1.bf16.msra.mxu0 %v1650
    %1875 = vmatprep.subr.bf16.mxu0 %v1655
    %1876 = vmatpush1.bf16.msra.mxu0 %v1654
    %1877 = vmatprep.subr.bf16.mxu0 %v1659
    %1878 = vmatpush1.bf16.msra.mxu0 %v1658
    %1879 = vmatprep.subr.bf16.mxu0 %v1663
    %1880 = vmatpush1.bf16.msra.mxu0 %v1662
    %1881 = vmatprep.subr.bf16.mxu0 %v1667
    %1882 = vmatpush1.bf16.msra.mxu0 %v1666
    %1883 = vmatprep.subr.bf16.mxu0 %v1671
    %1884 = vmatpush1.bf16.msra.mxu0 %v1670
    %1885 = vmatprep.subr.bf16.mxu0 %v1675
    %1886 = vmatpush1.bf16.msra.mxu0 %v1674
    %1887 = vmatprep.subr.bf16.mxu0 %v1679
    %1888 = vmatpush1.bf16.msra.mxu0 %v1678
    %1889 = vmatprep.subr.bf16.mxu0 %v1683
    %1890 = vmatpush1.bf16.msra.mxu0 %v1682
    %1891 = vmatprep.subr.bf16.mxu0 %v1687
    %1892 = vmatpush1.bf16.msra.mxu0 %v1686
    %1893 = vmatprep.subr.bf16.mxu0 %v1691
    %1894 = vmatpush1.bf16.msra.mxu0 %v1690
    %1895 = vmatprep.mubr.bf16.mxu0 %v1029
    %1896 = vmatmul.mubr.bf16.gmra.mrb[0].mxu0 %v1028
    %v1897 = vpop.f32.mrb[0].mxu0
    %v1898 = vadd.f32 %v1857, %v1897
    %v1899 = vpop.f32.mrb[0].mxu0
    %v1900 = vadd.f32 %v1859, %v1899
    %v1901 = vpop.f32.mrb[0].mxu0
    %v1902 = vpop.f32.mrb[0].mxu0
    %1903 = vdwg.mxu0
    %1904 = vmatprep.subr.bf16.mxu0 %v1569
    %1905 = vmatpush1.bf16.msra.mxu0 %v1568
    %1906 = vmatprep.subr.bf16.mxu0 %v1573
    %1907 = vmatpush1.bf16.msra.mxu0 %v1572
    %1908 = vmatprep.subr.bf16.mxu0 %v1577
    %1909 = vmatpush1.bf16.msra.mxu0 %v1576
    %1910 = vmatprep.subr.bf16.mxu0 %v1581
    %1911 = vmatpush1.bf16.msra.mxu0 %v1580
    %1912 = vmatprep.subr.bf16.mxu0 %v1585
    %1913 = vmatpush1.bf16.msra.mxu0 %v1584
    %1914 = vmatprep.subr.bf16.mxu0 %v1589
    %1915 = vmatpush1.bf16.msra.mxu0 %v1588
    %1916 = vmatprep.subr.bf16.mxu0 %v1593
    %1917 = vmatpush1.bf16.msra.mxu0 %v1592
    %1918 = vmatprep.subr.bf16.mxu0 %v1597
    %1919 = vmatpush1.bf16.msra.mxu0 %v1596
    %1920 = vmatprep.subr.bf16.mxu0 %v1601
    %1921 = vmatpush1.bf16.msra.mxu0 %v1600
    %1922 = vmatprep.subr.bf16.mxu0 %v1605
    %1923 = vmatpush1.bf16.msra.mxu0 %v1604
    %1924 = vmatprep.subr.bf16.mxu0 %v1609
    %1925 = vmatpush1.bf16.msra.mxu0 %v1608
    %1926 = vmatprep.subr.bf16.mxu0 %v1613
    %1927 = vmatpush1.bf16.msra.mxu0 %v1612
    %1928 = vmatprep.subr.bf16.mxu0 %v1617
    %1929 = vmatpush1.bf16.msra.mxu0 %v1616
    %1930 = vmatprep.subr.bf16.mxu0 %v1621
    %1931 = vmatpush1.bf16.msra.mxu0 %v1620
    %1932 = vmatprep.subr.bf16.mxu0 %v1625
    %1933 = vmatpush1.bf16.msra.mxu0 %v1624
    %1934 = vmatprep.subr.bf16.mxu0 %v1629
    %1935 = vmatpush1.bf16.msra.mxu0 %v1628
    %1936 = vmatprep.mubr.bf16.mxu0 %v1027
    %1937 = vmatmul.mubr.bf16.gmra.mrb[0].mxu0 %v1026
    %v1938 = vpop.f32.mrb[0].mxu0
    %v1939 = vadd.f32 %v1173, %v1938
    %v1940 = vpop.f32.mrb[0].mxu0
    %v1941 = vadd.f32 %v1177, %v1940
    %v1942 = vpop.f32.mrb[0].mxu0
    %v1943 = vpop.f32.mrb[0].mxu0
    %1944 = vdwg.mxu0
    %1945 = vmatprep.subr.bf16.mxu0 %v1633
    %1946 = vmatpush1.bf16.msra.mxu0 %v1632
    %1947 = vmatprep.subr.bf16.mxu0 %v1637
    %1948 = vmatpush1.bf16.msra.mxu0 %v1636
    %1949 = vmatprep.subr.bf16.mxu0 %v1641
    %1950 = vmatpush1.bf16.msra.mxu0 %v1640
    %1951 = vmatprep.subr.bf16.mxu0 %v1645
    %1952 = vmatpush1.bf16.msra.mxu0 %v1644
    %1953 = vmatprep.subr.bf16.mxu0 %v1649
    %1954 = vmatpush1.bf16.msra.mxu0 %v1648
    %1955 = vmatprep.subr.bf16.mxu0 %v1653
    %1956 = vmatpush1.bf16.msra.mxu0 %v1652
    %1957 = vmatprep.subr.bf16.mxu0 %v1657
    %1958 = vmatpush1.bf16.msra.mxu0 %v1656
    %1959 = vmatprep.subr.bf16.mxu0 %v1661
    %1960 = vmatpush1.bf16.msra.mxu0 %v1660
    %1961 = vmatprep.subr.bf16.mxu0 %v1665
    %1962 = vmatpush1.bf16.msra.mxu0 %v1664
    %1963 = vmatprep.subr.bf16.mxu0 %v1669
    %1964 = vmatpush1.bf16.msra.mxu0 %v1668
    %1965 = vmatprep.subr.bf16.mxu0 %v1673
    %1966 = vmatpush1.bf16.msra.mxu0 %v1672
    %1967 = vmatprep.subr.bf16.mxu0 %v1677
    %1968 = vmatpush1.bf16.msra.mxu0 %v1676
    %1969 = vmatprep.subr.bf16.mxu0 %v1681
    %1970 = vmatpush1.bf16.msra.mxu0 %v1680
    %1971 = vmatprep.subr.bf16.mxu0 %v1685
    %1972 = vmatpush1.bf16.msra.mxu0 %v1684
    %1973 = vmatprep.subr.bf16.mxu0 %v1689
    %1974 = vmatpush1.bf16.msra.mxu0 %v1688
    %1975 = vmatprep.subr.bf16.mxu0 %v1693
    %1976 = vmatpush1.bf16.msra.mxu0 %v1692
    %1977 = vmatprep.mubr.bf16.mxu0 %v1029
    %1978 = vmatmul.mubr.bf16.gmra.mrb[0].mxu0 %v1028
    %v1979 = vpop.f32.mrb[0].mxu0
    %v1980 = vadd.f32 %v1939, %v1979
    %v1981 = vpop.f32.mrb[0].mxu0
    %v1982 = vadd.f32 %v1941, %v1981
    %v1983 = vpop.f32.mrb[0].mxu0
    %v1984 = vpop.f32.mrb[0].mxu0
    %1985 = vdwg.mxu0
    %v1986 = vmul.f32 %v1898, 0.01
    %v1987 = vmul.f32 %v1900, 0.01
    %v1988 = vmul.f32 %v1980, 0.01
    %v1989 = vmul.f32 %v1982, 0.01
    %v1990 = vmax.f32 %v1898, %v1986
    %v1991 = vmax.f32 %v1900, %v1987
    %v1992 = vmax.f32 %v1980, %v1988
    %v1993 = vmax.f32 %v1982, %v1989
    %v1994 = vpack.c.bf16 %v1990, %v1990
    %v1995 = vpack.c.bf16 %v1991, %v1991
    %v1996 = vpack.c.bf16 %v1992, %v1992
    %v1997 = vpack.c.bf16 %v1993, %v1993
    %s1998 = scalar_lea.vmem [#allocation2], 2048
    %v1999 = vld [vmem:[%s1998] sm:$0xff]
    %v2000 = vld [vmem:[%s1998 + $0x8] sm:$0xff]
    %v2001 = vld [vmem:[%s1998 + $0x10] sm:$0xff]
    %v2002 = vld [vmem:[%s1998 + $0x18] sm:$0xff]
    %v2003 = vld [vmem:[%s1998 + $0x20] sm:$0xff]
    %v2004 = vld [vmem:[%s1998 + $0x28] sm:$0xff]
    %v2005 = vld [vmem:[%s1998 + $0x30] sm:$0xff]
    %v2006 = vld [vmem:[%s1998 + $0x38] sm:$0xff]
    %v2007 = vld [vmem:[%s1998 + $0x40] sm:$0xff]
    %v2008 = vld [vmem:[%s1998 + $0x48] sm:$0xff]
    %v2009 = vld [vmem:[%s1998 + $0x50] sm:$0xff]
    %v2010 = vld [vmem:[%s1998 + $0x58] sm:$0xff]
    %v2011 = vld [vmem:[%s1998 + $0x60] sm:$0xff]
    %v2012 = vld [vmem:[%s1998 + $0x68] sm:$0xff]
    %v2013 = vld [vmem:[%s1998 + $0x70] sm:$0xff]
    %v2014 = vld [vmem:[%s1998 + $0x78] sm:$0xff]
    %v2015 = vld [vmem:[%s1998 + $0x80] sm:$0xff]
    %v2016 = vld [vmem:[%s1998 + $0x88] sm:$0xff]
    %v2017 = vld [vmem:[%s1998 + $0x90] sm:$0xff]
    %v2018 = vld [vmem:[%s1998 + $0x98] sm:$0xff]
    %v2019 = vld [vmem:[%s1998 + $0xa0] sm:$0xff]
    %v2020 = vld [vmem:[%s1998 + $0xa8] sm:$0xff]
    %v2021 = vld [vmem:[%s1998 + $0xb0] sm:$0xff]
    %v2022 = vld [vmem:[%s1998 + $0xb8] sm:$0xff]
    %v2023 = vld [vmem:[%s1998 + $0xc0] sm:$0xff]
    %v2024 = vld [vmem:[%s1998 + $0xc8] sm:$0xff]
    %v2025 = vld [vmem:[%s1998 + $0xd0] sm:$0xff]
    %v2026 = vld [vmem:[%s1998 + $0xd8] sm:$0xff]
    %v2027 = vld [vmem:[%s1998 + $0xe0] sm:$0xff]
    %v2028 = vld [vmem:[%s1998 + $0xe8] sm:$0xff]
    %v2029 = vld [vmem:[%s1998 + $0xf0] sm:$0xff]
    %v2030 = vld [vmem:[%s1998 + $0xf8] sm:$0xff]
    %v2031 = vld [vmem:[%s1998 + $0x100] sm:$0xff]
    %v2032 = vld [vmem:[%s1998 + $0x108] sm:$0xff]
    %v2033 = vld [vmem:[%s1998 + $0x110] sm:$0xff]
    %v2034 = vld [vmem:[%s1998 + $0x118] sm:$0xff]
    %v2035 = vld [vmem:[%s1998 + $0x120] sm:$0xff]
    %v2036 = vld [vmem:[%s1998 + $0x128] sm:$0xff]
    %v2037 = vld [vmem:[%s1998 + $0x130] sm:$0xff]
    %v2038 = vld [vmem:[%s1998 + $0x138] sm:$0xff]
    %v2039 = vld [vmem:[%s1998 + $0x140] sm:$0xff]
    %v2040 = vld [vmem:[%s1998 + $0x148] sm:$0xff]
    %v2041 = vld [vmem:[%s1998 + $0x150] sm:$0xff]
    %v2042 = vld [vmem:[%s1998 + $0x158] sm:$0xff]
    %v2043 = vld [vmem:[%s1998 + $0x160] sm:$0xff]
    %v2044 = vld [vmem:[%s1998 + $0x168] sm:$0xff]
    %v2045 = vld [vmem:[%s1998 + $0x170] sm:$0xff]
    %v2046 = vld [vmem:[%s1998 + $0x178] sm:$0xff]
    %v2047 = vld [vmem:[%s1998 + $0x180] sm:$0xff]
    %v2048 = vld [vmem:[%s1998 + $0x188] sm:$0xff]
    %v2049 = vld [vmem:[%s1998 + $0x190] sm:$0xff]
    %v2050 = vld [vmem:[%s1998 + $0x198] sm:$0xff]
    %v2051 = vld [vmem:[%s1998 + $0x1a0] sm:$0xff]
    %v2052 = vld [vmem:[%s1998 + $0x1a8] sm:$0xff]
    %v2053 = vld [vmem:[%s1998 + $0x1b0] sm:$0xff]
    %v2054 = vld [vmem:[%s1998 + $0x1b8] sm:$0xff]
    %v2055 = vld [vmem:[%s1998 + $0x1c0] sm:$0xff]
    %v2056 = vld [vmem:[%s1998 + $0x1c8] sm:$0xff]
    %v2057 = vld [vmem:[%s1998 + $0x1d0] sm:$0xff]
    %v2058 = vld [vmem:[%s1998 + $0x1d8] sm:$0xff]
    %v2059 = vld [vmem:[%s1998 + $0x1e0] sm:$0xff]
    %v2060 = vld [vmem:[%s1998 + $0x1e8] sm:$0xff]
    %v2061 = vld [vmem:[%s1998 + $0x1f0] sm:$0xff]
    %v2062 = vld [vmem:[%s1998 + $0x1f8] sm:$0xff]
    %v2063 = vld [vmem:[%s1998 + $0x200] sm:$0xff]
    %v2064 = vld [vmem:[%s1998 + $0x208] sm:$0xff]
    %v2065 = vld [vmem:[%s1998 + $0x210] sm:$0xff]
    %v2066 = vld [vmem:[%s1998 + $0x218] sm:$0xff]
    %v2067 = vld [vmem:[%s1998 + $0x220] sm:$0xff]
    %v2068 = vld [vmem:[%s1998 + $0x228] sm:$0xff]
    %v2069 = vld [vmem:[%s1998 + $0x230] sm:$0xff]
    %v2070 = vld [vmem:[%s1998 + $0x238] sm:$0xff]
    %v2071 = vld [vmem:[%s1998 + $0x240] sm:$0xff]
    %v2072 = vld [vmem:[%s1998 + $0x248] sm:$0xff]
    %v2073 = vld [vmem:[%s1998 + $0x250] sm:$0xff]
    %v2074 = vld [vmem:[%s1998 + $0x258] sm:$0xff]
    %v2075 = vld [vmem:[%s1998 + $0x260] sm:$0xff]
    %v2076 = vld [vmem:[%s1998 + $0x268] sm:$0xff]
    %v2077 = vld [vmem:[%s1998 + $0x270] sm:$0xff]
    %v2078 = vld [vmem:[%s1998 + $0x278] sm:$0xff]
    %v2079 = vld [vmem:[%s1998 + $0x280] sm:$0xff]
    %v2080 = vld [vmem:[%s1998 + $0x288] sm:$0xff]
    %v2081 = vld [vmem:[%s1998 + $0x290] sm:$0xff]
    %v2082 = vld [vmem:[%s1998 + $0x298] sm:$0xff]
    %v2083 = vld [vmem:[%s1998 + $0x2a0] sm:$0xff]
    %v2084 = vld [vmem:[%s1998 + $0x2a8] sm:$0xff]
    %v2085 = vld [vmem:[%s1998 + $0x2b0] sm:$0xff]
    %v2086 = vld [vmem:[%s1998 + $0x2b8] sm:$0xff]
    %v2087 = vld [vmem:[%s1998 + $0x2c0] sm:$0xff]
    %v2088 = vld [vmem:[%s1998 + $0x2c8] sm:$0xff]
    %v2089 = vld [vmem:[%s1998 + $0x2d0] sm:$0xff]
    %v2090 = vld [vmem:[%s1998 + $0x2d8] sm:$0xff]
    %v2091 = vld [vmem:[%s1998 + $0x2e0] sm:$0xff]
    %v2092 = vld [vmem:[%s1998 + $0x2e8] sm:$0xff]
    %v2093 = vld [vmem:[%s1998 + $0x2f0] sm:$0xff]
    %v2094 = vld [vmem:[%s1998 + $0x2f8] sm:$0xff]
    %v2095 = vld [vmem:[%s1998 + $0x300] sm:$0xff]
    %v2096 = vld [vmem:[%s1998 + $0x308] sm:$0xff]
    %v2097 = vld [vmem:[%s1998 + $0x310] sm:$0xff]
    %v2098 = vld [vmem:[%s1998 + $0x318] sm:$0xff]
    %v2099 = vld [vmem:[%s1998 + $0x320] sm:$0xff]
    %v2100 = vld [vmem:[%s1998 + $0x328] sm:$0xff]
    %v2101 = vld [vmem:[%s1998 + $0x330] sm:$0xff]
    %v2102 = vld [vmem:[%s1998 + $0x338] sm:$0xff]
    %v2103 = vld [vmem:[%s1998 + $0x340] sm:$0xff]
    %v2104 = vld [vmem:[%s1998 + $0x348] sm:$0xff]
    %v2105 = vld [vmem:[%s1998 + $0x350] sm:$0xff]
    %v2106 = vld [vmem:[%s1998 + $0x358] sm:$0xff]
    %v2107 = vld [vmem:[%s1998 + $0x360] sm:$0xff]
    %v2108 = vld [vmem:[%s1998 + $0x368] sm:$0xff]
    %v2109 = vld [vmem:[%s1998 + $0x370] sm:$0xff]
    %v2110 = vld [vmem:[%s1998 + $0x378] sm:$0xff]
    %v2111 = vld [vmem:[%s1998 + $0x380] sm:$0xff]
    %v2112 = vld [vmem:[%s1998 + $0x388] sm:$0xff]
    %v2113 = vld [vmem:[%s1998 + $0x390] sm:$0xff]
    %v2114 = vld [vmem:[%s1998 + $0x398] sm:$0xff]
    %v2115 = vld [vmem:[%s1998 + $0x3a0] sm:$0xff]
    %v2116 = vld [vmem:[%s1998 + $0x3a8] sm:$0xff]
    %v2117 = vld [vmem:[%s1998 + $0x3b0] sm:$0xff]
    %v2118 = vld [vmem:[%s1998 + $0x3b8] sm:$0xff]
    %v2119 = vld [vmem:[%s1998 + $0x3c0] sm:$0xff]
    %v2120 = vld [vmem:[%s1998 + $0x3c8] sm:$0xff]
    %v2121 = vld [vmem:[%s1998 + $0x3d0] sm:$0xff]
    %v2122 = vld [vmem:[%s1998 + $0x3d8] sm:$0xff]
    %v2123 = vld [vmem:[%s1998 + $0x3e0] sm:$0xff]
    %v2124 = vld [vmem:[%s1998 + $0x3e8] sm:$0xff]
    %v2125 = vld [vmem:[%s1998 + $0x3f0] sm:$0xff]
    %v2126 = vld [vmem:[%s1998 + $0x3f8] sm:$0xff]
    %s2127 = scalar_lea.vmem [#allocation4], 8
    %v2128 = vld [vmem:[%s2127] sm:$0xf]
    %v2130 = vlaneseq
    %v2131 = vshrl.u32 %v2130, 7
    %v2132 = vsub.s32 0, %v2131
    %v2133 = vrot.slane %v2128, %v2132
    %v2134 = vlaneseq
    %v2135 = vshrl.u32 %v2134, 7
    %v2136 = vsub.s32 1, %v2135
    %v2137 = vrot.slane %v2128, %v2136
    %v2138 = vlaneseq
    %v2139 = vshrl.u32 %v2138, 7
    %v2140 = vsub.s32 2, %v2139
    %v2141 = vrot.slane %v2128, %v2140
    %v2142 = vlaneseq
    %v2143 = vshrl.u32 %v2142, 7
    %v2144 = vsub.s32 3, %v2143
    %v2145 = vrot.slane %v2128, %v2144
    %v2278 = vunpack.c.l.b16 %v1999
    %v2279 = vunpack.c.h.b16 %v1999
    %v2280 = vunpack.c.l.b16 %v2000
    %v2281 = vunpack.c.h.b16 %v2000
    %v2282 = vunpack.c.l.b16 %v2001
    %v2283 = vunpack.c.h.b16 %v2001
    %v2284 = vunpack.c.l.b16 %v2002
    %v2285 = vunpack.c.h.b16 %v2002
    %v2286 = vunpack.c.l.b16 %v2003
    %v2287 = vunpack.c.h.b16 %v2003
    %v2288 = vunpack.c.l.b16 %v2004
    %v2289 = vunpack.c.h.b16 %v2004
    %v2290 = vunpack.c.l.b16 %v2005
    %v2291 = vunpack.c.h.b16 %v2005
    %v2292 = vunpack.c.l.b16 %v2006
    %v2293 = vunpack.c.h.b16 %v2006
    %v2294 = vunpack.c.l.b16 %v2007
    %v2295 = vunpack.c.h.b16 %v2007
    %v2296 = vunpack.c.l.b16 %v2008
    %v2297 = vunpack.c.h.b16 %v2008
    %v2298 = vunpack.c.l.b16 %v2009
    %v2299 = vunpack.c.h.b16 %v2009
    %v2300 = vunpack.c.l.b16 %v2010
    %v2301 = vunpack.c.h.b16 %v2010
    %v2302 = vunpack.c.l.b16 %v2011
    %v2303 = vunpack.c.h.b16 %v2011
    %v2304 = vunpack.c.l.b16 %v2012
    %v2305 = vunpack.c.h.b16 %v2012
    %v2306 = vunpack.c.l.b16 %v2013
    %v2307 = vunpack.c.h.b16 %v2013
    %v2308 = vunpack.c.l.b16 %v2014
    %v2309 = vunpack.c.h.b16 %v2014
    %v2310 = vunpack.c.l.b16 %v2015
    %v2311 = vunpack.c.h.b16 %v2015
    %v2312 = vunpack.c.l.b16 %v2016
    %v2313 = vunpack.c.h.b16 %v2016
    %v2314 = vunpack.c.l.b16 %v2017
    %v2315 = vunpack.c.h.b16 %v2017
    %v2316 = vunpack.c.l.b16 %v2018
    %v2317 = vunpack.c.h.b16 %v2018
    %v2318 = vunpack.c.l.b16 %v2019
    %v2319 = vunpack.c.h.b16 %v2019
    %v2320 = vunpack.c.l.b16 %v2020
    %v2321 = vunpack.c.h.b16 %v2020
    %v2322 = vunpack.c.l.b16 %v2021
    %v2323 = vunpack.c.h.b16 %v2021
    %v2324 = vunpack.c.l.b16 %v2022
    %v2325 = vunpack.c.h.b16 %v2022
    %v2326 = vunpack.c.l.b16 %v2023
    %v2327 = vunpack.c.h.b16 %v2023
    %v2328 = vunpack.c.l.b16 %v2024
    %v2329 = vunpack.c.h.b16 %v2024
    %v2330 = vunpack.c.l.b16 %v2025
    %v2331 = vunpack.c.h.b16 %v2025
    %v2332 = vunpack.c.l.b16 %v2026
    %v2333 = vunpack.c.h.b16 %v2026
    %v2334 = vunpack.c.l.b16 %v2027
    %v2335 = vunpack.c.h.b16 %v2027
    %v2336 = vunpack.c.l.b16 %v2028
    %v2337 = vunpack.c.h.b16 %v2028
    %v2338 = vunpack.c.l.b16 %v2029
    %v2339 = vunpack.c.h.b16 %v2029
    %v2340 = vunpack.c.l.b16 %v2030
    %v2341 = vunpack.c.h.b16 %v2030
    %v2342 = vunpack.c.l.b16 %v2031
    %v2343 = vunpack.c.h.b16 %v2031
    %v2344 = vunpack.c.l.b16 %v2032
    %v2345 = vunpack.c.h.b16 %v2032
    %v2346 = vunpack.c.l.b16 %v2033
    %v2347 = vunpack.c.h.b16 %v2033
    %v2348 = vunpack.c.l.b16 %v2034
    %v2349 = vunpack.c.h.b16 %v2034
    %v2350 = vunpack.c.l.b16 %v2035
    %v2351 = vunpack.c.h.b16 %v2035
    %v2352 = vunpack.c.l.b16 %v2036
    %v2353 = vunpack.c.h.b16 %v2036
    %v2354 = vunpack.c.l.b16 %v2037
    %v2355 = vunpack.c.h.b16 %v2037
    %v2356 = vunpack.c.l.b16 %v2038
    %v2357 = vunpack.c.h.b16 %v2038
    %v2358 = vunpack.c.l.b16 %v2039
    %v2359 = vunpack.c.h.b16 %v2039
    %v2360 = vunpack.c.l.b16 %v2040
    %v2361 = vunpack.c.h.b16 %v2040
    %v2362 = vunpack.c.l.b16 %v2041
    %v2363 = vunpack.c.h.b16 %v2041
    %v2364 = vunpack.c.l.b16 %v2042
    %v2365 = vunpack.c.h.b16 %v2042
    %v2366 = vunpack.c.l.b16 %v2043
    %v2367 = vunpack.c.h.b16 %v2043
    %v2368 = vunpack.c.l.b16 %v2044
    %v2369 = vunpack.c.h.b16 %v2044
    %v2370 = vunpack.c.l.b16 %v2045
    %v2371 = vunpack.c.h.b16 %v2045
    %v2372 = vunpack.c.l.b16 %v2046
    %v2373 = vunpack.c.h.b16 %v2046
    %v2374 = vunpack.c.l.b16 %v2047
    %v2375 = vunpack.c.h.b16 %v2047
    %v2376 = vunpack.c.l.b16 %v2048
    %v2377 = vunpack.c.h.b16 %v2048
    %v2378 = vunpack.c.l.b16 %v2049
    %v2379 = vunpack.c.h.b16 %v2049
    %v2380 = vunpack.c.l.b16 %v2050
    %v2381 = vunpack.c.h.b16 %v2050
    %v2382 = vunpack.c.l.b16 %v2051
    %v2383 = vunpack.c.h.b16 %v2051
    %v2384 = vunpack.c.l.b16 %v2052
    %v2385 = vunpack.c.h.b16 %v2052
    %v2386 = vunpack.c.l.b16 %v2053
    %v2387 = vunpack.c.h.b16 %v2053
    %v2388 = vunpack.c.l.b16 %v2054
    %v2389 = vunpack.c.h.b16 %v2054
    %v2390 = vunpack.c.l.b16 %v2055
    %v2391 = vunpack.c.h.b16 %v2055
    %v2392 = vunpack.c.l.b16 %v2056
    %v2393 = vunpack.c.h.b16 %v2056
    %v2394 = vunpack.c.l.b16 %v2057
    %v2395 = vunpack.c.h.b16 %v2057
    %v2396 = vunpack.c.l.b16 %v2058
    %v2397 = vunpack.c.h.b16 %v2058
    %v2398 = vunpack.c.l.b16 %v2059
    %v2399 = vunpack.c.h.b16 %v2059
    %v2400 = vunpack.c.l.b16 %v2060
    %v2401 = vunpack.c.h.b16 %v2060
    %v2402 = vunpack.c.l.b16 %v2061
    %v2403 = vunpack.c.h.b16 %v2061
    %v2404 = vunpack.c.l.b16 %v2062
    %v2405 = vunpack.c.h.b16 %v2062
    %v2406 = vunpack.c.l.b16 %v2063
    %v2407 = vunpack.c.h.b16 %v2063
    %v2408 = vunpack.c.l.b16 %v2064
    %v2409 = vunpack.c.h.b16 %v2064
    %v2410 = vunpack.c.l.b16 %v2065
    %v2411 = vunpack.c.h.b16 %v2065
    %v2412 = vunpack.c.l.b16 %v2066
    %v2413 = vunpack.c.h.b16 %v2066
    %v2414 = vunpack.c.l.b16 %v2067
    %v2415 = vunpack.c.h.b16 %v2067
    %v2416 = vunpack.c.l.b16 %v2068
    %v2417 = vunpack.c.h.b16 %v2068
    %v2418 = vunpack.c.l.b16 %v2069
    %v2419 = vunpack.c.h.b16 %v2069
    %v2420 = vunpack.c.l.b16 %v2070
    %v2421 = vunpack.c.h.b16 %v2070
    %v2422 = vunpack.c.l.b16 %v2071
    %v2423 = vunpack.c.h.b16 %v2071
    %v2424 = vunpack.c.l.b16 %v2072
    %v2425 = vunpack.c.h.b16 %v2072
    %v2426 = vunpack.c.l.b16 %v2073
    %v2427 = vunpack.c.h.b16 %v2073
    %v2428 = vunpack.c.l.b16 %v2074
    %v2429 = vunpack.c.h.b16 %v2074
    %v2430 = vunpack.c.l.b16 %v2075
    %v2431 = vunpack.c.h.b16 %v2075
    %v2432 = vunpack.c.l.b16 %v2076
    %v2433 = vunpack.c.h.b16 %v2076
    %v2434 = vunpack.c.l.b16 %v2077
    %v2435 = vunpack.c.h.b16 %v2077
    %v2436 = vunpack.c.l.b16 %v2078
    %v2437 = vunpack.c.h.b16 %v2078
    %v2438 = vunpack.c.l.b16 %v2079
    %v2439 = vunpack.c.h.b16 %v2079
    %v2440 = vunpack.c.l.b16 %v2080
    %v2441 = vunpack.c.h.b16 %v2080
    %v2442 = vunpack.c.l.b16 %v2081
    %v2443 = vunpack.c.h.b16 %v2081
    %v2444 = vunpack.c.l.b16 %v2082
    %v2445 = vunpack.c.h.b16 %v2082
    %v2446 = vunpack.c.l.b16 %v2083
    %v2447 = vunpack.c.h.b16 %v2083
    %v2448 = vunpack.c.l.b16 %v2084
    %v2449 = vunpack.c.h.b16 %v2084
    %v2450 = vunpack.c.l.b16 %v2085
    %v2451 = vunpack.c.h.b16 %v2085
    %v2452 = vunpack.c.l.b16 %v2086
    %v2453 = vunpack.c.h.b16 %v2086
    %v2454 = vunpack.c.l.b16 %v2087
    %v2455 = vunpack.c.h.b16 %v2087
    %v2456 = vunpack.c.l.b16 %v2088
    %v2457 = vunpack.c.h.b16 %v2088
    %v2458 = vunpack.c.l.b16 %v2089
    %v2459 = vunpack.c.h.b16 %v2089
    %v2460 = vunpack.c.l.b16 %v2090
    %v2461 = vunpack.c.h.b16 %v2090
    %v2462 = vunpack.c.l.b16 %v2091
    %v2463 = vunpack.c.h.b16 %v2091
    %v2464 = vunpack.c.l.b16 %v2092
    %v2465 = vunpack.c.h.b16 %v2092
    %v2466 = vunpack.c.l.b16 %v2093
    %v2467 = vunpack.c.h.b16 %v2093
    %v2468 = vunpack.c.l.b16 %v2094
    %v2469 = vunpack.c.h.b16 %v2094
    %v2470 = vunpack.c.l.b16 %v2095
    %v2471 = vunpack.c.h.b16 %v2095
    %v2472 = vunpack.c.l.b16 %v2096
    %v2473 = vunpack.c.h.b16 %v2096
    %v2474 = vunpack.c.l.b16 %v2097
    %v2475 = vunpack.c.h.b16 %v2097
    %v2476 = vunpack.c.l.b16 %v2098
    %v2477 = vunpack.c.h.b16 %v2098
    %v2478 = vunpack.c.l.b16 %v2099
    %v2479 = vunpack.c.h.b16 %v2099
    %v2480 = vunpack.c.l.b16 %v2100
    %v2481 = vunpack.c.h.b16 %v2100
    %v2482 = vunpack.c.l.b16 %v2101
    %v2483 = vunpack.c.h.b16 %v2101
    %v2484 = vunpack.c.l.b16 %v2102
    %v2485 = vunpack.c.h.b16 %v2102
    %v2486 = vunpack.c.l.b16 %v2103
    %v2487 = vunpack.c.h.b16 %v2103
    %v2488 = vunpack.c.l.b16 %v2104
    %v2489 = vunpack.c.h.b16 %v2104
    %v2490 = vunpack.c.l.b16 %v2105
    %v2491 = vunpack.c.h.b16 %v2105
    %v2492 = vunpack.c.l.b16 %v2106
    %v2493 = vunpack.c.h.b16 %v2106
    %v2494 = vunpack.c.l.b16 %v2107
    %v2495 = vunpack.c.h.b16 %v2107
    %v2496 = vunpack.c.l.b16 %v2108
    %v2497 = vunpack.c.h.b16 %v2108
    %v2498 = vunpack.c.l.b16 %v2109
    %v2499 = vunpack.c.h.b16 %v2109
    %v2500 = vunpack.c.l.b16 %v2110
    %v2501 = vunpack.c.h.b16 %v2110
    %v2502 = vunpack.c.l.b16 %v2111
    %v2503 = vunpack.c.h.b16 %v2111
    %v2504 = vunpack.c.l.b16 %v2112
    %v2505 = vunpack.c.h.b16 %v2112
    %v2506 = vunpack.c.l.b16 %v2113
    %v2507 = vunpack.c.h.b16 %v2113
    %v2508 = vunpack.c.l.b16 %v2114
    %v2509 = vunpack.c.h.b16 %v2114
    %v2510 = vunpack.c.l.b16 %v2115
    %v2511 = vunpack.c.h.b16 %v2115
    %v2512 = vunpack.c.l.b16 %v2116
    %v2513 = vunpack.c.h.b16 %v2116
    %v2514 = vunpack.c.l.b16 %v2117
    %v2515 = vunpack.c.h.b16 %v2117
    %v2516 = vunpack.c.l.b16 %v2118
    %v2517 = vunpack.c.h.b16 %v2118
    %v2518 = vunpack.c.l.b16 %v2119
    %v2519 = vunpack.c.h.b16 %v2119
    %v2520 = vunpack.c.l.b16 %v2120
    %v2521 = vunpack.c.h.b16 %v2120
    %v2522 = vunpack.c.l.b16 %v2121
    %v2523 = vunpack.c.h.b16 %v2121
    %v2524 = vunpack.c.l.b16 %v2122
    %v2525 = vunpack.c.h.b16 %v2122
    %v2526 = vunpack.c.l.b16 %v2123
    %v2527 = vunpack.c.h.b16 %v2123
    %v2528 = vunpack.c.l.b16 %v2124
    %v2529 = vunpack.c.h.b16 %v2124
    %v2530 = vunpack.c.l.b16 %v2125
    %v2531 = vunpack.c.h.b16 %v2125
    %v2532 = vunpack.c.l.b16 %v2126
    %v2533 = vunpack.c.h.b16 %v2126
    %v2534 = vpack.c.b16 %v2282, %v2278
    %v2535 = vpack.c.b16 %v2283, %v2279
    %v2536 = vpack.c.b16 %v2284, %v2280
    %v2537 = vpack.c.b16 %v2285, %v2281
    %v2538 = vpack.c.b16 %v2290, %v2286
    %v2539 = vpack.c.b16 %v2291, %v2287
    %v2540 = vpack.c.b16 %v2292, %v2288
    %v2541 = vpack.c.b16 %v2293, %v2289
    %v2542 = vpack.c.b16 %v2298, %v2294
    %v2543 = vpack.c.b16 %v2299, %v2295
    %v2544 = vpack.c.b16 %v2300, %v2296
    %v2545 = vpack.c.b16 %v2301, %v2297
    %v2546 = vpack.c.b16 %v2306, %v2302
    %v2547 = vpack.c.b16 %v2307, %v2303
    %v2548 = vpack.c.b16 %v2308, %v2304
    %v2549 = vpack.c.b16 %v2309, %v2305
    %v2550 = vpack.c.b16 %v2314, %v2310
    %v2551 = vpack.c.b16 %v2315, %v2311
    %v2552 = vpack.c.b16 %v2316, %v2312
    %v2553 = vpack.c.b16 %v2317, %v2313
    %v2554 = vpack.c.b16 %v2322, %v2318
    %v2555 = vpack.c.b16 %v2323, %v2319
    %v2556 = vpack.c.b16 %v2324, %v2320
    %v2557 = vpack.c.b16 %v2325, %v2321
    %v2558 = vpack.c.b16 %v2330, %v2326
    %v2559 = vpack.c.b16 %v2331, %v2327
    %v2560 = vpack.c.b16 %v2332, %v2328
    %v2561 = vpack.c.b16 %v2333, %v2329
    %v2562 = vpack.c.b16 %v2338, %v2334
    %v2563 = vpack.c.b16 %v2339, %v2335
    %v2564 = vpack.c.b16 %v2340, %v2336
    %v2565 = vpack.c.b16 %v2341, %v2337
    %v2566 = vpack.c.b16 %v2346, %v2342
    %v2567 = vpack.c.b16 %v2347, %v2343
    %v2568 = vpack.c.b16 %v2348, %v2344
    %v2569 = vpack.c.b16 %v2349, %v2345
    %v2570 = vpack.c.b16 %v2354, %v2350
    %v2571 = vpack.c.b16 %v2355, %v2351
    %v2572 = vpack.c.b16 %v2356, %v2352
    %v2573 = vpack.c.b16 %v2357, %v2353
    %v2574 = vpack.c.b16 %v2362, %v2358
    %v2575 = vpack.c.b16 %v2363, %v2359
    %v2576 = vpack.c.b16 %v2364, %v2360
    %v2577 = vpack.c.b16 %v2365, %v2361
    %v2578 = vpack.c.b16 %v2370, %v2366
    %v2579 = vpack.c.b16 %v2371, %v2367
    %v2580 = vpack.c.b16 %v2372, %v2368
    %v2581 = vpack.c.b16 %v2373, %v2369
    %v2582 = vpack.c.b16 %v2378, %v2374
    %v2583 = vpack.c.b16 %v2379, %v2375
    %v2584 = vpack.c.b16 %v2380, %v2376
    %v2585 = vpack.c.b16 %v2381, %v2377
    %v2586 = vpack.c.b16 %v2386, %v2382
    %v2587 = vpack.c.b16 %v2387, %v2383
    %v2588 = vpack.c.b16 %v2388, %v2384
    %v2589 = vpack.c.b16 %v2389, %v2385
    %v2590 = vpack.c.b16 %v2394, %v2390
    %v2591 = vpack.c.b16 %v2395, %v2391
    %v2592 = vpack.c.b16 %v2396, %v2392
    %v2593 = vpack.c.b16 %v2397, %v2393
    %v2594 = vpack.c.b16 %v2402, %v2398
    %v2595 = vpack.c.b16 %v2403, %v2399
    %v2596 = vpack.c.b16 %v2404, %v2400
    %v2597 = vpack.c.b16 %v2405, %v2401
    %v2598 = vpack.c.b16 %v2410, %v2406
    %v2599 = vpack.c.b16 %v2411, %v2407
    %v2600 = vpack.c.b16 %v2412, %v2408
    %v2601 = vpack.c.b16 %v2413, %v2409
    %v2602 = vpack.c.b16 %v2418, %v2414
    %v2603 = vpack.c.b16 %v2419, %v2415
    %v2604 = vpack.c.b16 %v2420, %v2416
    %v2605 = vpack.c.b16 %v2421, %v2417
    %v2606 = vpack.c.b16 %v2426, %v2422
    %v2607 = vpack.c.b16 %v2427, %v2423
    %v2608 = vpack.c.b16 %v2428, %v2424
    %v2609 = vpack.c.b16 %v2429, %v2425
    %v2610 = vpack.c.b16 %v2434, %v2430
    %v2611 = vpack.c.b16 %v2435, %v2431
    %v2612 = vpack.c.b16 %v2436, %v2432
    %v2613 = vpack.c.b16 %v2437, %v2433
    %v2614 = vpack.c.b16 %v2442, %v2438
    %v2615 = vpack.c.b16 %v2443, %v2439
    %v2616 = vpack.c.b16 %v2444, %v2440
    %v2617 = vpack.c.b16 %v2445, %v2441
    %v2618 = vpack.c.b16 %v2450, %v2446
    %v2619 = vpack.c.b16 %v2451, %v2447
    %v2620 = vpack.c.b16 %v2452, %v2448
    %v2621 = vpack.c.b16 %v2453, %v2449
    %v2622 = vpack.c.b16 %v2458, %v2454
    %v2623 = vpack.c.b16 %v2459, %v2455
    %v2624 = vpack.c.b16 %v2460, %v2456
    %v2625 = vpack.c.b16 %v2461, %v2457
    %v2626 = vpack.c.b16 %v2466, %v2462
    %v2627 = vpack.c.b16 %v2467, %v2463
    %v2628 = vpack.c.b16 %v2468, %v2464
    %v2629 = vpack.c.b16 %v2469, %v2465
    %v2630 = vpack.c.b16 %v2474, %v2470
    %v2631 = vpack.c.b16 %v2475, %v2471
    %v2632 = vpack.c.b16 %v2476, %v2472
    %v2633 = vpack.c.b16 %v2477, %v2473
    %v2634 = vpack.c.b16 %v2482, %v2478
    %v2635 = vpack.c.b16 %v2483, %v2479
    %v2636 = vpack.c.b16 %v2484, %v2480
    %v2637 = vpack.c.b16 %v2485, %v2481
    %v2638 = vpack.c.b16 %v2490, %v2486
    %v2639 = vpack.c.b16 %v2491, %v2487
    %v2640 = vpack.c.b16 %v2492, %v2488
    %v2641 = vpack.c.b16 %v2493, %v2489
    %v2642 = vpack.c.b16 %v2498, %v2494
    %v2643 = vpack.c.b16 %v2499, %v2495
    %v2644 = vpack.c.b16 %v2500, %v2496
    %v2645 = vpack.c.b16 %v2501, %v2497
    %v2646 = vpack.c.b16 %v2506, %v2502
    %v2647 = vpack.c.b16 %v2507, %v2503
    %v2648 = vpack.c.b16 %v2508, %v2504
    %v2649 = vpack.c.b16 %v2509, %v2505
    %v2650 = vpack.c.b16 %v2514, %v2510
    %v2651 = vpack.c.b16 %v2515, %v2511
    %v2652 = vpack.c.b16 %v2516, %v2512
    %v2653 = vpack.c.b16 %v2517, %v2513
    %v2654 = vpack.c.b16 %v2522, %v2518
    %v2655 = vpack.c.b16 %v2523, %v2519
    %v2656 = vpack.c.b16 %v2524, %v2520
    %v2657 = vpack.c.b16 %v2525, %v2521
    %v2658 = vpack.c.b16 %v2530, %v2526
    %v2659 = vpack.c.b16 %v2531, %v2527
    %v2660 = vpack.c.b16 %v2532, %v2528
    %v2661 = vpack.c.b16 %v2533, %v2529
    %2790 = vmatprep.subr.bf16.mxu0 %v2535
    %2791 = vmatpush1.bf16.msra.mxu0 %v2534
    %2792 = vmatprep.subr.bf16.mxu0 %v2539
    %2793 = vmatpush1.bf16.msra.mxu0 %v2538
    %2794 = vmatprep.subr.bf16.mxu0 %v2543
    %2795 = vmatpush1.bf16.msra.mxu0 %v2542
    %2796 = vmatprep.subr.bf16.mxu0 %v2547
    %2797 = vmatpush1.bf16.msra.mxu0 %v2546
    %2798 = vmatprep.subr.bf16.mxu0 %v2551
    %2799 = vmatpush1.bf16.msra.mxu0 %v2550
    %2800 = vmatprep.subr.bf16.mxu0 %v2555
    %2801 = vmatpush1.bf16.msra.mxu0 %v2554
    %2802 = vmatprep.subr.bf16.mxu0 %v2559
    %2803 = vmatpush1.bf16.msra.mxu0 %v2558
    %2804 = vmatprep.subr.bf16.mxu0 %v2563
    %2805 = vmatpush1.bf16.msra.mxu0 %v2562
    %2806 = vmatprep.subr.bf16.mxu0 %v2567
    %2807 = vmatpush1.bf16.msra.mxu0 %v2566
    %2808 = vmatprep.subr.bf16.mxu0 %v2571
    %2809 = vmatpush1.bf16.msra.mxu0 %v2570
    %2810 = vmatprep.subr.bf16.mxu0 %v2575
    %2811 = vmatpush1.bf16.msra.mxu0 %v2574
    %2812 = vmatprep.subr.bf16.mxu0 %v2579
    %2813 = vmatpush1.bf16.msra.mxu0 %v2578
    %2814 = vmatprep.subr.bf16.mxu0 %v2583
    %2815 = vmatpush1.bf16.msra.mxu0 %v2582
    %2816 = vmatprep.subr.bf16.mxu0 %v2587
    %2817 = vmatpush1.bf16.msra.mxu0 %v2586
    %2818 = vmatprep.subr.bf16.mxu0 %v2591
    %2819 = vmatpush1.bf16.msra.mxu0 %v2590
    %2820 = vmatprep.subr.bf16.mxu0 %v2595
    %2821 = vmatpush1.bf16.msra.mxu0 %v2594
    %2822 = vmatprep.mubr.bf16.mxu0 %v1995
    %2823 = vmatmul.mubr.bf16.gmra.mrb[0].mxu0 %v1994
    %v2824 = vpop.f32.mrb[0].mxu0
    %v2825 = vadd.f32 %v2133, %v2824
    %v2826 = vpop.f32.mrb[0].mxu0
    %v2827 = vadd.f32 %v2137, %v2826
    %v2828 = vpop.f32.mrb[0].mxu0
    %v2829 = vpop.f32.mrb[0].mxu0
    %2830 = vdwg.mxu0
    %2831 = vmatprep.subr.bf16.mxu0 %v2599
    %2832 = vmatpush1.bf16.msra.mxu0 %v2598
    %2833 = vmatprep.subr.bf16.mxu0 %v2603
    %2834 = vmatpush1.bf16.msra.mxu0 %v2602
    %2835 = vmatprep.subr.bf16.mxu0 %v2607
    %2836 = vmatpush1.bf16.msra.mxu0 %v2606
    %2837 = vmatprep.subr.bf16.mxu0 %v2611
    %2838 = vmatpush1.bf16.msra.mxu0 %v2610
    %2839 = vmatprep.subr.bf16.mxu0 %v2615
    %2840 = vmatpush1.bf16.msra.mxu0 %v2614
    %2841 = vmatprep.subr.bf16.mxu0 %v2619
    %2842 = vmatpush1.bf16.msra.mxu0 %v2618
    %2843 = vmatprep.subr.bf16.mxu0 %v2623
    %2844 = vmatpush1.bf16.msra.mxu0 %v2622
    %2845 = vmatprep.subr.bf16.mxu0 %v2627
    %2846 = vmatpush1.bf16.msra.mxu0 %v2626
    %2847 = vmatprep.subr.bf16.mxu0 %v2631
    %2848 = vmatpush1.bf16.msra.mxu0 %v2630
    %2849 = vmatprep.subr.bf16.mxu0 %v2635
    %2850 = vmatpush1.bf16.msra.mxu0 %v2634
    %2851 = vmatprep.subr.bf16.mxu0 %v2639
    %2852 = vmatpush1.bf16.msra.mxu0 %v2638
    %2853 = vmatprep.subr.bf16.mxu0 %v2643
    %2854 = vmatpush1.bf16.msra.mxu0 %v2642
    %2855 = vmatprep.subr.bf16.mxu0 %v2647
    %2856 = vmatpush1.bf16.msra.mxu0 %v2646
    %2857 = vmatprep.subr.bf16.mxu0 %v2651
    %2858 = vmatpush1.bf16.msra.mxu0 %v2650
    %2859 = vmatprep.subr.bf16.mxu0 %v2655
    %2860 = vmatpush1.bf16.msra.mxu0 %v2654
    %2861 = vmatprep.subr.bf16.mxu0 %v2659
    %2862 = vmatpush1.bf16.msra.mxu0 %v2658
    %2863 = vmatprep.mubr.bf16.mxu0 %v1997
    %2864 = vmatmul.mubr.bf16.gmra.mrb[0].mxu0 %v1996
    %v2865 = vpop.f32.mrb[0].mxu0
    %v2866 = vadd.f32 %v2825, %v2865
    %v2867 = vpop.f32.mrb[0].mxu0
    %v2868 = vadd.f32 %v2827, %v2867
    %v2869 = vpop.f32.mrb[0].mxu0
    %v2870 = vpop.f32.mrb[0].mxu0
    %2871 = vdwg.mxu0
    %2872 = vmatprep.subr.bf16.mxu0 %v2537
    %2873 = vmatpush1.bf16.msra.mxu0 %v2536
    %2874 = vmatprep.subr.bf16.mxu0 %v2541
    %2875 = vmatpush1.bf16.msra.mxu0 %v2540
    %2876 = vmatprep.subr.bf16.mxu0 %v2545
    %2877 = vmatpush1.bf16.msra.mxu0 %v2544
    %2878 = vmatprep.subr.bf16.mxu0 %v2549
    %2879 = vmatpush1.bf16.msra.mxu0 %v2548
    %2880 = vmatprep.subr.bf16.mxu0 %v2553
    %2881 = vmatpush1.bf16.msra.mxu0 %v2552
    %2882 = vmatprep.subr.bf16.mxu0 %v2557
    %2883 = vmatpush1.bf16.msra.mxu0 %v2556
    %2884 = vmatprep.subr.bf16.mxu0 %v2561
    %2885 = vmatpush1.bf16.msra.mxu0 %v2560
    %2886 = vmatprep.subr.bf16.mxu0 %v2565
    %2887 = vmatpush1.bf16.msra.mxu0 %v2564
    %2888 = vmatprep.subr.bf16.mxu0 %v2569
    %2889 = vmatpush1.bf16.msra.mxu0 %v2568
    %2890 = vmatprep.subr.bf16.mxu0 %v2573
    %2891 = vmatpush1.bf16.msra.mxu0 %v2572
    %2892 = vmatprep.subr.bf16.mxu0 %v2577
    %2893 = vmatpush1.bf16.msra.mxu0 %v2576
    %2894 = vmatprep.subr.bf16.mxu0 %v2581
    %2895 = vmatpush1.bf16.msra.mxu0 %v2580
    %2896 = vmatprep.subr.bf16.mxu0 %v2585
    %2897 = vmatpush1.bf16.msra.mxu0 %v2584
    %2898 = vmatprep.subr.bf16.mxu0 %v2589
    %2899 = vmatpush1.bf16.msra.mxu0 %v2588
    %2900 = vmatprep.subr.bf16.mxu0 %v2593
    %2901 = vmatpush1.bf16.msra.mxu0 %v2592
    %2902 = vmatprep.subr.bf16.mxu0 %v2597
    %2903 = vmatpush1.bf16.msra.mxu0 %v2596
    %2904 = vmatprep.mubr.bf16.mxu0 %v1995
    %2905 = vmatmul.mubr.bf16.gmra.mrb[0].mxu0 %v1994
    %v2906 = vpop.f32.mrb[0].mxu0
    %v2907 = vadd.f32 %v2141, %v2906
    %v2908 = vpop.f32.mrb[0].mxu0
    %v2909 = vadd.f32 %v2145, %v2908
    %v2910 = vpop.f32.mrb[0].mxu0
    %v2911 = vpop.f32.mrb[0].mxu0
    %2912 = vdwg.mxu0
    %2913 = vmatprep.subr.bf16.mxu0 %v2601
    %2914 = vmatpush1.bf16.msra.mxu0 %v2600
    %2915 = vmatprep.subr.bf16.mxu0 %v2605
    %2916 = vmatpush1.bf16.msra.mxu0 %v2604
    %2917 = vmatprep.subr.bf16.mxu0 %v2609
    %2918 = vmatpush1.bf16.msra.mxu0 %v2608
    %2919 = vmatprep.subr.bf16.mxu0 %v2613
    %2920 = vmatpush1.bf16.msra.mxu0 %v2612
    %2921 = vmatprep.subr.bf16.mxu0 %v2617
    %2922 = vmatpush1.bf16.msra.mxu0 %v2616
    %2923 = vmatprep.subr.bf16.mxu0 %v2621
    %2924 = vmatpush1.bf16.msra.mxu0 %v2620
    %2925 = vmatprep.subr.bf16.mxu0 %v2625
    %2926 = vmatpush1.bf16.msra.mxu0 %v2624
    %2927 = vmatprep.subr.bf16.mxu0 %v2629
    %2928 = vmatpush1.bf16.msra.mxu0 %v2628
    %2929 = vmatprep.subr.bf16.mxu0 %v2633
    %2930 = vmatpush1.bf16.msra.mxu0 %v2632
    %2931 = vmatprep.subr.bf16.mxu0 %v2637
    %2932 = vmatpush1.bf16.msra.mxu0 %v2636
    %2933 = vmatprep.subr.bf16.mxu0 %v2641
    %2934 = vmatpush1.bf16.msra.mxu0 %v2640
    %2935 = vmatprep.subr.bf16.mxu0 %v2645
    %2936 = vmatpush1.bf16.msra.mxu0 %v2644
    %2937 = vmatprep.subr.bf16.mxu0 %v2649
    %2938 = vmatpush1.bf16.msra.mxu0 %v2648
    %2939 = vmatprep.subr.bf16.mxu0 %v2653
    %2940 = vmatpush1.bf16.msra.mxu0 %v2652
    %2941 = vmatprep.subr.bf16.mxu0 %v2657
    %2942 = vmatpush1.bf16.msra.mxu0 %v2656
    %2943 = vmatprep.subr.bf16.mxu0 %v2661
    %2944 = vmatpush1.bf16.msra.mxu0 %v2660
    %2945 = vmatprep.mubr.bf16.mxu0 %v1997
    %2946 = vmatmul.mubr.bf16.gmra.mrb[0].mxu0 %v1996
    %v2947 = vpop.f32.mrb[0].mxu0
    %v2948 = vadd.f32 %v2907, %v2947
    %v2949 = vpop.f32.mrb[0].mxu0
    %v2950 = vadd.f32 %v2909, %v2949
    %v2951 = vpop.f32.mrb[0].mxu0
    %v2952 = vpop.f32.mrb[0].mxu0
    %2953 = vdwg.mxu0
    %v2954 = vmul.f32 %v2866, 0.01
    %v2955 = vmul.f32 %v2868, 0.01
    %v2956 = vmul.f32 %v2948, 0.01
    %v2957 = vmul.f32 %v2950, 0.01
    %v2958 = vmax.f32 %v2866, %v2954
    %v2959 = vmax.f32 %v2868, %v2955
    %v2960 = vmax.f32 %v2948, %v2956
    %v2961 = vmax.f32 %v2950, %v2957
    %v2962 = vpack.c.bf16 %v2958, %v2958
    %v2963 = vpack.c.bf16 %v2959, %v2959
    %v2964 = vpack.c.bf16 %v2960, %v2960
    %v2965 = vpack.c.bf16 %v2961, %v2961
    %s2966 = scalar_lea.vmem [#allocation2], 3072
    %v2967 = vld [vmem:[%s2966] sm:$0xff]
    %v2968 = vld [vmem:[%s2966 + $0x8] sm:$0xff]
    %v2969 = vld [vmem:[%s2966 + $0x10] sm:$0xff]
    %v2970 = vld [vmem:[%s2966 + $0x18] sm:$0xff]
    %v2971 = vld [vmem:[%s2966 + $0x20] sm:$0xff]
    %v2972 = vld [vmem:[%s2966 + $0x28] sm:$0xff]
    %v2973 = vld [vmem:[%s2966 + $0x30] sm:$0xff]
    %v2974 = vld [vmem:[%s2966 + $0x38] sm:$0xff]
    %v2975 = vld [vmem:[%s2966 + $0x40] sm:$0xff]
    %v2976 = vld [vmem:[%s2966 + $0x48] sm:$0xff]
    %v2977 = vld [vmem:[%s2966 + $0x50] sm:$0xff]
    %v2978 = vld [vmem:[%s2966 + $0x58] sm:$0xff]
    %v2979 = vld [vmem:[%s2966 + $0x60] sm:$0xff]
    %v2980 = vld [vmem:[%s2966 + $0x68] sm:$0xff]
    %v2981 = vld [vmem:[%s2966 + $0x70] sm:$0xff]
    %v2982 = vld [vmem:[%s2966 + $0x78] sm:$0xff]
    %v2983 = vld [vmem:[%s2966 + $0x80] sm:$0xff]
    %v2984 = vld [vmem:[%s2966 + $0x88] sm:$0xff]
    %v2985 = vld [vmem:[%s2966 + $0x90] sm:$0xff]
    %v2986 = vld [vmem:[%s2966 + $0x98] sm:$0xff]
    %v2987 = vld [vmem:[%s2966 + $0xa0] sm:$0xff]
    %v2988 = vld [vmem:[%s2966 + $0xa8] sm:$0xff]
    %v2989 = vld [vmem:[%s2966 + $0xb0] sm:$0xff]
    %v2990 = vld [vmem:[%s2966 + $0xb8] sm:$0xff]
    %v2991 = vld [vmem:[%s2966 + $0xc0] sm:$0xff]
    %v2992 = vld [vmem:[%s2966 + $0xc8] sm:$0xff]
    %v2993 = vld [vmem:[%s2966 + $0xd0] sm:$0xff]
    %v2994 = vld [vmem:[%s2966 + $0xd8] sm:$0xff]
    %v2995 = vld [vmem:[%s2966 + $0xe0] sm:$0xff]
    %v2996 = vld [vmem:[%s2966 + $0xe8] sm:$0xff]
    %v2997 = vld [vmem:[%s2966 + $0xf0] sm:$0xff]
    %v2998 = vld [vmem:[%s2966 + $0xf8] sm:$0xff]
    %v2999 = vld [vmem:[%s2966 + $0x100] sm:$0xff]
    %v3000 = vld [vmem:[%s2966 + $0x108] sm:$0xff]
    %v3001 = vld [vmem:[%s2966 + $0x110] sm:$0xff]
    %v3002 = vld [vmem:[%s2966 + $0x118] sm:$0xff]
    %v3003 = vld [vmem:[%s2966 + $0x120] sm:$0xff]
    %v3004 = vld [vmem:[%s2966 + $0x128] sm:$0xff]
    %v3005 = vld [vmem:[%s2966 + $0x130] sm:$0xff]
    %v3006 = vld [vmem:[%s2966 + $0x138] sm:$0xff]
    %v3007 = vld [vmem:[%s2966 + $0x140] sm:$0xff]
    %v3008 = vld [vmem:[%s2966 + $0x148] sm:$0xff]
    %v3009 = vld [vmem:[%s2966 + $0x150] sm:$0xff]
    %v3010 = vld [vmem:[%s2966 + $0x158] sm:$0xff]
    %v3011 = vld [vmem:[%s2966 + $0x160] sm:$0xff]
    %v3012 = vld [vmem:[%s2966 + $0x168] sm:$0xff]
    %v3013 = vld [vmem:[%s2966 + $0x170] sm:$0xff]
    %v3014 = vld [vmem:[%s2966 + $0x178] sm:$0xff]
    %v3015 = vld [vmem:[%s2966 + $0x180] sm:$0xff]
    %v3016 = vld [vmem:[%s2966 + $0x188] sm:$0xff]
    %v3017 = vld [vmem:[%s2966 + $0x190] sm:$0xff]
    %v3018 = vld [vmem:[%s2966 + $0x198] sm:$0xff]
    %v3019 = vld [vmem:[%s2966 + $0x1a0] sm:$0xff]
    %v3020 = vld [vmem:[%s2966 + $0x1a8] sm:$0xff]
    %v3021 = vld [vmem:[%s2966 + $0x1b0] sm:$0xff]
    %v3022 = vld [vmem:[%s2966 + $0x1b8] sm:$0xff]
    %v3023 = vld [vmem:[%s2966 + $0x1c0] sm:$0xff]
    %v3024 = vld [vmem:[%s2966 + $0x1c8] sm:$0xff]
    %v3025 = vld [vmem:[%s2966 + $0x1d0] sm:$0xff]
    %v3026 = vld [vmem:[%s2966 + $0x1d8] sm:$0xff]
    %v3027 = vld [vmem:[%s2966 + $0x1e0] sm:$0xff]
    %v3028 = vld [vmem:[%s2966 + $0x1e8] sm:$0xff]
    %v3029 = vld [vmem:[%s2966 + $0x1f0] sm:$0xff]
    %v3030 = vld [vmem:[%s2966 + $0x1f8] sm:$0xff]
    %v3031 = vld [vmem:[%s2966 + $0x200] sm:$0xff]
    %v3032 = vld [vmem:[%s2966 + $0x208] sm:$0xff]
    %v3033 = vld [vmem:[%s2966 + $0x210] sm:$0xff]
    %v3034 = vld [vmem:[%s2966 + $0x218] sm:$0xff]
    %v3035 = vld [vmem:[%s2966 + $0x220] sm:$0xff]
    %v3036 = vld [vmem:[%s2966 + $0x228] sm:$0xff]
    %v3037 = vld [vmem:[%s2966 + $0x230] sm:$0xff]
    %v3038 = vld [vmem:[%s2966 + $0x238] sm:$0xff]
    %v3039 = vld [vmem:[%s2966 + $0x240] sm:$0xff]
    %v3040 = vld [vmem:[%s2966 + $0x248] sm:$0xff]
    %v3041 = vld [vmem:[%s2966 + $0x250] sm:$0xff]
    %v3042 = vld [vmem:[%s2966 + $0x258] sm:$0xff]
    %v3043 = vld [vmem:[%s2966 + $0x260] sm:$0xff]
    %v3044 = vld [vmem:[%s2966 + $0x268] sm:$0xff]
    %v3045 = vld [vmem:[%s2966 + $0x270] sm:$0xff]
    %v3046 = vld [vmem:[%s2966 + $0x278] sm:$0xff]
    %v3047 = vld [vmem:[%s2966 + $0x280] sm:$0xff]
    %v3048 = vld [vmem:[%s2966 + $0x288] sm:$0xff]
    %v3049 = vld [vmem:[%s2966 + $0x290] sm:$0xff]
    %v3050 = vld [vmem:[%s2966 + $0x298] sm:$0xff]
    %v3051 = vld [vmem:[%s2966 + $0x2a0] sm:$0xff]
    %v3052 = vld [vmem:[%s2966 + $0x2a8] sm:$0xff]
    %v3053 = vld [vmem:[%s2966 + $0x2b0] sm:$0xff]
    %v3054 = vld [vmem:[%s2966 + $0x2b8] sm:$0xff]
    %v3055 = vld [vmem:[%s2966 + $0x2c0] sm:$0xff]
    %v3056 = vld [vmem:[%s2966 + $0x2c8] sm:$0xff]
    %v3057 = vld [vmem:[%s2966 + $0x2d0] sm:$0xff]
    %v3058 = vld [vmem:[%s2966 + $0x2d8] sm:$0xff]
    %v3059 = vld [vmem:[%s2966 + $0x2e0] sm:$0xff]
    %v3060 = vld [vmem:[%s2966 + $0x2e8] sm:$0xff]
    %v3061 = vld [vmem:[%s2966 + $0x2f0] sm:$0xff]
    %v3062 = vld [vmem:[%s2966 + $0x2f8] sm:$0xff]
    %v3063 = vld [vmem:[%s2966 + $0x300] sm:$0xff]
    %v3064 = vld [vmem:[%s2966 + $0x308] sm:$0xff]
    %v3065 = vld [vmem:[%s2966 + $0x310] sm:$0xff]
    %v3066 = vld [vmem:[%s2966 + $0x318] sm:$0xff]
    %v3067 = vld [vmem:[%s2966 + $0x320] sm:$0xff]
    %v3068 = vld [vmem:[%s2966 + $0x328] sm:$0xff]
    %v3069 = vld [vmem:[%s2966 + $0x330] sm:$0xff]
    %v3070 = vld [vmem:[%s2966 + $0x338] sm:$0xff]
    %v3071 = vld [vmem:[%s2966 + $0x340] sm:$0xff]
    %v3072 = vld [vmem:[%s2966 + $0x348] sm:$0xff]
    %v3073 = vld [vmem:[%s2966 + $0x350] sm:$0xff]
    %v3074 = vld [vmem:[%s2966 + $0x358] sm:$0xff]
    %v3075 = vld [vmem:[%s2966 + $0x360] sm:$0xff]
    %v3076 = vld [vmem:[%s2966 + $0x368] sm:$0xff]
    %v3077 = vld [vmem:[%s2966 + $0x370] sm:$0xff]
    %v3078 = vld [vmem:[%s2966 + $0x378] sm:$0xff]
    %v3079 = vld [vmem:[%s2966 + $0x380] sm:$0xff]
    %v3080 = vld [vmem:[%s2966 + $0x388] sm:$0xff]
    %v3081 = vld [vmem:[%s2966 + $0x390] sm:$0xff]
    %v3082 = vld [vmem:[%s2966 + $0x398] sm:$0xff]
    %v3083 = vld [vmem:[%s2966 + $0x3a0] sm:$0xff]
    %v3084 = vld [vmem:[%s2966 + $0x3a8] sm:$0xff]
    %v3085 = vld [vmem:[%s2966 + $0x3b0] sm:$0xff]
    %v3086 = vld [vmem:[%s2966 + $0x3b8] sm:$0xff]
    %v3087 = vld [vmem:[%s2966 + $0x3c0] sm:$0xff]
    %v3088 = vld [vmem:[%s2966 + $0x3c8] sm:$0xff]
    %v3089 = vld [vmem:[%s2966 + $0x3d0] sm:$0xff]
    %v3090 = vld [vmem:[%s2966 + $0x3d8] sm:$0xff]
    %v3091 = vld [vmem:[%s2966 + $0x3e0] sm:$0xff]
    %v3092 = vld [vmem:[%s2966 + $0x3e8] sm:$0xff]
    %v3093 = vld [vmem:[%s2966 + $0x3f0] sm:$0xff]
    %v3094 = vld [vmem:[%s2966 + $0x3f8] sm:$0xff]
    %s3095 = scalar_lea.vmem [#allocation4], 12
    %v3096 = vld [vmem:[%s3095] sm:$0xf]
    %v3098 = vlaneseq
    %v3099 = vshrl.u32 %v3098, 7
    %v3100 = vsub.s32 0, %v3099
    %v3101 = vrot.slane %v3096, %v3100
    %v3102 = vlaneseq
    %v3103 = vshrl.u32 %v3102, 7
    %v3104 = vsub.s32 1, %v3103
    %v3105 = vrot.slane %v3096, %v3104
    %v3106 = vlaneseq
    %v3107 = vshrl.u32 %v3106, 7
    %v3108 = vsub.s32 2, %v3107
    %v3109 = vrot.slane %v3096, %v3108
    %v3110 = vlaneseq
    %v3111 = vshrl.u32 %v3110, 7
    %v3112 = vsub.s32 3, %v3111
    %v3113 = vrot.slane %v3096, %v3112
    %v3246 = vunpack.c.l.b16 %v2967
    %v3247 = vunpack.c.h.b16 %v2967
    %v3248 = vunpack.c.l.b16 %v2968
    %v3249 = vunpack.c.h.b16 %v2968
    %v3250 = vunpack.c.l.b16 %v2969
    %v3251 = vunpack.c.h.b16 %v2969
    %v3252 = vunpack.c.l.b16 %v2970
    %v3253 = vunpack.c.h.b16 %v2970
    %v3254 = vunpack.c.l.b16 %v2971
    %v3255 = vunpack.c.h.b16 %v2971
    %v3256 = vunpack.c.l.b16 %v2972
    %v3257 = vunpack.c.h.b16 %v2972
    %v3258 = vunpack.c.l.b16 %v2973
    %v3259 = vunpack.c.h.b16 %v2973
    %v3260 = vunpack.c.l.b16 %v2974
    %v3261 = vunpack.c.h.b16 %v2974
    %v3262 = vunpack.c.l.b16 %v2975
    %v3263 = vunpack.c.h.b16 %v2975
    %v3264 = vunpack.c.l.b16 %v2976
    %v3265 = vunpack.c.h.b16 %v2976
    %v3266 = vunpack.c.l.b16 %v2977
    %v3267 = vunpack.c.h.b16 %v2977
    %v3268 = vunpack.c.l.b16 %v2978
    %v3269 = vunpack.c.h.b16 %v2978
    %v3270 = vunpack.c.l.b16 %v2979
    %v3271 = vunpack.c.h.b16 %v2979
    %v3272 = vunpack.c.l.b16 %v2980
    %v3273 = vunpack.c.h.b16 %v2980
    %v3274 = vunpack.c.l.b16 %v2981
    %v3275 = vunpack.c.h.b16 %v2981
    %v3276 = vunpack.c.l.b16 %v2982
    %v3277 = vunpack.c.h.b16 %v2982
    %v3278 = vunpack.c.l.b16 %v2983
    %v3279 = vunpack.c.h.b16 %v2983
    %v3280 = vunpack.c.l.b16 %v2984
    %v3281 = vunpack.c.h.b16 %v2984
    %v3282 = vunpack.c.l.b16 %v2985
    %v3283 = vunpack.c.h.b16 %v2985
    %v3284 = vunpack.c.l.b16 %v2986
    %v3285 = vunpack.c.h.b16 %v2986
    %v3286 = vunpack.c.l.b16 %v2987
    %v3287 = vunpack.c.h.b16 %v2987
    %v3288 = vunpack.c.l.b16 %v2988
    %v3289 = vunpack.c.h.b16 %v2988
    %v3290 = vunpack.c.l.b16 %v2989
    %v3291 = vunpack.c.h.b16 %v2989
    %v3292 = vunpack.c.l.b16 %v2990
    %v3293 = vunpack.c.h.b16 %v2990
    %v3294 = vunpack.c.l.b16 %v2991
    %v3295 = vunpack.c.h.b16 %v2991
    %v3296 = vunpack.c.l.b16 %v2992
    %v3297 = vunpack.c.h.b16 %v2992
    %v3298 = vunpack.c.l.b16 %v2993
    %v3299 = vunpack.c.h.b16 %v2993
    %v3300 = vunpack.c.l.b16 %v2994
    %v3301 = vunpack.c.h.b16 %v2994
    %v3302 = vunpack.c.l.b16 %v2995
    %v3303 = vunpack.c.h.b16 %v2995
    %v3304 = vunpack.c.l.b16 %v2996
    %v3305 = vunpack.c.h.b16 %v2996
    %v3306 = vunpack.c.l.b16 %v2997
    %v3307 = vunpack.c.h.b16 %v2997
    %v3308 = vunpack.c.l.b16 %v2998
    %v3309 = vunpack.c.h.b16 %v2998
    %v3310 = vunpack.c.l.b16 %v2999
    %v3311 = vunpack.c.h.b16 %v2999
    %v3312 = vunpack.c.l.b16 %v3000
    %v3313 = vunpack.c.h.b16 %v3000
    %v3314 = vunpack.c.l.b16 %v3001
    %v3315 = vunpack.c.h.b16 %v3001
    %v3316 = vunpack.c.l.b16 %v3002
    %v3317 = vunpack.c.h.b16 %v3002
    %v3318 = vunpack.c.l.b16 %v3003
    %v3319 = vunpack.c.h.b16 %v3003
    %v3320 = vunpack.c.l.b16 %v3004
    %v3321 = vunpack.c.h.b16 %v3004
    %v3322 = vunpack.c.l.b16 %v3005
    %v3323 = vunpack.c.h.b16 %v3005
    %v3324 = vunpack.c.l.b16 %v3006
    %v3325 = vunpack.c.h.b16 %v3006
    %v3326 = vunpack.c.l.b16 %v3007
    %v3327 = vunpack.c.h.b16 %v3007
    %v3328 = vunpack.c.l.b16 %v3008
    %v3329 = vunpack.c.h.b16 %v3008
    %v3330 = vunpack.c.l.b16 %v3009
    %v3331 = vunpack.c.h.b16 %v3009
    %v3332 = vunpack.c.l.b16 %v3010
    %v3333 = vunpack.c.h.b16 %v3010
    %v3334 = vunpack.c.l.b16 %v3011
    %v3335 = vunpack.c.h.b16 %v3011
    %v3336 = vunpack.c.l.b16 %v3012
    %v3337 = vunpack.c.h.b16 %v3012
    %v3338 = vunpack.c.l.b16 %v3013
    %v3339 = vunpack.c.h.b16 %v3013
    %v3340 = vunpack.c.l.b16 %v3014
    %v3341 = vunpack.c.h.b16 %v3014
    %v3342 = vunpack.c.l.b16 %v3015
    %v3343 = vunpack.c.h.b16 %v3015
    %v3344 = vunpack.c.l.b16 %v3016
    %v3345 = vunpack.c.h.b16 %v3016
    %v3346 = vunpack.c.l.b16 %v3017
    %v3347 = vunpack.c.h.b16 %v3017
    %v3348 = vunpack.c.l.b16 %v3018
    %v3349 = vunpack.c.h.b16 %v3018
    %v3350 = vunpack.c.l.b16 %v3019
    %v3351 = vunpack.c.h.b16 %v3019
    %v3352 = vunpack.c.l.b16 %v3020
    %v3353 = vunpack.c.h.b16 %v3020
    %v3354 = vunpack.c.l.b16 %v3021
    %v3355 = vunpack.c.h.b16 %v3021
    %v3356 = vunpack.c.l.b16 %v3022
    %v3357 = vunpack.c.h.b16 %v3022
    %v3358 = vunpack.c.l.b16 %v3023
    %v3359 = vunpack.c.h.b16 %v3023
    %v3360 = vunpack.c.l.b16 %v3024
    %v3361 = vunpack.c.h.b16 %v3024
    %v3362 = vunpack.c.l.b16 %v3025
    %v3363 = vunpack.c.h.b16 %v3025
    %v3364 = vunpack.c.l.b16 %v3026
    %v3365 = vunpack.c.h.b16 %v3026
    %v3366 = vunpack.c.l.b16 %v3027
    %v3367 = vunpack.c.h.b16 %v3027
    %v3368 = vunpack.c.l.b16 %v3028
    %v3369 = vunpack.c.h.b16 %v3028
    %v3370 = vunpack.c.l.b16 %v3029
    %v3371 = vunpack.c.h.b16 %v3029
    %v3372 = vunpack.c.l.b16 %v3030
    %v3373 = vunpack.c.h.b16 %v3030
    %v3374 = vunpack.c.l.b16 %v3031
    %v3375 = vunpack.c.h.b16 %v3031
    %v3376 = vunpack.c.l.b16 %v3032
    %v3377 = vunpack.c.h.b16 %v3032
    %v3378 = vunpack.c.l.b16 %v3033
    %v3379 = vunpack.c.h.b16 %v3033
    %v3380 = vunpack.c.l.b16 %v3034
    %v3381 = vunpack.c.h.b16 %v3034
    %v3382 = vunpack.c.l.b16 %v3035
    %v3383 = vunpack.c.h.b16 %v3035
    %v3384 = vunpack.c.l.b16 %v3036
    %v3385 = vunpack.c.h.b16 %v3036
    %v3386 = vunpack.c.l.b16 %v3037
    %v3387 = vunpack.c.h.b16 %v3037
    %v3388 = vunpack.c.l.b16 %v3038
    %v3389 = vunpack.c.h.b16 %v3038
    %v3390 = vunpack.c.l.b16 %v3039
    %v3391 = vunpack.c.h.b16 %v3039
    %v3392 = vunpack.c.l.b16 %v3040
    %v3393 = vunpack.c.h.b16 %v3040
    %v3394 = vunpack.c.l.b16 %v3041
    %v3395 = vunpack.c.h.b16 %v3041
    %v3396 = vunpack.c.l.b16 %v3042
    %v3397 = vunpack.c.h.b16 %v3042
    %v3398 = vunpack.c.l.b16 %v3043
    %v3399 = vunpack.c.h.b16 %v3043
    %v3400 = vunpack.c.l.b16 %v3044
    %v3401 = vunpack.c.h.b16 %v3044
    %v3402 = vunpack.c.l.b16 %v3045
    %v3403 = vunpack.c.h.b16 %v3045
    %v3404 = vunpack.c.l.b16 %v3046
    %v3405 = vunpack.c.h.b16 %v3046
    %v3406 = vunpack.c.l.b16 %v3047
    %v3407 = vunpack.c.h.b16 %v3047
    %v3408 = vunpack.c.l.b16 %v3048
    %v3409 = vunpack.c.h.b16 %v3048
    %v3410 = vunpack.c.l.b16 %v3049
    %v3411 = vunpack.c.h.b16 %v3049
    %v3412 = vunpack.c.l.b16 %v3050
    %v3413 = vunpack.c.h.b16 %v3050
    %v3414 = vunpack.c.l.b16 %v3051
    %v3415 = vunpack.c.h.b16 %v3051
    %v3416 = vunpack.c.l.b16 %v3052
    %v3417 = vunpack.c.h.b16 %v3052
    %v3418 = vunpack.c.l.b16 %v3053
    %v3419 = vunpack.c.h.b16 %v3053
    %v3420 = vunpack.c.l.b16 %v3054
    %v3421 = vunpack.c.h.b16 %v3054
    %v3422 = vunpack.c.l.b16 %v3055
    %v3423 = vunpack.c.h.b16 %v3055
    %v3424 = vunpack.c.l.b16 %v3056
    %v3425 = vunpack.c.h.b16 %v3056
    %v3426 = vunpack.c.l.b16 %v3057
    %v3427 = vunpack.c.h.b16 %v3057
    %v3428 = vunpack.c.l.b16 %v3058
    %v3429 = vunpack.c.h.b16 %v3058
    %v3430 = vunpack.c.l.b16 %v3059
    %v3431 = vunpack.c.h.b16 %v3059
    %v3432 = vunpack.c.l.b16 %v3060
    %v3433 = vunpack.c.h.b16 %v3060
    %v3434 = vunpack.c.l.b16 %v3061
    %v3435 = vunpack.c.h.b16 %v3061
    %v3436 = vunpack.c.l.b16 %v3062
    %v3437 = vunpack.c.h.b16 %v3062
    %v3438 = vunpack.c.l.b16 %v3063
    %v3439 = vunpack.c.h.b16 %v3063
    %v3440 = vunpack.c.l.b16 %v3064
    %v3441 = vunpack.c.h.b16 %v3064
    %v3442 = vunpack.c.l.b16 %v3065
    %v3443 = vunpack.c.h.b16 %v3065
    %v3444 = vunpack.c.l.b16 %v3066
    %v3445 = vunpack.c.h.b16 %v3066
    %v3446 = vunpack.c.l.b16 %v3067
    %v3447 = vunpack.c.h.b16 %v3067
    %v3448 = vunpack.c.l.b16 %v3068
    %v3449 = vunpack.c.h.b16 %v3068
    %v3450 = vunpack.c.l.b16 %v3069
    %v3451 = vunpack.c.h.b16 %v3069
    %v3452 = vunpack.c.l.b16 %v3070
    %v3453 = vunpack.c.h.b16 %v3070
    %v3454 = vunpack.c.l.b16 %v3071
    %v3455 = vunpack.c.h.b16 %v3071
    %v3456 = vunpack.c.l.b16 %v3072
    %v3457 = vunpack.c.h.b16 %v3072
    %v3458 = vunpack.c.l.b16 %v3073
    %v3459 = vunpack.c.h.b16 %v3073
    %v3460 = vunpack.c.l.b16 %v3074
    %v3461 = vunpack.c.h.b16 %v3074
    %v3462 = vunpack.c.l.b16 %v3075
    %v3463 = vunpack.c.h.b16 %v3075
    %v3464 = vunpack.c.l.b16 %v3076
    %v3465 = vunpack.c.h.b16 %v3076
    %v3466 = vunpack.c.l.b16 %v3077
    %v3467 = vunpack.c.h.b16 %v3077
    %v3468 = vunpack.c.l.b16 %v3078
    %v3469 = vunpack.c.h.b16 %v3078
    %v3470 = vunpack.c.l.b16 %v3079
    %v3471 = vunpack.c.h.b16 %v3079
    %v3472 = vunpack.c.l.b16 %v3080
    %v3473 = vunpack.c.h.b16 %v3080
    %v3474 = vunpack.c.l.b16 %v3081
    %v3475 = vunpack.c.h.b16 %v3081
    %v3476 = vunpack.c.l.b16 %v3082
    %v3477 = vunpack.c.h.b16 %v3082
    %v3478 = vunpack.c.l.b16 %v3083
    %v3479 = vunpack.c.h.b16 %v3083
    %v3480 = vunpack.c.l.b16 %v3084
    %v3481 = vunpack.c.h.b16 %v3084
    %v3482 = vunpack.c.l.b16 %v3085
    %v3483 = vunpack.c.h.b16 %v3085
    %v3484 = vunpack.c.l.b16 %v3086
    %v3485 = vunpack.c.h.b16 %v3086
    %v3486 = vunpack.c.l.b16 %v3087
    %v3487 = vunpack.c.h.b16 %v3087
    %v3488 = vunpack.c.l.b16 %v3088
    %v3489 = vunpack.c.h.b16 %v3088
    %v3490 = vunpack.c.l.b16 %v3089
    %v3491 = vunpack.c.h.b16 %v3089
    %v3492 = vunpack.c.l.b16 %v3090
    %v3493 = vunpack.c.h.b16 %v3090
    %v3494 = vunpack.c.l.b16 %v3091
    %v3495 = vunpack.c.h.b16 %v3091
    %v3496 = vunpack.c.l.b16 %v3092
    %v3497 = vunpack.c.h.b16 %v3092
    %v3498 = vunpack.c.l.b16 %v3093
    %v3499 = vunpack.c.h.b16 %v3093
    %v3500 = vunpack.c.l.b16 %v3094
    %v3501 = vunpack.c.h.b16 %v3094
    %v3502 = vpack.c.b16 %v3250, %v3246
    %v3503 = vpack.c.b16 %v3251, %v3247
    %v3504 = vpack.c.b16 %v3252, %v3248
    %v3505 = vpack.c.b16 %v3253, %v3249
    %v3506 = vpack.c.b16 %v3258, %v3254
    %v3507 = vpack.c.b16 %v3259, %v3255
    %v3508 = vpack.c.b16 %v3260, %v3256
    %v3509 = vpack.c.b16 %v3261, %v3257
    %v3510 = vpack.c.b16 %v3266, %v3262
    %v3511 = vpack.c.b16 %v3267, %v3263
    %v3512 = vpack.c.b16 %v3268, %v3264
    %v3513 = vpack.c.b16 %v3269, %v3265
    %v3514 = vpack.c.b16 %v3274, %v3270
    %v3515 = vpack.c.b16 %v3275, %v3271
    %v3516 = vpack.c.b16 %v3276, %v3272
    %v3517 = vpack.c.b16 %v3277, %v3273
    %v3518 = vpack.c.b16 %v3282, %v3278
    %v3519 = vpack.c.b16 %v3283, %v3279
    %v3520 = vpack.c.b16 %v3284, %v3280
    %v3521 = vpack.c.b16 %v3285, %v3281
    %v3522 = vpack.c.b16 %v3290, %v3286
    %v3523 = vpack.c.b16 %v3291, %v3287
    %v3524 = vpack.c.b16 %v3292, %v3288
    %v3525 = vpack.c.b16 %v3293, %v3289
    %v3526 = vpack.c.b16 %v3298, %v3294
    %v3527 = vpack.c.b16 %v3299, %v3295
    %v3528 = vpack.c.b16 %v3300, %v3296
    %v3529 = vpack.c.b16 %v3301, %v3297
    %v3530 = vpack.c.b16 %v3306, %v3302
    %v3531 = vpack.c.b16 %v3307, %v3303
    %v3532 = vpack.c.b16 %v3308, %v3304
    %v3533 = vpack.c.b16 %v3309, %v3305
    %v3534 = vpack.c.b16 %v3314, %v3310
    %v3535 = vpack.c.b16 %v3315, %v3311
    %v3536 = vpack.c.b16 %v3316, %v3312
    %v3537 = vpack.c.b16 %v3317, %v3313
    %v3538 = vpack.c.b16 %v3322, %v3318
    %v3539 = vpack.c.b16 %v3323, %v3319
    %v3540 = vpack.c.b16 %v3324, %v3320
    %v3541 = vpack.c.b16 %v3325, %v3321
    %v3542 = vpack.c.b16 %v3330, %v3326
    %v3543 = vpack.c.b16 %v3331, %v3327
    %v3544 = vpack.c.b16 %v3332, %v3328
    %v3545 = vpack.c.b16 %v3333, %v3329
    %v3546 = vpack.c.b16 %v3338, %v3334
    %v3547 = vpack.c.b16 %v3339, %v3335
    %v3548 = vpack.c.b16 %v3340, %v3336
    %v3549 = vpack.c.b16 %v3341, %v3337
    %v3550 = vpack.c.b16 %v3346, %v3342
    %v3551 = vpack.c.b16 %v3347, %v3343
    %v3552 = vpack.c.b16 %v3348, %v3344
    %v3553 = vpack.c.b16 %v3349, %v3345
    %v3554 = vpack.c.b16 %v3354, %v3350
    %v3555 = vpack.c.b16 %v3355, %v3351
    %v3556 = vpack.c.b16 %v3356, %v3352
    %v3557 = vpack.c.b16 %v3357, %v3353
    %v3558 = vpack.c.b16 %v3362, %v3358
    %v3559 = vpack.c.b16 %v3363, %v3359
    %v3560 = vpack.c.b16 %v3364, %v3360
    %v3561 = vpack.c.b16 %v3365, %v3361
    %v3562 = vpack.c.b16 %v3370, %v3366
    %v3563 = vpack.c.b16 %v3371, %v3367
    %v3564 = vpack.c.b16 %v3372, %v3368
    %v3565 = vpack.c.b16 %v3373, %v3369
    %v3566 = vpack.c.b16 %v3378, %v3374
    %v3567 = vpack.c.b16 %v3379, %v3375
    %v3568 = vpack.c.b16 %v3380, %v3376
    %v3569 = vpack.c.b16 %v3381, %v3377
    %v3570 = vpack.c.b16 %v3386, %v3382
    %v3571 = vpack.c.b16 %v3387, %v3383
    %v3572 = vpack.c.b16 %v3388, %v3384
    %v3573 = vpack.c.b16 %v3389, %v3385
    %v3574 = vpack.c.b16 %v3394, %v3390
    %v3575 = vpack.c.b16 %v3395, %v3391
    %v3576 = vpack.c.b16 %v3396, %v3392
    %v3577 = vpack.c.b16 %v3397, %v3393
    %v3578 = vpack.c.b16 %v3402, %v3398
    %v3579 = vpack.c.b16 %v3403, %v3399
    %v3580 = vpack.c.b16 %v3404, %v3400
    %v3581 = vpack.c.b16 %v3405, %v3401
    %v3582 = vpack.c.b16 %v3410, %v3406
    %v3583 = vpack.c.b16 %v3411, %v3407
    %v3584 = vpack.c.b16 %v3412, %v3408
    %v3585 = vpack.c.b16 %v3413, %v3409
    %v3586 = vpack.c.b16 %v3418, %v3414
    %v3587 = vpack.c.b16 %v3419, %v3415
    %v3588 = vpack.c.b16 %v3420, %v3416
    %v3589 = vpack.c.b16 %v3421, %v3417
    %v3590 = vpack.c.b16 %v3426, %v3422
    %v3591 = vpack.c.b16 %v3427, %v3423
    %v3592 = vpack.c.b16 %v3428, %v3424
    %v3593 = vpack.c.b16 %v3429, %v3425
    %v3594 = vpack.c.b16 %v3434, %v3430
    %v3595 = vpack.c.b16 %v3435, %v3431
    %v3596 = vpack.c.b16 %v3436, %v3432
    %v3597 = vpack.c.b16 %v3437, %v3433
    %v3598 = vpack.c.b16 %v3442, %v3438
    %v3599 = vpack.c.b16 %v3443, %v3439
    %v3600 = vpack.c.b16 %v3444, %v3440
    %v3601 = vpack.c.b16 %v3445, %v3441
    %v3602 = vpack.c.b16 %v3450, %v3446
    %v3603 = vpack.c.b16 %v3451, %v3447
    %v3604 = vpack.c.b16 %v3452, %v3448
    %v3605 = vpack.c.b16 %v3453, %v3449
    %v3606 = vpack.c.b16 %v3458, %v3454
    %v3607 = vpack.c.b16 %v3459, %v3455
    %v3608 = vpack.c.b16 %v3460, %v3456
    %v3609 = vpack.c.b16 %v3461, %v3457
    %v3610 = vpack.c.b16 %v3466, %v3462
    %v3611 = vpack.c.b16 %v3467, %v3463
    %v3612 = vpack.c.b16 %v3468, %v3464
    %v3613 = vpack.c.b16 %v3469, %v3465
    %v3614 = vpack.c.b16 %v3474, %v3470
    %v3615 = vpack.c.b16 %v3475, %v3471
    %v3616 = vpack.c.b16 %v3476, %v3472
    %v3617 = vpack.c.b16 %v3477, %v3473
    %v3618 = vpack.c.b16 %v3482, %v3478
    %v3619 = vpack.c.b16 %v3483, %v3479
    %v3620 = vpack.c.b16 %v3484, %v3480
    %v3621 = vpack.c.b16 %v3485, %v3481
    %v3622 = vpack.c.b16 %v3490, %v3486
    %v3623 = vpack.c.b16 %v3491, %v3487
    %v3624 = vpack.c.b16 %v3492, %v3488
    %v3625 = vpack.c.b16 %v3493, %v3489
    %v3626 = vpack.c.b16 %v3498, %v3494
    %v3627 = vpack.c.b16 %v3499, %v3495
    %v3628 = vpack.c.b16 %v3500, %v3496
    %v3629 = vpack.c.b16 %v3501, %v3497
    %3758 = vmatprep.subr.bf16.mxu0 %v3503
    %3759 = vmatpush1.bf16.msra.mxu0 %v3502
    %3760 = vmatprep.subr.bf16.mxu0 %v3507
    %3761 = vmatpush1.bf16.msra.mxu0 %v3506
    %3762 = vmatprep.subr.bf16.mxu0 %v3511
    %3763 = vmatpush1.bf16.msra.mxu0 %v3510
    %3764 = vmatprep.subr.bf16.mxu0 %v3515
    %3765 = vmatpush1.bf16.msra.mxu0 %v3514
    %3766 = vmatprep.subr.bf16.mxu0 %v3519
    %3767 = vmatpush1.bf16.msra.mxu0 %v3518
    %3768 = vmatprep.subr.bf16.mxu0 %v3523
    %3769 = vmatpush1.bf16.msra.mxu0 %v3522
    %3770 = vmatprep.subr.bf16.mxu0 %v3527
    %3771 = vmatpush1.bf16.msra.mxu0 %v3526
    %3772 = vmatprep.subr.bf16.mxu0 %v3531
    %3773 = vmatpush1.bf16.msra.mxu0 %v3530
    %3774 = vmatprep.subr.bf16.mxu0 %v3535
    %3775 = vmatpush1.bf16.msra.mxu0 %v3534
    %3776 = vmatprep.subr.bf16.mxu0 %v3539
    %3777 = vmatpush1.bf16.msra.mxu0 %v3538
    %3778 = vmatprep.subr.bf16.mxu0 %v3543
    %3779 = vmatpush1.bf16.msra.mxu0 %v3542
    %3780 = vmatprep.subr.bf16.mxu0 %v3547
    %3781 = vmatpush1.bf16.msra.mxu0 %v3546
    %3782 = vmatprep.subr.bf16.mxu0 %v3551
    %3783 = vmatpush1.bf16.msra.mxu0 %v3550
    %3784 = vmatprep.subr.bf16.mxu0 %v3555
    %3785 = vmatpush1.bf16.msra.mxu0 %v3554
    %3786 = vmatprep.subr.bf16.mxu0 %v3559
    %3787 = vmatpush1.bf16.msra.mxu0 %v3558
    %3788 = vmatprep.subr.bf16.mxu0 %v3563
    %3789 = vmatpush1.bf16.msra.mxu0 %v3562
    %3790 = vmatprep.mubr.bf16.mxu0 %v2963
    %3791 = vmatmul.mubr.bf16.gmra.mrb[0].mxu0 %v2962
    %v3792 = vpop.f32.mrb[0].mxu0
    %v3793 = vadd.f32 %v3101, %v3792
    %v3794 = vpop.f32.mrb[0].mxu0
    %v3795 = vadd.f32 %v3105, %v3794
    %v3796 = vpop.f32.mrb[0].mxu0
    %v3797 = vpop.f32.mrb[0].mxu0
    %3798 = vdwg.mxu0
    %3799 = vmatprep.subr.bf16.mxu0 %v3567
    %3800 = vmatpush1.bf16.msra.mxu0 %v3566
    %3801 = vmatprep.subr.bf16.mxu0 %v3571
    %3802 = vmatpush1.bf16.msra.mxu0 %v3570
    %3803 = vmatprep.subr.bf16.mxu0 %v3575
    %3804 = vmatpush1.bf16.msra.mxu0 %v3574
    %3805 = vmatprep.subr.bf16.mxu0 %v3579
    %3806 = vmatpush1.bf16.msra.mxu0 %v3578
    %3807 = vmatprep.subr.bf16.mxu0 %v3583
    %3808 = vmatpush1.bf16.msra.mxu0 %v3582
    %3809 = vmatprep.subr.bf16.mxu0 %v3587
    %3810 = vmatpush1.bf16.msra.mxu0 %v3586
    %3811 = vmatprep.subr.bf16.mxu0 %v3591
    %3812 = vmatpush1.bf16.msra.mxu0 %v3590
    %3813 = vmatprep.subr.bf16.mxu0 %v3595
    %3814 = vmatpush1.bf16.msra.mxu0 %v3594
    %3815 = vmatprep.subr.bf16.mxu0 %v3599
    %3816 = vmatpush1.bf16.msra.mxu0 %v3598
    %3817 = vmatprep.subr.bf16.mxu0 %v3603
    %3818 = vmatpush1.bf16.msra.mxu0 %v3602
    %3819 = vmatprep.subr.bf16.mxu0 %v3607
    %3820 = vmatpush1.bf16.msra.mxu0 %v3606
    %3821 = vmatprep.subr.bf16.mxu0 %v3611
    %3822 = vmatpush1.bf16.msra.mxu0 %v3610
    %3823 = vmatprep.subr.bf16.mxu0 %v3615
    %3824 = vmatpush1.bf16.msra.mxu0 %v3614
    %3825 = vmatprep.subr.bf16.mxu0 %v3619
    %3826 = vmatpush1.bf16.msra.mxu0 %v3618
    %3827 = vmatprep.subr.bf16.mxu0 %v3623
    %3828 = vmatpush1.bf16.msra.mxu0 %v3622
    %3829 = vmatprep.subr.bf16.mxu0 %v3627
    %3830 = vmatpush1.bf16.msra.mxu0 %v3626
    %3831 = vmatprep.mubr.bf16.mxu0 %v2965
    %3832 = vmatmul.mubr.bf16.gmra.mrb[0].mxu0 %v2964
    %v3833 = vpop.f32.mrb[0].mxu0
    %v3834 = vadd.f32 %v3793, %v3833
    %v3835 = vpop.f32.mrb[0].mxu0
    %v3836 = vadd.f32 %v3795, %v3835
    %v3837 = vpop.f32.mrb[0].mxu0
    %v3838 = vpop.f32.mrb[0].mxu0
    %3839 = vdwg.mxu0
    %3840 = vmatprep.subr.bf16.mxu0 %v3505
    %3841 = vmatpush1.bf16.msra.mxu0 %v3504
    %3842 = vmatprep.subr.bf16.mxu0 %v3509
    %3843 = vmatpush1.bf16.msra.mxu0 %v3508
    %3844 = vmatprep.subr.bf16.mxu0 %v3513
    %3845 = vmatpush1.bf16.msra.mxu0 %v3512
    %3846 = vmatprep.subr.bf16.mxu0 %v3517
    %3847 = vmatpush1.bf16.msra.mxu0 %v3516
    %3848 = vmatprep.subr.bf16.mxu0 %v3521
    %3849 = vmatpush1.bf16.msra.mxu0 %v3520
    %3850 = vmatprep.subr.bf16.mxu0 %v3525
    %3851 = vmatpush1.bf16.msra.mxu0 %v3524
    %3852 = vmatprep.subr.bf16.mxu0 %v3529
    %3853 = vmatpush1.bf16.msra.mxu0 %v3528
    %3854 = vmatprep.subr.bf16.mxu0 %v3533
    %3855 = vmatpush1.bf16.msra.mxu0 %v3532
    %3856 = vmatprep.subr.bf16.mxu0 %v3537
    %3857 = vmatpush1.bf16.msra.mxu0 %v3536
    %3858 = vmatprep.subr.bf16.mxu0 %v3541
    %3859 = vmatpush1.bf16.msra.mxu0 %v3540
    %3860 = vmatprep.subr.bf16.mxu0 %v3545
    %3861 = vmatpush1.bf16.msra.mxu0 %v3544
    %3862 = vmatprep.subr.bf16.mxu0 %v3549
    %3863 = vmatpush1.bf16.msra.mxu0 %v3548
    %3864 = vmatprep.subr.bf16.mxu0 %v3553
    %3865 = vmatpush1.bf16.msra.mxu0 %v3552
    %3866 = vmatprep.subr.bf16.mxu0 %v3557
    %3867 = vmatpush1.bf16.msra.mxu0 %v3556
    %3868 = vmatprep.subr.bf16.mxu0 %v3561
    %3869 = vmatpush1.bf16.msra.mxu0 %v3560
    %3870 = vmatprep.subr.bf16.mxu0 %v3565
    %3871 = vmatpush1.bf16.msra.mxu0 %v3564
    %3872 = vmatprep.mubr.bf16.mxu0 %v2963
    %3873 = vmatmul.mubr.bf16.gmra.mrb[0].mxu0 %v2962
    %v3874 = vpop.f32.mrb[0].mxu0
    %v3875 = vadd.f32 %v3109, %v3874
    %v3876 = vpop.f32.mrb[0].mxu0
    %v3877 = vadd.f32 %v3113, %v3876
    %v3878 = vpop.f32.mrb[0].mxu0
    %v3879 = vpop.f32.mrb[0].mxu0
    %3880 = vdwg.mxu0
    %3881 = vmatprep.subr.bf16.mxu0 %v3569
    %3882 = vmatpush1.bf16.msra.mxu0 %v3568
    %3883 = vmatprep.subr.bf16.mxu0 %v3573
    %3884 = vmatpush1.bf16.msra.mxu0 %v3572
    %3885 = vmatprep.subr.bf16.mxu0 %v3577
    %3886 = vmatpush1.bf16.msra.mxu0 %v3576
    %3887 = vmatprep.subr.bf16.mxu0 %v3581
    %3888 = vmatpush1.bf16.msra.mxu0 %v3580
    %3889 = vmatprep.subr.bf16.mxu0 %v3585
    %3890 = vmatpush1.bf16.msra.mxu0 %v3584
    %3891 = vmatprep.subr.bf16.mxu0 %v3589
    %3892 = vmatpush1.bf16.msra.mxu0 %v3588
    %3893 = vmatprep.subr.bf16.mxu0 %v3593
    %3894 = vmatpush1.bf16.msra.mxu0 %v3592
    %3895 = vmatprep.subr.bf16.mxu0 %v3597
    %3896 = vmatpush1.bf16.msra.mxu0 %v3596
    %3897 = vmatprep.subr.bf16.mxu0 %v3601
    %3898 = vmatpush1.bf16.msra.mxu0 %v3600
    %3899 = vmatprep.subr.bf16.mxu0 %v3605
    %3900 = vmatpush1.bf16.msra.mxu0 %v3604
    %3901 = vmatprep.subr.bf16.mxu0 %v3609
    %3902 = vmatpush1.bf16.msra.mxu0 %v3608
    %3903 = vmatprep.subr.bf16.mxu0 %v3613
    %3904 = vmatpush1.bf16.msra.mxu0 %v3612
    %3905 = vmatprep.subr.bf16.mxu0 %v3617
    %3906 = vmatpush1.bf16.msra.mxu0 %v3616
    %3907 = vmatprep.subr.bf16.mxu0 %v3621
    %3908 = vmatpush1.bf16.msra.mxu0 %v3620
    %3909 = vmatprep.subr.bf16.mxu0 %v3625
    %3910 = vmatpush1.bf16.msra.mxu0 %v3624
    %3911 = vmatprep.subr.bf16.mxu0 %v3629
    %3912 = vmatpush1.bf16.msra.mxu0 %v3628
    %3913 = vmatprep.mubr.bf16.mxu0 %v2965
    %3914 = vmatmul.mubr.bf16.gmra.mrb[0].mxu0 %v2964
    %v3915 = vpop.f32.mrb[0].mxu0
    %v3916 = vadd.f32 %v3875, %v3915
    %v3917 = vpop.f32.mrb[0].mxu0
    %v3918 = vadd.f32 %v3877, %v3917
    %v3919 = vpop.f32.mrb[0].mxu0
    %v3920 = vpop.f32.mrb[0].mxu0
    %3921 = vdwg.mxu0
    %v3922 = vmul.f32 %v3834, 0.01
    %v3923 = vmul.f32 %v3836, 0.01
    %v3924 = vmul.f32 %v3916, 0.01
    %v3925 = vmul.f32 %v3918, 0.01
    %v3926 = vmax.f32 %v3834, %v3922
    %v3927 = vmax.f32 %v3836, %v3923
    %v3928 = vmax.f32 %v3916, %v3924
    %v3929 = vmax.f32 %v3918, %v3925
    %v3930 = vadd.f32 %v3926, %v2958
    %v3931 = vadd.f32 %v3927, %v2959
    %v3932 = vadd.f32 %v3928, %v2960
    %v3933 = vadd.f32 %v3929, %v2961
    %v3934 = vpack.c.bf16 %v3930, %v3930
    %v3935 = vpack.c.bf16 %v3931, %v3931
    %v3936 = vpack.c.bf16 %v3932, %v3932
    %v3937 = vpack.c.bf16 %v3933, %v3933
    %s3938 = scalar_lea.vmem [#allocation2], 4096
    %v3939 = vld [vmem:[%s3938] sm:$0xff]
    %v3940 = vld [vmem:[%s3938 + $0x8] sm:$0xff]
    %v3941 = vld [vmem:[%s3938 + $0x10] sm:$0xff]
    %v3942 = vld [vmem:[%s3938 + $0x18] sm:$0xff]
    %v3943 = vld [vmem:[%s3938 + $0x20] sm:$0xff]
    %v3944 = vld [vmem:[%s3938 + $0x28] sm:$0xff]
    %v3945 = vld [vmem:[%s3938 + $0x30] sm:$0xff]
    %v3946 = vld [vmem:[%s3938 + $0x38] sm:$0xff]
    %v3947 = vld [vmem:[%s3938 + $0x40] sm:$0xff]
    %v3948 = vld [vmem:[%s3938 + $0x48] sm:$0xff]
    %v3949 = vld [vmem:[%s3938 + $0x50] sm:$0xff]
    %v3950 = vld [vmem:[%s3938 + $0x58] sm:$0xff]
    %v3951 = vld [vmem:[%s3938 + $0x60] sm:$0xff]
    %v3952 = vld [vmem:[%s3938 + $0x68] sm:$0xff]
    %v3953 = vld [vmem:[%s3938 + $0x70] sm:$0xff]
    %v3954 = vld [vmem:[%s3938 + $0x78] sm:$0xff]
    %v3955 = vld [vmem:[%s3938 + $0x80] sm:$0xff]
    %v3956 = vld [vmem:[%s3938 + $0x88] sm:$0xff]
    %v3957 = vld [vmem:[%s3938 + $0x90] sm:$0xff]
    %v3958 = vld [vmem:[%s3938 + $0x98] sm:$0xff]
    %v3959 = vld [vmem:[%s3938 + $0xa0] sm:$0xff]
    %v3960 = vld [vmem:[%s3938 + $0xa8] sm:$0xff]
    %v3961 = vld [vmem:[%s3938 + $0xb0] sm:$0xff]
    %v3962 = vld [vmem:[%s3938 + $0xb8] sm:$0xff]
    %v3963 = vld [vmem:[%s3938 + $0xc0] sm:$0xff]
    %v3964 = vld [vmem:[%s3938 + $0xc8] sm:$0xff]
    %v3965 = vld [vmem:[%s3938 + $0xd0] sm:$0xff]
    %v3966 = vld [vmem:[%s3938 + $0xd8] sm:$0xff]
    %v3967 = vld [vmem:[%s3938 + $0xe0] sm:$0xff]
    %v3968 = vld [vmem:[%s3938 + $0xe8] sm:$0xff]
    %v3969 = vld [vmem:[%s3938 + $0xf0] sm:$0xff]
    %v3970 = vld [vmem:[%s3938 + $0xf8] sm:$0xff]
    %v3971 = vld [vmem:[%s3938 + $0x100] sm:$0xff]
    %v3972 = vld [vmem:[%s3938 + $0x108] sm:$0xff]
    %v3973 = vld [vmem:[%s3938 + $0x110] sm:$0xff]
    %v3974 = vld [vmem:[%s3938 + $0x118] sm:$0xff]
    %v3975 = vld [vmem:[%s3938 + $0x120] sm:$0xff]
    %v3976 = vld [vmem:[%s3938 + $0x128] sm:$0xff]
    %v3977 = vld [vmem:[%s3938 + $0x130] sm:$0xff]
    %v3978 = vld [vmem:[%s3938 + $0x138] sm:$0xff]
    %v3979 = vld [vmem:[%s3938 + $0x140] sm:$0xff]
    %v3980 = vld [vmem:[%s3938 + $0x148] sm:$0xff]
    %v3981 = vld [vmem:[%s3938 + $0x150] sm:$0xff]
    %v3982 = vld [vmem:[%s3938 + $0x158] sm:$0xff]
    %v3983 = vld [vmem:[%s3938 + $0x160] sm:$0xff]
    %v3984 = vld [vmem:[%s3938 + $0x168] sm:$0xff]
    %v3985 = vld [vmem:[%s3938 + $0x170] sm:$0xff]
    %v3986 = vld [vmem:[%s3938 + $0x178] sm:$0xff]
    %v3987 = vld [vmem:[%s3938 + $0x180] sm:$0xff]
    %v3988 = vld [vmem:[%s3938 + $0x188] sm:$0xff]
    %v3989 = vld [vmem:[%s3938 + $0x190] sm:$0xff]
    %v3990 = vld [vmem:[%s3938 + $0x198] sm:$0xff]
    %v3991 = vld [vmem:[%s3938 + $0x1a0] sm:$0xff]
    %v3992 = vld [vmem:[%s3938 + $0x1a8] sm:$0xff]
    %v3993 = vld [vmem:[%s3938 + $0x1b0] sm:$0xff]
    %v3994 = vld [vmem:[%s3938 + $0x1b8] sm:$0xff]
    %v3995 = vld [vmem:[%s3938 + $0x1c0] sm:$0xff]
    %v3996 = vld [vmem:[%s3938 + $0x1c8] sm:$0xff]
    %v3997 = vld [vmem:[%s3938 + $0x1d0] sm:$0xff]
    %v3998 = vld [vmem:[%s3938 + $0x1d8] sm:$0xff]
    %v3999 = vld [vmem:[%s3938 + $0x1e0] sm:$0xff]
    %v4000 = vld [vmem:[%s3938 + $0x1e8] sm:$0xff]
    %v4001 = vld [vmem:[%s3938 + $0x1f0] sm:$0xff]
    %v4002 = vld [vmem:[%s3938 + $0x1f8] sm:$0xff]
    %v4003 = vld [vmem:[%s3938 + $0x200] sm:$0xff]
    %v4004 = vld [vmem:[%s3938 + $0x208] sm:$0xff]
    %v4005 = vld [vmem:[%s3938 + $0x210] sm:$0xff]
    %v4006 = vld [vmem:[%s3938 + $0x218] sm:$0xff]
    %v4007 = vld [vmem:[%s3938 + $0x220] sm:$0xff]
    %v4008 = vld [vmem:[%s3938 + $0x228] sm:$0xff]
    %v4009 = vld [vmem:[%s3938 + $0x230] sm:$0xff]
    %v4010 = vld [vmem:[%s3938 + $0x238] sm:$0xff]
    %v4011 = vld [vmem:[%s3938 + $0x240] sm:$0xff]
    %v4012 = vld [vmem:[%s3938 + $0x248] sm:$0xff]
    %v4013 = vld [vmem:[%s3938 + $0x250] sm:$0xff]
    %v4014 = vld [vmem:[%s3938 + $0x258] sm:$0xff]
    %v4015 = vld [vmem:[%s3938 + $0x260] sm:$0xff]
    %v4016 = vld [vmem:[%s3938 + $0x268] sm:$0xff]
    %v4017 = vld [vmem:[%s3938 + $0x270] sm:$0xff]
    %v4018 = vld [vmem:[%s3938 + $0x278] sm:$0xff]
    %v4019 = vld [vmem:[%s3938 + $0x280] sm:$0xff]
    %v4020 = vld [vmem:[%s3938 + $0x288] sm:$0xff]
    %v4021 = vld [vmem:[%s3938 + $0x290] sm:$0xff]
    %v4022 = vld [vmem:[%s3938 + $0x298] sm:$0xff]
    %v4023 = vld [vmem:[%s3938 + $0x2a0] sm:$0xff]
    %v4024 = vld [vmem:[%s3938 + $0x2a8] sm:$0xff]
    %v4025 = vld [vmem:[%s3938 + $0x2b0] sm:$0xff]
    %v4026 = vld [vmem:[%s3938 + $0x2b8] sm:$0xff]
    %v4027 = vld [vmem:[%s3938 + $0x2c0] sm:$0xff]
    %v4028 = vld [vmem:[%s3938 + $0x2c8] sm:$0xff]
    %v4029 = vld [vmem:[%s3938 + $0x2d0] sm:$0xff]
    %v4030 = vld [vmem:[%s3938 + $0x2d8] sm:$0xff]
    %v4031 = vld [vmem:[%s3938 + $0x2e0] sm:$0xff]
    %v4032 = vld [vmem:[%s3938 + $0x2e8] sm:$0xff]
    %v4033 = vld [vmem:[%s3938 + $0x2f0] sm:$0xff]
    %v4034 = vld [vmem:[%s3938 + $0x2f8] sm:$0xff]
    %v4035 = vld [vmem:[%s3938 + $0x300] sm:$0xff]
    %v4036 = vld [vmem:[%s3938 + $0x308] sm:$0xff]
    %v4037 = vld [vmem:[%s3938 + $0x310] sm:$0xff]
    %v4038 = vld [vmem:[%s3938 + $0x318] sm:$0xff]
    %v4039 = vld [vmem:[%s3938 + $0x320] sm:$0xff]
    %v4040 = vld [vmem:[%s3938 + $0x328] sm:$0xff]
    %v4041 = vld [vmem:[%s3938 + $0x330] sm:$0xff]
    %v4042 = vld [vmem:[%s3938 + $0x338] sm:$0xff]
    %v4043 = vld [vmem:[%s3938 + $0x340] sm:$0xff]
    %v4044 = vld [vmem:[%s3938 + $0x348] sm:$0xff]
    %v4045 = vld [vmem:[%s3938 + $0x350] sm:$0xff]
    %v4046 = vld [vmem:[%s3938 + $0x358] sm:$0xff]
    %v4047 = vld [vmem:[%s3938 + $0x360] sm:$0xff]
    %v4048 = vld [vmem:[%s3938 + $0x368] sm:$0xff]
    %v4049 = vld [vmem:[%s3938 + $0x370] sm:$0xff]
    %v4050 = vld [vmem:[%s3938 + $0x378] sm:$0xff]
    %v4051 = vld [vmem:[%s3938 + $0x380] sm:$0xff]
    %v4052 = vld [vmem:[%s3938 + $0x388] sm:$0xff]
    %v4053 = vld [vmem:[%s3938 + $0x390] sm:$0xff]
    %v4054 = vld [vmem:[%s3938 + $0x398] sm:$0xff]
    %v4055 = vld [vmem:[%s3938 + $0x3a0] sm:$0xff]
    %v4056 = vld [vmem:[%s3938 + $0x3a8] sm:$0xff]
    %v4057 = vld [vmem:[%s3938 + $0x3b0] sm:$0xff]
    %v4058 = vld [vmem:[%s3938 + $0x3b8] sm:$0xff]
    %v4059 = vld [vmem:[%s3938 + $0x3c0] sm:$0xff]
    %v4060 = vld [vmem:[%s3938 + $0x3c8] sm:$0xff]
    %v4061 = vld [vmem:[%s3938 + $0x3d0] sm:$0xff]
    %v4062 = vld [vmem:[%s3938 + $0x3d8] sm:$0xff]
    %v4063 = vld [vmem:[%s3938 + $0x3e0] sm:$0xff]
    %v4064 = vld [vmem:[%s3938 + $0x3e8] sm:$0xff]
    %v4065 = vld [vmem:[%s3938 + $0x3f0] sm:$0xff]
    %v4066 = vld [vmem:[%s3938 + $0x3f8] sm:$0xff]
    %s4067 = scalar_lea.vmem [#allocation4], 16
    %v4068 = vld [vmem:[%s4067] sm:$0xf]
    %v4070 = vlaneseq
    %v4071 = vshrl.u32 %v4070, 7
    %v4072 = vsub.s32 0, %v4071
    %v4073 = vrot.slane %v4068, %v4072
    %v4074 = vlaneseq
    %v4075 = vshrl.u32 %v4074, 7
    %v4076 = vsub.s32 1, %v4075
    %v4077 = vrot.slane %v4068, %v4076
    %v4078 = vlaneseq
    %v4079 = vshrl.u32 %v4078, 7
    %v4080 = vsub.s32 2, %v4079
    %v4081 = vrot.slane %v4068, %v4080
    %v4082 = vlaneseq
    %v4083 = vshrl.u32 %v4082, 7
    %v4084 = vsub.s32 3, %v4083
    %v4085 = vrot.slane %v4068, %v4084
    %v4218 = vunpack.c.l.b16 %v3939
    %v4219 = vunpack.c.h.b16 %v3939
    %v4220 = vunpack.c.l.b16 %v3940
    %v4221 = vunpack.c.h.b16 %v3940
    %v4222 = vunpack.c.l.b16 %v3941
    %v4223 = vunpack.c.h.b16 %v3941
    %v4224 = vunpack.c.l.b16 %v3942
    %v4225 = vunpack.c.h.b16 %v3942
    %v4226 = vunpack.c.l.b16 %v3943
    %v4227 = vunpack.c.h.b16 %v3943
    %v4228 = vunpack.c.l.b16 %v3944
    %v4229 = vunpack.c.h.b16 %v3944
    %v4230 = vunpack.c.l.b16 %v3945
    %v4231 = vunpack.c.h.b16 %v3945
    %v4232 = vunpack.c.l.b16 %v3946
    %v4233 = vunpack.c.h.b16 %v3946
    %v4234 = vunpack.c.l.b16 %v3947
    %v4235 = vunpack.c.h.b16 %v3947
    %v4236 = vunpack.c.l.b16 %v3948
    %v4237 = vunpack.c.h.b16 %v3948
    %v4238 = vunpack.c.l.b16 %v3949
    %v4239 = vunpack.c.h.b16 %v3949
    %v4240 = vunpack.c.l.b16 %v3950
    %v4241 = vunpack.c.h.b16 %v3950
    %v4242 = vunpack.c.l.b16 %v3951
    %v4243 = vunpack.c.h.b16 %v3951
    %v4244 = vunpack.c.l.b16 %v3952
    %v4245 = vunpack.c.h.b16 %v3952
    %v4246 = vunpack.c.l.b16 %v3953
    %v4247 = vunpack.c.h.b16 %v3953
    %v4248 = vunpack.c.l.b16 %v3954
    %v4249 = vunpack.c.h.b16 %v3954
    %v4250 = vunpack.c.l.b16 %v3955
    %v4251 = vunpack.c.h.b16 %v3955
    %v4252 = vunpack.c.l.b16 %v3956
    %v4253 = vunpack.c.h.b16 %v3956
    %v4254 = vunpack.c.l.b16 %v3957
    %v4255 = vunpack.c.h.b16 %v3957
    %v4256 = vunpack.c.l.b16 %v3958
    %v4257 = vunpack.c.h.b16 %v3958
    %v4258 = vunpack.c.l.b16 %v3959
    %v4259 = vunpack.c.h.b16 %v3959
    %v4260 = vunpack.c.l.b16 %v3960
    %v4261 = vunpack.c.h.b16 %v3960
    %v4262 = vunpack.c.l.b16 %v3961
    %v4263 = vunpack.c.h.b16 %v3961
    %v4264 = vunpack.c.l.b16 %v3962
    %v4265 = vunpack.c.h.b16 %v3962
    %v4266 = vunpack.c.l.b16 %v3963
    %v4267 = vunpack.c.h.b16 %v3963
    %v4268 = vunpack.c.l.b16 %v3964
    %v4269 = vunpack.c.h.b16 %v3964
    %v4270 = vunpack.c.l.b16 %v3965
    %v4271 = vunpack.c.h.b16 %v3965
    %v4272 = vunpack.c.l.b16 %v3966
    %v4273 = vunpack.c.h.b16 %v3966
    %v4274 = vunpack.c.l.b16 %v3967
    %v4275 = vunpack.c.h.b16 %v3967
    %v4276 = vunpack.c.l.b16 %v3968
    %v4277 = vunpack.c.h.b16 %v3968
    %v4278 = vunpack.c.l.b16 %v3969
    %v4279 = vunpack.c.h.b16 %v3969
    %v4280 = vunpack.c.l.b16 %v3970
    %v4281 = vunpack.c.h.b16 %v3970
    %v4282 = vunpack.c.l.b16 %v3971
    %v4283 = vunpack.c.h.b16 %v3971
    %v4284 = vunpack.c.l.b16 %v3972
    %v4285 = vunpack.c.h.b16 %v3972
    %v4286 = vunpack.c.l.b16 %v3973
    %v4287 = vunpack.c.h.b16 %v3973
    %v4288 = vunpack.c.l.b16 %v3974
    %v4289 = vunpack.c.h.b16 %v3974
    %v4290 = vunpack.c.l.b16 %v3975
    %v4291 = vunpack.c.h.b16 %v3975
    %v4292 = vunpack.c.l.b16 %v3976
    %v4293 = vunpack.c.h.b16 %v3976
    %v4294 = vunpack.c.l.b16 %v3977
    %v4295 = vunpack.c.h.b16 %v3977
    %v4296 = vunpack.c.l.b16 %v3978
    %v4297 = vunpack.c.h.b16 %v3978
    %v4298 = vunpack.c.l.b16 %v3979
    %v4299 = vunpack.c.h.b16 %v3979
    %v4300 = vunpack.c.l.b16 %v3980
    %v4301 = vunpack.c.h.b16 %v3980
    %v4302 = vunpack.c.l.b16 %v3981
    %v4303 = vunpack.c.h.b16 %v3981
    %v4304 = vunpack.c.l.b16 %v3982
    %v4305 = vunpack.c.h.b16 %v3982
    %v4306 = vunpack.c.l.b16 %v3983
    %v4307 = vunpack.c.h.b16 %v3983
    %v4308 = vunpack.c.l.b16 %v3984
    %v4309 = vunpack.c.h.b16 %v3984
    %v4310 = vunpack.c.l.b16 %v3985
    %v4311 = vunpack.c.h.b16 %v3985
    %v4312 = vunpack.c.l.b16 %v3986
    %v4313 = vunpack.c.h.b16 %v3986
    %v4314 = vunpack.c.l.b16 %v3987
    %v4315 = vunpack.c.h.b16 %v3987
    %v4316 = vunpack.c.l.b16 %v3988
    %v4317 = vunpack.c.h.b16 %v3988
    %v4318 = vunpack.c.l.b16 %v3989
    %v4319 = vunpack.c.h.b16 %v3989
    %v4320 = vunpack.c.l.b16 %v3990
    %v4321 = vunpack.c.h.b16 %v3990
    %v4322 = vunpack.c.l.b16 %v3991
    %v4323 = vunpack.c.h.b16 %v3991
    %v4324 = vunpack.c.l.b16 %v3992
    %v4325 = vunpack.c.h.b16 %v3992
    %v4326 = vunpack.c.l.b16 %v3993
    %v4327 = vunpack.c.h.b16 %v3993
    %v4328 = vunpack.c.l.b16 %v3994
    %v4329 = vunpack.c.h.b16 %v3994
    %v4330 = vunpack.c.l.b16 %v3995
    %v4331 = vunpack.c.h.b16 %v3995
    %v4332 = vunpack.c.l.b16 %v3996
    %v4333 = vunpack.c.h.b16 %v3996
    %v4334 = vunpack.c.l.b16 %v3997
    %v4335 = vunpack.c.h.b16 %v3997
    %v4336 = vunpack.c.l.b16 %v3998
    %v4337 = vunpack.c.h.b16 %v3998
    %v4338 = vunpack.c.l.b16 %v3999
    %v4339 = vunpack.c.h.b16 %v3999
    %v4340 = vunpack.c.l.b16 %v4000
    %v4341 = vunpack.c.h.b16 %v4000
    %v4342 = vunpack.c.l.b16 %v4001
    %v4343 = vunpack.c.h.b16 %v4001
    %v4344 = vunpack.c.l.b16 %v4002
    %v4345 = vunpack.c.h.b16 %v4002
    %v4346 = vunpack.c.l.b16 %v4003
    %v4347 = vunpack.c.h.b16 %v4003
    %v4348 = vunpack.c.l.b16 %v4004
    %v4349 = vunpack.c.h.b16 %v4004
    %v4350 = vunpack.c.l.b16 %v4005
    %v4351 = vunpack.c.h.b16 %v4005
    %v4352 = vunpack.c.l.b16 %v4006
    %v4353 = vunpack.c.h.b16 %v4006
    %v4354 = vunpack.c.l.b16 %v4007
    %v4355 = vunpack.c.h.b16 %v4007
    %v4356 = vunpack.c.l.b16 %v4008
    %v4357 = vunpack.c.h.b16 %v4008
    %v4358 = vunpack.c.l.b16 %v4009
    %v4359 = vunpack.c.h.b16 %v4009
    %v4360 = vunpack.c.l.b16 %v4010
    %v4361 = vunpack.c.h.b16 %v4010
    %v4362 = vunpack.c.l.b16 %v4011
    %v4363 = vunpack.c.h.b16 %v4011
    %v4364 = vunpack.c.l.b16 %v4012
    %v4365 = vunpack.c.h.b16 %v4012
    %v4366 = vunpack.c.l.b16 %v4013
    %v4367 = vunpack.c.h.b16 %v4013
    %v4368 = vunpack.c.l.b16 %v4014
    %v4369 = vunpack.c.h.b16 %v4014
    %v4370 = vunpack.c.l.b16 %v4015
    %v4371 = vunpack.c.h.b16 %v4015
    %v4372 = vunpack.c.l.b16 %v4016
    %v4373 = vunpack.c.h.b16 %v4016
    %v4374 = vunpack.c.l.b16 %v4017
    %v4375 = vunpack.c.h.b16 %v4017
    %v4376 = vunpack.c.l.b16 %v4018
    %v4377 = vunpack.c.h.b16 %v4018
    %v4378 = vunpack.c.l.b16 %v4019
    %v4379 = vunpack.c.h.b16 %v4019
    %v4380 = vunpack.c.l.b16 %v4020
    %v4381 = vunpack.c.h.b16 %v4020
    %v4382 = vunpack.c.l.b16 %v4021
    %v4383 = vunpack.c.h.b16 %v4021
    %v4384 = vunpack.c.l.b16 %v4022
    %v4385 = vunpack.c.h.b16 %v4022
    %v4386 = vunpack.c.l.b16 %v4023
    %v4387 = vunpack.c.h.b16 %v4023
    %v4388 = vunpack.c.l.b16 %v4024
    %v4389 = vunpack.c.h.b16 %v4024
    %v4390 = vunpack.c.l.b16 %v4025
    %v4391 = vunpack.c.h.b16 %v4025
    %v4392 = vunpack.c.l.b16 %v4026
    %v4393 = vunpack.c.h.b16 %v4026
    %v4394 = vunpack.c.l.b16 %v4027
    %v4395 = vunpack.c.h.b16 %v4027
    %v4396 = vunpack.c.l.b16 %v4028
    %v4397 = vunpack.c.h.b16 %v4028
    %v4398 = vunpack.c.l.b16 %v4029
    %v4399 = vunpack.c.h.b16 %v4029
    %v4400 = vunpack.c.l.b16 %v4030
    %v4401 = vunpack.c.h.b16 %v4030
    %v4402 = vunpack.c.l.b16 %v4031
    %v4403 = vunpack.c.h.b16 %v4031
    %v4404 = vunpack.c.l.b16 %v4032
    %v4405 = vunpack.c.h.b16 %v4032
    %v4406 = vunpack.c.l.b16 %v4033
    %v4407 = vunpack.c.h.b16 %v4033
    %v4408 = vunpack.c.l.b16 %v4034
    %v4409 = vunpack.c.h.b16 %v4034
    %v4410 = vunpack.c.l.b16 %v4035
    %v4411 = vunpack.c.h.b16 %v4035
    %v4412 = vunpack.c.l.b16 %v4036
    %v4413 = vunpack.c.h.b16 %v4036
    %v4414 = vunpack.c.l.b16 %v4037
    %v4415 = vunpack.c.h.b16 %v4037
    %v4416 = vunpack.c.l.b16 %v4038
    %v4417 = vunpack.c.h.b16 %v4038
    %v4418 = vunpack.c.l.b16 %v4039
    %v4419 = vunpack.c.h.b16 %v4039
    %v4420 = vunpack.c.l.b16 %v4040
    %v4421 = vunpack.c.h.b16 %v4040
    %v4422 = vunpack.c.l.b16 %v4041
    %v4423 = vunpack.c.h.b16 %v4041
    %v4424 = vunpack.c.l.b16 %v4042
    %v4425 = vunpack.c.h.b16 %v4042
    %v4426 = vunpack.c.l.b16 %v4043
    %v4427 = vunpack.c.h.b16 %v4043
    %v4428 = vunpack.c.l.b16 %v4044
    %v4429 = vunpack.c.h.b16 %v4044
    %v4430 = vunpack.c.l.b16 %v4045
    %v4431 = vunpack.c.h.b16 %v4045
    %v4432 = vunpack.c.l.b16 %v4046
    %v4433 = vunpack.c.h.b16 %v4046
    %v4434 = vunpack.c.l.b16 %v4047
    %v4435 = vunpack.c.h.b16 %v4047
    %v4436 = vunpack.c.l.b16 %v4048
    %v4437 = vunpack.c.h.b16 %v4048
    %v4438 = vunpack.c.l.b16 %v4049
    %v4439 = vunpack.c.h.b16 %v4049
    %v4440 = vunpack.c.l.b16 %v4050
    %v4441 = vunpack.c.h.b16 %v4050
    %v4442 = vunpack.c.l.b16 %v4051
    %v4443 = vunpack.c.h.b16 %v4051
    %v4444 = vunpack.c.l.b16 %v4052
    %v4445 = vunpack.c.h.b16 %v4052
    %v4446 = vunpack.c.l.b16 %v4053
    %v4447 = vunpack.c.h.b16 %v4053
    %v4448 = vunpack.c.l.b16 %v4054
    %v4449 = vunpack.c.h.b16 %v4054
    %v4450 = vunpack.c.l.b16 %v4055
    %v4451 = vunpack.c.h.b16 %v4055
    %v4452 = vunpack.c.l.b16 %v4056
    %v4453 = vunpack.c.h.b16 %v4056
    %v4454 = vunpack.c.l.b16 %v4057
    %v4455 = vunpack.c.h.b16 %v4057
    %v4456 = vunpack.c.l.b16 %v4058
    %v4457 = vunpack.c.h.b16 %v4058
    %v4458 = vunpack.c.l.b16 %v4059
    %v4459 = vunpack.c.h.b16 %v4059
    %v4460 = vunpack.c.l.b16 %v4060
    %v4461 = vunpack.c.h.b16 %v4060
    %v4462 = vunpack.c.l.b16 %v4061
    %v4463 = vunpack.c.h.b16 %v4061
    %v4464 = vunpack.c.l.b16 %v4062
    %v4465 = vunpack.c.h.b16 %v4062
    %v4466 = vunpack.c.l.b16 %v4063
    %v4467 = vunpack.c.h.b16 %v4063
    %v4468 = vunpack.c.l.b16 %v4064
    %v4469 = vunpack.c.h.b16 %v4064
    %v4470 = vunpack.c.l.b16 %v4065
    %v4471 = vunpack.c.h.b16 %v4065
    %v4472 = vunpack.c.l.b16 %v4066
    %v4473 = vunpack.c.h.b16 %v4066
    %v4474 = vpack.c.b16 %v4222, %v4218
    %v4475 = vpack.c.b16 %v4223, %v4219
    %v4476 = vpack.c.b16 %v4224, %v4220
    %v4477 = vpack.c.b16 %v4225, %v4221
    %v4478 = vpack.c.b16 %v4230, %v4226
    %v4479 = vpack.c.b16 %v4231, %v4227
    %v4480 = vpack.c.b16 %v4232, %v4228
    %v4481 = vpack.c.b16 %v4233, %v4229
    %v4482 = vpack.c.b16 %v4238, %v4234
    %v4483 = vpack.c.b16 %v4239, %v4235
    %v4484 = vpack.c.b16 %v4240, %v4236
    %v4485 = vpack.c.b16 %v4241, %v4237
    %v4486 = vpack.c.b16 %v4246, %v4242
    %v4487 = vpack.c.b16 %v4247, %v4243
    %v4488 = vpack.c.b16 %v4248, %v4244
    %v4489 = vpack.c.b16 %v4249, %v4245
    %v4490 = vpack.c.b16 %v4254, %v4250
    %v4491 = vpack.c.b16 %v4255, %v4251
    %v4492 = vpack.c.b16 %v4256, %v4252
    %v4493 = vpack.c.b16 %v4257, %v4253
    %v4494 = vpack.c.b16 %v4262, %v4258
    %v4495 = vpack.c.b16 %v4263, %v4259
    %v4496 = vpack.c.b16 %v4264, %v4260
    %v4497 = vpack.c.b16 %v4265, %v4261
    %v4498 = vpack.c.b16 %v4270, %v4266
    %v4499 = vpack.c.b16 %v4271, %v4267
    %v4500 = vpack.c.b16 %v4272, %v4268
    %v4501 = vpack.c.b16 %v4273, %v4269
    %v4502 = vpack.c.b16 %v4278, %v4274
    %v4503 = vpack.c.b16 %v4279, %v4275
    %v4504 = vpack.c.b16 %v4280, %v4276
    %v4505 = vpack.c.b16 %v4281, %v4277
    %v4506 = vpack.c.b16 %v4286, %v4282
    %v4507 = vpack.c.b16 %v4287, %v4283
    %v4508 = vpack.c.b16 %v4288, %v4284
    %v4509 = vpack.c.b16 %v4289, %v4285
    %v4510 = vpack.c.b16 %v4294, %v4290
    %v4511 = vpack.c.b16 %v4295, %v4291
    %v4512 = vpack.c.b16 %v4296, %v4292
    %v4513 = vpack.c.b16 %v4297, %v4293
    %v4514 = vpack.c.b16 %v4302, %v4298
    %v4515 = vpack.c.b16 %v4303, %v4299
    %v4516 = vpack.c.b16 %v4304, %v4300
    %v4517 = vpack.c.b16 %v4305, %v4301
    %v4518 = vpack.c.b16 %v4310, %v4306
    %v4519 = vpack.c.b16 %v4311, %v4307
    %v4520 = vpack.c.b16 %v4312, %v4308
    %v4521 = vpack.c.b16 %v4313, %v4309
    %v4522 = vpack.c.b16 %v4318, %v4314
    %v4523 = vpack.c.b16 %v4319, %v4315
    %v4524 = vpack.c.b16 %v4320, %v4316
    %v4525 = vpack.c.b16 %v4321, %v4317
    %v4526 = vpack.c.b16 %v4326, %v4322
    %v4527 = vpack.c.b16 %v4327, %v4323
    %v4528 = vpack.c.b16 %v4328, %v4324
    %v4529 = vpack.c.b16 %v4329, %v4325
    %v4530 = vpack.c.b16 %v4334, %v4330
    %v4531 = vpack.c.b16 %v4335, %v4331
    %v4532 = vpack.c.b16 %v4336, %v4332
    %v4533 = vpack.c.b16 %v4337, %v4333
    %v4534 = vpack.c.b16 %v4342, %v4338
    %v4535 = vpack.c.b16 %v4343, %v4339
    %v4536 = vpack.c.b16 %v4344, %v4340
    %v4537 = vpack.c.b16 %v4345, %v4341
    %v4538 = vpack.c.b16 %v4350, %v4346
    %v4539 = vpack.c.b16 %v4351, %v4347
    %v4540 = vpack.c.b16 %v4352, %v4348
    %v4541 = vpack.c.b16 %v4353, %v4349
    %v4542 = vpack.c.b16 %v4358, %v4354
    %v4543 = vpack.c.b16 %v4359, %v4355
    %v4544 = vpack.c.b16 %v4360, %v4356
    %v4545 = vpack.c.b16 %v4361, %v4357
    %v4546 = vpack.c.b16 %v4366, %v4362
    %v4547 = vpack.c.b16 %v4367, %v4363
    %v4548 = vpack.c.b16 %v4368, %v4364
    %v4549 = vpack.c.b16 %v4369, %v4365
    %v4550 = vpack.c.b16 %v4374, %v4370
    %v4551 = vpack.c.b16 %v4375, %v4371
    %v4552 = vpack.c.b16 %v4376, %v4372
    %v4553 = vpack.c.b16 %v4377, %v4373
    %v4554 = vpack.c.b16 %v4382, %v4378
    %v4555 = vpack.c.b16 %v4383, %v4379
    %v4556 = vpack.c.b16 %v4384, %v4380
    %v4557 = vpack.c.b16 %v4385, %v4381
    %v4558 = vpack.c.b16 %v4390, %v4386
    %v4559 = vpack.c.b16 %v4391, %v4387
    %v4560 = vpack.c.b16 %v4392, %v4388
    %v4561 = vpack.c.b16 %v4393, %v4389
    %v4562 = vpack.c.b16 %v4398, %v4394
    %v4563 = vpack.c.b16 %v4399, %v4395
    %v4564 = vpack.c.b16 %v4400, %v4396
    %v4565 = vpack.c.b16 %v4401, %v4397
    %v4566 = vpack.c.b16 %v4406, %v4402
    %v4567 = vpack.c.b16 %v4407, %v4403
    %v4568 = vpack.c.b16 %v4408, %v4404
    %v4569 = vpack.c.b16 %v4409, %v4405
    %v4570 = vpack.c.b16 %v4414, %v4410
    %v4571 = vpack.c.b16 %v4415, %v4411
    %v4572 = vpack.c.b16 %v4416, %v4412
    %v4573 = vpack.c.b16 %v4417, %v4413
    %v4574 = vpack.c.b16 %v4422, %v4418
    %v4575 = vpack.c.b16 %v4423, %v4419
    %v4576 = vpack.c.b16 %v4424, %v4420
    %v4577 = vpack.c.b16 %v4425, %v4421
    %v4578 = vpack.c.b16 %v4430, %v4426
    %v4579 = vpack.c.b16 %v4431, %v4427
    %v4580 = vpack.c.b16 %v4432, %v4428
    %v4581 = vpack.c.b16 %v4433, %v4429
    %v4582 = vpack.c.b16 %v4438, %v4434
    %v4583 = vpack.c.b16 %v4439, %v4435
    %v4584 = vpack.c.b16 %v4440, %v4436
    %v4585 = vpack.c.b16 %v4441, %v4437
    %v4586 = vpack.c.b16 %v4446, %v4442
    %v4587 = vpack.c.b16 %v4447, %v4443
    %v4588 = vpack.c.b16 %v4448, %v4444
    %v4589 = vpack.c.b16 %v4449, %v4445
    %v4590 = vpack.c.b16 %v4454, %v4450
    %v4591 = vpack.c.b16 %v4455, %v4451
    %v4592 = vpack.c.b16 %v4456, %v4452
    %v4593 = vpack.c.b16 %v4457, %v4453
    %v4594 = vpack.c.b16 %v4462, %v4458
    %v4595 = vpack.c.b16 %v4463, %v4459
    %v4596 = vpack.c.b16 %v4464, %v4460
    %v4597 = vpack.c.b16 %v4465, %v4461
    %v4598 = vpack.c.b16 %v4470, %v4466
    %v4599 = vpack.c.b16 %v4471, %v4467
    %v4600 = vpack.c.b16 %v4472, %v4468
    %v4601 = vpack.c.b16 %v4473, %v4469
    %4730 = vmatprep.subr.bf16.mxu0 %v4475
    %4731 = vmatpush1.bf16.msra.mxu0 %v4474
    %4732 = vmatprep.subr.bf16.mxu0 %v4479
    %4733 = vmatpush1.bf16.msra.mxu0 %v4478
    %4734 = vmatprep.subr.bf16.mxu0 %v4483
    %4735 = vmatpush1.bf16.msra.mxu0 %v4482
    %4736 = vmatprep.subr.bf16.mxu0 %v4487
    %4737 = vmatpush1.bf16.msra.mxu0 %v4486
    %4738 = vmatprep.subr.bf16.mxu0 %v4491
    %4739 = vmatpush1.bf16.msra.mxu0 %v4490
    %4740 = vmatprep.subr.bf16.mxu0 %v4495
    %4741 = vmatpush1.bf16.msra.mxu0 %v4494
    %4742 = vmatprep.subr.bf16.mxu0 %v4499
    %4743 = vmatpush1.bf16.msra.mxu0 %v4498
    %4744 = vmatprep.subr.bf16.mxu0 %v4503
    %4745 = vmatpush1.bf16.msra.mxu0 %v4502
    %4746 = vmatprep.subr.bf16.mxu0 %v4507
    %4747 = vmatpush1.bf16.msra.mxu0 %v4506
    %4748 = vmatprep.subr.bf16.mxu0 %v4511
    %4749 = vmatpush1.bf16.msra.mxu0 %v4510
    %4750 = vmatprep.subr.bf16.mxu0 %v4515
    %4751 = vmatpush1.bf16.msra.mxu0 %v4514
    %4752 = vmatprep.subr.bf16.mxu0 %v4519
    %4753 = vmatpush1.bf16.msra.mxu0 %v4518
    %4754 = vmatprep.subr.bf16.mxu0 %v4523
    %4755 = vmatpush1.bf16.msra.mxu0 %v4522
    %4756 = vmatprep.subr.bf16.mxu0 %v4527
    %4757 = vmatpush1.bf16.msra.mxu0 %v4526
    %4758 = vmatprep.subr.bf16.mxu0 %v4531
    %4759 = vmatpush1.bf16.msra.mxu0 %v4530
    %4760 = vmatprep.subr.bf16.mxu0 %v4535
    %4761 = vmatpush1.bf16.msra.mxu0 %v4534
    %4762 = vmatprep.mubr.bf16.mxu0 %v3935
    %4763 = vmatmul.mubr.bf16.gmra.mrb[0].mxu0 %v3934
    %v4764 = vpop.f32.mrb[0].mxu0
    %v4765 = vadd.f32 %v4073, %v4764
    %v4766 = vpop.f32.mrb[0].mxu0
    %v4767 = vadd.f32 %v4077, %v4766
    %v4768 = vpop.f32.mrb[0].mxu0
    %v4769 = vpop.f32.mrb[0].mxu0
    %4770 = vdwg.mxu0
    %4771 = vmatprep.subr.bf16.mxu0 %v4539
    %4772 = vmatpush1.bf16.msra.mxu0 %v4538
    %4773 = vmatprep.subr.bf16.mxu0 %v4543
    %4774 = vmatpush1.bf16.msra.mxu0 %v4542
    %4775 = vmatprep.subr.bf16.mxu0 %v4547
    %4776 = vmatpush1.bf16.msra.mxu0 %v4546
    %4777 = vmatprep.subr.bf16.mxu0 %v4551
    %4778 = vmatpush1.bf16.msra.mxu0 %v4550
    %4779 = vmatprep.subr.bf16.mxu0 %v4555
    %4780 = vmatpush1.bf16.msra.mxu0 %v4554
    %4781 = vmatprep.subr.bf16.mxu0 %v4559
    %4782 = vmatpush1.bf16.msra.mxu0 %v4558
    %4783 = vmatprep.subr.bf16.mxu0 %v4563
    %4784 = vmatpush1.bf16.msra.mxu0 %v4562
    %4785 = vmatprep.subr.bf16.mxu0 %v4567
    %4786 = vmatpush1.bf16.msra.mxu0 %v4566
    %4787 = vmatprep.subr.bf16.mxu0 %v4571
    %4788 = vmatpush1.bf16.msra.mxu0 %v4570
    %4789 = vmatprep.subr.bf16.mxu0 %v4575
    %4790 = vmatpush1.bf16.msra.mxu0 %v4574
    %4791 = vmatprep.subr.bf16.mxu0 %v4579
    %4792 = vmatpush1.bf16.msra.mxu0 %v4578
    %4793 = vmatprep.subr.bf16.mxu0 %v4583
    %4794 = vmatpush1.bf16.msra.mxu0 %v4582
    %4795 = vmatprep.subr.bf16.mxu0 %v4587
    %4796 = vmatpush1.bf16.msra.mxu0 %v4586
    %4797 = vmatprep.subr.bf16.mxu0 %v4591
    %4798 = vmatpush1.bf16.msra.mxu0 %v4590
    %4799 = vmatprep.subr.bf16.mxu0 %v4595
    %4800 = vmatpush1.bf16.msra.mxu0 %v4594
    %4801 = vmatprep.subr.bf16.mxu0 %v4599
    %4802 = vmatpush1.bf16.msra.mxu0 %v4598
    %4803 = vmatprep.mubr.bf16.mxu0 %v3937
    %4804 = vmatmul.mubr.bf16.gmra.mrb[0].mxu0 %v3936
    %v4805 = vpop.f32.mrb[0].mxu0
    %v4806 = vadd.f32 %v4765, %v4805
    %v4807 = vpop.f32.mrb[0].mxu0
    %v4808 = vadd.f32 %v4767, %v4807
    %v4809 = vpop.f32.mrb[0].mxu0
    %v4810 = vpop.f32.mrb[0].mxu0
    %4811 = vdwg.mxu0
    %4812 = vmatprep.subr.bf16.mxu0 %v4477
    %4813 = vmatpush1.bf16.msra.mxu0 %v4476
    %4814 = vmatprep.subr.bf16.mxu0 %v4481
    %4815 = vmatpush1.bf16.msra.mxu0 %v4480
    %4816 = vmatprep.subr.bf16.mxu0 %v4485
    %4817 = vmatpush1.bf16.msra.mxu0 %v4484
    %4818 = vmatprep.subr.bf16.mxu0 %v4489
    %4819 = vmatpush1.bf16.msra.mxu0 %v4488
    %4820 = vmatprep.subr.bf16.mxu0 %v4493
    %4821 = vmatpush1.bf16.msra.mxu0 %v4492
    %4822 = vmatprep.subr.bf16.mxu0 %v4497
    %4823 = vmatpush1.bf16.msra.mxu0 %v4496
    %4824 = vmatprep.subr.bf16.mxu0 %v4501
    %4825 = vmatpush1.bf16.msra.mxu0 %v4500
    %4826 = vmatprep.subr.bf16.mxu0 %v4505
    %4827 = vmatpush1.bf16.msra.mxu0 %v4504
    %4828 = vmatprep.subr.bf16.mxu0 %v4509
    %4829 = vmatpush1.bf16.msra.mxu0 %v4508
    %4830 = vmatprep.subr.bf16.mxu0 %v4513
    %4831 = vmatpush1.bf16.msra.mxu0 %v4512
    %4832 = vmatprep.subr.bf16.mxu0 %v4517
    %4833 = vmatpush1.bf16.msra.mxu0 %v4516
    %4834 = vmatprep.subr.bf16.mxu0 %v4521
    %4835 = vmatpush1.bf16.msra.mxu0 %v4520
    %4836 = vmatprep.subr.bf16.mxu0 %v4525
    %4837 = vmatpush1.bf16.msra.mxu0 %v4524
    %4838 = vmatprep.subr.bf16.mxu0 %v4529
    %4839 = vmatpush1.bf16.msra.mxu0 %v4528
    %4840 = vmatprep.subr.bf16.mxu0 %v4533
    %4841 = vmatpush1.bf16.msra.mxu0 %v4532
    %4842 = vmatprep.subr.bf16.mxu0 %v4537
    %4843 = vmatpush1.bf16.msra.mxu0 %v4536
    %4844 = vmatprep.mubr.bf16.mxu0 %v3935
    %4845 = vmatmul.mubr.bf16.gmra.mrb[0].mxu0 %v3934
    %v4846 = vpop.f32.mrb[0].mxu0
    %v4847 = vadd.f32 %v4081, %v4846
    %v4848 = vpop.f32.mrb[0].mxu0
    %v4849 = vadd.f32 %v4085, %v4848
    %v4850 = vpop.f32.mrb[0].mxu0
    %v4851 = vpop.f32.mrb[0].mxu0
    %4852 = vdwg.mxu0
    %4853 = vmatprep.subr.bf16.mxu0 %v4541
    %4854 = vmatpush1.bf16.msra.mxu0 %v4540
    %4855 = vmatprep.subr.bf16.mxu0 %v4545
    %4856 = vmatpush1.bf16.msra.mxu0 %v4544
    %4857 = vmatprep.subr.bf16.mxu0 %v4549
    %4858 = vmatpush1.bf16.msra.mxu0 %v4548
    %4859 = vmatprep.subr.bf16.mxu0 %v4553
    %4860 = vmatpush1.bf16.msra.mxu0 %v4552
    %4861 = vmatprep.subr.bf16.mxu0 %v4557
    %4862 = vmatpush1.bf16.msra.mxu0 %v4556
    %4863 = vmatprep.subr.bf16.mxu0 %v4561
    %4864 = vmatpush1.bf16.msra.mxu0 %v4560
    %4865 = vmatprep.subr.bf16.mxu0 %v4565
    %4866 = vmatpush1.bf16.msra.mxu0 %v4564
    %4867 = vmatprep.subr.bf16.mxu0 %v4569
    %4868 = vmatpush1.bf16.msra.mxu0 %v4568
    %4869 = vmatprep.subr.bf16.mxu0 %v4573
    %4870 = vmatpush1.bf16.msra.mxu0 %v4572
    %4871 = vmatprep.subr.bf16.mxu0 %v4577
    %4872 = vmatpush1.bf16.msra.mxu0 %v4576
    %4873 = vmatprep.subr.bf16.mxu0 %v4581
    %4874 = vmatpush1.bf16.msra.mxu0 %v4580
    %4875 = vmatprep.subr.bf16.mxu0 %v4585
    %4876 = vmatpush1.bf16.msra.mxu0 %v4584
    %4877 = vmatprep.subr.bf16.mxu0 %v4589
    %4878 = vmatpush1.bf16.msra.mxu0 %v4588
    %4879 = vmatprep.subr.bf16.mxu0 %v4593
    %4880 = vmatpush1.bf16.msra.mxu0 %v4592
    %4881 = vmatprep.subr.bf16.mxu0 %v4597
    %4882 = vmatpush1.bf16.msra.mxu0 %v4596
    %4883 = vmatprep.subr.bf16.mxu0 %v4601
    %4884 = vmatpush1.bf16.msra.mxu0 %v4600
    %4885 = vmatprep.mubr.bf16.mxu0 %v3937
    %4886 = vmatmul.mubr.bf16.gmra.mrb[0].mxu0 %v3936
    %v4887 = vpop.f32.mrb[0].mxu0
    %v4888 = vadd.f32 %v4847, %v4887
    %v4889 = vpop.f32.mrb[0].mxu0
    %v4890 = vadd.f32 %v4849, %v4889
    %v4891 = vpop.f32.mrb[0].mxu0
    %v4892 = vpop.f32.mrb[0].mxu0
    %4893 = vdwg.mxu0
    %v4894 = vmul.f32 %v4806, 0.01
    %v4895 = vmul.f32 %v4808, 0.01
    %v4896 = vmul.f32 %v4888, 0.01
    %v4897 = vmul.f32 %v4890, 0.01
    %v4898 = vmax.f32 %v4806, %v4894
    %v4899 = vmax.f32 %v4808, %v4895
    %v4900 = vmax.f32 %v4888, %v4896
    %v4901 = vmax.f32 %v4890, %v4897
    %v4902 = vadd.f32 %v4898, %v3930
    %v4903 = vadd.f32 %v4899, %v3931
    %v4904 = vadd.f32 %v4900, %v3932
    %v4905 = vadd.f32 %v4901, %v3933
    %v4906 = vpack.c.bf16 %v4902, %v4902
    %v4907 = vpack.c.bf16 %v4903, %v4903
    %v4908 = vpack.c.bf16 %v4904, %v4904
    %v4909 = vpack.c.bf16 %v4905, %v4905
    %s4910 = scalar_lea.vmem [#allocation2], 5120
    %v4911 = vld [vmem:[%s4910] sm:$0xff]
    %v4912 = vld [vmem:[%s4910 + $0x8] sm:$0xff]
    %v4913 = vld [vmem:[%s4910 + $0x10] sm:$0xff]
    %v4914 = vld [vmem:[%s4910 + $0x18] sm:$0xff]
    %v4915 = vld [vmem:[%s4910 + $0x20] sm:$0xff]
    %v4916 = vld [vmem:[%s4910 + $0x28] sm:$0xff]
    %v4917 = vld [vmem:[%s4910 + $0x30] sm:$0xff]
    %v4918 = vld [vmem:[%s4910 + $0x38] sm:$0xff]
    %v4919 = vld [vmem:[%s4910 + $0x40] sm:$0xff]
    %v4920 = vld [vmem:[%s4910 + $0x48] sm:$0xff]
    %v4921 = vld [vmem:[%s4910 + $0x50] sm:$0xff]
    %v4922 = vld [vmem:[%s4910 + $0x58] sm:$0xff]
    %v4923 = vld [vmem:[%s4910 + $0x60] sm:$0xff]
    %v4924 = vld [vmem:[%s4910 + $0x68] sm:$0xff]
    %v4925 = vld [vmem:[%s4910 + $0x70] sm:$0xff]
    %v4926 = vld [vmem:[%s4910 + $0x78] sm:$0xff]
    %v4927 = vld [vmem:[%s4910 + $0x80] sm:$0xff]
    %v4928 = vld [vmem:[%s4910 + $0x88] sm:$0xff]
    %v4929 = vld [vmem:[%s4910 + $0x90] sm:$0xff]
    %v4930 = vld [vmem:[%s4910 + $0x98] sm:$0xff]
    %v4931 = vld [vmem:[%s4910 + $0xa0] sm:$0xff]
    %v4932 = vld [vmem:[%s4910 + $0xa8] sm:$0xff]
    %v4933 = vld [vmem:[%s4910 + $0xb0] sm:$0xff]
    %v4934 = vld [vmem:[%s4910 + $0xb8] sm:$0xff]
    %v4935 = vld [vmem:[%s4910 + $0xc0] sm:$0xff]
    %v4936 = vld [vmem:[%s4910 + $0xc8] sm:$0xff]
    %v4937 = vld [vmem:[%s4910 + $0xd0] sm:$0xff]
    %v4938 = vld [vmem:[%s4910 + $0xd8] sm:$0xff]
    %v4939 = vld [vmem:[%s4910 + $0xe0] sm:$0xff]
    %v4940 = vld [vmem:[%s4910 + $0xe8] sm:$0xff]
    %v4941 = vld [vmem:[%s4910 + $0xf0] sm:$0xff]
    %v4942 = vld [vmem:[%s4910 + $0xf8] sm:$0xff]
    %v4943 = vld [vmem:[%s4910 + $0x100] sm:$0xff]
    %v4944 = vld [vmem:[%s4910 + $0x108] sm:$0xff]
    %v4945 = vld [vmem:[%s4910 + $0x110] sm:$0xff]
    %v4946 = vld [vmem:[%s4910 + $0x118] sm:$0xff]
    %v4947 = vld [vmem:[%s4910 + $0x120] sm:$0xff]
    %v4948 = vld [vmem:[%s4910 + $0x128] sm:$0xff]
    %v4949 = vld [vmem:[%s4910 + $0x130] sm:$0xff]
    %v4950 = vld [vmem:[%s4910 + $0x138] sm:$0xff]
    %v4951 = vld [vmem:[%s4910 + $0x140] sm:$0xff]
    %v4952 = vld [vmem:[%s4910 + $0x148] sm:$0xff]
    %v4953 = vld [vmem:[%s4910 + $0x150] sm:$0xff]
    %v4954 = vld [vmem:[%s4910 + $0x158] sm:$0xff]
    %v4955 = vld [vmem:[%s4910 + $0x160] sm:$0xff]
    %v4956 = vld [vmem:[%s4910 + $0x168] sm:$0xff]
    %v4957 = vld [vmem:[%s4910 + $0x170] sm:$0xff]
    %v4958 = vld [vmem:[%s4910 + $0x178] sm:$0xff]
    %v4959 = vld [vmem:[%s4910 + $0x180] sm:$0xff]
    %v4960 = vld [vmem:[%s4910 + $0x188] sm:$0xff]
    %v4961 = vld [vmem:[%s4910 + $0x190] sm:$0xff]
    %v4962 = vld [vmem:[%s4910 + $0x198] sm:$0xff]
    %v4963 = vld [vmem:[%s4910 + $0x1a0] sm:$0xff]
    %v4964 = vld [vmem:[%s4910 + $0x1a8] sm:$0xff]
    %v4965 = vld [vmem:[%s4910 + $0x1b0] sm:$0xff]
    %v4966 = vld [vmem:[%s4910 + $0x1b8] sm:$0xff]
    %v4967 = vld [vmem:[%s4910 + $0x1c0] sm:$0xff]
    %v4968 = vld [vmem:[%s4910 + $0x1c8] sm:$0xff]
    %v4969 = vld [vmem:[%s4910 + $0x1d0] sm:$0xff]
    %v4970 = vld [vmem:[%s4910 + $0x1d8] sm:$0xff]
    %v4971 = vld [vmem:[%s4910 + $0x1e0] sm:$0xff]
    %v4972 = vld [vmem:[%s4910 + $0x1e8] sm:$0xff]
    %v4973 = vld [vmem:[%s4910 + $0x1f0] sm:$0xff]
    %v4974 = vld [vmem:[%s4910 + $0x1f8] sm:$0xff]
    %v4975 = vld [vmem:[%s4910 + $0x200] sm:$0xff]
    %v4976 = vld [vmem:[%s4910 + $0x208] sm:$0xff]
    %v4977 = vld [vmem:[%s4910 + $0x210] sm:$0xff]
    %v4978 = vld [vmem:[%s4910 + $0x218] sm:$0xff]
    %v4979 = vld [vmem:[%s4910 + $0x220] sm:$0xff]
    %v4980 = vld [vmem:[%s4910 + $0x228] sm:$0xff]
    %v4981 = vld [vmem:[%s4910 + $0x230] sm:$0xff]
    %v4982 = vld [vmem:[%s4910 + $0x238] sm:$0xff]
    %v4983 = vld [vmem:[%s4910 + $0x240] sm:$0xff]
    %v4984 = vld [vmem:[%s4910 + $0x248] sm:$0xff]
    %v4985 = vld [vmem:[%s4910 + $0x250] sm:$0xff]
    %v4986 = vld [vmem:[%s4910 + $0x258] sm:$0xff]
    %v4987 = vld [vmem:[%s4910 + $0x260] sm:$0xff]
    %v4988 = vld [vmem:[%s4910 + $0x268] sm:$0xff]
    %v4989 = vld [vmem:[%s4910 + $0x270] sm:$0xff]
    %v4990 = vld [vmem:[%s4910 + $0x278] sm:$0xff]
    %v4991 = vld [vmem:[%s4910 + $0x280] sm:$0xff]
    %v4992 = vld [vmem:[%s4910 + $0x288] sm:$0xff]
    %v4993 = vld [vmem:[%s4910 + $0x290] sm:$0xff]
    %v4994 = vld [vmem:[%s4910 + $0x298] sm:$0xff]
    %v4995 = vld [vmem:[%s4910 + $0x2a0] sm:$0xff]
    %v4996 = vld [vmem:[%s4910 + $0x2a8] sm:$0xff]
    %v4997 = vld [vmem:[%s4910 + $0x2b0] sm:$0xff]
    %v4998 = vld [vmem:[%s4910 + $0x2b8] sm:$0xff]
    %v4999 = vld [vmem:[%s4910 + $0x2c0] sm:$0xff]
    %v5000 = vld [vmem:[%s4910 + $0x2c8] sm:$0xff]
    %v5001 = vld [vmem:[%s4910 + $0x2d0] sm:$0xff]
    %v5002 = vld [vmem:[%s4910 + $0x2d8] sm:$0xff]
    %v5003 = vld [vmem:[%s4910 + $0x2e0] sm:$0xff]
    %v5004 = vld [vmem:[%s4910 + $0x2e8] sm:$0xff]
    %v5005 = vld [vmem:[%s4910 + $0x2f0] sm:$0xff]
    %v5006 = vld [vmem:[%s4910 + $0x2f8] sm:$0xff]
    %v5007 = vld [vmem:[%s4910 + $0x300] sm:$0xff]
    %v5008 = vld [vmem:[%s4910 + $0x308] sm:$0xff]
    %v5009 = vld [vmem:[%s4910 + $0x310] sm:$0xff]
    %v5010 = vld [vmem:[%s4910 + $0x318] sm:$0xff]
    %v5011 = vld [vmem:[%s4910 + $0x320] sm:$0xff]
    %v5012 = vld [vmem:[%s4910 + $0x328] sm:$0xff]
    %v5013 = vld [vmem:[%s4910 + $0x330] sm:$0xff]
    %v5014 = vld [vmem:[%s4910 + $0x338] sm:$0xff]
    %v5015 = vld [vmem:[%s4910 + $0x340] sm:$0xff]
    %v5016 = vld [vmem:[%s4910 + $0x348] sm:$0xff]
    %v5017 = vld [vmem:[%s4910 + $0x350] sm:$0xff]
    %v5018 = vld [vmem:[%s4910 + $0x358] sm:$0xff]
    %v5019 = vld [vmem:[%s4910 + $0x360] sm:$0xff]
    %v5020 = vld [vmem:[%s4910 + $0x368] sm:$0xff]
    %v5021 = vld [vmem:[%s4910 + $0x370] sm:$0xff]
    %v5022 = vld [vmem:[%s4910 + $0x378] sm:$0xff]
    %v5023 = vld [vmem:[%s4910 + $0x380] sm:$0xff]
    %v5024 = vld [vmem:[%s4910 + $0x388] sm:$0xff]
    %v5025 = vld [vmem:[%s4910 + $0x390] sm:$0xff]
    %v5026 = vld [vmem:[%s4910 + $0x398] sm:$0xff]
    %v5027 = vld [vmem:[%s4910 + $0x3a0] sm:$0xff]
    %v5028 = vld [vmem:[%s4910 + $0x3a8] sm:$0xff]
    %v5029 = vld [vmem:[%s4910 + $0x3b0] sm:$0xff]
    %v5030 = vld [vmem:[%s4910 + $0x3b8] sm:$0xff]
    %v5031 = vld [vmem:[%s4910 + $0x3c0] sm:$0xff]
    %v5032 = vld [vmem:[%s4910 + $0x3c8] sm:$0xff]
    %v5033 = vld [vmem:[%s4910 + $0x3d0] sm:$0xff]
    %v5034 = vld [vmem:[%s4910 + $0x3d8] sm:$0xff]
    %v5035 = vld [vmem:[%s4910 + $0x3e0] sm:$0xff]
    %v5036 = vld [vmem:[%s4910 + $0x3e8] sm:$0xff]
    %v5037 = vld [vmem:[%s4910 + $0x3f0] sm:$0xff]
    %v5038 = vld [vmem:[%s4910 + $0x3f8] sm:$0xff]
    %s5039 = scalar_lea.vmem [#allocation4], 20
    %v5040 = vld [vmem:[%s5039] sm:$0xf]
    %v5042 = vlaneseq
    %v5043 = vshrl.u32 %v5042, 7
    %v5044 = vsub.s32 0, %v5043
    %v5045 = vrot.slane %v5040, %v5044
    %v5046 = vlaneseq
    %v5047 = vshrl.u32 %v5046, 7
    %v5048 = vsub.s32 1, %v5047
    %v5049 = vrot.slane %v5040, %v5048
    %v5050 = vlaneseq
    %v5051 = vshrl.u32 %v5050, 7
    %v5052 = vsub.s32 2, %v5051
    %v5053 = vrot.slane %v5040, %v5052
    %v5054 = vlaneseq
    %v5055 = vshrl.u32 %v5054, 7
    %v5056 = vsub.s32 3, %v5055
    %v5057 = vrot.slane %v5040, %v5056
    %v5190 = vunpack.c.l.b16 %v4911
    %v5191 = vunpack.c.h.b16 %v4911
    %v5192 = vunpack.c.l.b16 %v4912
    %v5193 = vunpack.c.h.b16 %v4912
    %v5194 = vunpack.c.l.b16 %v4913
    %v5195 = vunpack.c.h.b16 %v4913
    %v5196 = vunpack.c.l.b16 %v4914
    %v5197 = vunpack.c.h.b16 %v4914
    %v5198 = vunpack.c.l.b16 %v4915
    %v5199 = vunpack.c.h.b16 %v4915
    %v5200 = vunpack.c.l.b16 %v4916
    %v5201 = vunpack.c.h.b16 %v4916
    %v5202 = vunpack.c.l.b16 %v4917
    %v5203 = vunpack.c.h.b16 %v4917
    %v5204 = vunpack.c.l.b16 %v4918
    %v5205 = vunpack.c.h.b16 %v4918
    %v5206 = vunpack.c.l.b16 %v4919
    %v5207 = vunpack.c.h.b16 %v4919
    %v5208 = vunpack.c.l.b16 %v4920
    %v5209 = vunpack.c.h.b16 %v4920
    %v5210 = vunpack.c.l.b16 %v4921
    %v5211 = vunpack.c.h.b16 %v4921
    %v5212 = vunpack.c.l.b16 %v4922
    %v5213 = vunpack.c.h.b16 %v4922
    %v5214 = vunpack.c.l.b16 %v4923
    %v5215 = vunpack.c.h.b16 %v4923
    %v5216 = vunpack.c.l.b16 %v4924
    %v5217 = vunpack.c.h.b16 %v4924
    %v5218 = vunpack.c.l.b16 %v4925
    %v5219 = vunpack.c.h.b16 %v4925
    %v5220 = vunpack.c.l.b16 %v4926
    %v5221 = vunpack.c.h.b16 %v4926
    %v5222 = vunpack.c.l.b16 %v4927
    %v5223 = vunpack.c.h.b16 %v4927
    %v5224 = vunpack.c.l.b16 %v4928
    %v5225 = vunpack.c.h.b16 %v4928
    %v5226 = vunpack.c.l.b16 %v4929
    %v5227 = vunpack.c.h.b16 %v4929
    %v5228 = vunpack.c.l.b16 %v4930
    %v5229 = vunpack.c.h.b16 %v4930
    %v5230 = vunpack.c.l.b16 %v4931
    %v5231 = vunpack.c.h.b16 %v4931
    %v5232 = vunpack.c.l.b16 %v4932
    %v5233 = vunpack.c.h.b16 %v4932
    %v5234 = vunpack.c.l.b16 %v4933
    %v5235 = vunpack.c.h.b16 %v4933
    %v5236 = vunpack.c.l.b16 %v4934
    %v5237 = vunpack.c.h.b16 %v4934
    %v5238 = vunpack.c.l.b16 %v4935
    %v5239 = vunpack.c.h.b16 %v4935
    %v5240 = vunpack.c.l.b16 %v4936
    %v5241 = vunpack.c.h.b16 %v4936
    %v5242 = vunpack.c.l.b16 %v4937
    %v5243 = vunpack.c.h.b16 %v4937
    %v5244 = vunpack.c.l.b16 %v4938
    %v5245 = vunpack.c.h.b16 %v4938
    %v5246 = vunpack.c.l.b16 %v4939
    %v5247 = vunpack.c.h.b16 %v4939
    %v5248 = vunpack.c.l.b16 %v4940
    %v5249 = vunpack.c.h.b16 %v4940
    %v5250 = vunpack.c.l.b16 %v4941
    %v5251 = vunpack.c.h.b16 %v4941
    %v5252 = vunpack.c.l.b16 %v4942
    %v5253 = vunpack.c.h.b16 %v4942
    %v5254 = vunpack.c.l.b16 %v4943
    %v5255 = vunpack.c.h.b16 %v4943
    %v5256 = vunpack.c.l.b16 %v4944
    %v5257 = vunpack.c.h.b16 %v4944
    %v5258 = vunpack.c.l.b16 %v4945
    %v5259 = vunpack.c.h.b16 %v4945
    %v5260 = vunpack.c.l.b16 %v4946
    %v5261 = vunpack.c.h.b16 %v4946
    %v5262 = vunpack.c.l.b16 %v4947
    %v5263 = vunpack.c.h.b16 %v4947
    %v5264 = vunpack.c.l.b16 %v4948
    %v5265 = vunpack.c.h.b16 %v4948
    %v5266 = vunpack.c.l.b16 %v4949
    %v5267 = vunpack.c.h.b16 %v4949
    %v5268 = vunpack.c.l.b16 %v4950
    %v5269 = vunpack.c.h.b16 %v4950
    %v5270 = vunpack.c.l.b16 %v4951
    %v5271 = vunpack.c.h.b16 %v4951
    %v5272 = vunpack.c.l.b16 %v4952
    %v5273 = vunpack.c.h.b16 %v4952
    %v5274 = vunpack.c.l.b16 %v4953
    %v5275 = vunpack.c.h.b16 %v4953
    %v5276 = vunpack.c.l.b16 %v4954
    %v5277 = vunpack.c.h.b16 %v4954
    %v5278 = vunpack.c.l.b16 %v4955
    %v5279 = vunpack.c.h.b16 %v4955
    %v5280 = vunpack.c.l.b16 %v4956
    %v5281 = vunpack.c.h.b16 %v4956
    %v5282 = vunpack.c.l.b16 %v4957
    %v5283 = vunpack.c.h.b16 %v4957
    %v5284 = vunpack.c.l.b16 %v4958
    %v5285 = vunpack.c.h.b16 %v4958
    %v5286 = vunpack.c.l.b16 %v4959
    %v5287 = vunpack.c.h.b16 %v4959
    %v5288 = vunpack.c.l.b16 %v4960
    %v5289 = vunpack.c.h.b16 %v4960
    %v5290 = vunpack.c.l.b16 %v4961
    %v5291 = vunpack.c.h.b16 %v4961
    %v5292 = vunpack.c.l.b16 %v4962
    %v5293 = vunpack.c.h.b16 %v4962
    %v5294 = vunpack.c.l.b16 %v4963
    %v5295 = vunpack.c.h.b16 %v4963
    %v5296 = vunpack.c.l.b16 %v4964
    %v5297 = vunpack.c.h.b16 %v4964
    %v5298 = vunpack.c.l.b16 %v4965
    %v5299 = vunpack.c.h.b16 %v4965
    %v5300 = vunpack.c.l.b16 %v4966
    %v5301 = vunpack.c.h.b16 %v4966
    %v5302 = vunpack.c.l.b16 %v4967
    %v5303 = vunpack.c.h.b16 %v4967
    %v5304 = vunpack.c.l.b16 %v4968
    %v5305 = vunpack.c.h.b16 %v4968
    %v5306 = vunpack.c.l.b16 %v4969
    %v5307 = vunpack.c.h.b16 %v4969
    %v5308 = vunpack.c.l.b16 %v4970
    %v5309 = vunpack.c.h.b16 %v4970
    %v5310 = vunpack.c.l.b16 %v4971
    %v5311 = vunpack.c.h.b16 %v4971
    %v5312 = vunpack.c.l.b16 %v4972
    %v5313 = vunpack.c.h.b16 %v4972
    %v5314 = vunpack.c.l.b16 %v4973
    %v5315 = vunpack.c.h.b16 %v4973
    %v5316 = vunpack.c.l.b16 %v4974
    %v5317 = vunpack.c.h.b16 %v4974
    %v5318 = vunpack.c.l.b16 %v4975
    %v5319 = vunpack.c.h.b16 %v4975
    %v5320 = vunpack.c.l.b16 %v4976
    %v5321 = vunpack.c.h.b16 %v4976
    %v5322 = vunpack.c.l.b16 %v4977
    %v5323 = vunpack.c.h.b16 %v4977
    %v5324 = vunpack.c.l.b16 %v4978
    %v5325 = vunpack.c.h.b16 %v4978
    %v5326 = vunpack.c.l.b16 %v4979
    %v5327 = vunpack.c.h.b16 %v4979
    %v5328 = vunpack.c.l.b16 %v4980
    %v5329 = vunpack.c.h.b16 %v4980
    %v5330 = vunpack.c.l.b16 %v4981
    %v5331 = vunpack.c.h.b16 %v4981
    %v5332 = vunpack.c.l.b16 %v4982
    %v5333 = vunpack.c.h.b16 %v4982
    %v5334 = vunpack.c.l.b16 %v4983
    %v5335 = vunpack.c.h.b16 %v4983
    %v5336 = vunpack.c.l.b16 %v4984
    %v5337 = vunpack.c.h.b16 %v4984
    %v5338 = vunpack.c.l.b16 %v4985
    %v5339 = vunpack.c.h.b16 %v4985
    %v5340 = vunpack.c.l.b16 %v4986
    %v5341 = vunpack.c.h.b16 %v4986
    %v5342 = vunpack.c.l.b16 %v4987
    %v5343 = vunpack.c.h.b16 %v4987
    %v5344 = vunpack.c.l.b16 %v4988
    %v5345 = vunpack.c.h.b16 %v4988
    %v5346 = vunpack.c.l.b16 %v4989
    %v5347 = vunpack.c.h.b16 %v4989
    %v5348 = vunpack.c.l.b16 %v4990
    %v5349 = vunpack.c.h.b16 %v4990
    %v5350 = vunpack.c.l.b16 %v4991
    %v5351 = vunpack.c.h.b16 %v4991
    %v5352 = vunpack.c.l.b16 %v4992
    %v5353 = vunpack.c.h.b16 %v4992
    %v5354 = vunpack.c.l.b16 %v4993
    %v5355 = vunpack.c.h.b16 %v4993
    %v5356 = vunpack.c.l.b16 %v4994
    %v5357 = vunpack.c.h.b16 %v4994
    %v5358 = vunpack.c.l.b16 %v4995
    %v5359 = vunpack.c.h.b16 %v4995
    %v5360 = vunpack.c.l.b16 %v4996
    %v5361 = vunpack.c.h.b16 %v4996
    %v5362 = vunpack.c.l.b16 %v4997
    %v5363 = vunpack.c.h.b16 %v4997
    %v5364 = vunpack.c.l.b16 %v4998
    %v5365 = vunpack.c.h.b16 %v4998
    %v5366 = vunpack.c.l.b16 %v4999
    %v5367 = vunpack.c.h.b16 %v4999
    %v5368 = vunpack.c.l.b16 %v5000
    %v5369 = vunpack.c.h.b16 %v5000
    %v5370 = vunpack.c.l.b16 %v5001
    %v5371 = vunpack.c.h.b16 %v5001
    %v5372 = vunpack.c.l.b16 %v5002
    %v5373 = vunpack.c.h.b16 %v5002
    %v5374 = vunpack.c.l.b16 %v5003
    %v5375 = vunpack.c.h.b16 %v5003
    %v5376 = vunpack.c.l.b16 %v5004
    %v5377 = vunpack.c.h.b16 %v5004
    %v5378 = vunpack.c.l.b16 %v5005
    %v5379 = vunpack.c.h.b16 %v5005
    %v5380 = vunpack.c.l.b16 %v5006
    %v5381 = vunpack.c.h.b16 %v5006
    %v5382 = vunpack.c.l.b16 %v5007
    %v5383 = vunpack.c.h.b16 %v5007
    %v5384 = vunpack.c.l.b16 %v5008
    %v5385 = vunpack.c.h.b16 %v5008
    %v5386 = vunpack.c.l.b16 %v5009
    %v5387 = vunpack.c.h.b16 %v5009
    %v5388 = vunpack.c.l.b16 %v5010
    %v5389 = vunpack.c.h.b16 %v5010
    %v5390 = vunpack.c.l.b16 %v5011
    %v5391 = vunpack.c.h.b16 %v5011
    %v5392 = vunpack.c.l.b16 %v5012
    %v5393 = vunpack.c.h.b16 %v5012
    %v5394 = vunpack.c.l.b16 %v5013
    %v5395 = vunpack.c.h.b16 %v5013
    %v5396 = vunpack.c.l.b16 %v5014
    %v5397 = vunpack.c.h.b16 %v5014
    %v5398 = vunpack.c.l.b16 %v5015
    %v5399 = vunpack.c.h.b16 %v5015
    %v5400 = vunpack.c.l.b16 %v5016
    %v5401 = vunpack.c.h.b16 %v5016
    %v5402 = vunpack.c.l.b16 %v5017
    %v5403 = vunpack.c.h.b16 %v5017
    %v5404 = vunpack.c.l.b16 %v5018
    %v5405 = vunpack.c.h.b16 %v5018
    %v5406 = vunpack.c.l.b16 %v5019
    %v5407 = vunpack.c.h.b16 %v5019
    %v5408 = vunpack.c.l.b16 %v5020
    %v5409 = vunpack.c.h.b16 %v5020
    %v5410 = vunpack.c.l.b16 %v5021
    %v5411 = vunpack.c.h.b16 %v5021
    %v5412 = vunpack.c.l.b16 %v5022
    %v5413 = vunpack.c.h.b16 %v5022
    %v5414 = vunpack.c.l.b16 %v5023
    %v5415 = vunpack.c.h.b16 %v5023
    %v5416 = vunpack.c.l.b16 %v5024
    %v5417 = vunpack.c.h.b16 %v5024
    %v5418 = vunpack.c.l.b16 %v5025
    %v5419 = vunpack.c.h.b16 %v5025
    %v5420 = vunpack.c.l.b16 %v5026
    %v5421 = vunpack.c.h.b16 %v5026
    %v5422 = vunpack.c.l.b16 %v5027
    %v5423 = vunpack.c.h.b16 %v5027
    %v5424 = vunpack.c.l.b16 %v5028
    %v5425 = vunpack.c.h.b16 %v5028
    %v5426 = vunpack.c.l.b16 %v5029
    %v5427 = vunpack.c.h.b16 %v5029
    %v5428 = vunpack.c.l.b16 %v5030
    %v5429 = vunpack.c.h.b16 %v5030
    %v5430 = vunpack.c.l.b16 %v5031
    %v5431 = vunpack.c.h.b16 %v5031
    %v5432 = vunpack.c.l.b16 %v5032
    %v5433 = vunpack.c.h.b16 %v5032
    %v5434 = vunpack.c.l.b16 %v5033
    %v5435 = vunpack.c.h.b16 %v5033
    %v5436 = vunpack.c.l.b16 %v5034
    %v5437 = vunpack.c.h.b16 %v5034
    %v5438 = vunpack.c.l.b16 %v5035
    %v5439 = vunpack.c.h.b16 %v5035
    %v5440 = vunpack.c.l.b16 %v5036
    %v5441 = vunpack.c.h.b16 %v5036
    %v5442 = vunpack.c.l.b16 %v5037
    %v5443 = vunpack.c.h.b16 %v5037
    %v5444 = vunpack.c.l.b16 %v5038
    %v5445 = vunpack.c.h.b16 %v5038
    %v5446 = vpack.c.b16 %v5194, %v5190
    %v5447 = vpack.c.b16 %v5195, %v5191
    %v5448 = vpack.c.b16 %v5196, %v5192
    %v5449 = vpack.c.b16 %v5197, %v5193
    %v5450 = vpack.c.b16 %v5202, %v5198
    %v5451 = vpack.c.b16 %v5203, %v5199
    %v5452 = vpack.c.b16 %v5204, %v5200
    %v5453 = vpack.c.b16 %v5205, %v5201
    %v5454 = vpack.c.b16 %v5210, %v5206
    %v5455 = vpack.c.b16 %v5211, %v5207
    %v5456 = vpack.c.b16 %v5212, %v5208
    %v5457 = vpack.c.b16 %v5213, %v5209
    %v5458 = vpack.c.b16 %v5218, %v5214
    %v5459 = vpack.c.b16 %v5219, %v5215
    %v5460 = vpack.c.b16 %v5220, %v5216
    %v5461 = vpack.c.b16 %v5221, %v5217
    %v5462 = vpack.c.b16 %v5226, %v5222
    %v5463 = vpack.c.b16 %v5227, %v5223
    %v5464 = vpack.c.b16 %v5228, %v5224
    %v5465 = vpack.c.b16 %v5229, %v5225
    %v5466 = vpack.c.b16 %v5234, %v5230
    %v5467 = vpack.c.b16 %v5235, %v5231
    %v5468 = vpack.c.b16 %v5236, %v5232
    %v5469 = vpack.c.b16 %v5237, %v5233
    %v5470 = vpack.c.b16 %v5242, %v5238
    %v5471 = vpack.c.b16 %v5243, %v5239
    %v5472 = vpack.c.b16 %v5244, %v5240
    %v5473 = vpack.c.b16 %v5245, %v5241
    %v5474 = vpack.c.b16 %v5250, %v5246
    %v5475 = vpack.c.b16 %v5251, %v5247
    %v5476 = vpack.c.b16 %v5252, %v5248
    %v5477 = vpack.c.b16 %v5253, %v5249
    %v5478 = vpack.c.b16 %v5258, %v5254
    %v5479 = vpack.c.b16 %v5259, %v5255
    %v5480 = vpack.c.b16 %v5260, %v5256
    %v5481 = vpack.c.b16 %v5261, %v5257
    %v5482 = vpack.c.b16 %v5266, %v5262
    %v5483 = vpack.c.b16 %v5267, %v5263
    %v5484 = vpack.c.b16 %v5268, %v5264
    %v5485 = vpack.c.b16 %v5269, %v5265
    %v5486 = vpack.c.b16 %v5274, %v5270
    %v5487 = vpack.c.b16 %v5275, %v5271
    %v5488 = vpack.c.b16 %v5276, %v5272
    %v5489 = vpack.c.b16 %v5277, %v5273
    %v5490 = vpack.c.b16 %v5282, %v5278
    %v5491 = vpack.c.b16 %v5283, %v5279
    %v5492 = vpack.c.b16 %v5284, %v5280
    %v5493 = vpack.c.b16 %v5285, %v5281
    %v5494 = vpack.c.b16 %v5290, %v5286
    %v5495 = vpack.c.b16 %v5291, %v5287
    %v5496 = vpack.c.b16 %v5292, %v5288
    %v5497 = vpack.c.b16 %v5293, %v5289
    %v5498 = vpack.c.b16 %v5298, %v5294
    %v5499 = vpack.c.b16 %v5299, %v5295
    %v5500 = vpack.c.b16 %v5300, %v5296
    %v5501 = vpack.c.b16 %v5301, %v5297
    %v5502 = vpack.c.b16 %v5306, %v5302
    %v5503 = vpack.c.b16 %v5307, %v5303
    %v5504 = vpack.c.b16 %v5308, %v5304
    %v5505 = vpack.c.b16 %v5309, %v5305
    %v5506 = vpack.c.b16 %v5314, %v5310
    %v5507 = vpack.c.b16 %v5315, %v5311
    %v5508 = vpack.c.b16 %v5316, %v5312
    %v5509 = vpack.c.b16 %v5317, %v5313
    %v5510 = vpack.c.b16 %v5322, %v5318
    %v5511 = vpack.c.b16 %v5323, %v5319
    %v5512 = vpack.c.b16 %v5324, %v5320
    %v5513 = vpack.c.b16 %v5325, %v5321
    %v5514 = vpack.c.b16 %v5330, %v5326
    %v5515 = vpack.c.b16 %v5331, %v5327
    %v5516 = vpack.c.b16 %v5332, %v5328
    %v5517 = vpack.c.b16 %v5333, %v5329
    %v5518 = vpack.c.b16 %v5338, %v5334
    %v5519 = vpack.c.b16 %v5339, %v5335
    %v5520 = vpack.c.b16 %v5340, %v5336
    %v5521 = vpack.c.b16 %v5341, %v5337
    %v5522 = vpack.c.b16 %v5346, %v5342
    %v5523 = vpack.c.b16 %v5347, %v5343
    %v5524 = vpack.c.b16 %v5348, %v5344
    %v5525 = vpack.c.b16 %v5349, %v5345
    %v5526 = vpack.c.b16 %v5354, %v5350
    %v5527 = vpack.c.b16 %v5355, %v5351
    %v5528 = vpack.c.b16 %v5356, %v5352
    %v5529 = vpack.c.b16 %v5357, %v5353
    %v5530 = vpack.c.b16 %v5362, %v5358
    %v5531 = vpack.c.b16 %v5363, %v5359
    %v5532 = vpack.c.b16 %v5364, %v5360
    %v5533 = vpack.c.b16 %v5365, %v5361
    %v5534 = vpack.c.b16 %v5370, %v5366
    %v5535 = vpack.c.b16 %v5371, %v5367
    %v5536 = vpack.c.b16 %v5372, %v5368
    %v5537 = vpack.c.b16 %v5373, %v5369
    %v5538 = vpack.c.b16 %v5378, %v5374
    %v5539 = vpack.c.b16 %v5379, %v5375
    %v5540 = vpack.c.b16 %v5380, %v5376
    %v5541 = vpack.c.b16 %v5381, %v5377
    %v5542 = vpack.c.b16 %v5386, %v5382
    %v5543 = vpack.c.b16 %v5387, %v5383
    %v5544 = vpack.c.b16 %v5388, %v5384
    %v5545 = vpack.c.b16 %v5389, %v5385
    %v5546 = vpack.c.b16 %v5394, %v5390
    %v5547 = vpack.c.b16 %v5395, %v5391
    %v5548 = vpack.c.b16 %v5396, %v5392
    %v5549 = vpack.c.b16 %v5397, %v5393
    %v5550 = vpack.c.b16 %v5402, %v5398
    %v5551 = vpack.c.b16 %v5403, %v5399
    %v5552 = vpack.c.b16 %v5404, %v5400
    %v5553 = vpack.c.b16 %v5405, %v5401
    %v5554 = vpack.c.b16 %v5410, %v5406
    %v5555 = vpack.c.b16 %v5411, %v5407
    %v5556 = vpack.c.b16 %v5412, %v5408
    %v5557 = vpack.c.b16 %v5413, %v5409
    %v5558 = vpack.c.b16 %v5418, %v5414
    %v5559 = vpack.c.b16 %v5419, %v5415
    %v5560 = vpack.c.b16 %v5420, %v5416
    %v5561 = vpack.c.b16 %v5421, %v5417
    %v5562 = vpack.c.b16 %v5426, %v5422
    %v5563 = vpack.c.b16 %v5427, %v5423
    %v5564 = vpack.c.b16 %v5428, %v5424
    %v5565 = vpack.c.b16 %v5429, %v5425
    %v5566 = vpack.c.b16 %v5434, %v5430
    %v5567 = vpack.c.b16 %v5435, %v5431
    %v5568 = vpack.c.b16 %v5436, %v5432
    %v5569 = vpack.c.b16 %v5437, %v5433
    %v5570 = vpack.c.b16 %v5442, %v5438
    %v5571 = vpack.c.b16 %v5443, %v5439
    %v5572 = vpack.c.b16 %v5444, %v5440
    %v5573 = vpack.c.b16 %v5445, %v5441
    %5702 = vmatprep.subr.bf16.mxu0 %v5447
    %5703 = vmatpush1.bf16.msra.mxu0 %v5446
    %5704 = vmatprep.subr.bf16.mxu0 %v5451
    %5705 = vmatpush1.bf16.msra.mxu0 %v5450
    %5706 = vmatprep.subr.bf16.mxu0 %v5455
    %5707 = vmatpush1.bf16.msra.mxu0 %v5454
    %5708 = vmatprep.subr.bf16.mxu0 %v5459
    %5709 = vmatpush1.bf16.msra.mxu0 %v5458
    %5710 = vmatprep.subr.bf16.mxu0 %v5463
    %5711 = vmatpush1.bf16.msra.mxu0 %v5462
    %5712 = vmatprep.subr.bf16.mxu0 %v5467
    %5713 = vmatpush1.bf16.msra.mxu0 %v5466
    %5714 = vmatprep.subr.bf16.mxu0 %v5471
    %5715 = vmatpush1.bf16.msra.mxu0 %v5470
    %5716 = vmatprep.subr.bf16.mxu0 %v5475
    %5717 = vmatpush1.bf16.msra.mxu0 %v5474
    %5718 = vmatprep.subr.bf16.mxu0 %v5479
    %5719 = vmatpush1.bf16.msra.mxu0 %v5478
    %5720 = vmatprep.subr.bf16.mxu0 %v5483
    %5721 = vmatpush1.bf16.msra.mxu0 %v5482
    %5722 = vmatprep.subr.bf16.mxu0 %v5487
    %5723 = vmatpush1.bf16.msra.mxu0 %v5486
    %5724 = vmatprep.subr.bf16.mxu0 %v5491
    %5725 = vmatpush1.bf16.msra.mxu0 %v5490
    %5726 = vmatprep.subr.bf16.mxu0 %v5495
    %5727 = vmatpush1.bf16.msra.mxu0 %v5494
    %5728 = vmatprep.subr.bf16.mxu0 %v5499
    %5729 = vmatpush1.bf16.msra.mxu0 %v5498
    %5730 = vmatprep.subr.bf16.mxu0 %v5503
    %5731 = vmatpush1.bf16.msra.mxu0 %v5502
    %5732 = vmatprep.subr.bf16.mxu0 %v5507
    %5733 = vmatpush1.bf16.msra.mxu0 %v5506
    %5734 = vmatprep.mubr.bf16.mxu0 %v4907
    %5735 = vmatmul.mubr.bf16.gmra.mrb[0].mxu0 %v4906
    %v5736 = vpop.f32.mrb[0].mxu0
    %v5737 = vadd.f32 %v5045, %v5736
    %v5738 = vpop.f32.mrb[0].mxu0
    %v5739 = vadd.f32 %v5049, %v5738
    %v5740 = vpop.f32.mrb[0].mxu0
    %v5741 = vpop.f32.mrb[0].mxu0
    %5742 = vdwg.mxu0
    %5743 = vmatprep.subr.bf16.mxu0 %v5511
    %5744 = vmatpush1.bf16.msra.mxu0 %v5510
    %5745 = vmatprep.subr.bf16.mxu0 %v5515
    %5746 = vmatpush1.bf16.msra.mxu0 %v5514
    %5747 = vmatprep.subr.bf16.mxu0 %v5519
    %5748 = vmatpush1.bf16.msra.mxu0 %v5518
    %5749 = vmatprep.subr.bf16.mxu0 %v5523
    %5750 = vmatpush1.bf16.msra.mxu0 %v5522
    %5751 = vmatprep.subr.bf16.mxu0 %v5527
    %5752 = vmatpush1.bf16.msra.mxu0 %v5526
    %5753 = vmatprep.subr.bf16.mxu0 %v5531
    %5754 = vmatpush1.bf16.msra.mxu0 %v5530
    %5755 = vmatprep.subr.bf16.mxu0 %v5535
    %5756 = vmatpush1.bf16.msra.mxu0 %v5534
    %5757 = vmatprep.subr.bf16.mxu0 %v5539
    %5758 = vmatpush1.bf16.msra.mxu0 %v5538
    %5759 = vmatprep.subr.bf16.mxu0 %v5543
    %5760 = vmatpush1.bf16.msra.mxu0 %v5542
    %5761 = vmatprep.subr.bf16.mxu0 %v5547
    %5762 = vmatpush1.bf16.msra.mxu0 %v5546
    %5763 = vmatprep.subr.bf16.mxu0 %v5551
    %5764 = vmatpush1.bf16.msra.mxu0 %v5550
    %5765 = vmatprep.subr.bf16.mxu0 %v5555
    %5766 = vmatpush1.bf16.msra.mxu0 %v5554
    %5767 = vmatprep.subr.bf16.mxu0 %v5559
    %5768 = vmatpush1.bf16.msra.mxu0 %v5558
    %5769 = vmatprep.subr.bf16.mxu0 %v5563
    %5770 = vmatpush1.bf16.msra.mxu0 %v5562
    %5771 = vmatprep.subr.bf16.mxu0 %v5567
    %5772 = vmatpush1.bf16.msra.mxu0 %v5566
    %5773 = vmatprep.subr.bf16.mxu0 %v5571
    %5774 = vmatpush1.bf16.msra.mxu0 %v5570
    %5775 = vmatprep.mubr.bf16.mxu0 %v4909
    %5776 = vmatmul.mubr.bf16.gmra.mrb[0].mxu0 %v4908
    %v5777 = vpop.f32.mrb[0].mxu0
    %v5778 = vadd.f32 %v5737, %v5777
    %v5779 = vpop.f32.mrb[0].mxu0
    %v5780 = vadd.f32 %v5739, %v5779
    %v5781 = vpop.f32.mrb[0].mxu0
    %v5782 = vpop.f32.mrb[0].mxu0
    %5783 = vdwg.mxu0
    %5784 = vmatprep.subr.bf16.mxu0 %v5449
    %5785 = vmatpush1.bf16.msra.mxu0 %v5448
    %5786 = vmatprep.subr.bf16.mxu0 %v5453
    %5787 = vmatpush1.bf16.msra.mxu0 %v5452
    %5788 = vmatprep.subr.bf16.mxu0 %v5457
    %5789 = vmatpush1.bf16.msra.mxu0 %v5456
    %5790 = vmatprep.subr.bf16.mxu0 %v5461
    %5791 = vmatpush1.bf16.msra.mxu0 %v5460
    %5792 = vmatprep.subr.bf16.mxu0 %v5465
    %5793 = vmatpush1.bf16.msra.mxu0 %v5464
    %5794 = vmatprep.subr.bf16.mxu0 %v5469
    %5795 = vmatpush1.bf16.msra.mxu0 %v5468
    %5796 = vmatprep.subr.bf16.mxu0 %v5473
    %5797 = vmatpush1.bf16.msra.mxu0 %v5472
    %5798 = vmatprep.subr.bf16.mxu0 %v5477
    %5799 = vmatpush1.bf16.msra.mxu0 %v5476
    %5800 = vmatprep.subr.bf16.mxu0 %v5481
    %5801 = vmatpush1.bf16.msra.mxu0 %v5480
    %5802 = vmatprep.subr.bf16.mxu0 %v5485
    %5803 = vmatpush1.bf16.msra.mxu0 %v5484
    %5804 = vmatprep.subr.bf16.mxu0 %v5489
    %5805 = vmatpush1.bf16.msra.mxu0 %v5488
    %5806 = vmatprep.subr.bf16.mxu0 %v5493
    %5807 = vmatpush1.bf16.msra.mxu0 %v5492
    %5808 = vmatprep.subr.bf16.mxu0 %v5497
    %5809 = vmatpush1.bf16.msra.mxu0 %v5496
    %5810 = vmatprep.subr.bf16.mxu0 %v5501
    %5811 = vmatpush1.bf16.msra.mxu0 %v5500
    %5812 = vmatprep.subr.bf16.mxu0 %v5505
    %5813 = vmatpush1.bf16.msra.mxu0 %v5504
    %5814 = vmatprep.subr.bf16.mxu0 %v5509
    %5815 = vmatpush1.bf16.msra.mxu0 %v5508
    %5816 = vmatprep.mubr.bf16.mxu0 %v4907
    %5817 = vmatmul.mubr.bf16.gmra.mrb[0].mxu0 %v4906
    %v5818 = vpop.f32.mrb[0].mxu0
    %v5819 = vadd.f32 %v5053, %v5818
    %v5820 = vpop.f32.mrb[0].mxu0
    %v5821 = vadd.f32 %v5057, %v5820
    %v5822 = vpop.f32.mrb[0].mxu0
    %v5823 = vpop.f32.mrb[0].mxu0
    %5824 = vdwg.mxu0
    %5825 = vmatprep.subr.bf16.mxu0 %v5513
    %5826 = vmatpush1.bf16.msra.mxu0 %v5512
    %5827 = vmatprep.subr.bf16.mxu0 %v5517
    %5828 = vmatpush1.bf16.msra.mxu0 %v5516
    %5829 = vmatprep.subr.bf16.mxu0 %v5521
    %5830 = vmatpush1.bf16.msra.mxu0 %v5520
    %5831 = vmatprep.subr.bf16.mxu0 %v5525
    %5832 = vmatpush1.bf16.msra.mxu0 %v5524
    %5833 = vmatprep.subr.bf16.mxu0 %v5529
    %5834 = vmatpush1.bf16.msra.mxu0 %v5528
    %5835 = vmatprep.subr.bf16.mxu0 %v5533
    %5836 = vmatpush1.bf16.msra.mxu0 %v5532
    %5837 = vmatprep.subr.bf16.mxu0 %v5537
    %5838 = vmatpush1.bf16.msra.mxu0 %v5536
    %5839 = vmatprep.subr.bf16.mxu0 %v5541
    %5840 = vmatpush1.bf16.msra.mxu0 %v5540
    %5841 = vmatprep.subr.bf16.mxu0 %v5545
    %5842 = vmatpush1.bf16.msra.mxu0 %v5544
    %5843 = vmatprep.subr.bf16.mxu0 %v5549
    %5844 = vmatpush1.bf16.msra.mxu0 %v5548
    %5845 = vmatprep.subr.bf16.mxu0 %v5553
    %5846 = vmatpush1.bf16.msra.mxu0 %v5552
    %5847 = vmatprep.subr.bf16.mxu0 %v5557
    %5848 = vmatpush1.bf16.msra.mxu0 %v5556
    %5849 = vmatprep.subr.bf16.mxu0 %v5561
    %5850 = vmatpush1.bf16.msra.mxu0 %v5560
    %5851 = vmatprep.subr.bf16.mxu0 %v5565
    %5852 = vmatpush1.bf16.msra.mxu0 %v5564
    %5853 = vmatprep.subr.bf16.mxu0 %v5569
    %5854 = vmatpush1.bf16.msra.mxu0 %v5568
    %5855 = vmatprep.subr.bf16.mxu0 %v5573
    %5856 = vmatpush1.bf16.msra.mxu0 %v5572
    %5857 = vmatprep.mubr.bf16.mxu0 %v4909
    %5858 = vmatmul.mubr.bf16.gmra.mrb[0].mxu0 %v4908
    %v5859 = vpop.f32.mrb[0].mxu0
    %v5860 = vadd.f32 %v5819, %v5859
    %v5861 = vpop.f32.mrb[0].mxu0
    %v5862 = vadd.f32 %v5821, %v5861
    %v5863 = vpop.f32.mrb[0].mxu0
    %v5864 = vpop.f32.mrb[0].mxu0
    %5865 = vdwg.mxu0
    %v5866 = vmul.f32 %v5778, 0.01
    %v5867 = vmul.f32 %v5780, 0.01
    %v5868 = vmul.f32 %v5860, 0.01
    %v5869 = vmul.f32 %v5862, 0.01
    %v5870 = vmax.f32 %v5778, %v5866
    %v5871 = vmax.f32 %v5780, %v5867
    %v5872 = vmax.f32 %v5860, %v5868
    %v5873 = vmax.f32 %v5862, %v5869
    %v5874 = vadd.f32 %v5870, %v4902
    %v5875 = vadd.f32 %v5871, %v4903
    %v5876 = vadd.f32 %v5872, %v4904
    %v5877 = vadd.f32 %v5873, %v4905
    %v5878 = vpack.c.bf16 %v5874, %v5874
    %v5879 = vpack.c.bf16 %v5875, %v5875
    %v5880 = vpack.c.bf16 %v5876, %v5876
    %v5881 = vpack.c.bf16 %v5877, %v5877
    %s5882 = scalar_lea.vmem [#allocation2], 6144
    %v5883 = vld [vmem:[%s5882] sm:$0xff]
    %v5884 = vld [vmem:[%s5882 + $0x8] sm:$0xff]
    %v5885 = vld [vmem:[%s5882 + $0x10] sm:$0xff]
    %v5886 = vld [vmem:[%s5882 + $0x18] sm:$0xff]
    %v5887 = vld [vmem:[%s5882 + $0x20] sm:$0xff]
    %v5888 = vld [vmem:[%s5882 + $0x28] sm:$0xff]
    %v5889 = vld [vmem:[%s5882 + $0x30] sm:$0xff]
    %v5890 = vld [vmem:[%s5882 + $0x38] sm:$0xff]
    %v5891 = vld [vmem:[%s5882 + $0x40] sm:$0xff]
    %v5892 = vld [vmem:[%s5882 + $0x48] sm:$0xff]
    %v5893 = vld [vmem:[%s5882 + $0x50] sm:$0xff]
    %v5894 = vld [vmem:[%s5882 + $0x58] sm:$0xff]
    %v5895 = vld [vmem:[%s5882 + $0x60] sm:$0xff]
    %v5896 = vld [vmem:[%s5882 + $0x68] sm:$0xff]
    %v5897 = vld [vmem:[%s5882 + $0x70] sm:$0xff]
    %v5898 = vld [vmem:[%s5882 + $0x78] sm:$0xff]
    %v5899 = vld [vmem:[%s5882 + $0x80] sm:$0xff]
    %v5900 = vld [vmem:[%s5882 + $0x88] sm:$0xff]
    %v5901 = vld [vmem:[%s5882 + $0x90] sm:$0xff]
    %v5902 = vld [vmem:[%s5882 + $0x98] sm:$0xff]
    %v5903 = vld [vmem:[%s5882 + $0xa0] sm:$0xff]
    %v5904 = vld [vmem:[%s5882 + $0xa8] sm:$0xff]
    %v5905 = vld [vmem:[%s5882 + $0xb0] sm:$0xff]
    %v5906 = vld [vmem:[%s5882 + $0xb8] sm:$0xff]
    %v5907 = vld [vmem:[%s5882 + $0xc0] sm:$0xff]
    %v5908 = vld [vmem:[%s5882 + $0xc8] sm:$0xff]
    %v5909 = vld [vmem:[%s5882 + $0xd0] sm:$0xff]
    %v5910 = vld [vmem:[%s5882 + $0xd8] sm:$0xff]
    %v5911 = vld [vmem:[%s5882 + $0xe0] sm:$0xff]
    %v5912 = vld [vmem:[%s5882 + $0xe8] sm:$0xff]
    %v5913 = vld [vmem:[%s5882 + $0xf0] sm:$0xff]
    %v5914 = vld [vmem:[%s5882 + $0xf8] sm:$0xff]
    %v5915 = vld [vmem:[%s5882 + $0x100] sm:$0xff]
    %v5916 = vld [vmem:[%s5882 + $0x108] sm:$0xff]
    %v5917 = vld [vmem:[%s5882 + $0x110] sm:$0xff]
    %v5918 = vld [vmem:[%s5882 + $0x118] sm:$0xff]
    %v5919 = vld [vmem:[%s5882 + $0x120] sm:$0xff]
    %v5920 = vld [vmem:[%s5882 + $0x128] sm:$0xff]
    %v5921 = vld [vmem:[%s5882 + $0x130] sm:$0xff]
    %v5922 = vld [vmem:[%s5882 + $0x138] sm:$0xff]
    %v5923 = vld [vmem:[%s5882 + $0x140] sm:$0xff]
    %v5924 = vld [vmem:[%s5882 + $0x148] sm:$0xff]
    %v5925 = vld [vmem:[%s5882 + $0x150] sm:$0xff]
    %v5926 = vld [vmem:[%s5882 + $0x158] sm:$0xff]
    %v5927 = vld [vmem:[%s5882 + $0x160] sm:$0xff]
    %v5928 = vld [vmem:[%s5882 + $0x168] sm:$0xff]
    %v5929 = vld [vmem:[%s5882 + $0x170] sm:$0xff]
    %v5930 = vld [vmem:[%s5882 + $0x178] sm:$0xff]
    %v5931 = vld [vmem:[%s5882 + $0x180] sm:$0xff]
    %v5932 = vld [vmem:[%s5882 + $0x188] sm:$0xff]
    %v5933 = vld [vmem:[%s5882 + $0x190] sm:$0xff]
    %v5934 = vld [vmem:[%s5882 + $0x198] sm:$0xff]
    %v5935 = vld [vmem:[%s5882 + $0x1a0] sm:$0xff]
    %v5936 = vld [vmem:[%s5882 + $0x1a8] sm:$0xff]
    %v5937 = vld [vmem:[%s5882 + $0x1b0] sm:$0xff]
    %v5938 = vld [vmem:[%s5882 + $0x1b8] sm:$0xff]
    %v5939 = vld [vmem:[%s5882 + $0x1c0] sm:$0xff]
    %v5940 = vld [vmem:[%s5882 + $0x1c8] sm:$0xff]
    %v5941 = vld [vmem:[%s5882 + $0x1d0] sm:$0xff]
    %v5942 = vld [vmem:[%s5882 + $0x1d8] sm:$0xff]
    %v5943 = vld [vmem:[%s5882 + $0x1e0] sm:$0xff]
    %v5944 = vld [vmem:[%s5882 + $0x1e8] sm:$0xff]
    %v5945 = vld [vmem:[%s5882 + $0x1f0] sm:$0xff]
    %v5946 = vld [vmem:[%s5882 + $0x1f8] sm:$0xff]
    %v5947 = vld [vmem:[%s5882 + $0x200] sm:$0xff]
    %v5948 = vld [vmem:[%s5882 + $0x208] sm:$0xff]
    %v5949 = vld [vmem:[%s5882 + $0x210] sm:$0xff]
    %v5950 = vld [vmem:[%s5882 + $0x218] sm:$0xff]
    %v5951 = vld [vmem:[%s5882 + $0x220] sm:$0xff]
    %v5952 = vld [vmem:[%s5882 + $0x228] sm:$0xff]
    %v5953 = vld [vmem:[%s5882 + $0x230] sm:$0xff]
    %v5954 = vld [vmem:[%s5882 + $0x238] sm:$0xff]
    %v5955 = vld [vmem:[%s5882 + $0x240] sm:$0xff]
    %v5956 = vld [vmem:[%s5882 + $0x248] sm:$0xff]
    %v5957 = vld [vmem:[%s5882 + $0x250] sm:$0xff]
    %v5958 = vld [vmem:[%s5882 + $0x258] sm:$0xff]
    %v5959 = vld [vmem:[%s5882 + $0x260] sm:$0xff]
    %v5960 = vld [vmem:[%s5882 + $0x268] sm:$0xff]
    %v5961 = vld [vmem:[%s5882 + $0x270] sm:$0xff]
    %v5962 = vld [vmem:[%s5882 + $0x278] sm:$0xff]
    %v5963 = vld [vmem:[%s5882 + $0x280] sm:$0xff]
    %v5964 = vld [vmem:[%s5882 + $0x288] sm:$0xff]
    %v5965 = vld [vmem:[%s5882 + $0x290] sm:$0xff]
    %v5966 = vld [vmem:[%s5882 + $0x298] sm:$0xff]
    %v5967 = vld [vmem:[%s5882 + $0x2a0] sm:$0xff]
    %v5968 = vld [vmem:[%s5882 + $0x2a8] sm:$0xff]
    %v5969 = vld [vmem:[%s5882 + $0x2b0] sm:$0xff]
    %v5970 = vld [vmem:[%s5882 + $0x2b8] sm:$0xff]
    %v5971 = vld [vmem:[%s5882 + $0x2c0] sm:$0xff]
    %v5972 = vld [vmem:[%s5882 + $0x2c8] sm:$0xff]
    %v5973 = vld [vmem:[%s5882 + $0x2d0] sm:$0xff]
    %v5974 = vld [vmem:[%s5882 + $0x2d8] sm:$0xff]
    %v5975 = vld [vmem:[%s5882 + $0x2e0] sm:$0xff]
    %v5976 = vld [vmem:[%s5882 + $0x2e8] sm:$0xff]
    %v5977 = vld [vmem:[%s5882 + $0x2f0] sm:$0xff]
    %v5978 = vld [vmem:[%s5882 + $0x2f8] sm:$0xff]
    %v5979 = vld [vmem:[%s5882 + $0x300] sm:$0xff]
    %v5980 = vld [vmem:[%s5882 + $0x308] sm:$0xff]
    %v5981 = vld [vmem:[%s5882 + $0x310] sm:$0xff]
    %v5982 = vld [vmem:[%s5882 + $0x318] sm:$0xff]
    %v5983 = vld [vmem:[%s5882 + $0x320] sm:$0xff]
    %v5984 = vld [vmem:[%s5882 + $0x328] sm:$0xff]
    %v5985 = vld [vmem:[%s5882 + $0x330] sm:$0xff]
    %v5986 = vld [vmem:[%s5882 + $0x338] sm:$0xff]
    %v5987 = vld [vmem:[%s5882 + $0x340] sm:$0xff]
    %v5988 = vld [vmem:[%s5882 + $0x348] sm:$0xff]
    %v5989 = vld [vmem:[%s5882 + $0x350] sm:$0xff]
    %v5990 = vld [vmem:[%s5882 + $0x358] sm:$0xff]
    %v5991 = vld [vmem:[%s5882 + $0x360] sm:$0xff]
    %v5992 = vld [vmem:[%s5882 + $0x368] sm:$0xff]
    %v5993 = vld [vmem:[%s5882 + $0x370] sm:$0xff]
    %v5994 = vld [vmem:[%s5882 + $0x378] sm:$0xff]
    %v5995 = vld [vmem:[%s5882 + $0x380] sm:$0xff]
    %v5996 = vld [vmem:[%s5882 + $0x388] sm:$0xff]
    %v5997 = vld [vmem:[%s5882 + $0x390] sm:$0xff]
    %v5998 = vld [vmem:[%s5882 + $0x398] sm:$0xff]
    %v5999 = vld [vmem:[%s5882 + $0x3a0] sm:$0xff]
    %v6000 = vld [vmem:[%s5882 + $0x3a8] sm:$0xff]
    %v6001 = vld [vmem:[%s5882 + $0x3b0] sm:$0xff]
    %v6002 = vld [vmem:[%s5882 + $0x3b8] sm:$0xff]
    %v6003 = vld [vmem:[%s5882 + $0x3c0] sm:$0xff]
    %v6004 = vld [vmem:[%s5882 + $0x3c8] sm:$0xff]
    %v6005 = vld [vmem:[%s5882 + $0x3d0] sm:$0xff]
    %v6006 = vld [vmem:[%s5882 + $0x3d8] sm:$0xff]
    %v6007 = vld [vmem:[%s5882 + $0x3e0] sm:$0xff]
    %v6008 = vld [vmem:[%s5882 + $0x3e8] sm:$0xff]
    %v6009 = vld [vmem:[%s5882 + $0x3f0] sm:$0xff]
    %v6010 = vld [vmem:[%s5882 + $0x3f8] sm:$0xff]
    %s6011 = scalar_lea.vmem [#allocation4], 24
    %v6012 = vld [vmem:[%s6011] sm:$0xf]
    %v6014 = vlaneseq
    %v6015 = vshrl.u32 %v6014, 7
    %v6016 = vsub.s32 0, %v6015
    %v6017 = vrot.slane %v6012, %v6016
    %v6018 = vlaneseq
    %v6019 = vshrl.u32 %v6018, 7
    %v6020 = vsub.s32 1, %v6019
    %v6021 = vrot.slane %v6012, %v6020
    %v6022 = vlaneseq
    %v6023 = vshrl.u32 %v6022, 7
    %v6024 = vsub.s32 2, %v6023
    %v6025 = vrot.slane %v6012, %v6024
    %v6026 = vlaneseq
    %v6027 = vshrl.u32 %v6026, 7
    %v6028 = vsub.s32 3, %v6027
    %v6029 = vrot.slane %v6012, %v6028
    %v6162 = vunpack.c.l.b16 %v5883
    %v6163 = vunpack.c.h.b16 %v5883
    %v6164 = vunpack.c.l.b16 %v5884
    %v6165 = vunpack.c.h.b16 %v5884
    %v6166 = vunpack.c.l.b16 %v5885
    %v6167 = vunpack.c.h.b16 %v5885
    %v6168 = vunpack.c.l.b16 %v5886
    %v6169 = vunpack.c.h.b16 %v5886
    %v6170 = vunpack.c.l.b16 %v5887
    %v6171 = vunpack.c.h.b16 %v5887
    %v6172 = vunpack.c.l.b16 %v5888
    %v6173 = vunpack.c.h.b16 %v5888
    %v6174 = vunpack.c.l.b16 %v5889
    %v6175 = vunpack.c.h.b16 %v5889
    %v6176 = vunpack.c.l.b16 %v5890
    %v6177 = vunpack.c.h.b16 %v5890
    %v6178 = vunpack.c.l.b16 %v5891
    %v6179 = vunpack.c.h.b16 %v5891
    %v6180 = vunpack.c.l.b16 %v5892
    %v6181 = vunpack.c.h.b16 %v5892
    %v6182 = vunpack.c.l.b16 %v5893
    %v6183 = vunpack.c.h.b16 %v5893
    %v6184 = vunpack.c.l.b16 %v5894
    %v6185 = vunpack.c.h.b16 %v5894
    %v6186 = vunpack.c.l.b16 %v5895
    %v6187 = vunpack.c.h.b16 %v5895
    %v6188 = vunpack.c.l.b16 %v5896
    %v6189 = vunpack.c.h.b16 %v5896
    %v6190 = vunpack.c.l.b16 %v5897
    %v6191 = vunpack.c.h.b16 %v5897
    %v6192 = vunpack.c.l.b16 %v5898
    %v6193 = vunpack.c.h.b16 %v5898
    %v6194 = vunpack.c.l.b16 %v5899
    %v6195 = vunpack.c.h.b16 %v5899
    %v6196 = vunpack.c.l.b16 %v5900
    %v6197 = vunpack.c.h.b16 %v5900
    %v6198 = vunpack.c.l.b16 %v5901
    %v6199 = vunpack.c.h.b16 %v5901
    %v6200 = vunpack.c.l.b16 %v5902
    %v6201 = vunpack.c.h.b16 %v5902
    %v6202 = vunpack.c.l.b16 %v5903
    %v6203 = vunpack.c.h.b16 %v5903
    %v6204 = vunpack.c.l.b16 %v5904
    %v6205 = vunpack.c.h.b16 %v5904
    %v6206 = vunpack.c.l.b16 %v5905
    %v6207 = vunpack.c.h.b16 %v5905
    %v6208 = vunpack.c.l.b16 %v5906
    %v6209 = vunpack.c.h.b16 %v5906
    %v6210 = vunpack.c.l.b16 %v5907
    %v6211 = vunpack.c.h.b16 %v5907
    %v6212 = vunpack.c.l.b16 %v5908
    %v6213 = vunpack.c.h.b16 %v5908
    %v6214 = vunpack.c.l.b16 %v5909
    %v6215 = vunpack.c.h.b16 %v5909
    %v6216 = vunpack.c.l.b16 %v5910
    %v6217 = vunpack.c.h.b16 %v5910
    %v6218 = vunpack.c.l.b16 %v5911
    %v6219 = vunpack.c.h.b16 %v5911
    %v6220 = vunpack.c.l.b16 %v5912
    %v6221 = vunpack.c.h.b16 %v5912
    %v6222 = vunpack.c.l.b16 %v5913
    %v6223 = vunpack.c.h.b16 %v5913
    %v6224 = vunpack.c.l.b16 %v5914
    %v6225 = vunpack.c.h.b16 %v5914
    %v6226 = vunpack.c.l.b16 %v5915
    %v6227 = vunpack.c.h.b16 %v5915
    %v6228 = vunpack.c.l.b16 %v5916
    %v6229 = vunpack.c.h.b16 %v5916
    %v6230 = vunpack.c.l.b16 %v5917
    %v6231 = vunpack.c.h.b16 %v5917
    %v6232 = vunpack.c.l.b16 %v5918
    %v6233 = vunpack.c.h.b16 %v5918
    %v6234 = vunpack.c.l.b16 %v5919
    %v6235 = vunpack.c.h.b16 %v5919
    %v6236 = vunpack.c.l.b16 %v5920
    %v6237 = vunpack.c.h.b16 %v5920
    %v6238 = vunpack.c.l.b16 %v5921
    %v6239 = vunpack.c.h.b16 %v5921
    %v6240 = vunpack.c.l.b16 %v5922
    %v6241 = vunpack.c.h.b16 %v5922
    %v6242 = vunpack.c.l.b16 %v5923
    %v6243 = vunpack.c.h.b16 %v5923
    %v6244 = vunpack.c.l.b16 %v5924
    %v6245 = vunpack.c.h.b16 %v5924
    %v6246 = vunpack.c.l.b16 %v5925
    %v6247 = vunpack.c.h.b16 %v5925
    %v6248 = vunpack.c.l.b16 %v5926
    %v6249 = vunpack.c.h.b16 %v5926
    %v6250 = vunpack.c.l.b16 %v5927
    %v6251 = vunpack.c.h.b16 %v5927
    %v6252 = vunpack.c.l.b16 %v5928
    %v6253 = vunpack.c.h.b16 %v5928
    %v6254 = vunpack.c.l.b16 %v5929
    %v6255 = vunpack.c.h.b16 %v5929
    %v6256 = vunpack.c.l.b16 %v5930
    %v6257 = vunpack.c.h.b16 %v5930
    %v6258 = vunpack.c.l.b16 %v5931
    %v6259 = vunpack.c.h.b16 %v5931
    %v6260 = vunpack.c.l.b16 %v5932
    %v6261 = vunpack.c.h.b16 %v5932
    %v6262 = vunpack.c.l.b16 %v5933
    %v6263 = vunpack.c.h.b16 %v5933
    %v6264 = vunpack.c.l.b16 %v5934
    %v6265 = vunpack.c.h.b16 %v5934
    %v6266 = vunpack.c.l.b16 %v5935
    %v6267 = vunpack.c.h.b16 %v5935
    %v6268 = vunpack.c.l.b16 %v5936
    %v6269 = vunpack.c.h.b16 %v5936
    %v6270 = vunpack.c.l.b16 %v5937
    %v6271 = vunpack.c.h.b16 %v5937
    %v6272 = vunpack.c.l.b16 %v5938
    %v6273 = vunpack.c.h.b16 %v5938
    %v6274 = vunpack.c.l.b16 %v5939
    %v6275 = vunpack.c.h.b16 %v5939
    %v6276 = vunpack.c.l.b16 %v5940
    %v6277 = vunpack.c.h.b16 %v5940
    %v6278 = vunpack.c.l.b16 %v5941
    %v6279 = vunpack.c.h.b16 %v5941
    %v6280 = vunpack.c.l.b16 %v5942
    %v6281 = vunpack.c.h.b16 %v5942
    %v6282 = vunpack.c.l.b16 %v5943
    %v6283 = vunpack.c.h.b16 %v5943
    %v6284 = vunpack.c.l.b16 %v5944
    %v6285 = vunpack.c.h.b16 %v5944
    %v6286 = vunpack.c.l.b16 %v5945
    %v6287 = vunpack.c.h.b16 %v5945
    %v6288 = vunpack.c.l.b16 %v5946
    %v6289 = vunpack.c.h.b16 %v5946
    %v6290 = vunpack.c.l.b16 %v5947
    %v6291 = vunpack.c.h.b16 %v5947
    %v6292 = vunpack.c.l.b16 %v5948
    %v6293 = vunpack.c.h.b16 %v5948
    %v6294 = vunpack.c.l.b16 %v5949
    %v6295 = vunpack.c.h.b16 %v5949
    %v6296 = vunpack.c.l.b16 %v5950
    %v6297 = vunpack.c.h.b16 %v5950
    %v6298 = vunpack.c.l.b16 %v5951
    %v6299 = vunpack.c.h.b16 %v5951
    %v6300 = vunpack.c.l.b16 %v5952
    %v6301 = vunpack.c.h.b16 %v5952
    %v6302 = vunpack.c.l.b16 %v5953
    %v6303 = vunpack.c.h.b16 %v5953
    %v6304 = vunpack.c.l.b16 %v5954
    %v6305 = vunpack.c.h.b16 %v5954
    %v6306 = vunpack.c.l.b16 %v5955
    %v6307 = vunpack.c.h.b16 %v5955
    %v6308 = vunpack.c.l.b16 %v5956
    %v6309 = vunpack.c.h.b16 %v5956
    %v6310 = vunpack.c.l.b16 %v5957
    %v6311 = vunpack.c.h.b16 %v5957
    %v6312 = vunpack.c.l.b16 %v5958
    %v6313 = vunpack.c.h.b16 %v5958
    %v6314 = vunpack.c.l.b16 %v5959
    %v6315 = vunpack.c.h.b16 %v5959
    %v6316 = vunpack.c.l.b16 %v5960
    %v6317 = vunpack.c.h.b16 %v5960
    %v6318 = vunpack.c.l.b16 %v5961
    %v6319 = vunpack.c.h.b16 %v5961
    %v6320 = vunpack.c.l.b16 %v5962
    %v6321 = vunpack.c.h.b16 %v5962
    %v6322 = vunpack.c.l.b16 %v5963
    %v6323 = vunpack.c.h.b16 %v5963
    %v6324 = vunpack.c.l.b16 %v5964
    %v6325 = vunpack.c.h.b16 %v5964
    %v6326 = vunpack.c.l.b16 %v5965
    %v6327 = vunpack.c.h.b16 %v5965
    %v6328 = vunpack.c.l.b16 %v5966
    %v6329 = vunpack.c.h.b16 %v5966
    %v6330 = vunpack.c.l.b16 %v5967
    %v6331 = vunpack.c.h.b16 %v5967
    %v6332 = vunpack.c.l.b16 %v5968
    %v6333 = vunpack.c.h.b16 %v5968
    %v6334 = vunpack.c.l.b16 %v5969
    %v6335 = vunpack.c.h.b16 %v5969
    %v6336 = vunpack.c.l.b16 %v5970
    %v6337 = vunpack.c.h.b16 %v5970
    %v6338 = vunpack.c.l.b16 %v5971
    %v6339 = vunpack.c.h.b16 %v5971
    %v6340 = vunpack.c.l.b16 %v5972
    %v6341 = vunpack.c.h.b16 %v5972
    %v6342 = vunpack.c.l.b16 %v5973
    %v6343 = vunpack.c.h.b16 %v5973
    %v6344 = vunpack.c.l.b16 %v5974
    %v6345 = vunpack.c.h.b16 %v5974
    %v6346 = vunpack.c.l.b16 %v5975
    %v6347 = vunpack.c.h.b16 %v5975
    %v6348 = vunpack.c.l.b16 %v5976
    %v6349 = vunpack.c.h.b16 %v5976
    %v6350 = vunpack.c.l.b16 %v5977
    %v6351 = vunpack.c.h.b16 %v5977
    %v6352 = vunpack.c.l.b16 %v5978
    %v6353 = vunpack.c.h.b16 %v5978
    %v6354 = vunpack.c.l.b16 %v5979
    %v6355 = vunpack.c.h.b16 %v5979
    %v6356 = vunpack.c.l.b16 %v5980
    %v6357 = vunpack.c.h.b16 %v5980
    %v6358 = vunpack.c.l.b16 %v5981
    %v6359 = vunpack.c.h.b16 %v5981
    %v6360 = vunpack.c.l.b16 %v5982
    %v6361 = vunpack.c.h.b16 %v5982
    %v6362 = vunpack.c.l.b16 %v5983
    %v6363 = vunpack.c.h.b16 %v5983
    %v6364 = vunpack.c.l.b16 %v5984
    %v6365 = vunpack.c.h.b16 %v5984
    %v6366 = vunpack.c.l.b16 %v5985
    %v6367 = vunpack.c.h.b16 %v5985
    %v6368 = vunpack.c.l.b16 %v5986
    %v6369 = vunpack.c.h.b16 %v5986
    %v6370 = vunpack.c.l.b16 %v5987
    %v6371 = vunpack.c.h.b16 %v5987
    %v6372 = vunpack.c.l.b16 %v5988
    %v6373 = vunpack.c.h.b16 %v5988
    %v6374 = vunpack.c.l.b16 %v5989
    %v6375 = vunpack.c.h.b16 %v5989
    %v6376 = vunpack.c.l.b16 %v5990
    %v6377 = vunpack.c.h.b16 %v5990
    %v6378 = vunpack.c.l.b16 %v5991
    %v6379 = vunpack.c.h.b16 %v5991
    %v6380 = vunpack.c.l.b16 %v5992
    %v6381 = vunpack.c.h.b16 %v5992
    %v6382 = vunpack.c.l.b16 %v5993
    %v6383 = vunpack.c.h.b16 %v5993
    %v6384 = vunpack.c.l.b16 %v5994
    %v6385 = vunpack.c.h.b16 %v5994
    %v6386 = vunpack.c.l.b16 %v5995
    %v6387 = vunpack.c.h.b16 %v5995
    %v6388 = vunpack.c.l.b16 %v5996
    %v6389 = vunpack.c.h.b16 %v5996
    %v6390 = vunpack.c.l.b16 %v5997
    %v6391 = vunpack.c.h.b16 %v5997
    %v6392 = vunpack.c.l.b16 %v5998
    %v6393 = vunpack.c.h.b16 %v5998
    %v6394 = vunpack.c.l.b16 %v5999
    %v6395 = vunpack.c.h.b16 %v5999
    %v6396 = vunpack.c.l.b16 %v6000
    %v6397 = vunpack.c.h.b16 %v6000
    %v6398 = vunpack.c.l.b16 %v6001
    %v6399 = vunpack.c.h.b16 %v6001
    %v6400 = vunpack.c.l.b16 %v6002
    %v6401 = vunpack.c.h.b16 %v6002
    %v6402 = vunpack.c.l.b16 %v6003
    %v6403 = vunpack.c.h.b16 %v6003
    %v6404 = vunpack.c.l.b16 %v6004
    %v6405 = vunpack.c.h.b16 %v6004
    %v6406 = vunpack.c.l.b16 %v6005
    %v6407 = vunpack.c.h.b16 %v6005
    %v6408 = vunpack.c.l.b16 %v6006
    %v6409 = vunpack.c.h.b16 %v6006
    %v6410 = vunpack.c.l.b16 %v6007
    %v6411 = vunpack.c.h.b16 %v6007
    %v6412 = vunpack.c.l.b16 %v6008
    %v6413 = vunpack.c.h.b16 %v6008
    %v6414 = vunpack.c.l.b16 %v6009
    %v6415 = vunpack.c.h.b16 %v6009
    %v6416 = vunpack.c.l.b16 %v6010
    %v6417 = vunpack.c.h.b16 %v6010
    %v6418 = vpack.c.b16 %v6166, %v6162
    %v6419 = vpack.c.b16 %v6167, %v6163
    %v6420 = vpack.c.b16 %v6168, %v6164
    %v6421 = vpack.c.b16 %v6169, %v6165
    %v6422 = vpack.c.b16 %v6174, %v6170
    %v6423 = vpack.c.b16 %v6175, %v6171
    %v6424 = vpack.c.b16 %v6176, %v6172
    %v6425 = vpack.c.b16 %v6177, %v6173
    %v6426 = vpack.c.b16 %v6182, %v6178
    %v6427 = vpack.c.b16 %v6183, %v6179
    %v6428 = vpack.c.b16 %v6184, %v6180
    %v6429 = vpack.c.b16 %v6185, %v6181
    %v6430 = vpack.c.b16 %v6190, %v6186
    %v6431 = vpack.c.b16 %v6191, %v6187
    %v6432 = vpack.c.b16 %v6192, %v6188
    %v6433 = vpack.c.b16 %v6193, %v6189
    %v6434 = vpack.c.b16 %v6198, %v6194
    %v6435 = vpack.c.b16 %v6199, %v6195
    %v6436 = vpack.c.b16 %v6200, %v6196
    %v6437 = vpack.c.b16 %v6201, %v6197
    %v6438 = vpack.c.b16 %v6206, %v6202
    %v6439 = vpack.c.b16 %v6207, %v6203
    %v6440 = vpack.c.b16 %v6208, %v6204
    %v6441 = vpack.c.b16 %v6209, %v6205
    %v6442 = vpack.c.b16 %v6214, %v6210
    %v6443 = vpack.c.b16 %v6215, %v6211
    %v6444 = vpack.c.b16 %v6216, %v6212
    %v6445 = vpack.c.b16 %v6217, %v6213
    %v6446 = vpack.c.b16 %v6222, %v6218
    %v6447 = vpack.c.b16 %v6223, %v6219
    %v6448 = vpack.c.b16 %v6224, %v6220
    %v6449 = vpack.c.b16 %v6225, %v6221
    %v6450 = vpack.c.b16 %v6230, %v6226
    %v6451 = vpack.c.b16 %v6231, %v6227
    %v6452 = vpack.c.b16 %v6232, %v6228
    %v6453 = vpack.c.b16 %v6233, %v6229
    %v6454 = vpack.c.b16 %v6238, %v6234
    %v6455 = vpack.c.b16 %v6239, %v6235
    %v6456 = vpack.c.b16 %v6240, %v6236
    %v6457 = vpack.c.b16 %v6241, %v6237
    %v6458 = vpack.c.b16 %v6246, %v6242
    %v6459 = vpack.c.b16 %v6247, %v6243
    %v6460 = vpack.c.b16 %v6248, %v6244
    %v6461 = vpack.c.b16 %v6249, %v6245
    %v6462 = vpack.c.b16 %v6254, %v6250
    %v6463 = vpack.c.b16 %v6255, %v6251
    %v6464 = vpack.c.b16 %v6256, %v6252
    %v6465 = vpack.c.b16 %v6257, %v6253
    %v6466 = vpack.c.b16 %v6262, %v6258
    %v6467 = vpack.c.b16 %v6263, %v6259
    %v6468 = vpack.c.b16 %v6264, %v6260
    %v6469 = vpack.c.b16 %v6265, %v6261
    %v6470 = vpack.c.b16 %v6270, %v6266
    %v6471 = vpack.c.b16 %v6271, %v6267
    %v6472 = vpack.c.b16 %v6272, %v6268
    %v6473 = vpack.c.b16 %v6273, %v6269
    %v6474 = vpack.c.b16 %v6278, %v6274
    %v6475 = vpack.c.b16 %v6279, %v6275
    %v6476 = vpack.c.b16 %v6280, %v6276
    %v6477 = vpack.c.b16 %v6281, %v6277
    %v6478 = vpack.c.b16 %v6286, %v6282
    %v6479 = vpack.c.b16 %v6287, %v6283
    %v6480 = vpack.c.b16 %v6288, %v6284
    %v6481 = vpack.c.b16 %v6289, %v6285
    %v6482 = vpack.c.b16 %v6294, %v6290
    %v6483 = vpack.c.b16 %v6295, %v6291
    %v6484 = vpack.c.b16 %v6296, %v6292
    %v6485 = vpack.c.b16 %v6297, %v6293
    %v6486 = vpack.c.b16 %v6302, %v6298
    %v6487 = vpack.c.b16 %v6303, %v6299
    %v6488 = vpack.c.b16 %v6304, %v6300
    %v6489 = vpack.c.b16 %v6305, %v6301
    %v6490 = vpack.c.b16 %v6310, %v6306
    %v6491 = vpack.c.b16 %v6311, %v6307
    %v6492 = vpack.c.b16 %v6312, %v6308
    %v6493 = vpack.c.b16 %v6313, %v6309
    %v6494 = vpack.c.b16 %v6318, %v6314
    %v6495 = vpack.c.b16 %v6319, %v6315
    %v6496 = vpack.c.b16 %v6320, %v6316
    %v6497 = vpack.c.b16 %v6321, %v6317
    %v6498 = vpack.c.b16 %v6326, %v6322
    %v6499 = vpack.c.b16 %v6327, %v6323
    %v6500 = vpack.c.b16 %v6328, %v6324
    %v6501 = vpack.c.b16 %v6329, %v6325
    %v6502 = vpack.c.b16 %v6334, %v6330
    %v6503 = vpack.c.b16 %v6335, %v6331
    %v6504 = vpack.c.b16 %v6336, %v6332
    %v6505 = vpack.c.b16 %v6337, %v6333
    %v6506 = vpack.c.b16 %v6342, %v6338
    %v6507 = vpack.c.b16 %v6343, %v6339
    %v6508 = vpack.c.b16 %v6344, %v6340
    %v6509 = vpack.c.b16 %v6345, %v6341
    %v6510 = vpack.c.b16 %v6350, %v6346
    %v6511 = vpack.c.b16 %v6351, %v6347
    %v6512 = vpack.c.b16 %v6352, %v6348
    %v6513 = vpack.c.b16 %v6353, %v6349
    %v6514 = vpack.c.b16 %v6358, %v6354
    %v6515 = vpack.c.b16 %v6359, %v6355
    %v6516 = vpack.c.b16 %v6360, %v6356
    %v6517 = vpack.c.b16 %v6361, %v6357
    %v6518 = vpack.c.b16 %v6366, %v6362
    %v6519 = vpack.c.b16 %v6367, %v6363
    %v6520 = vpack.c.b16 %v6368, %v6364
    %v6521 = vpack.c.b16 %v6369, %v6365
    %v6522 = vpack.c.b16 %v6374, %v6370
    %v6523 = vpack.c.b16 %v6375, %v6371
    %v6524 = vpack.c.b16 %v6376, %v6372
    %v6525 = vpack.c.b16 %v6377, %v6373
    %v6526 = vpack.c.b16 %v6382, %v6378
    %v6527 = vpack.c.b16 %v6383, %v6379
    %v6528 = vpack.c.b16 %v6384, %v6380
    %v6529 = vpack.c.b16 %v6385, %v6381
    %v6530 = vpack.c.b16 %v6390, %v6386
    %v6531 = vpack.c.b16 %v6391, %v6387
    %v6532 = vpack.c.b16 %v6392, %v6388
    %v6533 = vpack.c.b16 %v6393, %v6389
    %v6534 = vpack.c.b16 %v6398, %v6394
    %v6535 = vpack.c.b16 %v6399, %v6395
    %v6536 = vpack.c.b16 %v6400, %v6396
    %v6537 = vpack.c.b16 %v6401, %v6397
    %v6538 = vpack.c.b16 %v6406, %v6402
    %v6539 = vpack.c.b16 %v6407, %v6403
    %v6540 = vpack.c.b16 %v6408, %v6404
    %v6541 = vpack.c.b16 %v6409, %v6405
    %v6542 = vpack.c.b16 %v6414, %v6410
    %v6543 = vpack.c.b16 %v6415, %v6411
    %v6544 = vpack.c.b16 %v6416, %v6412
    %v6545 = vpack.c.b16 %v6417, %v6413
    %6674 = vmatprep.subr.bf16.mxu0 %v6419
    %6675 = vmatpush1.bf16.msra.mxu0 %v6418
    %6676 = vmatprep.subr.bf16.mxu0 %v6423
    %6677 = vmatpush1.bf16.msra.mxu0 %v6422
    %6678 = vmatprep.subr.bf16.mxu0 %v6427
    %6679 = vmatpush1.bf16.msra.mxu0 %v6426
    %6680 = vmatprep.subr.bf16.mxu0 %v6431
    %6681 = vmatpush1.bf16.msra.mxu0 %v6430
    %6682 = vmatprep.subr.bf16.mxu0 %v6435
    %6683 = vmatpush1.bf16.msra.mxu0 %v6434
    %6684 = vmatprep.subr.bf16.mxu0 %v6439
    %6685 = vmatpush1.bf16.msra.mxu0 %v6438
    %6686 = vmatprep.subr.bf16.mxu0 %v6443
    %6687 = vmatpush1.bf16.msra.mxu0 %v6442
    %6688 = vmatprep.subr.bf16.mxu0 %v6447
    %6689 = vmatpush1.bf16.msra.mxu0 %v6446
    %6690 = vmatprep.subr.bf16.mxu0 %v6451
    %6691 = vmatpush1.bf16.msra.mxu0 %v6450
    %6692 = vmatprep.subr.bf16.mxu0 %v6455
    %6693 = vmatpush1.bf16.msra.mxu0 %v6454
    %6694 = vmatprep.subr.bf16.mxu0 %v6459
    %6695 = vmatpush1.bf16.msra.mxu0 %v6458
    %6696 = vmatprep.subr.bf16.mxu0 %v6463
    %6697 = vmatpush1.bf16.msra.mxu0 %v6462
    %6698 = vmatprep.subr.bf16.mxu0 %v6467
    %6699 = vmatpush1.bf16.msra.mxu0 %v6466
    %6700 = vmatprep.subr.bf16.mxu0 %v6471
    %6701 = vmatpush1.bf16.msra.mxu0 %v6470
    %6702 = vmatprep.subr.bf16.mxu0 %v6475
    %6703 = vmatpush1.bf16.msra.mxu0 %v6474
    %6704 = vmatprep.subr.bf16.mxu0 %v6479
    %6705 = vmatpush1.bf16.msra.mxu0 %v6478
    %6706 = vmatprep.mubr.bf16.mxu0 %v5879
    %6707 = vmatmul.mubr.bf16.gmra.mrb[0].mxu0 %v5878
    %v6708 = vpop.f32.mrb[0].mxu0
    %v6709 = vadd.f32 %v6017, %v6708
    %v6710 = vpop.f32.mrb[0].mxu0
    %v6711 = vadd.f32 %v6021, %v6710
    %v6712 = vpop.f32.mrb[0].mxu0
    %v6713 = vpop.f32.mrb[0].mxu0
    %6714 = vdwg.mxu0
    %6715 = vmatprep.subr.bf16.mxu0 %v6483
    %6716 = vmatpush1.bf16.msra.mxu0 %v6482
    %6717 = vmatprep.subr.bf16.mxu0 %v6487
    %6718 = vmatpush1.bf16.msra.mxu0 %v6486
    %6719 = vmatprep.subr.bf16.mxu0 %v6491
    %6720 = vmatpush1.bf16.msra.mxu0 %v6490
    %6721 = vmatprep.subr.bf16.mxu0 %v6495
    %6722 = vmatpush1.bf16.msra.mxu0 %v6494
    %6723 = vmatprep.subr.bf16.mxu0 %v6499
    %6724 = vmatpush1.bf16.msra.mxu0 %v6498
    %6725 = vmatprep.subr.bf16.mxu0 %v6503
    %6726 = vmatpush1.bf16.msra.mxu0 %v6502
    %6727 = vmatprep.subr.bf16.mxu0 %v6507
    %6728 = vmatpush1.bf16.msra.mxu0 %v6506
    %6729 = vmatprep.subr.bf16.mxu0 %v6511
    %6730 = vmatpush1.bf16.msra.mxu0 %v6510
    %6731 = vmatprep.subr.bf16.mxu0 %v6515
    %6732 = vmatpush1.bf16.msra.mxu0 %v6514
    %6733 = vmatprep.subr.bf16.mxu0 %v6519
    %6734 = vmatpush1.bf16.msra.mxu0 %v6518
    %6735 = vmatprep.subr.bf16.mxu0 %v6523
    %6736 = vmatpush1.bf16.msra.mxu0 %v6522
    %6737 = vmatprep.subr.bf16.mxu0 %v6527
    %6738 = vmatpush1.bf16.msra.mxu0 %v6526
    %6739 = vmatprep.subr.bf16.mxu0 %v6531
    %6740 = vmatpush1.bf16.msra.mxu0 %v6530
    %6741 = vmatprep.subr.bf16.mxu0 %v6535
    %6742 = vmatpush1.bf16.msra.mxu0 %v6534
    %6743 = vmatprep.subr.bf16.mxu0 %v6539
    %6744 = vmatpush1.bf16.msra.mxu0 %v6538
    %6745 = vmatprep.subr.bf16.mxu0 %v6543
    %6746 = vmatpush1.bf16.msra.mxu0 %v6542
    %6747 = vmatprep.mubr.bf16.mxu0 %v5881
    %6748 = vmatmul.mubr.bf16.gmra.mrb[0].mxu0 %v5880
    %v6749 = vpop.f32.mrb[0].mxu0
    %v6750 = vadd.f32 %v6709, %v6749
    %v6751 = vpop.f32.mrb[0].mxu0
    %v6752 = vadd.f32 %v6711, %v6751
    %v6753 = vpop.f32.mrb[0].mxu0
    %v6754 = vpop.f32.mrb[0].mxu0
    %6755 = vdwg.mxu0
    %6756 = vmatprep.subr.bf16.mxu0 %v6421
    %6757 = vmatpush1.bf16.msra.mxu0 %v6420
    %6758 = vmatprep.subr.bf16.mxu0 %v6425
    %6759 = vmatpush1.bf16.msra.mxu0 %v6424
    %6760 = vmatprep.subr.bf16.mxu0 %v6429
    %6761 = vmatpush1.bf16.msra.mxu0 %v6428
    %6762 = vmatprep.subr.bf16.mxu0 %v6433
    %6763 = vmatpush1.bf16.msra.mxu0 %v6432
    %6764 = vmatprep.subr.bf16.mxu0 %v6437
    %6765 = vmatpush1.bf16.msra.mxu0 %v6436
    %6766 = vmatprep.subr.bf16.mxu0 %v6441
    %6767 = vmatpush1.bf16.msra.mxu0 %v6440
    %6768 = vmatprep.subr.bf16.mxu0 %v6445
    %6769 = vmatpush1.bf16.msra.mxu0 %v6444
    %6770 = vmatprep.subr.bf16.mxu0 %v6449
    %6771 = vmatpush1.bf16.msra.mxu0 %v6448
    %6772 = vmatprep.subr.bf16.mxu0 %v6453
    %6773 = vmatpush1.bf16.msra.mxu0 %v6452
    %6774 = vmatprep.subr.bf16.mxu0 %v6457
    %6775 = vmatpush1.bf16.msra.mxu0 %v6456
    %6776 = vmatprep.subr.bf16.mxu0 %v6461
    %6777 = vmatpush1.bf16.msra.mxu0 %v6460
    %6778 = vmatprep.subr.bf16.mxu0 %v6465
    %6779 = vmatpush1.bf16.msra.mxu0 %v6464
    %6780 = vmatprep.subr.bf16.mxu0 %v6469
    %6781 = vmatpush1.bf16.msra.mxu0 %v6468
    %6782 = vmatprep.subr.bf16.mxu0 %v6473
    %6783 = vmatpush1.bf16.msra.mxu0 %v6472
    %6784 = vmatprep.subr.bf16.mxu0 %v6477
    %6785 = vmatpush1.bf16.msra.mxu0 %v6476
    %6786 = vmatprep.subr.bf16.mxu0 %v6481
    %6787 = vmatpush1.bf16.msra.mxu0 %v6480
    %6788 = vmatprep.mubr.bf16.mxu0 %v5879
    %6789 = vmatmul.mubr.bf16.gmra.mrb[0].mxu0 %v5878
    %v6790 = vpop.f32.mrb[0].mxu0
    %v6791 = vadd.f32 %v6025, %v6790
    %v6792 = vpop.f32.mrb[0].mxu0
    %v6793 = vadd.f32 %v6029, %v6792
    %v6794 = vpop.f32.mrb[0].mxu0
    %v6795 = vpop.f32.mrb[0].mxu0
    %6796 = vdwg.mxu0
    %6797 = vmatprep.subr.bf16.mxu0 %v6485
    %6798 = vmatpush1.bf16.msra.mxu0 %v6484
    %6799 = vmatprep.subr.bf16.mxu0 %v6489
    %6800 = vmatpush1.bf16.msra.mxu0 %v6488
    %6801 = vmatprep.subr.bf16.mxu0 %v6493
    %6802 = vmatpush1.bf16.msra.mxu0 %v6492
    %6803 = vmatprep.subr.bf16.mxu0 %v6497
    %6804 = vmatpush1.bf16.msra.mxu0 %v6496
    %6805 = vmatprep.subr.bf16.mxu0 %v6501
    %6806 = vmatpush1.bf16.msra.mxu0 %v6500
    %6807 = vmatprep.subr.bf16.mxu0 %v6505
    %6808 = vmatpush1.bf16.msra.mxu0 %v6504
    %6809 = vmatprep.subr.bf16.mxu0 %v6509
    %6810 = vmatpush1.bf16.msra.mxu0 %v6508
    %6811 = vmatprep.subr.bf16.mxu0 %v6513
    %6812 = vmatpush1.bf16.msra.mxu0 %v6512
    %6813 = vmatprep.subr.bf16.mxu0 %v6517
    %6814 = vmatpush1.bf16.msra.mxu0 %v6516
    %6815 = vmatprep.subr.bf16.mxu0 %v6521
    %6816 = vmatpush1.bf16.msra.mxu0 %v6520
    %6817 = vmatprep.subr.bf16.mxu0 %v6525
    %6818 = vmatpush1.bf16.msra.mxu0 %v6524
    %6819 = vmatprep.subr.bf16.mxu0 %v6529
    %6820 = vmatpush1.bf16.msra.mxu0 %v6528
    %6821 = vmatprep.subr.bf16.mxu0 %v6533
    %6822 = vmatpush1.bf16.msra.mxu0 %v6532
    %6823 = vmatprep.subr.bf16.mxu0 %v6537
    %6824 = vmatpush1.bf16.msra.mxu0 %v6536
    %6825 = vmatprep.subr.bf16.mxu0 %v6541
    %6826 = vmatpush1.bf16.msra.mxu0 %v6540
    %6827 = vmatprep.subr.bf16.mxu0 %v6545
    %6828 = vmatpush1.bf16.msra.mxu0 %v6544
    %6829 = vmatprep.mubr.bf16.mxu0 %v5881
    %6830 = vmatmul.mubr.bf16.gmra.mrb[0].mxu0 %v5880
    %v6831 = vpop.f32.mrb[0].mxu0
    %v6832 = vadd.f32 %v6791, %v6831
    %v6833 = vpop.f32.mrb[0].mxu0
    %v6834 = vadd.f32 %v6793, %v6833
    %v6835 = vpop.f32.mrb[0].mxu0
    %v6836 = vpop.f32.mrb[0].mxu0
    %6837 = vdwg.mxu0
    %s6838 = scalar_lea.vmem [#allocation2], 7168
    %v6839 = vld [vmem:[%s6838] sm:$0xff]
    %v6840 = vld [vmem:[%s6838 + $0x8] sm:$0xff]
    %v6841 = vld [vmem:[%s6838 + $0x10] sm:$0xff]
    %v6842 = vld [vmem:[%s6838 + $0x18] sm:$0xff]
    %v6843 = vld [vmem:[%s6838 + $0x20] sm:$0xff]
    %v6844 = vld [vmem:[%s6838 + $0x28] sm:$0xff]
    %v6845 = vld [vmem:[%s6838 + $0x30] sm:$0xff]
    %v6846 = vld [vmem:[%s6838 + $0x38] sm:$0xff]
    %v6847 = vld [vmem:[%s6838 + $0x40] sm:$0xff]
    %v6848 = vld [vmem:[%s6838 + $0x48] sm:$0xff]
    %v6849 = vld [vmem:[%s6838 + $0x50] sm:$0xff]
    %v6850 = vld [vmem:[%s6838 + $0x58] sm:$0xff]
    %v6851 = vld [vmem:[%s6838 + $0x60] sm:$0xff]
    %v6852 = vld [vmem:[%s6838 + $0x68] sm:$0xff]
    %v6853 = vld [vmem:[%s6838 + $0x70] sm:$0xff]
    %v6854 = vld [vmem:[%s6838 + $0x78] sm:$0xff]
    %v6855 = vld [vmem:[%s6838 + $0x80] sm:$0xff]
    %v6856 = vld [vmem:[%s6838 + $0x88] sm:$0xff]
    %v6857 = vld [vmem:[%s6838 + $0x90] sm:$0xff]
    %v6858 = vld [vmem:[%s6838 + $0x98] sm:$0xff]
    %v6859 = vld [vmem:[%s6838 + $0xa0] sm:$0xff]
    %v6860 = vld [vmem:[%s6838 + $0xa8] sm:$0xff]
    %v6861 = vld [vmem:[%s6838 + $0xb0] sm:$0xff]
    %v6862 = vld [vmem:[%s6838 + $0xb8] sm:$0xff]
    %v6863 = vld [vmem:[%s6838 + $0xc0] sm:$0xff]
    %v6864 = vld [vmem:[%s6838 + $0xc8] sm:$0xff]
    %v6865 = vld [vmem:[%s6838 + $0xd0] sm:$0xff]
    %v6866 = vld [vmem:[%s6838 + $0xd8] sm:$0xff]
    %v6867 = vld [vmem:[%s6838 + $0xe0] sm:$0xff]
    %v6868 = vld [vmem:[%s6838 + $0xe8] sm:$0xff]
    %v6869 = vld [vmem:[%s6838 + $0xf0] sm:$0xff]
    %v6870 = vld [vmem:[%s6838 + $0xf8] sm:$0xff]
    %v6871 = vld [vmem:[%s6838 + $0x100] sm:$0xff]
    %v6872 = vld [vmem:[%s6838 + $0x108] sm:$0xff]
    %v6873 = vld [vmem:[%s6838 + $0x110] sm:$0xff]
    %v6874 = vld [vmem:[%s6838 + $0x118] sm:$0xff]
    %v6875 = vld [vmem:[%s6838 + $0x120] sm:$0xff]
    %v6876 = vld [vmem:[%s6838 + $0x128] sm:$0xff]
    %v6877 = vld [vmem:[%s6838 + $0x130] sm:$0xff]
    %v6878 = vld [vmem:[%s6838 + $0x138] sm:$0xff]
    %v6879 = vld [vmem:[%s6838 + $0x140] sm:$0xff]
    %v6880 = vld [vmem:[%s6838 + $0x148] sm:$0xff]
    %v6881 = vld [vmem:[%s6838 + $0x150] sm:$0xff]
    %v6882 = vld [vmem:[%s6838 + $0x158] sm:$0xff]
    %v6883 = vld [vmem:[%s6838 + $0x160] sm:$0xff]
    %v6884 = vld [vmem:[%s6838 + $0x168] sm:$0xff]
    %v6885 = vld [vmem:[%s6838 + $0x170] sm:$0xff]
    %v6886 = vld [vmem:[%s6838 + $0x178] sm:$0xff]
    %v6887 = vld [vmem:[%s6838 + $0x180] sm:$0xff]
    %v6888 = vld [vmem:[%s6838 + $0x188] sm:$0xff]
    %v6889 = vld [vmem:[%s6838 + $0x190] sm:$0xff]
    %v6890 = vld [vmem:[%s6838 + $0x198] sm:$0xff]
    %v6891 = vld [vmem:[%s6838 + $0x1a0] sm:$0xff]
    %v6892 = vld [vmem:[%s6838 + $0x1a8] sm:$0xff]
    %v6893 = vld [vmem:[%s6838 + $0x1b0] sm:$0xff]
    %v6894 = vld [vmem:[%s6838 + $0x1b8] sm:$0xff]
    %v6895 = vld [vmem:[%s6838 + $0x1c0] sm:$0xff]
    %v6896 = vld [vmem:[%s6838 + $0x1c8] sm:$0xff]
    %v6897 = vld [vmem:[%s6838 + $0x1d0] sm:$0xff]
    %v6898 = vld [vmem:[%s6838 + $0x1d8] sm:$0xff]
    %v6899 = vld [vmem:[%s6838 + $0x1e0] sm:$0xff]
    %v6900 = vld [vmem:[%s6838 + $0x1e8] sm:$0xff]
    %v6901 = vld [vmem:[%s6838 + $0x1f0] sm:$0xff]
    %v6902 = vld [vmem:[%s6838 + $0x1f8] sm:$0xff]
    %v6903 = vld [vmem:[%s6838 + $0x200] sm:$0xff]
    %v6904 = vld [vmem:[%s6838 + $0x208] sm:$0xff]
    %v6905 = vld [vmem:[%s6838 + $0x210] sm:$0xff]
    %v6906 = vld [vmem:[%s6838 + $0x218] sm:$0xff]
    %v6907 = vld [vmem:[%s6838 + $0x220] sm:$0xff]
    %v6908 = vld [vmem:[%s6838 + $0x228] sm:$0xff]
    %v6909 = vld [vmem:[%s6838 + $0x230] sm:$0xff]
    %v6910 = vld [vmem:[%s6838 + $0x238] sm:$0xff]
    %v6911 = vld [vmem:[%s6838 + $0x240] sm:$0xff]
    %v6912 = vld [vmem:[%s6838 + $0x248] sm:$0xff]
    %v6913 = vld [vmem:[%s6838 + $0x250] sm:$0xff]
    %v6914 = vld [vmem:[%s6838 + $0x258] sm:$0xff]
    %v6915 = vld [vmem:[%s6838 + $0x260] sm:$0xff]
    %v6916 = vld [vmem:[%s6838 + $0x268] sm:$0xff]
    %v6917 = vld [vmem:[%s6838 + $0x270] sm:$0xff]
    %v6918 = vld [vmem:[%s6838 + $0x278] sm:$0xff]
    %v6919 = vld [vmem:[%s6838 + $0x280] sm:$0xff]
    %v6920 = vld [vmem:[%s6838 + $0x288] sm:$0xff]
    %v6921 = vld [vmem:[%s6838 + $0x290] sm:$0xff]
    %v6922 = vld [vmem:[%s6838 + $0x298] sm:$0xff]
    %v6923 = vld [vmem:[%s6838 + $0x2a0] sm:$0xff]
    %v6924 = vld [vmem:[%s6838 + $0x2a8] sm:$0xff]
    %v6925 = vld [vmem:[%s6838 + $0x2b0] sm:$0xff]
    %v6926 = vld [vmem:[%s6838 + $0x2b8] sm:$0xff]
    %v6927 = vld [vmem:[%s6838 + $0x2c0] sm:$0xff]
    %v6928 = vld [vmem:[%s6838 + $0x2c8] sm:$0xff]
    %v6929 = vld [vmem:[%s6838 + $0x2d0] sm:$0xff]
    %v6930 = vld [vmem:[%s6838 + $0x2d8] sm:$0xff]
    %v6931 = vld [vmem:[%s6838 + $0x2e0] sm:$0xff]
    %v6932 = vld [vmem:[%s6838 + $0x2e8] sm:$0xff]
    %v6933 = vld [vmem:[%s6838 + $0x2f0] sm:$0xff]
    %v6934 = vld [vmem:[%s6838 + $0x2f8] sm:$0xff]
    %v6935 = vld [vmem:[%s6838 + $0x300] sm:$0xff]
    %v6936 = vld [vmem:[%s6838 + $0x308] sm:$0xff]
    %v6937 = vld [vmem:[%s6838 + $0x310] sm:$0xff]
    %v6938 = vld [vmem:[%s6838 + $0x318] sm:$0xff]
    %v6939 = vld [vmem:[%s6838 + $0x320] sm:$0xff]
    %v6940 = vld [vmem:[%s6838 + $0x328] sm:$0xff]
    %v6941 = vld [vmem:[%s6838 + $0x330] sm:$0xff]
    %v6942 = vld [vmem:[%s6838 + $0x338] sm:$0xff]
    %v6943 = vld [vmem:[%s6838 + $0x340] sm:$0xff]
    %v6944 = vld [vmem:[%s6838 + $0x348] sm:$0xff]
    %v6945 = vld [vmem:[%s6838 + $0x350] sm:$0xff]
    %v6946 = vld [vmem:[%s6838 + $0x358] sm:$0xff]
    %v6947 = vld [vmem:[%s6838 + $0x360] sm:$0xff]
    %v6948 = vld [vmem:[%s6838 + $0x368] sm:$0xff]
    %v6949 = vld [vmem:[%s6838 + $0x370] sm:$0xff]
    %v6950 = vld [vmem:[%s6838 + $0x378] sm:$0xff]
    %v6951 = vld [vmem:[%s6838 + $0x380] sm:$0xff]
    %v6952 = vld [vmem:[%s6838 + $0x388] sm:$0xff]
    %v6953 = vld [vmem:[%s6838 + $0x390] sm:$0xff]
    %v6954 = vld [vmem:[%s6838 + $0x398] sm:$0xff]
    %v6955 = vld [vmem:[%s6838 + $0x3a0] sm:$0xff]
    %v6956 = vld [vmem:[%s6838 + $0x3a8] sm:$0xff]
    %v6957 = vld [vmem:[%s6838 + $0x3b0] sm:$0xff]
    %v6958 = vld [vmem:[%s6838 + $0x3b8] sm:$0xff]
    %v6959 = vld [vmem:[%s6838 + $0x3c0] sm:$0xff]
    %v6960 = vld [vmem:[%s6838 + $0x3c8] sm:$0xff]
    %v6961 = vld [vmem:[%s6838 + $0x3d0] sm:$0xff]
    %v6962 = vld [vmem:[%s6838 + $0x3d8] sm:$0xff]
    %v6963 = vld [vmem:[%s6838 + $0x3e0] sm:$0xff]
    %v6964 = vld [vmem:[%s6838 + $0x3e8] sm:$0xff]
    %v6965 = vld [vmem:[%s6838 + $0x3f0] sm:$0xff]
    %v6966 = vld [vmem:[%s6838 + $0x3f8] sm:$0xff]
    %s6967 = scalar_lea.vmem [#allocation4], 28
    %v6968 = vld [vmem:[%s6967] sm:$0xf]
    %v6970 = vlaneseq
    %v6971 = vshrl.u32 %v6970, 7
    %v6972 = vsub.s32 0, %v6971
    %v6973 = vrot.slane %v6968, %v6972
    %v6974 = vlaneseq
    %v6975 = vshrl.u32 %v6974, 7
    %v6976 = vsub.s32 1, %v6975
    %v6977 = vrot.slane %v6968, %v6976
    %v6978 = vlaneseq
    %v6979 = vshrl.u32 %v6978, 7
    %v6980 = vsub.s32 2, %v6979
    %v6981 = vrot.slane %v6968, %v6980
    %v6982 = vlaneseq
    %v6983 = vshrl.u32 %v6982, 7
    %v6984 = vsub.s32 3, %v6983
    %v6985 = vrot.slane %v6968, %v6984
    %v7118 = vunpack.c.l.b16 %v6839
    %v7119 = vunpack.c.h.b16 %v6839
    %v7120 = vunpack.c.l.b16 %v6840
    %v7121 = vunpack.c.h.b16 %v6840
    %v7122 = vunpack.c.l.b16 %v6841
    %v7123 = vunpack.c.h.b16 %v6841
    %v7124 = vunpack.c.l.b16 %v6842
    %v7125 = vunpack.c.h.b16 %v6842
    %v7126 = vunpack.c.l.b16 %v6843
    %v7127 = vunpack.c.h.b16 %v6843
    %v7128 = vunpack.c.l.b16 %v6844
    %v7129 = vunpack.c.h.b16 %v6844
    %v7130 = vunpack.c.l.b16 %v6845
    %v7131 = vunpack.c.h.b16 %v6845
    %v7132 = vunpack.c.l.b16 %v6846
    %v7133 = vunpack.c.h.b16 %v6846
    %v7134 = vunpack.c.l.b16 %v6847
    %v7135 = vunpack.c.h.b16 %v6847
    %v7136 = vunpack.c.l.b16 %v6848
    %v7137 = vunpack.c.h.b16 %v6848
    %v7138 = vunpack.c.l.b16 %v6849
    %v7139 = vunpack.c.h.b16 %v6849
    %v7140 = vunpack.c.l.b16 %v6850
    %v7141 = vunpack.c.h.b16 %v6850
    %v7142 = vunpack.c.l.b16 %v6851
    %v7143 = vunpack.c.h.b16 %v6851
    %v7144 = vunpack.c.l.b16 %v6852
    %v7145 = vunpack.c.h.b16 %v6852
    %v7146 = vunpack.c.l.b16 %v6853
    %v7147 = vunpack.c.h.b16 %v6853
    %v7148 = vunpack.c.l.b16 %v6854
    %v7149 = vunpack.c.h.b16 %v6854
    %v7150 = vunpack.c.l.b16 %v6855
    %v7151 = vunpack.c.h.b16 %v6855
    %v7152 = vunpack.c.l.b16 %v6856
    %v7153 = vunpack.c.h.b16 %v6856
    %v7154 = vunpack.c.l.b16 %v6857
    %v7155 = vunpack.c.h.b16 %v6857
    %v7156 = vunpack.c.l.b16 %v6858
    %v7157 = vunpack.c.h.b16 %v6858
    %v7158 = vunpack.c.l.b16 %v6859
    %v7159 = vunpack.c.h.b16 %v6859
    %v7160 = vunpack.c.l.b16 %v6860
    %v7161 = vunpack.c.h.b16 %v6860
    %v7162 = vunpack.c.l.b16 %v6861
    %v7163 = vunpack.c.h.b16 %v6861
    %v7164 = vunpack.c.l.b16 %v6862
    %v7165 = vunpack.c.h.b16 %v6862
    %v7166 = vunpack.c.l.b16 %v6863
    %v7167 = vunpack.c.h.b16 %v6863
    %v7168 = vunpack.c.l.b16 %v6864
    %v7169 = vunpack.c.h.b16 %v6864
    %v7170 = vunpack.c.l.b16 %v6865
    %v7171 = vunpack.c.h.b16 %v6865
    %v7172 = vunpack.c.l.b16 %v6866
    %v7173 = vunpack.c.h.b16 %v6866
    %v7174 = vunpack.c.l.b16 %v6867
    %v7175 = vunpack.c.h.b16 %v6867
    %v7176 = vunpack.c.l.b16 %v6868
    %v7177 = vunpack.c.h.b16 %v6868
    %v7178 = vunpack.c.l.b16 %v6869
    %v7179 = vunpack.c.h.b16 %v6869
    %v7180 = vunpack.c.l.b16 %v6870
    %v7181 = vunpack.c.h.b16 %v6870
    %v7182 = vunpack.c.l.b16 %v6871
    %v7183 = vunpack.c.h.b16 %v6871
    %v7184 = vunpack.c.l.b16 %v6872
    %v7185 = vunpack.c.h.b16 %v6872
    %v7186 = vunpack.c.l.b16 %v6873
    %v7187 = vunpack.c.h.b16 %v6873
    %v7188 = vunpack.c.l.b16 %v6874
    %v7189 = vunpack.c.h.b16 %v6874
    %v7190 = vunpack.c.l.b16 %v6875
    %v7191 = vunpack.c.h.b16 %v6875
    %v7192 = vunpack.c.l.b16 %v6876
    %v7193 = vunpack.c.h.b16 %v6876
    %v7194 = vunpack.c.l.b16 %v6877
    %v7195 = vunpack.c.h.b16 %v6877
    %v7196 = vunpack.c.l.b16 %v6878
    %v7197 = vunpack.c.h.b16 %v6878
    %v7198 = vunpack.c.l.b16 %v6879
    %v7199 = vunpack.c.h.b16 %v6879
    %v7200 = vunpack.c.l.b16 %v6880
    %v7201 = vunpack.c.h.b16 %v6880
    %v7202 = vunpack.c.l.b16 %v6881
    %v7203 = vunpack.c.h.b16 %v6881
    %v7204 = vunpack.c.l.b16 %v6882
    %v7205 = vunpack.c.h.b16 %v6882
    %v7206 = vunpack.c.l.b16 %v6883
    %v7207 = vunpack.c.h.b16 %v6883
    %v7208 = vunpack.c.l.b16 %v6884
    %v7209 = vunpack.c.h.b16 %v6884
    %v7210 = vunpack.c.l.b16 %v6885
    %v7211 = vunpack.c.h.b16 %v6885
    %v7212 = vunpack.c.l.b16 %v6886
    %v7213 = vunpack.c.h.b16 %v6886
    %v7214 = vunpack.c.l.b16 %v6887
    %v7215 = vunpack.c.h.b16 %v6887
    %v7216 = vunpack.c.l.b16 %v6888
    %v7217 = vunpack.c.h.b16 %v6888
    %v7218 = vunpack.c.l.b16 %v6889
    %v7219 = vunpack.c.h.b16 %v6889
    %v7220 = vunpack.c.l.b16 %v6890
    %v7221 = vunpack.c.h.b16 %v6890
    %v7222 = vunpack.c.l.b16 %v6891
    %v7223 = vunpack.c.h.b16 %v6891
    %v7224 = vunpack.c.l.b16 %v6892
    %v7225 = vunpack.c.h.b16 %v6892
    %v7226 = vunpack.c.l.b16 %v6893
    %v7227 = vunpack.c.h.b16 %v6893
    %v7228 = vunpack.c.l.b16 %v6894
    %v7229 = vunpack.c.h.b16 %v6894
    %v7230 = vunpack.c.l.b16 %v6895
    %v7231 = vunpack.c.h.b16 %v6895
    %v7232 = vunpack.c.l.b16 %v6896
    %v7233 = vunpack.c.h.b16 %v6896
    %v7234 = vunpack.c.l.b16 %v6897
    %v7235 = vunpack.c.h.b16 %v6897
    %v7236 = vunpack.c.l.b16 %v6898
    %v7237 = vunpack.c.h.b16 %v6898
    %v7238 = vunpack.c.l.b16 %v6899
    %v7239 = vunpack.c.h.b16 %v6899
    %v7240 = vunpack.c.l.b16 %v6900
    %v7241 = vunpack.c.h.b16 %v6900
    %v7242 = vunpack.c.l.b16 %v6901
    %v7243 = vunpack.c.h.b16 %v6901
    %v7244 = vunpack.c.l.b16 %v6902
    %v7245 = vunpack.c.h.b16 %v6902
    %v7246 = vunpack.c.l.b16 %v6903
    %v7247 = vunpack.c.h.b16 %v6903
    %v7248 = vunpack.c.l.b16 %v6904
    %v7249 = vunpack.c.h.b16 %v6904
    %v7250 = vunpack.c.l.b16 %v6905
    %v7251 = vunpack.c.h.b16 %v6905
    %v7252 = vunpack.c.l.b16 %v6906
    %v7253 = vunpack.c.h.b16 %v6906
    %v7254 = vunpack.c.l.b16 %v6907
    %v7255 = vunpack.c.h.b16 %v6907
    %v7256 = vunpack.c.l.b16 %v6908
    %v7257 = vunpack.c.h.b16 %v6908
    %v7258 = vunpack.c.l.b16 %v6909
    %v7259 = vunpack.c.h.b16 %v6909
    %v7260 = vunpack.c.l.b16 %v6910
    %v7261 = vunpack.c.h.b16 %v6910
    %v7262 = vunpack.c.l.b16 %v6911
    %v7263 = vunpack.c.h.b16 %v6911
    %v7264 = vunpack.c.l.b16 %v6912
    %v7265 = vunpack.c.h.b16 %v6912
    %v7266 = vunpack.c.l.b16 %v6913
    %v7267 = vunpack.c.h.b16 %v6913
    %v7268 = vunpack.c.l.b16 %v6914
    %v7269 = vunpack.c.h.b16 %v6914
    %v7270 = vunpack.c.l.b16 %v6915
    %v7271 = vunpack.c.h.b16 %v6915
    %v7272 = vunpack.c.l.b16 %v6916
    %v7273 = vunpack.c.h.b16 %v6916
    %v7274 = vunpack.c.l.b16 %v6917
    %v7275 = vunpack.c.h.b16 %v6917
    %v7276 = vunpack.c.l.b16 %v6918
    %v7277 = vunpack.c.h.b16 %v6918
    %v7278 = vunpack.c.l.b16 %v6919
    %v7279 = vunpack.c.h.b16 %v6919
    %v7280 = vunpack.c.l.b16 %v6920
    %v7281 = vunpack.c.h.b16 %v6920
    %v7282 = vunpack.c.l.b16 %v6921
    %v7283 = vunpack.c.h.b16 %v6921
    %v7284 = vunpack.c.l.b16 %v6922
    %v7285 = vunpack.c.h.b16 %v6922
    %v7286 = vunpack.c.l.b16 %v6923
    %v7287 = vunpack.c.h.b16 %v6923
    %v7288 = vunpack.c.l.b16 %v6924
    %v7289 = vunpack.c.h.b16 %v6924
    %v7290 = vunpack.c.l.b16 %v6925
    %v7291 = vunpack.c.h.b16 %v6925
    %v7292 = vunpack.c.l.b16 %v6926
    %v7293 = vunpack.c.h.b16 %v6926
    %v7294 = vunpack.c.l.b16 %v6927
    %v7295 = vunpack.c.h.b16 %v6927
    %v7296 = vunpack.c.l.b16 %v6928
    %v7297 = vunpack.c.h.b16 %v6928
    %v7298 = vunpack.c.l.b16 %v6929
    %v7299 = vunpack.c.h.b16 %v6929
    %v7300 = vunpack.c.l.b16 %v6930
    %v7301 = vunpack.c.h.b16 %v6930
    %v7302 = vunpack.c.l.b16 %v6931
    %v7303 = vunpack.c.h.b16 %v6931
    %v7304 = vunpack.c.l.b16 %v6932
    %v7305 = vunpack.c.h.b16 %v6932
    %v7306 = vunpack.c.l.b16 %v6933
    %v7307 = vunpack.c.h.b16 %v6933
    %v7308 = vunpack.c.l.b16 %v6934
    %v7309 = vunpack.c.h.b16 %v6934
    %v7310 = vunpack.c.l.b16 %v6935
    %v7311 = vunpack.c.h.b16 %v6935
    %v7312 = vunpack.c.l.b16 %v6936
    %v7313 = vunpack.c.h.b16 %v6936
    %v7314 = vunpack.c.l.b16 %v6937
    %v7315 = vunpack.c.h.b16 %v6937
    %v7316 = vunpack.c.l.b16 %v6938
    %v7317 = vunpack.c.h.b16 %v6938
    %v7318 = vunpack.c.l.b16 %v6939
    %v7319 = vunpack.c.h.b16 %v6939
    %v7320 = vunpack.c.l.b16 %v6940
    %v7321 = vunpack.c.h.b16 %v6940
    %v7322 = vunpack.c.l.b16 %v6941
    %v7323 = vunpack.c.h.b16 %v6941
    %v7324 = vunpack.c.l.b16 %v6942
    %v7325 = vunpack.c.h.b16 %v6942
    %v7326 = vunpack.c.l.b16 %v6943
    %v7327 = vunpack.c.h.b16 %v6943
    %v7328 = vunpack.c.l.b16 %v6944
    %v7329 = vunpack.c.h.b16 %v6944
    %v7330 = vunpack.c.l.b16 %v6945
    %v7331 = vunpack.c.h.b16 %v6945
    %v7332 = vunpack.c.l.b16 %v6946
    %v7333 = vunpack.c.h.b16 %v6946
    %v7334 = vunpack.c.l.b16 %v6947
    %v7335 = vunpack.c.h.b16 %v6947
    %v7336 = vunpack.c.l.b16 %v6948
    %v7337 = vunpack.c.h.b16 %v6948
    %v7338 = vunpack.c.l.b16 %v6949
    %v7339 = vunpack.c.h.b16 %v6949
    %v7340 = vunpack.c.l.b16 %v6950
    %v7341 = vunpack.c.h.b16 %v6950
    %v7342 = vunpack.c.l.b16 %v6951
    %v7343 = vunpack.c.h.b16 %v6951
    %v7344 = vunpack.c.l.b16 %v6952
    %v7345 = vunpack.c.h.b16 %v6952
    %v7346 = vunpack.c.l.b16 %v6953
    %v7347 = vunpack.c.h.b16 %v6953
    %v7348 = vunpack.c.l.b16 %v6954
    %v7349 = vunpack.c.h.b16 %v6954
    %v7350 = vunpack.c.l.b16 %v6955
    %v7351 = vunpack.c.h.b16 %v6955
    %v7352 = vunpack.c.l.b16 %v6956
    %v7353 = vunpack.c.h.b16 %v6956
    %v7354 = vunpack.c.l.b16 %v6957
    %v7355 = vunpack.c.h.b16 %v6957
    %v7356 = vunpack.c.l.b16 %v6958
    %v7357 = vunpack.c.h.b16 %v6958
    %v7358 = vunpack.c.l.b16 %v6959
    %v7359 = vunpack.c.h.b16 %v6959
    %v7360 = vunpack.c.l.b16 %v6960
    %v7361 = vunpack.c.h.b16 %v6960
    %v7362 = vunpack.c.l.b16 %v6961
    %v7363 = vunpack.c.h.b16 %v6961
    %v7364 = vunpack.c.l.b16 %v6962
    %v7365 = vunpack.c.h.b16 %v6962
    %v7366 = vunpack.c.l.b16 %v6963
    %v7367 = vunpack.c.h.b16 %v6963
    %v7368 = vunpack.c.l.b16 %v6964
    %v7369 = vunpack.c.h.b16 %v6964
    %v7370 = vunpack.c.l.b16 %v6965
    %v7371 = vunpack.c.h.b16 %v6965
    %v7372 = vunpack.c.l.b16 %v6966
    %v7373 = vunpack.c.h.b16 %v6966
    %v7374 = vpack.c.b16 %v7122, %v7118
    %v7375 = vpack.c.b16 %v7123, %v7119
    %v7376 = vpack.c.b16 %v7124, %v7120
    %v7377 = vpack.c.b16 %v7125, %v7121
    %v7378 = vpack.c.b16 %v7130, %v7126
    %v7379 = vpack.c.b16 %v7131, %v7127
    %v7380 = vpack.c.b16 %v7132, %v7128
    %v7381 = vpack.c.b16 %v7133, %v7129
    %v7382 = vpack.c.b16 %v7138, %v7134
    %v7383 = vpack.c.b16 %v7139, %v7135
    %v7384 = vpack.c.b16 %v7140, %v7136
    %v7385 = vpack.c.b16 %v7141, %v7137
    %v7386 = vpack.c.b16 %v7146, %v7142
    %v7387 = vpack.c.b16 %v7147, %v7143
    %v7388 = vpack.c.b16 %v7148, %v7144
    %v7389 = vpack.c.b16 %v7149, %v7145
    %v7390 = vpack.c.b16 %v7154, %v7150
    %v7391 = vpack.c.b16 %v7155, %v7151
    %v7392 = vpack.c.b16 %v7156, %v7152
    %v7393 = vpack.c.b16 %v7157, %v7153
    %v7394 = vpack.c.b16 %v7162, %v7158
    %v7395 = vpack.c.b16 %v7163, %v7159
    %v7396 = vpack.c.b16 %v7164, %v7160
    %v7397 = vpack.c.b16 %v7165, %v7161
    %v7398 = vpack.c.b16 %v7170, %v7166
    %v7399 = vpack.c.b16 %v7171, %v7167
    %v7400 = vpack.c.b16 %v7172, %v7168
    %v7401 = vpack.c.b16 %v7173, %v7169
    %v7402 = vpack.c.b16 %v7178, %v7174
    %v7403 = vpack.c.b16 %v7179, %v7175
    %v7404 = vpack.c.b16 %v7180, %v7176
    %v7405 = vpack.c.b16 %v7181, %v7177
    %v7406 = vpack.c.b16 %v7186, %v7182
    %v7407 = vpack.c.b16 %v7187, %v7183
    %v7408 = vpack.c.b16 %v7188, %v7184
    %v7409 = vpack.c.b16 %v7189, %v7185
    %v7410 = vpack.c.b16 %v7194, %v7190
    %v7411 = vpack.c.b16 %v7195, %v7191
    %v7412 = vpack.c.b16 %v7196, %v7192
    %v7413 = vpack.c.b16 %v7197, %v7193
    %v7414 = vpack.c.b16 %v7202, %v7198
    %v7415 = vpack.c.b16 %v7203, %v7199
    %v7416 = vpack.c.b16 %v7204, %v7200
    %v7417 = vpack.c.b16 %v7205, %v7201
    %v7418 = vpack.c.b16 %v7210, %v7206
    %v7419 = vpack.c.b16 %v7211, %v7207
    %v7420 = vpack.c.b16 %v7212, %v7208
    %v7421 = vpack.c.b16 %v7213, %v7209
    %v7422 = vpack.c.b16 %v7218, %v7214
    %v7423 = vpack.c.b16 %v7219, %v7215
    %v7424 = vpack.c.b16 %v7220, %v7216
    %v7425 = vpack.c.b16 %v7221, %v7217
    %v7426 = vpack.c.b16 %v7226, %v7222
    %v7427 = vpack.c.b16 %v7227, %v7223
    %v7428 = vpack.c.b16 %v7228, %v7224
    %v7429 = vpack.c.b16 %v7229, %v7225
    %v7430 = vpack.c.b16 %v7234, %v7230
    %v7431 = vpack.c.b16 %v7235, %v7231
    %v7432 = vpack.c.b16 %v7236, %v7232
    %v7433 = vpack.c.b16 %v7237, %v7233
    %v7434 = vpack.c.b16 %v7242, %v7238
    %v7435 = vpack.c.b16 %v7243, %v7239
    %v7436 = vpack.c.b16 %v7244, %v7240
    %v7437 = vpack.c.b16 %v7245, %v7241
    %v7438 = vpack.c.b16 %v7250, %v7246
    %v7439 = vpack.c.b16 %v7251, %v7247
    %v7440 = vpack.c.b16 %v7252, %v7248
    %v7441 = vpack.c.b16 %v7253, %v7249
    %v7442 = vpack.c.b16 %v7258, %v7254
    %v7443 = vpack.c.b16 %v7259, %v7255
    %v7444 = vpack.c.b16 %v7260, %v7256
    %v7445 = vpack.c.b16 %v7261, %v7257
    %v7446 = vpack.c.b16 %v7266, %v7262
    %v7447 = vpack.c.b16 %v7267, %v7263
    %v7448 = vpack.c.b16 %v7268, %v7264
    %v7449 = vpack.c.b16 %v7269, %v7265
    %v7450 = vpack.c.b16 %v7274, %v7270
    %v7451 = vpack.c.b16 %v7275, %v7271
    %v7452 = vpack.c.b16 %v7276, %v7272
    %v7453 = vpack.c.b16 %v7277, %v7273
    %v7454 = vpack.c.b16 %v7282, %v7278
    %v7455 = vpack.c.b16 %v7283, %v7279
    %v7456 = vpack.c.b16 %v7284, %v7280
    %v7457 = vpack.c.b16 %v7285, %v7281
    %v7458 = vpack.c.b16 %v7290, %v7286
    %v7459 = vpack.c.b16 %v7291, %v7287
    %v7460 = vpack.c.b16 %v7292, %v7288
    %v7461 = vpack.c.b16 %v7293, %v7289
    %v7462 = vpack.c.b16 %v7298, %v7294
    %v7463 = vpack.c.b16 %v7299, %v7295
    %v7464 = vpack.c.b16 %v7300, %v7296
    %v7465 = vpack.c.b16 %v7301, %v7297
    %v7466 = vpack.c.b16 %v7306, %v7302
    %v7467 = vpack.c.b16 %v7307, %v7303
    %v7468 = vpack.c.b16 %v7308, %v7304
    %v7469 = vpack.c.b16 %v7309, %v7305
    %v7470 = vpack.c.b16 %v7314, %v7310
    %v7471 = vpack.c.b16 %v7315, %v7311
    %v7472 = vpack.c.b16 %v7316, %v7312
    %v7473 = vpack.c.b16 %v7317, %v7313
    %v7474 = vpack.c.b16 %v7322, %v7318
    %v7475 = vpack.c.b16 %v7323, %v7319
    %v7476 = vpack.c.b16 %v7324, %v7320
    %v7477 = vpack.c.b16 %v7325, %v7321
    %v7478 = vpack.c.b16 %v7330, %v7326
    %v7479 = vpack.c.b16 %v7331, %v7327
    %v7480 = vpack.c.b16 %v7332, %v7328
    %v7481 = vpack.c.b16 %v7333, %v7329
    %v7482 = vpack.c.b16 %v7338, %v7334
    %v7483 = vpack.c.b16 %v7339, %v7335
    %v7484 = vpack.c.b16 %v7340, %v7336
    %v7485 = vpack.c.b16 %v7341, %v7337
    %v7486 = vpack.c.b16 %v7346, %v7342
    %v7487 = vpack.c.b16 %v7347, %v7343
    %v7488 = vpack.c.b16 %v7348, %v7344
    %v7489 = vpack.c.b16 %v7349, %v7345
    %v7490 = vpack.c.b16 %v7354, %v7350
    %v7491 = vpack.c.b16 %v7355, %v7351
    %v7492 = vpack.c.b16 %v7356, %v7352
    %v7493 = vpack.c.b16 %v7357, %v7353
    %v7494 = vpack.c.b16 %v7362, %v7358
    %v7495 = vpack.c.b16 %v7363, %v7359
    %v7496 = vpack.c.b16 %v7364, %v7360
    %v7497 = vpack.c.b16 %v7365, %v7361
    %v7498 = vpack.c.b16 %v7370, %v7366
    %v7499 = vpack.c.b16 %v7371, %v7367
    %v7500 = vpack.c.b16 %v7372, %v7368
    %v7501 = vpack.c.b16 %v7373, %v7369
    %7630 = vmatprep.subr.bf16.mxu0 %v7375
    %7631 = vmatpush1.bf16.msra.mxu0 %v7374
    %7632 = vmatprep.subr.bf16.mxu0 %v7379
    %7633 = vmatpush1.bf16.msra.mxu0 %v7378
    %7634 = vmatprep.subr.bf16.mxu0 %v7383
    %7635 = vmatpush1.bf16.msra.mxu0 %v7382
    %7636 = vmatprep.subr.bf16.mxu0 %v7387
    %7637 = vmatpush1.bf16.msra.mxu0 %v7386
    %7638 = vmatprep.subr.bf16.mxu0 %v7391
    %7639 = vmatpush1.bf16.msra.mxu0 %v7390
    %7640 = vmatprep.subr.bf16.mxu0 %v7395
    %7641 = vmatpush1.bf16.msra.mxu0 %v7394
    %7642 = vmatprep.subr.bf16.mxu0 %v7399
    %7643 = vmatpush1.bf16.msra.mxu0 %v7398
    %7644 = vmatprep.subr.bf16.mxu0 %v7403
    %7645 = vmatpush1.bf16.msra.mxu0 %v7402
    %7646 = vmatprep.subr.bf16.mxu0 %v7407
    %7647 = vmatpush1.bf16.msra.mxu0 %v7406
    %7648 = vmatprep.subr.bf16.mxu0 %v7411
    %7649 = vmatpush1.bf16.msra.mxu0 %v7410
    %7650 = vmatprep.subr.bf16.mxu0 %v7415
    %7651 = vmatpush1.bf16.msra.mxu0 %v7414
    %7652 = vmatprep.subr.bf16.mxu0 %v7419
    %7653 = vmatpush1.bf16.msra.mxu0 %v7418
    %7654 = vmatprep.subr.bf16.mxu0 %v7423
    %7655 = vmatpush1.bf16.msra.mxu0 %v7422
    %7656 = vmatprep.subr.bf16.mxu0 %v7427
    %7657 = vmatpush1.bf16.msra.mxu0 %v7426
    %7658 = vmatprep.subr.bf16.mxu0 %v7431
    %7659 = vmatpush1.bf16.msra.mxu0 %v7430
    %7660 = vmatprep.subr.bf16.mxu0 %v7435
    %7661 = vmatpush1.bf16.msra.mxu0 %v7434
    %7662 = vmatprep.mubr.bf16.mxu0 %v5879
    %7663 = vmatmul.mubr.bf16.gmra.mrb[0].mxu0 %v5878
    %v7664 = vpop.f32.mrb[0].mxu0
    %v7665 = vadd.f32 %v6973, %v7664
    %v7666 = vpop.f32.mrb[0].mxu0
    %v7667 = vadd.f32 %v6977, %v7666
    %v7668 = vpop.f32.mrb[0].mxu0
    %v7669 = vpop.f32.mrb[0].mxu0
    %7670 = vdwg.mxu0
    %7671 = vmatprep.subr.bf16.mxu0 %v7439
    %7672 = vmatpush1.bf16.msra.mxu0 %v7438
    %7673 = vmatprep.subr.bf16.mxu0 %v7443
    %7674 = vmatpush1.bf16.msra.mxu0 %v7442
    %7675 = vmatprep.subr.bf16.mxu0 %v7447
    %7676 = vmatpush1.bf16.msra.mxu0 %v7446
    %7677 = vmatprep.subr.bf16.mxu0 %v7451
    %7678 = vmatpush1.bf16.msra.mxu0 %v7450
    %7679 = vmatprep.subr.bf16.mxu0 %v7455
    %7680 = vmatpush1.bf16.msra.mxu0 %v7454
    %7681 = vmatprep.subr.bf16.mxu0 %v7459
    %7682 = vmatpush1.bf16.msra.mxu0 %v7458
    %7683 = vmatprep.subr.bf16.mxu0 %v7463
    %7684 = vmatpush1.bf16.msra.mxu0 %v7462
    %7685 = vmatprep.subr.bf16.mxu0 %v7467
    %7686 = vmatpush1.bf16.msra.mxu0 %v7466
    %7687 = vmatprep.subr.bf16.mxu0 %v7471
    %7688 = vmatpush1.bf16.msra.mxu0 %v7470
    %7689 = vmatprep.subr.bf16.mxu0 %v7475
    %7690 = vmatpush1.bf16.msra.mxu0 %v7474
    %7691 = vmatprep.subr.bf16.mxu0 %v7479
    %7692 = vmatpush1.bf16.msra.mxu0 %v7478
    %7693 = vmatprep.subr.bf16.mxu0 %v7483
    %7694 = vmatpush1.bf16.msra.mxu0 %v7482
    %7695 = vmatprep.subr.bf16.mxu0 %v7487
    %7696 = vmatpush1.bf16.msra.mxu0 %v7486
    %7697 = vmatprep.subr.bf16.mxu0 %v7491
    %7698 = vmatpush1.bf16.msra.mxu0 %v7490
    %7699 = vmatprep.subr.bf16.mxu0 %v7495
    %7700 = vmatpush1.bf16.msra.mxu0 %v7494
    %7701 = vmatprep.subr.bf16.mxu0 %v7499
    %7702 = vmatpush1.bf16.msra.mxu0 %v7498
    %7703 = vmatprep.mubr.bf16.mxu0 %v5881
    %7704 = vmatmul.mubr.bf16.gmra.mrb[0].mxu0 %v5880
    %v7705 = vpop.f32.mrb[0].mxu0
    %v7706 = vadd.f32 %v7665, %v7705
    %v7707 = vpop.f32.mrb[0].mxu0
    %v7708 = vadd.f32 %v7667, %v7707
    %v7709 = vpop.f32.mrb[0].mxu0
    %v7710 = vpop.f32.mrb[0].mxu0
    %7711 = vdwg.mxu0
    %7712 = vmatprep.subr.bf16.mxu0 %v7377
    %7713 = vmatpush1.bf16.msra.mxu0 %v7376
    %7714 = vmatprep.subr.bf16.mxu0 %v7381
    %7715 = vmatpush1.bf16.msra.mxu0 %v7380
    %7716 = vmatprep.subr.bf16.mxu0 %v7385
    %7717 = vmatpush1.bf16.msra.mxu0 %v7384
    %7718 = vmatprep.subr.bf16.mxu0 %v7389
    %7719 = vmatpush1.bf16.msra.mxu0 %v7388
    %7720 = vmatprep.subr.bf16.mxu0 %v7393
    %7721 = vmatpush1.bf16.msra.mxu0 %v7392
    %7722 = vmatprep.subr.bf16.mxu0 %v7397
    %7723 = vmatpush1.bf16.msra.mxu0 %v7396
    %7724 = vmatprep.subr.bf16.mxu0 %v7401
    %7725 = vmatpush1.bf16.msra.mxu0 %v7400
    %7726 = vmatprep.subr.bf16.mxu0 %v7405
    %7727 = vmatpush1.bf16.msra.mxu0 %v7404
    %7728 = vmatprep.subr.bf16.mxu0 %v7409
    %7729 = vmatpush1.bf16.msra.mxu0 %v7408
    %7730 = vmatprep.subr.bf16.mxu0 %v7413
    %7731 = vmatpush1.bf16.msra.mxu0 %v7412
    %7732 = vmatprep.subr.bf16.mxu0 %v7417
    %7733 = vmatpush1.bf16.msra.mxu0 %v7416
    %7734 = vmatprep.subr.bf16.mxu0 %v7421
    %7735 = vmatpush1.bf16.msra.mxu0 %v7420
    %7736 = vmatprep.subr.bf16.mxu0 %v7425
    %7737 = vmatpush1.bf16.msra.mxu0 %v7424
    %7738 = vmatprep.subr.bf16.mxu0 %v7429
    %7739 = vmatpush1.bf16.msra.mxu0 %v7428
    %7740 = vmatprep.subr.bf16.mxu0 %v7433
    %7741 = vmatpush1.bf16.msra.mxu0 %v7432
    %7742 = vmatprep.subr.bf16.mxu0 %v7437
    %7743 = vmatpush1.bf16.msra.mxu0 %v7436
    %7744 = vmatprep.mubr.bf16.mxu0 %v5879
    %7745 = vmatmul.mubr.bf16.gmra.mrb[0].mxu0 %v5878
    %v7746 = vpop.f32.mrb[0].mxu0
    %v7747 = vadd.f32 %v6981, %v7746
    %v7748 = vpop.f32.mrb[0].mxu0
    %v7749 = vadd.f32 %v6985, %v7748
    %v7750 = vpop.f32.mrb[0].mxu0
    %v7751 = vpop.f32.mrb[0].mxu0
    %7752 = vdwg.mxu0
    %7753 = vmatprep.subr.bf16.mxu0 %v7441
    %7754 = vmatpush1.bf16.msra.mxu0 %v7440
    %7755 = vmatprep.subr.bf16.mxu0 %v7445
    %7756 = vmatpush1.bf16.msra.mxu0 %v7444
    %7757 = vmatprep.subr.bf16.mxu0 %v7449
    %7758 = vmatpush1.bf16.msra.mxu0 %v7448
    %7759 = vmatprep.subr.bf16.mxu0 %v7453
    %7760 = vmatpush1.bf16.msra.mxu0 %v7452
    %7761 = vmatprep.subr.bf16.mxu0 %v7457
    %7762 = vmatpush1.bf16.msra.mxu0 %v7456
    %7763 = vmatprep.subr.bf16.mxu0 %v7461
    %7764 = vmatpush1.bf16.msra.mxu0 %v7460
    %7765 = vmatprep.subr.bf16.mxu0 %v7465
    %7766 = vmatpush1.bf16.msra.mxu0 %v7464
    %7767 = vmatprep.subr.bf16.mxu0 %v7469
    %7768 = vmatpush1.bf16.msra.mxu0 %v7468
    %7769 = vmatprep.subr.bf16.mxu0 %v7473
    %7770 = vmatpush1.bf16.msra.mxu0 %v7472
    %7771 = vmatprep.subr.bf16.mxu0 %v7477
    %7772 = vmatpush1.bf16.msra.mxu0 %v7476
    %7773 = vmatprep.subr.bf16.mxu0 %v7481
    %7774 = vmatpush1.bf16.msra.mxu0 %v7480
    %7775 = vmatprep.subr.bf16.mxu0 %v7485
    %7776 = vmatpush1.bf16.msra.mxu0 %v7484
    %7777 = vmatprep.subr.bf16.mxu0 %v7489
    %7778 = vmatpush1.bf16.msra.mxu0 %v7488
    %7779 = vmatprep.subr.bf16.mxu0 %v7493
    %7780 = vmatpush1.bf16.msra.mxu0 %v7492
    %7781 = vmatprep.subr.bf16.mxu0 %v7497
    %7782 = vmatpush1.bf16.msra.mxu0 %v7496
    %7783 = vmatprep.subr.bf16.mxu0 %v7501
    %7784 = vmatpush1.bf16.msra.mxu0 %v7500
    %7785 = vmatprep.mubr.bf16.mxu0 %v5881
    %7786 = vmatmul.mubr.bf16.gmra.mrb[0].mxu0 %v5880
    %v7787 = vpop.f32.mrb[0].mxu0
    %v7788 = vadd.f32 %v7747, %v7787
    %v7789 = vpop.f32.mrb[0].mxu0
    %v7790 = vadd.f32 %v7749, %v7789
    %v7791 = vpop.f32.mrb[0].mxu0
    %v7792 = vpop.f32.mrb[0].mxu0
    %7793 = vdwg.mxu0
    %v7794 = vld [vmem:[%s1] sm:$0xff]
    %v7795 = vld [vmem:[%s1 + $0x8] sm:$0xff]
    %v7796 = vld [vmem:[%s1 + $0x10] sm:$0xff]
    %v7797 = vld [vmem:[%s1 + $0x18] sm:$0xff]
    %v7798 = vmul.f32 %v7706, 0.5
    %v7799 = vmul.f32 %v7708, 0.5
    %v7800 = vmul.f32 %v7788, 0.5
    %v7801 = vmul.f32 %v7790, 0.5
    %v7802 = vmul.f32 %v7798, 1.442695
    %v7803 = vpow.pop %v7802
    %v7804 = vmul.f32 %v7799, 1.442695
    %v7805 = vpow.pop %v7804
    %v7806 = vmul.f32 %v7800, 1.442695
    %v7807 = vpow.pop %v7806
    %v7808 = vmul.f32 %v7801, 1.442695
    %v7809 = vpow.pop %v7808
    %v7810 = vmul.f32 %v7794, %v7803
    %v7811 = vmul.f32 %v7795, %v7805
    %v7812 = vmul.f32 %v7796, %v7807
    %v7813 = vmul.f32 %v7797, %v7809
    %v7814 = vadd.f32 %v6750, %v7810
    %v7815 = vadd.f32 %v6752, %v7811
    %v7816 = vadd.f32 %v6832, %v7812
    %v7817 = vadd.f32 %v6834, %v7813
    %v7818 = vpack.c.bf16 %v7814, %v7814
    %v7819 = vpack.c.bf16 %v7815, %v7815
    %v7820 = vpack.c.bf16 %v7816, %v7816
    %v7821 = vpack.c.bf16 %v7817, %v7817
    %s7822 = scalar_lea.vmem [#allocation2], 8192
    %v7823 = vld [vmem:[%s7822] sm:$0xff]
    %v7824 = vld [vmem:[%s7822 + $0x8] sm:$0xff]
    %v7825 = vld [vmem:[%s7822 + $0x10] sm:$0xff]
    %v7826 = vld [vmem:[%s7822 + $0x18] sm:$0xff]
    %v7827 = vld [vmem:[%s7822 + $0x20] sm:$0xff]
    %v7828 = vld [vmem:[%s7822 + $0x28] sm:$0xff]
    %v7829 = vld [vmem:[%s7822 + $0x30] sm:$0xff]
    %v7830 = vld [vmem:[%s7822 + $0x38] sm:$0xff]
    %v7831 = vld [vmem:[%s7822 + $0x40] sm:$0xff]
    %v7832 = vld [vmem:[%s7822 + $0x48] sm:$0xff]
    %v7833 = vld [vmem:[%s7822 + $0x50] sm:$0xff]
    %v7834 = vld [vmem:[%s7822 + $0x58] sm:$0xff]
    %v7835 = vld [vmem:[%s7822 + $0x60] sm:$0xff]
    %v7836 = vld [vmem:[%s7822 + $0x68] sm:$0xff]
    %v7837 = vld [vmem:[%s7822 + $0x70] sm:$0xff]
    %v7838 = vld [vmem:[%s7822 + $0x78] sm:$0xff]
    %v7839 = vld [vmem:[%s7822 + $0x80] sm:$0xff]
    %v7840 = vld [vmem:[%s7822 + $0x88] sm:$0xff]
    %v7841 = vld [vmem:[%s7822 + $0x90] sm:$0xff]
    %v7842 = vld [vmem:[%s7822 + $0x98] sm:$0xff]
    %v7843 = vld [vmem:[%s7822 + $0xa0] sm:$0xff]
    %v7844 = vld [vmem:[%s7822 + $0xa8] sm:$0xff]
    %v7845 = vld [vmem:[%s7822 + $0xb0] sm:$0xff]
    %v7846 = vld [vmem:[%s7822 + $0xb8] sm:$0xff]
    %v7847 = vld [vmem:[%s7822 + $0xc0] sm:$0xff]
    %v7848 = vld [vmem:[%s7822 + $0xc8] sm:$0xff]
    %v7849 = vld [vmem:[%s7822 + $0xd0] sm:$0xff]
    %v7850 = vld [vmem:[%s7822 + $0xd8] sm:$0xff]
    %v7851 = vld [vmem:[%s7822 + $0xe0] sm:$0xff]
    %v7852 = vld [vmem:[%s7822 + $0xe8] sm:$0xff]
    %v7853 = vld [vmem:[%s7822 + $0xf0] sm:$0xff]
    %v7854 = vld [vmem:[%s7822 + $0xf8] sm:$0xff]
    %v7855 = vld [vmem:[%s7822 + $0x100] sm:$0xff]
    %v7856 = vld [vmem:[%s7822 + $0x108] sm:$0xff]
    %v7857 = vld [vmem:[%s7822 + $0x110] sm:$0xff]
    %v7858 = vld [vmem:[%s7822 + $0x118] sm:$0xff]
    %v7859 = vld [vmem:[%s7822 + $0x120] sm:$0xff]
    %v7860 = vld [vmem:[%s7822 + $0x128] sm:$0xff]
    %v7861 = vld [vmem:[%s7822 + $0x130] sm:$0xff]
    %v7862 = vld [vmem:[%s7822 + $0x138] sm:$0xff]
    %v7863 = vld [vmem:[%s7822 + $0x140] sm:$0xff]
    %v7864 = vld [vmem:[%s7822 + $0x148] sm:$0xff]
    %v7865 = vld [vmem:[%s7822 + $0x150] sm:$0xff]
    %v7866 = vld [vmem:[%s7822 + $0x158] sm:$0xff]
    %v7867 = vld [vmem:[%s7822 + $0x160] sm:$0xff]
    %v7868 = vld [vmem:[%s7822 + $0x168] sm:$0xff]
    %v7869 = vld [vmem:[%s7822 + $0x170] sm:$0xff]
    %v7870 = vld [vmem:[%s7822 + $0x178] sm:$0xff]
    %v7871 = vld [vmem:[%s7822 + $0x180] sm:$0xff]
    %v7872 = vld [vmem:[%s7822 + $0x188] sm:$0xff]
    %v7873 = vld [vmem:[%s7822 + $0x190] sm:$0xff]
    %v7874 = vld [vmem:[%s7822 + $0x198] sm:$0xff]
    %v7875 = vld [vmem:[%s7822 + $0x1a0] sm:$0xff]
    %v7876 = vld [vmem:[%s7822 + $0x1a8] sm:$0xff]
    %v7877 = vld [vmem:[%s7822 + $0x1b0] sm:$0xff]
    %v7878 = vld [vmem:[%s7822 + $0x1b8] sm:$0xff]
    %v7879 = vld [vmem:[%s7822 + $0x1c0] sm:$0xff]
    %v7880 = vld [vmem:[%s7822 + $0x1c8] sm:$0xff]
    %v7881 = vld [vmem:[%s7822 + $0x1d0] sm:$0xff]
    %v7882 = vld [vmem:[%s7822 + $0x1d8] sm:$0xff]
    %v7883 = vld [vmem:[%s7822 + $0x1e0] sm:$0xff]
    %v7884 = vld [vmem:[%s7822 + $0x1e8] sm:$0xff]
    %v7885 = vld [vmem:[%s7822 + $0x1f0] sm:$0xff]
    %v7886 = vld [vmem:[%s7822 + $0x1f8] sm:$0xff]
    %v7887 = vld [vmem:[%s7822 + $0x200] sm:$0xff]
    %v7888 = vld [vmem:[%s7822 + $0x208] sm:$0xff]
    %v7889 = vld [vmem:[%s7822 + $0x210] sm:$0xff]
    %v7890 = vld [vmem:[%s7822 + $0x218] sm:$0xff]
    %v7891 = vld [vmem:[%s7822 + $0x220] sm:$0xff]
    %v7892 = vld [vmem:[%s7822 + $0x228] sm:$0xff]
    %v7893 = vld [vmem:[%s7822 + $0x230] sm:$0xff]
    %v7894 = vld [vmem:[%s7822 + $0x238] sm:$0xff]
    %v7895 = vld [vmem:[%s7822 + $0x240] sm:$0xff]
    %v7896 = vld [vmem:[%s7822 + $0x248] sm:$0xff]
    %v7897 = vld [vmem:[%s7822 + $0x250] sm:$0xff]
    %v7898 = vld [vmem:[%s7822 + $0x258] sm:$0xff]
    %v7899 = vld [vmem:[%s7822 + $0x260] sm:$0xff]
    %v7900 = vld [vmem:[%s7822 + $0x268] sm:$0xff]
    %v7901 = vld [vmem:[%s7822 + $0x270] sm:$0xff]
    %v7902 = vld [vmem:[%s7822 + $0x278] sm:$0xff]
    %v7903 = vld [vmem:[%s7822 + $0x280] sm:$0xff]
    %v7904 = vld [vmem:[%s7822 + $0x288] sm:$0xff]
    %v7905 = vld [vmem:[%s7822 + $0x290] sm:$0xff]
    %v7906 = vld [vmem:[%s7822 + $0x298] sm:$0xff]
    %v7907 = vld [vmem:[%s7822 + $0x2a0] sm:$0xff]
    %v7908 = vld [vmem:[%s7822 + $0x2a8] sm:$0xff]
    %v7909 = vld [vmem:[%s7822 + $0x2b0] sm:$0xff]
    %v7910 = vld [vmem:[%s7822 + $0x2b8] sm:$0xff]
    %v7911 = vld [vmem:[%s7822 + $0x2c0] sm:$0xff]
    %v7912 = vld [vmem:[%s7822 + $0x2c8] sm:$0xff]
    %v7913 = vld [vmem:[%s7822 + $0x2d0] sm:$0xff]
    %v7914 = vld [vmem:[%s7822 + $0x2d8] sm:$0xff]
    %v7915 = vld [vmem:[%s7822 + $0x2e0] sm:$0xff]
    %v7916 = vld [vmem:[%s7822 + $0x2e8] sm:$0xff]
    %v7917 = vld [vmem:[%s7822 + $0x2f0] sm:$0xff]
    %v7918 = vld [vmem:[%s7822 + $0x2f8] sm:$0xff]
    %v7919 = vld [vmem:[%s7822 + $0x300] sm:$0xff]
    %v7920 = vld [vmem:[%s7822 + $0x308] sm:$0xff]
    %v7921 = vld [vmem:[%s7822 + $0x310] sm:$0xff]
    %v7922 = vld [vmem:[%s7822 + $0x318] sm:$0xff]
    %v7923 = vld [vmem:[%s7822 + $0x320] sm:$0xff]
    %v7924 = vld [vmem:[%s7822 + $0x328] sm:$0xff]
    %v7925 = vld [vmem:[%s7822 + $0x330] sm:$0xff]
    %v7926 = vld [vmem:[%s7822 + $0x338] sm:$0xff]
    %v7927 = vld [vmem:[%s7822 + $0x340] sm:$0xff]
    %v7928 = vld [vmem:[%s7822 + $0x348] sm:$0xff]
    %v7929 = vld [vmem:[%s7822 + $0x350] sm:$0xff]
    %v7930 = vld [vmem:[%s7822 + $0x358] sm:$0xff]
    %v7931 = vld [vmem:[%s7822 + $0x360] sm:$0xff]
    %v7932 = vld [vmem:[%s7822 + $0x368] sm:$0xff]
    %v7933 = vld [vmem:[%s7822 + $0x370] sm:$0xff]
    %v7934 = vld [vmem:[%s7822 + $0x378] sm:$0xff]
    %v7935 = vld [vmem:[%s7822 + $0x380] sm:$0xff]
    %v7936 = vld [vmem:[%s7822 + $0x388] sm:$0xff]
    %v7937 = vld [vmem:[%s7822 + $0x390] sm:$0xff]
    %v7938 = vld [vmem:[%s7822 + $0x398] sm:$0xff]
    %v7939 = vld [vmem:[%s7822 + $0x3a0] sm:$0xff]
    %v7940 = vld [vmem:[%s7822 + $0x3a8] sm:$0xff]
    %v7941 = vld [vmem:[%s7822 + $0x3b0] sm:$0xff]
    %v7942 = vld [vmem:[%s7822 + $0x3b8] sm:$0xff]
    %v7943 = vld [vmem:[%s7822 + $0x3c0] sm:$0xff]
    %v7944 = vld [vmem:[%s7822 + $0x3c8] sm:$0xff]
    %v7945 = vld [vmem:[%s7822 + $0x3d0] sm:$0xff]
    %v7946 = vld [vmem:[%s7822 + $0x3d8] sm:$0xff]
    %v7947 = vld [vmem:[%s7822 + $0x3e0] sm:$0xff]
    %v7948 = vld [vmem:[%s7822 + $0x3e8] sm:$0xff]
    %v7949 = vld [vmem:[%s7822 + $0x3f0] sm:$0xff]
    %v7950 = vld [vmem:[%s7822 + $0x3f8] sm:$0xff]
    %s7951 = scalar_lea.vmem [#allocation4], 32
    %v7952 = vld [vmem:[%s7951] sm:$0xf]
    %v7954 = vlaneseq
    %v7955 = vshrl.u32 %v7954, 7
    %v7956 = vsub.s32 0, %v7955
    %v7957 = vrot.slane %v7952, %v7956
    %v7958 = vlaneseq
    %v7959 = vshrl.u32 %v7958, 7
    %v7960 = vsub.s32 1, %v7959
    %v7961 = vrot.slane %v7952, %v7960
    %v7962 = vlaneseq
    %v7963 = vshrl.u32 %v7962, 7
    %v7964 = vsub.s32 2, %v7963
    %v7965 = vrot.slane %v7952, %v7964
    %v7966 = vlaneseq
    %v7967 = vshrl.u32 %v7966, 7
    %v7968 = vsub.s32 3, %v7967
    %v7969 = vrot.slane %v7952, %v7968
    %v8102 = vunpack.c.l.b16 %v7823
    %v8103 = vunpack.c.h.b16 %v7823
    %v8104 = vunpack.c.l.b16 %v7824
    %v8105 = vunpack.c.h.b16 %v7824
    %v8106 = vunpack.c.l.b16 %v7825
    %v8107 = vunpack.c.h.b16 %v7825
    %v8108 = vunpack.c.l.b16 %v7826
    %v8109 = vunpack.c.h.b16 %v7826
    %v8110 = vunpack.c.l.b16 %v7827
    %v8111 = vunpack.c.h.b16 %v7827
    %v8112 = vunpack.c.l.b16 %v7828
    %v8113 = vunpack.c.h.b16 %v7828
    %v8114 = vunpack.c.l.b16 %v7829
    %v8115 = vunpack.c.h.b16 %v7829
    %v8116 = vunpack.c.l.b16 %v7830
    %v8117 = vunpack.c.h.b16 %v7830
    %v8118 = vunpack.c.l.b16 %v7831
    %v8119 = vunpack.c.h.b16 %v7831
    %v8120 = vunpack.c.l.b16 %v7832
    %v8121 = vunpack.c.h.b16 %v7832
    %v8122 = vunpack.c.l.b16 %v7833
    %v8123 = vunpack.c.h.b16 %v7833
    %v8124 = vunpack.c.l.b16 %v7834
    %v8125 = vunpack.c.h.b16 %v7834
    %v8126 = vunpack.c.l.b16 %v7835
    %v8127 = vunpack.c.h.b16 %v7835
    %v8128 = vunpack.c.l.b16 %v7836
    %v8129 = vunpack.c.h.b16 %v7836
    %v8130 = vunpack.c.l.b16 %v7837
    %v8131 = vunpack.c.h.b16 %v7837
    %v8132 = vunpack.c.l.b16 %v7838
    %v8133 = vunpack.c.h.b16 %v7838
    %v8134 = vunpack.c.l.b16 %v7839
    %v8135 = vunpack.c.h.b16 %v7839
    %v8136 = vunpack.c.l.b16 %v7840
    %v8137 = vunpack.c.h.b16 %v7840
    %v8138 = vunpack.c.l.b16 %v7841
    %v8139 = vunpack.c.h.b16 %v7841
    %v8140 = vunpack.c.l.b16 %v7842
    %v8141 = vunpack.c.h.b16 %v7842
    %v8142 = vunpack.c.l.b16 %v7843
    %v8143 = vunpack.c.h.b16 %v7843
    %v8144 = vunpack.c.l.b16 %v7844
    %v8145 = vunpack.c.h.b16 %v7844
    %v8146 = vunpack.c.l.b16 %v7845
    %v8147 = vunpack.c.h.b16 %v7845
    %v8148 = vunpack.c.l.b16 %v7846
    %v8149 = vunpack.c.h.b16 %v7846
    %v8150 = vunpack.c.l.b16 %v7847
    %v8151 = vunpack.c.h.b16 %v7847
    %v8152 = vunpack.c.l.b16 %v7848
    %v8153 = vunpack.c.h.b16 %v7848
    %v8154 = vunpack.c.l.b16 %v7849
    %v8155 = vunpack.c.h.b16 %v7849
    %v8156 = vunpack.c.l.b16 %v7850
    %v8157 = vunpack.c.h.b16 %v7850
    %v8158 = vunpack.c.l.b16 %v7851
    %v8159 = vunpack.c.h.b16 %v7851
    %v8160 = vunpack.c.l.b16 %v7852
    %v8161 = vunpack.c.h.b16 %v7852
    %v8162 = vunpack.c.l.b16 %v7853
    %v8163 = vunpack.c.h.b16 %v7853
    %v8164 = vunpack.c.l.b16 %v7854
    %v8165 = vunpack.c.h.b16 %v7854
    %v8166 = vunpack.c.l.b16 %v7855
    %v8167 = vunpack.c.h.b16 %v7855
    %v8168 = vunpack.c.l.b16 %v7856
    %v8169 = vunpack.c.h.b16 %v7856
    %v8170 = vunpack.c.l.b16 %v7857
    %v8171 = vunpack.c.h.b16 %v7857
    %v8172 = vunpack.c.l.b16 %v7858
    %v8173 = vunpack.c.h.b16 %v7858
    %v8174 = vunpack.c.l.b16 %v7859
    %v8175 = vunpack.c.h.b16 %v7859
    %v8176 = vunpack.c.l.b16 %v7860
    %v8177 = vunpack.c.h.b16 %v7860
    %v8178 = vunpack.c.l.b16 %v7861
    %v8179 = vunpack.c.h.b16 %v7861
    %v8180 = vunpack.c.l.b16 %v7862
    %v8181 = vunpack.c.h.b16 %v7862
    %v8182 = vunpack.c.l.b16 %v7863
    %v8183 = vunpack.c.h.b16 %v7863
    %v8184 = vunpack.c.l.b16 %v7864
    %v8185 = vunpack.c.h.b16 %v7864
    %v8186 = vunpack.c.l.b16 %v7865
    %v8187 = vunpack.c.h.b16 %v7865
    %v8188 = vunpack.c.l.b16 %v7866
    %v8189 = vunpack.c.h.b16 %v7866
    %v8190 = vunpack.c.l.b16 %v7867
    %v8191 = vunpack.c.h.b16 %v7867
    %v8192 = vunpack.c.l.b16 %v7868
    %v8193 = vunpack.c.h.b16 %v7868
    %v8194 = vunpack.c.l.b16 %v7869
    %v8195 = vunpack.c.h.b16 %v7869
    %v8196 = vunpack.c.l.b16 %v7870
    %v8197 = vunpack.c.h.b16 %v7870
    %v8198 = vunpack.c.l.b16 %v7871
    %v8199 = vunpack.c.h.b16 %v7871
    %v8200 = vunpack.c.l.b16 %v7872
    %v8201 = vunpack.c.h.b16 %v7872
    %v8202 = vunpack.c.l.b16 %v7873
    %v8203 = vunpack.c.h.b16 %v7873
    %v8204 = vunpack.c.l.b16 %v7874
    %v8205 = vunpack.c.h.b16 %v7874
    %v8206 = vunpack.c.l.b16 %v7875
    %v8207 = vunpack.c.h.b16 %v7875
    %v8208 = vunpack.c.l.b16 %v7876
    %v8209 = vunpack.c.h.b16 %v7876
    %v8210 = vunpack.c.l.b16 %v7877
    %v8211 = vunpack.c.h.b16 %v7877
    %v8212 = vunpack.c.l.b16 %v7878
    %v8213 = vunpack.c.h.b16 %v7878
    %v8214 = vunpack.c.l.b16 %v7879
    %v8215 = vunpack.c.h.b16 %v7879
    %v8216 = vunpack.c.l.b16 %v7880
    %v8217 = vunpack.c.h.b16 %v7880
    %v8218 = vunpack.c.l.b16 %v7881
    %v8219 = vunpack.c.h.b16 %v7881
    %v8220 = vunpack.c.l.b16 %v7882
    %v8221 = vunpack.c.h.b16 %v7882
    %v8222 = vunpack.c.l.b16 %v7883
    %v8223 = vunpack.c.h.b16 %v7883
    %v8224 = vunpack.c.l.b16 %v7884
    %v8225 = vunpack.c.h.b16 %v7884
    %v8226 = vunpack.c.l.b16 %v7885
    %v8227 = vunpack.c.h.b16 %v7885
    %v8228 = vunpack.c.l.b16 %v7886
    %v8229 = vunpack.c.h.b16 %v7886
    %v8230 = vunpack.c.l.b16 %v7887
    %v8231 = vunpack.c.h.b16 %v7887
    %v8232 = vunpack.c.l.b16 %v7888
    %v8233 = vunpack.c.h.b16 %v7888
    %v8234 = vunpack.c.l.b16 %v7889
    %v8235 = vunpack.c.h.b16 %v7889
    %v8236 = vunpack.c.l.b16 %v7890
    %v8237 = vunpack.c.h.b16 %v7890
    %v8238 = vunpack.c.l.b16 %v7891
    %v8239 = vunpack.c.h.b16 %v7891
    %v8240 = vunpack.c.l.b16 %v7892
    %v8241 = vunpack.c.h.b16 %v7892
    %v8242 = vunpack.c.l.b16 %v7893
    %v8243 = vunpack.c.h.b16 %v7893
    %v8244 = vunpack.c.l.b16 %v7894
    %v8245 = vunpack.c.h.b16 %v7894
    %v8246 = vunpack.c.l.b16 %v7895
    %v8247 = vunpack.c.h.b16 %v7895
    %v8248 = vunpack.c.l.b16 %v7896
    %v8249 = vunpack.c.h.b16 %v7896
    %v8250 = vunpack.c.l.b16 %v7897
    %v8251 = vunpack.c.h.b16 %v7897
    %v8252 = vunpack.c.l.b16 %v7898
    %v8253 = vunpack.c.h.b16 %v7898
    %v8254 = vunpack.c.l.b16 %v7899
    %v8255 = vunpack.c.h.b16 %v7899
    %v8256 = vunpack.c.l.b16 %v7900
    %v8257 = vunpack.c.h.b16 %v7900
    %v8258 = vunpack.c.l.b16 %v7901
    %v8259 = vunpack.c.h.b16 %v7901
    %v8260 = vunpack.c.l.b16 %v7902
    %v8261 = vunpack.c.h.b16 %v7902
    %v8262 = vunpack.c.l.b16 %v7903
    %v8263 = vunpack.c.h.b16 %v7903
    %v8264 = vunpack.c.l.b16 %v7904
    %v8265 = vunpack.c.h.b16 %v7904
    %v8266 = vunpack.c.l.b16 %v7905
    %v8267 = vunpack.c.h.b16 %v7905
    %v8268 = vunpack.c.l.b16 %v7906
    %v8269 = vunpack.c.h.b16 %v7906
    %v8270 = vunpack.c.l.b16 %v7907
    %v8271 = vunpack.c.h.b16 %v7907
    %v8272 = vunpack.c.l.b16 %v7908
    %v8273 = vunpack.c.h.b16 %v7908
    %v8274 = vunpack.c.l.b16 %v7909
    %v8275 = vunpack.c.h.b16 %v7909
    %v8276 = vunpack.c.l.b16 %v7910
    %v8277 = vunpack.c.h.b16 %v7910
    %v8278 = vunpack.c.l.b16 %v7911
    %v8279 = vunpack.c.h.b16 %v7911
    %v8280 = vunpack.c.l.b16 %v7912
    %v8281 = vunpack.c.h.b16 %v7912
    %v8282 = vunpack.c.l.b16 %v7913
    %v8283 = vunpack.c.h.b16 %v7913
    %v8284 = vunpack.c.l.b16 %v7914
    %v8285 = vunpack.c.h.b16 %v7914
    %v8286 = vunpack.c.l.b16 %v7915
    %v8287 = vunpack.c.h.b16 %v7915
    %v8288 = vunpack.c.l.b16 %v7916
    %v8289 = vunpack.c.h.b16 %v7916
    %v8290 = vunpack.c.l.b16 %v7917
    %v8291 = vunpack.c.h.b16 %v7917
    %v8292 = vunpack.c.l.b16 %v7918
    %v8293 = vunpack.c.h.b16 %v7918
    %v8294 = vunpack.c.l.b16 %v7919
    %v8295 = vunpack.c.h.b16 %v7919
    %v8296 = vunpack.c.l.b16 %v7920
    %v8297 = vunpack.c.h.b16 %v7920
    %v8298 = vunpack.c.l.b16 %v7921
    %v8299 = vunpack.c.h.b16 %v7921
    %v8300 = vunpack.c.l.b16 %v7922
    %v8301 = vunpack.c.h.b16 %v7922
    %v8302 = vunpack.c.l.b16 %v7923
    %v8303 = vunpack.c.h.b16 %v7923
    %v8304 = vunpack.c.l.b16 %v7924
    %v8305 = vunpack.c.h.b16 %v7924
    %v8306 = vunpack.c.l.b16 %v7925
    %v8307 = vunpack.c.h.b16 %v7925
    %v8308 = vunpack.c.l.b16 %v7926
    %v8309 = vunpack.c.h.b16 %v7926
    %v8310 = vunpack.c.l.b16 %v7927
    %v8311 = vunpack.c.h.b16 %v7927
    %v8312 = vunpack.c.l.b16 %v7928
    %v8313 = vunpack.c.h.b16 %v7928
    %v8314 = vunpack.c.l.b16 %v7929
    %v8315 = vunpack.c.h.b16 %v7929
    %v8316 = vunpack.c.l.b16 %v7930
    %v8317 = vunpack.c.h.b16 %v7930
    %v8318 = vunpack.c.l.b16 %v7931
    %v8319 = vunpack.c.h.b16 %v7931
    %v8320 = vunpack.c.l.b16 %v7932
    %v8321 = vunpack.c.h.b16 %v7932
    %v8322 = vunpack.c.l.b16 %v7933
    %v8323 = vunpack.c.h.b16 %v7933
    %v8324 = vunpack.c.l.b16 %v7934
    %v8325 = vunpack.c.h.b16 %v7934
    %v8326 = vunpack.c.l.b16 %v7935
    %v8327 = vunpack.c.h.b16 %v7935
    %v8328 = vunpack.c.l.b16 %v7936
    %v8329 = vunpack.c.h.b16 %v7936
    %v8330 = vunpack.c.l.b16 %v7937
    %v8331 = vunpack.c.h.b16 %v7937
    %v8332 = vunpack.c.l.b16 %v7938
    %v8333 = vunpack.c.h.b16 %v7938
    %v8334 = vunpack.c.l.b16 %v7939
    %v8335 = vunpack.c.h.b16 %v7939
    %v8336 = vunpack.c.l.b16 %v7940
    %v8337 = vunpack.c.h.b16 %v7940
    %v8338 = vunpack.c.l.b16 %v7941
    %v8339 = vunpack.c.h.b16 %v7941
    %v8340 = vunpack.c.l.b16 %v7942
    %v8341 = vunpack.c.h.b16 %v7942
    %v8342 = vunpack.c.l.b16 %v7943
    %v8343 = vunpack.c.h.b16 %v7943
    %v8344 = vunpack.c.l.b16 %v7944
    %v8345 = vunpack.c.h.b16 %v7944
    %v8346 = vunpack.c.l.b16 %v7945
    %v8347 = vunpack.c.h.b16 %v7945
    %v8348 = vunpack.c.l.b16 %v7946
    %v8349 = vunpack.c.h.b16 %v7946
    %v8350 = vunpack.c.l.b16 %v7947
    %v8351 = vunpack.c.h.b16 %v7947
    %v8352 = vunpack.c.l.b16 %v7948
    %v8353 = vunpack.c.h.b16 %v7948
    %v8354 = vunpack.c.l.b16 %v7949
    %v8355 = vunpack.c.h.b16 %v7949
    %v8356 = vunpack.c.l.b16 %v7950
    %v8357 = vunpack.c.h.b16 %v7950
    %v8358 = vpack.c.b16 %v8106, %v8102
    %v8359 = vpack.c.b16 %v8107, %v8103
    %v8360 = vpack.c.b16 %v8108, %v8104
    %v8361 = vpack.c.b16 %v8109, %v8105
    %v8362 = vpack.c.b16 %v8114, %v8110
    %v8363 = vpack.c.b16 %v8115, %v8111
    %v8364 = vpack.c.b16 %v8116, %v8112
    %v8365 = vpack.c.b16 %v8117, %v8113
    %v8366 = vpack.c.b16 %v8122, %v8118
    %v8367 = vpack.c.b16 %v8123, %v8119
    %v8368 = vpack.c.b16 %v8124, %v8120
    %v8369 = vpack.c.b16 %v8125, %v8121
    %v8370 = vpack.c.b16 %v8130, %v8126
    %v8371 = vpack.c.b16 %v8131, %v8127
    %v8372 = vpack.c.b16 %v8132, %v8128
    %v8373 = vpack.c.b16 %v8133, %v8129
    %v8374 = vpack.c.b16 %v8138, %v8134
    %v8375 = vpack.c.b16 %v8139, %v8135
    %v8376 = vpack.c.b16 %v8140, %v8136
    %v8377 = vpack.c.b16 %v8141, %v8137
    %v8378 = vpack.c.b16 %v8146, %v8142
    %v8379 = vpack.c.b16 %v8147, %v8143
    %v8380 = vpack.c.b16 %v8148, %v8144
    %v8381 = vpack.c.b16 %v8149, %v8145
    %v8382 = vpack.c.b16 %v8154, %v8150
    %v8383 = vpack.c.b16 %v8155, %v8151
    %v8384 = vpack.c.b16 %v8156, %v8152
    %v8385 = vpack.c.b16 %v8157, %v8153
    %v8386 = vpack.c.b16 %v8162, %v8158
    %v8387 = vpack.c.b16 %v8163, %v8159
    %v8388 = vpack.c.b16 %v8164, %v8160
    %v8389 = vpack.c.b16 %v8165, %v8161
    %v8390 = vpack.c.b16 %v8170, %v8166
    %v8391 = vpack.c.b16 %v8171, %v8167
    %v8392 = vpack.c.b16 %v8172, %v8168
    %v8393 = vpack.c.b16 %v8173, %v8169
    %v8394 = vpack.c.b16 %v8178, %v8174
    %v8395 = vpack.c.b16 %v8179, %v8175
    %v8396 = vpack.c.b16 %v8180, %v8176
    %v8397 = vpack.c.b16 %v8181, %v8177
    %v8398 = vpack.c.b16 %v8186, %v8182
    %v8399 = vpack.c.b16 %v8187, %v8183
    %v8400 = vpack.c.b16 %v8188, %v8184
    %v8401 = vpack.c.b16 %v8189, %v8185
    %v8402 = vpack.c.b16 %v8194, %v8190
    %v8403 = vpack.c.b16 %v8195, %v8191
    %v8404 = vpack.c.b16 %v8196, %v8192
    %v8405 = vpack.c.b16 %v8197, %v8193
    %v8406 = vpack.c.b16 %v8202, %v8198
    %v8407 = vpack.c.b16 %v8203, %v8199
    %v8408 = vpack.c.b16 %v8204, %v8200
    %v8409 = vpack.c.b16 %v8205, %v8201
    %v8410 = vpack.c.b16 %v8210, %v8206
    %v8411 = vpack.c.b16 %v8211, %v8207
    %v8412 = vpack.c.b16 %v8212, %v8208
    %v8413 = vpack.c.b16 %v8213, %v8209
    %v8414 = vpack.c.b16 %v8218, %v8214
    %v8415 = vpack.c.b16 %v8219, %v8215
    %v8416 = vpack.c.b16 %v8220, %v8216
    %v8417 = vpack.c.b16 %v8221, %v8217
    %v8418 = vpack.c.b16 %v8226, %v8222
    %v8419 = vpack.c.b16 %v8227, %v8223
    %v8420 = vpack.c.b16 %v8228, %v8224
    %v8421 = vpack.c.b16 %v8229, %v8225
    %v8422 = vpack.c.b16 %v8234, %v8230
    %v8423 = vpack.c.b16 %v8235, %v8231
    %v8424 = vpack.c.b16 %v8236, %v8232
    %v8425 = vpack.c.b16 %v8237, %v8233
    %v8426 = vpack.c.b16 %v8242, %v8238
    %v8427 = vpack.c.b16 %v8243, %v8239
    %v8428 = vpack.c.b16 %v8244, %v8240
    %v8429 = vpack.c.b16 %v8245, %v8241
    %v8430 = vpack.c.b16 %v8250, %v8246
    %v8431 = vpack.c.b16 %v8251, %v8247
    %v8432 = vpack.c.b16 %v8252, %v8248
    %v8433 = vpack.c.b16 %v8253, %v8249
    %v8434 = vpack.c.b16 %v8258, %v8254
    %v8435 = vpack.c.b16 %v8259, %v8255
    %v8436 = vpack.c.b16 %v8260, %v8256
    %v8437 = vpack.c.b16 %v8261, %v8257
    %v8438 = vpack.c.b16 %v8266, %v8262
    %v8439 = vpack.c.b16 %v8267, %v8263
    %v8440 = vpack.c.b16 %v8268, %v8264
    %v8441 = vpack.c.b16 %v8269, %v8265
    %v8442 = vpack.c.b16 %v8274, %v8270
    %v8443 = vpack.c.b16 %v8275, %v8271
    %v8444 = vpack.c.b16 %v8276, %v8272
    %v8445 = vpack.c.b16 %v8277, %v8273
    %v8446 = vpack.c.b16 %v8282, %v8278
    %v8447 = vpack.c.b16 %v8283, %v8279
    %v8448 = vpack.c.b16 %v8284, %v8280
    %v8449 = vpack.c.b16 %v8285, %v8281
    %v8450 = vpack.c.b16 %v8290, %v8286
    %v8451 = vpack.c.b16 %v8291, %v8287
    %v8452 = vpack.c.b16 %v8292, %v8288
    %v8453 = vpack.c.b16 %v8293, %v8289
    %v8454 = vpack.c.b16 %v8298, %v8294
    %v8455 = vpack.c.b16 %v8299, %v8295
    %v8456 = vpack.c.b16 %v8300, %v8296
    %v8457 = vpack.c.b16 %v8301, %v8297
    %v8458 = vpack.c.b16 %v8306, %v8302
    %v8459 = vpack.c.b16 %v8307, %v8303
    %v8460 = vpack.c.b16 %v8308, %v8304
    %v8461 = vpack.c.b16 %v8309, %v8305
    %v8462 = vpack.c.b16 %v8314, %v8310
    %v8463 = vpack.c.b16 %v8315, %v8311
    %v8464 = vpack.c.b16 %v8316, %v8312
    %v8465 = vpack.c.b16 %v8317, %v8313
    %v8466 = vpack.c.b16 %v8322, %v8318
    %v8467 = vpack.c.b16 %v8323, %v8319
    %v8468 = vpack.c.b16 %v8324, %v8320
    %v8469 = vpack.c.b16 %v8325, %v8321
    %v8470 = vpack.c.b16 %v8330, %v8326
    %v8471 = vpack.c.b16 %v8331, %v8327
    %v8472 = vpack.c.b16 %v8332, %v8328
    %v8473 = vpack.c.b16 %v8333, %v8329
    %v8474 = vpack.c.b16 %v8338, %v8334
    %v8475 = vpack.c.b16 %v8339, %v8335
    %v8476 = vpack.c.b16 %v8340, %v8336
    %v8477 = vpack.c.b16 %v8341, %v8337
    %v8478 = vpack.c.b16 %v8346, %v8342
    %v8479 = vpack.c.b16 %v8347, %v8343
    %v8480 = vpack.c.b16 %v8348, %v8344
    %v8481 = vpack.c.b16 %v8349, %v8345
    %v8482 = vpack.c.b16 %v8354, %v8350
    %v8483 = vpack.c.b16 %v8355, %v8351
    %v8484 = vpack.c.b16 %v8356, %v8352
    %v8485 = vpack.c.b16 %v8357, %v8353
    %8614 = vmatprep.subr.bf16.mxu0 %v8359
    %8615 = vmatpush1.bf16.msra.mxu0 %v8358
    %8616 = vmatprep.subr.bf16.mxu0 %v8363
    %8617 = vmatpush1.bf16.msra.mxu0 %v8362
    %8618 = vmatprep.subr.bf16.mxu0 %v8367
    %8619 = vmatpush1.bf16.msra.mxu0 %v8366
    %8620 = vmatprep.subr.bf16.mxu0 %v8371
    %8621 = vmatpush1.bf16.msra.mxu0 %v8370
    %8622 = vmatprep.subr.bf16.mxu0 %v8375
    %8623 = vmatpush1.bf16.msra.mxu0 %v8374
    %8624 = vmatprep.subr.bf16.mxu0 %v8379
    %8625 = vmatpush1.bf16.msra.mxu0 %v8378
    %8626 = vmatprep.subr.bf16.mxu0 %v8383
    %8627 = vmatpush1.bf16.msra.mxu0 %v8382
    %8628 = vmatprep.subr.bf16.mxu0 %v8387
    %8629 = vmatpush1.bf16.msra.mxu0 %v8386
    %8630 = vmatprep.subr.bf16.mxu0 %v8391
    %8631 = vmatpush1.bf16.msra.mxu0 %v8390
    %8632 = vmatprep.subr.bf16.mxu0 %v8395
    %8633 = vmatpush1.bf16.msra.mxu0 %v8394
    %8634 = vmatprep.subr.bf16.mxu0 %v8399
    %8635 = vmatpush1.bf16.msra.mxu0 %v8398
    %8636 = vmatprep.subr.bf16.mxu0 %v8403
    %8637 = vmatpush1.bf16.msra.mxu0 %v8402
    %8638 = vmatprep.subr.bf16.mxu0 %v8407
    %8639 = vmatpush1.bf16.msra.mxu0 %v8406
    %8640 = vmatprep.subr.bf16.mxu0 %v8411
    %8641 = vmatpush1.bf16.msra.mxu0 %v8410
    %8642 = vmatprep.subr.bf16.mxu0 %v8415
    %8643 = vmatpush1.bf16.msra.mxu0 %v8414
    %8644 = vmatprep.subr.bf16.mxu0 %v8419
    %8645 = vmatpush1.bf16.msra.mxu0 %v8418
    %8646 = vmatprep.mubr.bf16.mxu0 %v7819
    %8647 = vmatmul.mubr.bf16.gmra.mrb[0].mxu0 %v7818
    %v8648 = vpop.f32.mrb[0].mxu0
    %v8649 = vadd.f32 %v7957, %v8648
    %v8650 = vpop.f32.mrb[0].mxu0
    %v8651 = vadd.f32 %v7961, %v8650
    %v8652 = vpop.f32.mrb[0].mxu0
    %v8653 = vpop.f32.mrb[0].mxu0
    %8654 = vdwg.mxu0
    %8655 = vmatprep.subr.bf16.mxu0 %v8423
    %8656 = vmatpush1.bf16.msra.mxu0 %v8422
    %8657 = vmatprep.subr.bf16.mxu0 %v8427
    %8658 = vmatpush1.bf16.msra.mxu0 %v8426
    %8659 = vmatprep.subr.bf16.mxu0 %v8431
    %8660 = vmatpush1.bf16.msra.mxu0 %v8430
    %8661 = vmatprep.subr.bf16.mxu0 %v8435
    %8662 = vmatpush1.bf16.msra.mxu0 %v8434
    %8663 = vmatprep.subr.bf16.mxu0 %v8439
    %8664 = vmatpush1.bf16.msra.mxu0 %v8438
    %8665 = vmatprep.subr.bf16.mxu0 %v8443
    %8666 = vmatpush1.bf16.msra.mxu0 %v8442
    %8667 = vmatprep.subr.bf16.mxu0 %v8447
    %8668 = vmatpush1.bf16.msra.mxu0 %v8446
    %8669 = vmatprep.subr.bf16.mxu0 %v8451
    %8670 = vmatpush1.bf16.msra.mxu0 %v8450
    %8671 = vmatprep.subr.bf16.mxu0 %v8455
    %8672 = vmatpush1.bf16.msra.mxu0 %v8454
    %8673 = vmatprep.subr.bf16.mxu0 %v8459
    %8674 = vmatpush1.bf16.msra.mxu0 %v8458
    %8675 = vmatprep.subr.bf16.mxu0 %v8463
    %8676 = vmatpush1.bf16.msra.mxu0 %v8462
    %8677 = vmatprep.subr.bf16.mxu0 %v8467
    %8678 = vmatpush1.bf16.msra.mxu0 %v8466
    %8679 = vmatprep.subr.bf16.mxu0 %v8471
    %8680 = vmatpush1.bf16.msra.mxu0 %v8470
    %8681 = vmatprep.subr.bf16.mxu0 %v8475
    %8682 = vmatpush1.bf16.msra.mxu0 %v8474
    %8683 = vmatprep.subr.bf16.mxu0 %v8479
    %8684 = vmatpush1.bf16.msra.mxu0 %v8478
    %8685 = vmatprep.subr.bf16.mxu0 %v8483
    %8686 = vmatpush1.bf16.msra.mxu0 %v8482
    %8687 = vmatprep.mubr.bf16.mxu0 %v7821
    %8688 = vmatmul.mubr.bf16.gmra.mrb[0].mxu0 %v7820
    %v8689 = vpop.f32.mrb[0].mxu0
    %v8690 = vadd.f32 %v8649, %v8689
    %v8691 = vpop.f32.mrb[0].mxu0
    %v8692 = vadd.f32 %v8651, %v8691
    %v8693 = vpop.f32.mrb[0].mxu0
    %v8694 = vpop.f32.mrb[0].mxu0
    %8695 = vdwg.mxu0
    %8696 = vmatprep.subr.bf16.mxu0 %v8361
    %8697 = vmatpush1.bf16.msra.mxu0 %v8360
    %8698 = vmatprep.subr.bf16.mxu0 %v8365
    %8699 = vmatpush1.bf16.msra.mxu0 %v8364
    %8700 = vmatprep.subr.bf16.mxu0 %v8369
    %8701 = vmatpush1.bf16.msra.mxu0 %v8368
    %8702 = vmatprep.subr.bf16.mxu0 %v8373
    %8703 = vmatpush1.bf16.msra.mxu0 %v8372
    %8704 = vmatprep.subr.bf16.mxu0 %v8377
    %8705 = vmatpush1.bf16.msra.mxu0 %v8376
    %8706 = vmatprep.subr.bf16.mxu0 %v8381
    %8707 = vmatpush1.bf16.msra.mxu0 %v8380
    %8708 = vmatprep.subr.bf16.mxu0 %v8385
    %8709 = vmatpush1.bf16.msra.mxu0 %v8384
    %8710 = vmatprep.subr.bf16.mxu0 %v8389
    %8711 = vmatpush1.bf16.msra.mxu0 %v8388
    %8712 = vmatprep.subr.bf16.mxu0 %v8393
    %8713 = vmatpush1.bf16.msra.mxu0 %v8392
    %8714 = vmatprep.subr.bf16.mxu0 %v8397
    %8715 = vmatpush1.bf16.msra.mxu0 %v8396
    %8716 = vmatprep.subr.bf16.mxu0 %v8401
    %8717 = vmatpush1.bf16.msra.mxu0 %v8400
    %8718 = vmatprep.subr.bf16.mxu0 %v8405
    %8719 = vmatpush1.bf16.msra.mxu0 %v8404
    %8720 = vmatprep.subr.bf16.mxu0 %v8409
    %8721 = vmatpush1.bf16.msra.mxu0 %v8408
    %8722 = vmatprep.subr.bf16.mxu0 %v8413
    %8723 = vmatpush1.bf16.msra.mxu0 %v8412
    %8724 = vmatprep.subr.bf16.mxu0 %v8417
    %8725 = vmatpush1.bf16.msra.mxu0 %v8416
    %8726 = vmatprep.subr.bf16.mxu0 %v8421
    %8727 = vmatpush1.bf16.msra.mxu0 %v8420
    %8728 = vmatprep.mubr.bf16.mxu0 %v7819
    %8729 = vmatmul.mubr.bf16.gmra.mrb[0].mxu0 %v7818
    %v8730 = vpop.f32.mrb[0].mxu0
    %v8731 = vadd.f32 %v7965, %v8730
    %v8732 = vpop.f32.mrb[0].mxu0
    %v8733 = vadd.f32 %v7969, %v8732
    %v8734 = vpop.f32.mrb[0].mxu0
    %v8735 = vpop.f32.mrb[0].mxu0
    %8736 = vdwg.mxu0
    %8737 = vmatprep.subr.bf16.mxu0 %v8425
    %8738 = vmatpush1.bf16.msra.mxu0 %v8424
    %8739 = vmatprep.subr.bf16.mxu0 %v8429
    %8740 = vmatpush1.bf16.msra.mxu0 %v8428
    %8741 = vmatprep.subr.bf16.mxu0 %v8433
    %8742 = vmatpush1.bf16.msra.mxu0 %v8432
    %8743 = vmatprep.subr.bf16.mxu0 %v8437
    %8744 = vmatpush1.bf16.msra.mxu0 %v8436
    %8745 = vmatprep.subr.bf16.mxu0 %v8441
    %8746 = vmatpush1.bf16.msra.mxu0 %v8440
    %8747 = vmatprep.subr.bf16.mxu0 %v8445
    %8748 = vmatpush1.bf16.msra.mxu0 %v8444
    %8749 = vmatprep.subr.bf16.mxu0 %v8449
    %8750 = vmatpush1.bf16.msra.mxu0 %v8448
    %8751 = vmatprep.subr.bf16.mxu0 %v8453
    %8752 = vmatpush1.bf16.msra.mxu0 %v8452
    %8753 = vmatprep.subr.bf16.mxu0 %v8457
    %8754 = vmatpush1.bf16.msra.mxu0 %v8456
    %8755 = vmatprep.subr.bf16.mxu0 %v8461
    %8756 = vmatpush1.bf16.msra.mxu0 %v8460
    %8757 = vmatprep.subr.bf16.mxu0 %v8465
    %8758 = vmatpush1.bf16.msra.mxu0 %v8464
    %8759 = vmatprep.subr.bf16.mxu0 %v8469
    %8760 = vmatpush1.bf16.msra.mxu0 %v8468
    %8761 = vmatprep.subr.bf16.mxu0 %v8473
    %8762 = vmatpush1.bf16.msra.mxu0 %v8472
    %8763 = vmatprep.subr.bf16.mxu0 %v8477
    %8764 = vmatpush1.bf16.msra.mxu0 %v8476
    %8765 = vmatprep.subr.bf16.mxu0 %v8481
    %8766 = vmatpush1.bf16.msra.mxu0 %v8480
    %8767 = vmatprep.subr.bf16.mxu0 %v8485
    %8768 = vmatpush1.bf16.msra.mxu0 %v8484
    %8769 = vmatprep.mubr.bf16.mxu0 %v7821
    %8770 = vmatmul.mubr.bf16.gmra.mrb[0].mxu0 %v7820
    %v8771 = vpop.f32.mrb[0].mxu0
    %v8772 = vadd.f32 %v8731, %v8771
    %v8773 = vpop.f32.mrb[0].mxu0
    %v8774 = vadd.f32 %v8733, %v8773
    %v8775 = vpop.f32.mrb[0].mxu0
    %v8776 = vpop.f32.mrb[0].mxu0
    %8777 = vdwg.mxu0
    %v8778 = vmul.f32 %v8690, 0.01
    %v8779 = vmul.f32 %v8692, 0.01
    %v8780 = vmul.f32 %v8772, 0.01
    %v8781 = vmul.f32 %v8774, 0.01
    %v8782 = vmax.f32 %v8690, %v8778
    %v8783 = vmax.f32 %v8692, %v8779
    %v8784 = vmax.f32 %v8772, %v8780
    %v8785 = vmax.f32 %v8774, %v8781
    %v8786 = vpack.c.bf16 %v8782, %v8782
    %v8787 = vpack.c.bf16 %v8783, %v8783
    %v8788 = vpack.c.bf16 %v8784, %v8784
    %v8789 = vpack.c.bf16 %v8785, %v8785
    %s8790 = scalar_lea.vmem [#allocation2], 9216
    %v8791 = vld [vmem:[%s8790] sm:$0xff]
    %v8792 = vld [vmem:[%s8790 + $0x8] sm:$0xff]
    %v8793 = vld [vmem:[%s8790 + $0x10] sm:$0xff]
    %v8794 = vld [vmem:[%s8790 + $0x18] sm:$0xff]
    %v8795 = vld [vmem:[%s8790 + $0x20] sm:$0xff]
    %v8796 = vld [vmem:[%s8790 + $0x28] sm:$0xff]
    %v8797 = vld [vmem:[%s8790 + $0x30] sm:$0xff]
    %v8798 = vld [vmem:[%s8790 + $0x38] sm:$0xff]
    %v8799 = vld [vmem:[%s8790 + $0x40] sm:$0xff]
    %v8800 = vld [vmem:[%s8790 + $0x48] sm:$0xff]
    %v8801 = vld [vmem:[%s8790 + $0x50] sm:$0xff]
    %v8802 = vld [vmem:[%s8790 + $0x58] sm:$0xff]
    %v8803 = vld [vmem:[%s8790 + $0x60] sm:$0xff]
    %v8804 = vld [vmem:[%s8790 + $0x68] sm:$0xff]
    %v8805 = vld [vmem:[%s8790 + $0x70] sm:$0xff]
    %v8806 = vld [vmem:[%s8790 + $0x78] sm:$0xff]
    %v8807 = vld [vmem:[%s8790 + $0x80] sm:$0xff]
    %v8808 = vld [vmem:[%s8790 + $0x88] sm:$0xff]
    %v8809 = vld [vmem:[%s8790 + $0x90] sm:$0xff]
    %v8810 = vld [vmem:[%s8790 + $0x98] sm:$0xff]
    %v8811 = vld [vmem:[%s8790 + $0xa0] sm:$0xff]
    %v8812 = vld [vmem:[%s8790 + $0xa8] sm:$0xff]
    %v8813 = vld [vmem:[%s8790 + $0xb0] sm:$0xff]
    %v8814 = vld [vmem:[%s8790 + $0xb8] sm:$0xff]
    %v8815 = vld [vmem:[%s8790 + $0xc0] sm:$0xff]
    %v8816 = vld [vmem:[%s8790 + $0xc8] sm:$0xff]
    %v8817 = vld [vmem:[%s8790 + $0xd0] sm:$0xff]
    %v8818 = vld [vmem:[%s8790 + $0xd8] sm:$0xff]
    %v8819 = vld [vmem:[%s8790 + $0xe0] sm:$0xff]
    %v8820 = vld [vmem:[%s8790 + $0xe8] sm:$0xff]
    %v8821 = vld [vmem:[%s8790 + $0xf0] sm:$0xff]
    %v8822 = vld [vmem:[%s8790 + $0xf8] sm:$0xff]
    %v8823 = vld [vmem:[%s8790 + $0x100] sm:$0xff]
    %v8824 = vld [vmem:[%s8790 + $0x108] sm:$0xff]
    %v8825 = vld [vmem:[%s8790 + $0x110] sm:$0xff]
    %v8826 = vld [vmem:[%s8790 + $0x118] sm:$0xff]
    %v8827 = vld [vmem:[%s8790 + $0x120] sm:$0xff]
    %v8828 = vld [vmem:[%s8790 + $0x128] sm:$0xff]
    %v8829 = vld [vmem:[%s8790 + $0x130] sm:$0xff]
    %v8830 = vld [vmem:[%s8790 + $0x138] sm:$0xff]
    %v8831 = vld [vmem:[%s8790 + $0x140] sm:$0xff]
    %v8832 = vld [vmem:[%s8790 + $0x148] sm:$0xff]
    %v8833 = vld [vmem:[%s8790 + $0x150] sm:$0xff]
    %v8834 = vld [vmem:[%s8790 + $0x158] sm:$0xff]
    %v8835 = vld [vmem:[%s8790 + $0x160] sm:$0xff]
    %v8836 = vld [vmem:[%s8790 + $0x168] sm:$0xff]
    %v8837 = vld [vmem:[%s8790 + $0x170] sm:$0xff]
    %v8838 = vld [vmem:[%s8790 + $0x178] sm:$0xff]
    %v8839 = vld [vmem:[%s8790 + $0x180] sm:$0xff]
    %v8840 = vld [vmem:[%s8790 + $0x188] sm:$0xff]
    %v8841 = vld [vmem:[%s8790 + $0x190] sm:$0xff]
    %v8842 = vld [vmem:[%s8790 + $0x198] sm:$0xff]
    %v8843 = vld [vmem:[%s8790 + $0x1a0] sm:$0xff]
    %v8844 = vld [vmem:[%s8790 + $0x1a8] sm:$0xff]
    %v8845 = vld [vmem:[%s8790 + $0x1b0] sm:$0xff]
    %v8846 = vld [vmem:[%s8790 + $0x1b8] sm:$0xff]
    %v8847 = vld [vmem:[%s8790 + $0x1c0] sm:$0xff]
    %v8848 = vld [vmem:[%s8790 + $0x1c8] sm:$0xff]
    %v8849 = vld [vmem:[%s8790 + $0x1d0] sm:$0xff]
    %v8850 = vld [vmem:[%s8790 + $0x1d8] sm:$0xff]
    %v8851 = vld [vmem:[%s8790 + $0x1e0] sm:$0xff]
    %v8852 = vld [vmem:[%s8790 + $0x1e8] sm:$0xff]
    %v8853 = vld [vmem:[%s8790 + $0x1f0] sm:$0xff]
    %v8854 = vld [vmem:[%s8790 + $0x1f8] sm:$0xff]
    %v8855 = vld [vmem:[%s8790 + $0x200] sm:$0xff]
    %v8856 = vld [vmem:[%s8790 + $0x208] sm:$0xff]
    %v8857 = vld [vmem:[%s8790 + $0x210] sm:$0xff]
    %v8858 = vld [vmem:[%s8790 + $0x218] sm:$0xff]
    %v8859 = vld [vmem:[%s8790 + $0x220] sm:$0xff]
    %v8860 = vld [vmem:[%s8790 + $0x228] sm:$0xff]
    %v8861 = vld [vmem:[%s8790 + $0x230] sm:$0xff]
    %v8862 = vld [vmem:[%s8790 + $0x238] sm:$0xff]
    %v8863 = vld [vmem:[%s8790 + $0x240] sm:$0xff]
    %v8864 = vld [vmem:[%s8790 + $0x248] sm:$0xff]
    %v8865 = vld [vmem:[%s8790 + $0x250] sm:$0xff]
    %v8866 = vld [vmem:[%s8790 + $0x258] sm:$0xff]
    %v8867 = vld [vmem:[%s8790 + $0x260] sm:$0xff]
    %v8868 = vld [vmem:[%s8790 + $0x268] sm:$0xff]
    %v8869 = vld [vmem:[%s8790 + $0x270] sm:$0xff]
    %v8870 = vld [vmem:[%s8790 + $0x278] sm:$0xff]
    %v8871 = vld [vmem:[%s8790 + $0x280] sm:$0xff]
    %v8872 = vld [vmem:[%s8790 + $0x288] sm:$0xff]
    %v8873 = vld [vmem:[%s8790 + $0x290] sm:$0xff]
    %v8874 = vld [vmem:[%s8790 + $0x298] sm:$0xff]
    %v8875 = vld [vmem:[%s8790 + $0x2a0] sm:$0xff]
    %v8876 = vld [vmem:[%s8790 + $0x2a8] sm:$0xff]
    %v8877 = vld [vmem:[%s8790 + $0x2b0] sm:$0xff]
    %v8878 = vld [vmem:[%s8790 + $0x2b8] sm:$0xff]
    %v8879 = vld [vmem:[%s8790 + $0x2c0] sm:$0xff]
    %v8880 = vld [vmem:[%s8790 + $0x2c8] sm:$0xff]
    %v8881 = vld [vmem:[%s8790 + $0x2d0] sm:$0xff]
    %v8882 = vld [vmem:[%s8790 + $0x2d8] sm:$0xff]
    %v8883 = vld [vmem:[%s8790 + $0x2e0] sm:$0xff]
    %v8884 = vld [vmem:[%s8790 + $0x2e8] sm:$0xff]
    %v8885 = vld [vmem:[%s8790 + $0x2f0] sm:$0xff]
    %v8886 = vld [vmem:[%s8790 + $0x2f8] sm:$0xff]
    %v8887 = vld [vmem:[%s8790 + $0x300] sm:$0xff]
    %v8888 = vld [vmem:[%s8790 + $0x308] sm:$0xff]
    %v8889 = vld [vmem:[%s8790 + $0x310] sm:$0xff]
    %v8890 = vld [vmem:[%s8790 + $0x318] sm:$0xff]
    %v8891 = vld [vmem:[%s8790 + $0x320] sm:$0xff]
    %v8892 = vld [vmem:[%s8790 + $0x328] sm:$0xff]
    %v8893 = vld [vmem:[%s8790 + $0x330] sm:$0xff]
    %v8894 = vld [vmem:[%s8790 + $0x338] sm:$0xff]
    %v8895 = vld [vmem:[%s8790 + $0x340] sm:$0xff]
    %v8896 = vld [vmem:[%s8790 + $0x348] sm:$0xff]
    %v8897 = vld [vmem:[%s8790 + $0x350] sm:$0xff]
    %v8898 = vld [vmem:[%s8790 + $0x358] sm:$0xff]
    %v8899 = vld [vmem:[%s8790 + $0x360] sm:$0xff]
    %v8900 = vld [vmem:[%s8790 + $0x368] sm:$0xff]
    %v8901 = vld [vmem:[%s8790 + $0x370] sm:$0xff]
    %v8902 = vld [vmem:[%s8790 + $0x378] sm:$0xff]
    %v8903 = vld [vmem:[%s8790 + $0x380] sm:$0xff]
    %v8904 = vld [vmem:[%s8790 + $0x388] sm:$0xff]
    %v8905 = vld [vmem:[%s8790 + $0x390] sm:$0xff]
    %v8906 = vld [vmem:[%s8790 + $0x398] sm:$0xff]
    %v8907 = vld [vmem:[%s8790 + $0x3a0] sm:$0xff]
    %v8908 = vld [vmem:[%s8790 + $0x3a8] sm:$0xff]
    %v8909 = vld [vmem:[%s8790 + $0x3b0] sm:$0xff]
    %v8910 = vld [vmem:[%s8790 + $0x3b8] sm:$0xff]
    %v8911 = vld [vmem:[%s8790 + $0x3c0] sm:$0xff]
    %v8912 = vld [vmem:[%s8790 + $0x3c8] sm:$0xff]
    %v8913 = vld [vmem:[%s8790 + $0x3d0] sm:$0xff]
    %v8914 = vld [vmem:[%s8790 + $0x3d8] sm:$0xff]
    %v8915 = vld [vmem:[%s8790 + $0x3e0] sm:$0xff]
    %v8916 = vld [vmem:[%s8790 + $0x3e8] sm:$0xff]
    %v8917 = vld [vmem:[%s8790 + $0x3f0] sm:$0xff]
    %v8918 = vld [vmem:[%s8790 + $0x3f8] sm:$0xff]
    %s8919 = scalar_lea.vmem [#allocation4], 36
    %v8920 = vld [vmem:[%s8919] sm:$0xf]
    %v8922 = vlaneseq
    %v8923 = vshrl.u32 %v8922, 7
    %v8924 = vsub.s32 0, %v8923
    %v8925 = vrot.slane %v8920, %v8924
    %v8926 = vlaneseq
    %v8927 = vshrl.u32 %v8926, 7
    %v8928 = vsub.s32 1, %v8927
    %v8929 = vrot.slane %v8920, %v8928
    %v8930 = vlaneseq
    %v8931 = vshrl.u32 %v8930, 7
    %v8932 = vsub.s32 2, %v8931
    %v8933 = vrot.slane %v8920, %v8932
    %v8934 = vlaneseq
    %v8935 = vshrl.u32 %v8934, 7
    %v8936 = vsub.s32 3, %v8935
    %v8937 = vrot.slane %v8920, %v8936
    %v9070 = vunpack.c.l.b16 %v8791
    %v9071 = vunpack.c.h.b16 %v8791
    %v9072 = vunpack.c.l.b16 %v8792
    %v9073 = vunpack.c.h.b16 %v8792
    %v9074 = vunpack.c.l.b16 %v8793
    %v9075 = vunpack.c.h.b16 %v8793
    %v9076 = vunpack.c.l.b16 %v8794
    %v9077 = vunpack.c.h.b16 %v8794
    %v9078 = vunpack.c.l.b16 %v8795
    %v9079 = vunpack.c.h.b16 %v8795
    %v9080 = vunpack.c.l.b16 %v8796
    %v9081 = vunpack.c.h.b16 %v8796
    %v9082 = vunpack.c.l.b16 %v8797
    %v9083 = vunpack.c.h.b16 %v8797
    %v9084 = vunpack.c.l.b16 %v8798
    %v9085 = vunpack.c.h.b16 %v8798
    %v9086 = vunpack.c.l.b16 %v8799
    %v9087 = vunpack.c.h.b16 %v8799
    %v9088 = vunpack.c.l.b16 %v8800
    %v9089 = vunpack.c.h.b16 %v8800
    %v9090 = vunpack.c.l.b16 %v8801
    %v9091 = vunpack.c.h.b16 %v8801
    %v9092 = vunpack.c.l.b16 %v8802
    %v9093 = vunpack.c.h.b16 %v8802
    %v9094 = vunpack.c.l.b16 %v8803
    %v9095 = vunpack.c.h.b16 %v8803
    %v9096 = vunpack.c.l.b16 %v8804
    %v9097 = vunpack.c.h.b16 %v8804
    %v9098 = vunpack.c.l.b16 %v8805
    %v9099 = vunpack.c.h.b16 %v8805
    %v9100 = vunpack.c.l.b16 %v8806
    %v9101 = vunpack.c.h.b16 %v8806
    %v9102 = vunpack.c.l.b16 %v8807
    %v9103 = vunpack.c.h.b16 %v8807
    %v9104 = vunpack.c.l.b16 %v8808
    %v9105 = vunpack.c.h.b16 %v8808
    %v9106 = vunpack.c.l.b16 %v8809
    %v9107 = vunpack.c.h.b16 %v8809
    %v9108 = vunpack.c.l.b16 %v8810
    %v9109 = vunpack.c.h.b16 %v8810
    %v9110 = vunpack.c.l.b16 %v8811
    %v9111 = vunpack.c.h.b16 %v8811
    %v9112 = vunpack.c.l.b16 %v8812
    %v9113 = vunpack.c.h.b16 %v8812
    %v9114 = vunpack.c.l.b16 %v8813
    %v9115 = vunpack.c.h.b16 %v8813
    %v9116 = vunpack.c.l.b16 %v8814
    %v9117 = vunpack.c.h.b16 %v8814
    %v9118 = vunpack.c.l.b16 %v8815
    %v9119 = vunpack.c.h.b16 %v8815
    %v9120 = vunpack.c.l.b16 %v8816
    %v9121 = vunpack.c.h.b16 %v8816
    %v9122 = vunpack.c.l.b16 %v8817
    %v9123 = vunpack.c.h.b16 %v8817
    %v9124 = vunpack.c.l.b16 %v8818
    %v9125 = vunpack.c.h.b16 %v8818
    %v9126 = vunpack.c.l.b16 %v8819
    %v9127 = vunpack.c.h.b16 %v8819
    %v9128 = vunpack.c.l.b16 %v8820
    %v9129 = vunpack.c.h.b16 %v8820
    %v9130 = vunpack.c.l.b16 %v8821
    %v9131 = vunpack.c.h.b16 %v8821
    %v9132 = vunpack.c.l.b16 %v8822
    %v9133 = vunpack.c.h.b16 %v8822
    %v9134 = vunpack.c.l.b16 %v8823
    %v9135 = vunpack.c.h.b16 %v8823
    %v9136 = vunpack.c.l.b16 %v8824
    %v9137 = vunpack.c.h.b16 %v8824
    %v9138 = vunpack.c.l.b16 %v8825
    %v9139 = vunpack.c.h.b16 %v8825
    %v9140 = vunpack.c.l.b16 %v8826
    %v9141 = vunpack.c.h.b16 %v8826
    %v9142 = vunpack.c.l.b16 %v8827
    %v9143 = vunpack.c.h.b16 %v8827
    %v9144 = vunpack.c.l.b16 %v8828
    %v9145 = vunpack.c.h.b16 %v8828
    %v9146 = vunpack.c.l.b16 %v8829
    %v9147 = vunpack.c.h.b16 %v8829
    %v9148 = vunpack.c.l.b16 %v8830
    %v9149 = vunpack.c.h.b16 %v8830
    %v9150 = vunpack.c.l.b16 %v8831
    %v9151 = vunpack.c.h.b16 %v8831
    %v9152 = vunpack.c.l.b16 %v8832
    %v9153 = vunpack.c.h.b16 %v8832
    %v9154 = vunpack.c.l.b16 %v8833
    %v9155 = vunpack.c.h.b16 %v8833
    %v9156 = vunpack.c.l.b16 %v8834
    %v9157 = vunpack.c.h.b16 %v8834
    %v9158 = vunpack.c.l.b16 %v8835
    %v9159 = vunpack.c.h.b16 %v8835
    %v9160 = vunpack.c.l.b16 %v8836
    %v9161 = vunpack.c.h.b16 %v8836
    %v9162 = vunpack.c.l.b16 %v8837
    %v9163 = vunpack.c.h.b16 %v8837
    %v9164 = vunpack.c.l.b16 %v8838
    %v9165 = vunpack.c.h.b16 %v8838
    %v9166 = vunpack.c.l.b16 %v8839
    %v9167 = vunpack.c.h.b16 %v8839
    %v9168 = vunpack.c.l.b16 %v8840
    %v9169 = vunpack.c.h.b16 %v8840
    %v9170 = vunpack.c.l.b16 %v8841
    %v9171 = vunpack.c.h.b16 %v8841
    %v9172 = vunpack.c.l.b16 %v8842
    %v9173 = vunpack.c.h.b16 %v8842
    %v9174 = vunpack.c.l.b16 %v8843
    %v9175 = vunpack.c.h.b16 %v8843
    %v9176 = vunpack.c.l.b16 %v8844
    %v9177 = vunpack.c.h.b16 %v8844
    %v9178 = vunpack.c.l.b16 %v8845
    %v9179 = vunpack.c.h.b16 %v8845
    %v9180 = vunpack.c.l.b16 %v8846
    %v9181 = vunpack.c.h.b16 %v8846
    %v9182 = vunpack.c.l.b16 %v8847
    %v9183 = vunpack.c.h.b16 %v8847
    %v9184 = vunpack.c.l.b16 %v8848
    %v9185 = vunpack.c.h.b16 %v8848
    %v9186 = vunpack.c.l.b16 %v8849
    %v9187 = vunpack.c.h.b16 %v8849
    %v9188 = vunpack.c.l.b16 %v8850
    %v9189 = vunpack.c.h.b16 %v8850
    %v9190 = vunpack.c.l.b16 %v8851
    %v9191 = vunpack.c.h.b16 %v8851
    %v9192 = vunpack.c.l.b16 %v8852
    %v9193 = vunpack.c.h.b16 %v8852
    %v9194 = vunpack.c.l.b16 %v8853
    %v9195 = vunpack.c.h.b16 %v8853
    %v9196 = vunpack.c.l.b16 %v8854
    %v9197 = vunpack.c.h.b16 %v8854
    %v9198 = vunpack.c.l.b16 %v8855
    %v9199 = vunpack.c.h.b16 %v8855
    %v9200 = vunpack.c.l.b16 %v8856
    %v9201 = vunpack.c.h.b16 %v8856
    %v9202 = vunpack.c.l.b16 %v8857
    %v9203 = vunpack.c.h.b16 %v8857
    %v9204 = vunpack.c.l.b16 %v8858
    %v9205 = vunpack.c.h.b16 %v8858
    %v9206 = vunpack.c.l.b16 %v8859
    %v9207 = vunpack.c.h.b16 %v8859
    %v9208 = vunpack.c.l.b16 %v8860
    %v9209 = vunpack.c.h.b16 %v8860
    %v9210 = vunpack.c.l.b16 %v8861
    %v9211 = vunpack.c.h.b16 %v8861
    %v9212 = vunpack.c.l.b16 %v8862
    %v9213 = vunpack.c.h.b16 %v8862
    %v9214 = vunpack.c.l.b16 %v8863
    %v9215 = vunpack.c.h.b16 %v8863
    %v9216 = vunpack.c.l.b16 %v8864
    %v9217 = vunpack.c.h.b16 %v8864
    %v9218 = vunpack.c.l.b16 %v8865
    %v9219 = vunpack.c.h.b16 %v8865
    %v9220 = vunpack.c.l.b16 %v8866
    %v9221 = vunpack.c.h.b16 %v8866
    %v9222 = vunpack.c.l.b16 %v8867
    %v9223 = vunpack.c.h.b16 %v8867
    %v9224 = vunpack.c.l.b16 %v8868
    %v9225 = vunpack.c.h.b16 %v8868
    %v9226 = vunpack.c.l.b16 %v8869
    %v9227 = vunpack.c.h.b16 %v8869
    %v9228 = vunpack.c.l.b16 %v8870
    %v9229 = vunpack.c.h.b16 %v8870
    %v9230 = vunpack.c.l.b16 %v8871
    %v9231 = vunpack.c.h.b16 %v8871
    %v9232 = vunpack.c.l.b16 %v8872
    %v9233 = vunpack.c.h.b16 %v8872
    %v9234 = vunpack.c.l.b16 %v8873
    %v9235 = vunpack.c.h.b16 %v8873
    %v9236 = vunpack.c.l.b16 %v8874
    %v9237 = vunpack.c.h.b16 %v8874
    %v9238 = vunpack.c.l.b16 %v8875
    %v9239 = vunpack.c.h.b16 %v8875
    %v9240 = vunpack.c.l.b16 %v8876
    %v9241 = vunpack.c.h.b16 %v8876
    %v9242 = vunpack.c.l.b16 %v8877
    %v9243 = vunpack.c.h.b16 %v8877
    %v9244 = vunpack.c.l.b16 %v8878
    %v9245 = vunpack.c.h.b16 %v8878
    %v9246 = vunpack.c.l.b16 %v8879
    %v9247 = vunpack.c.h.b16 %v8879
    %v9248 = vunpack.c.l.b16 %v8880
    %v9249 = vunpack.c.h.b16 %v8880
    %v9250 = vunpack.c.l.b16 %v8881
    %v9251 = vunpack.c.h.b16 %v8881
    %v9252 = vunpack.c.l.b16 %v8882
    %v9253 = vunpack.c.h.b16 %v8882
    %v9254 = vunpack.c.l.b16 %v8883
    %v9255 = vunpack.c.h.b16 %v8883
    %v9256 = vunpack.c.l.b16 %v8884
    %v9257 = vunpack.c.h.b16 %v8884
    %v9258 = vunpack.c.l.b16 %v8885
    %v9259 = vunpack.c.h.b16 %v8885
    %v9260 = vunpack.c.l.b16 %v8886
    %v9261 = vunpack.c.h.b16 %v8886
    %v9262 = vunpack.c.l.b16 %v8887
    %v9263 = vunpack.c.h.b16 %v8887
    %v9264 = vunpack.c.l.b16 %v8888
    %v9265 = vunpack.c.h.b16 %v8888
    %v9266 = vunpack.c.l.b16 %v8889
    %v9267 = vunpack.c.h.b16 %v8889
    %v9268 = vunpack.c.l.b16 %v8890
    %v9269 = vunpack.c.h.b16 %v8890
    %v9270 = vunpack.c.l.b16 %v8891
    %v9271 = vunpack.c.h.b16 %v8891
    %v9272 = vunpack.c.l.b16 %v8892
    %v9273 = vunpack.c.h.b16 %v8892
    %v9274 = vunpack.c.l.b16 %v8893
    %v9275 = vunpack.c.h.b16 %v8893
    %v9276 = vunpack.c.l.b16 %v8894
    %v9277 = vunpack.c.h.b16 %v8894
    %v9278 = vunpack.c.l.b16 %v8895
    %v9279 = vunpack.c.h.b16 %v8895
    %v9280 = vunpack.c.l.b16 %v8896
    %v9281 = vunpack.c.h.b16 %v8896
    %v9282 = vunpack.c.l.b16 %v8897
    %v9283 = vunpack.c.h.b16 %v8897
    %v9284 = vunpack.c.l.b16 %v8898
    %v9285 = vunpack.c.h.b16 %v8898
    %v9286 = vunpack.c.l.b16 %v8899
    %v9287 = vunpack.c.h.b16 %v8899
    %v9288 = vunpack.c.l.b16 %v8900
    %v9289 = vunpack.c.h.b16 %v8900
    %v9290 = vunpack.c.l.b16 %v8901
    %v9291 = vunpack.c.h.b16 %v8901
    %v9292 = vunpack.c.l.b16 %v8902
    %v9293 = vunpack.c.h.b16 %v8902
    %v9294 = vunpack.c.l.b16 %v8903
    %v9295 = vunpack.c.h.b16 %v8903
    %v9296 = vunpack.c.l.b16 %v8904
    %v9297 = vunpack.c.h.b16 %v8904
    %v9298 = vunpack.c.l.b16 %v8905
    %v9299 = vunpack.c.h.b16 %v8905
    %v9300 = vunpack.c.l.b16 %v8906
    %v9301 = vunpack.c.h.b16 %v8906
    %v9302 = vunpack.c.l.b16 %v8907
    %v9303 = vunpack.c.h.b16 %v8907
    %v9304 = vunpack.c.l.b16 %v8908
    %v9305 = vunpack.c.h.b16 %v8908
    %v9306 = vunpack.c.l.b16 %v8909
    %v9307 = vunpack.c.h.b16 %v8909
    %v9308 = vunpack.c.l.b16 %v8910
    %v9309 = vunpack.c.h.b16 %v8910
    %v9310 = vunpack.c.l.b16 %v8911
    %v9311 = vunpack.c.h.b16 %v8911
    %v9312 = vunpack.c.l.b16 %v8912
    %v9313 = vunpack.c.h.b16 %v8912
    %v9314 = vunpack.c.l.b16 %v8913
    %v9315 = vunpack.c.h.b16 %v8913
    %v9316 = vunpack.c.l.b16 %v8914
    %v9317 = vunpack.c.h.b16 %v8914
    %v9318 = vunpack.c.l.b16 %v8915
    %v9319 = vunpack.c.h.b16 %v8915
    %v9320 = vunpack.c.l.b16 %v8916
    %v9321 = vunpack.c.h.b16 %v8916
    %v9322 = vunpack.c.l.b16 %v8917
    %v9323 = vunpack.c.h.b16 %v8917
    %v9324 = vunpack.c.l.b16 %v8918
    %v9325 = vunpack.c.h.b16 %v8918
    %v9326 = vpack.c.b16 %v9074, %v9070
    %v9327 = vpack.c.b16 %v9075, %v9071
    %v9328 = vpack.c.b16 %v9076, %v9072
    %v9329 = vpack.c.b16 %v9077, %v9073
    %v9330 = vpack.c.b16 %v9082, %v9078
    %v9331 = vpack.c.b16 %v9083, %v9079
    %v9332 = vpack.c.b16 %v9084, %v9080
    %v9333 = vpack.c.b16 %v9085, %v9081
    %v9334 = vpack.c.b16 %v9090, %v9086
    %v9335 = vpack.c.b16 %v9091, %v9087
    %v9336 = vpack.c.b16 %v9092, %v9088
    %v9337 = vpack.c.b16 %v9093, %v9089
    %v9338 = vpack.c.b16 %v9098, %v9094
    %v9339 = vpack.c.b16 %v9099, %v9095
    %v9340 = vpack.c.b16 %v9100, %v9096
    %v9341 = vpack.c.b16 %v9101, %v9097
    %v9342 = vpack.c.b16 %v9106, %v9102
    %v9343 = vpack.c.b16 %v9107, %v9103
    %v9344 = vpack.c.b16 %v9108, %v9104
    %v9345 = vpack.c.b16 %v9109, %v9105
    %v9346 = vpack.c.b16 %v9114, %v9110
    %v9347 = vpack.c.b16 %v9115, %v9111
    %v9348 = vpack.c.b16 %v9116, %v9112
    %v9349 = vpack.c.b16 %v9117, %v9113
    %v9350 = vpack.c.b16 %v9122, %v9118
    %v9351 = vpack.c.b16 %v9123, %v9119
    %v9352 = vpack.c.b16 %v9124, %v9120
    %v9353 = vpack.c.b16 %v9125, %v9121
    %v9354 = vpack.c.b16 %v9130, %v9126
    %v9355 = vpack.c.b16 %v9131, %v9127
    %v9356 = vpack.c.b16 %v9132, %v9128
    %v9357 = vpack.c.b16 %v9133, %v9129
    %v9358 = vpack.c.b16 %v9138, %v9134
    %v9359 = vpack.c.b16 %v9139, %v9135
    %v9360 = vpack.c.b16 %v9140, %v9136
    %v9361 = vpack.c.b16 %v9141, %v9137
    %v9362 = vpack.c.b16 %v9146, %v9142
    %v9363 = vpack.c.b16 %v9147, %v9143
    %v9364 = vpack.c.b16 %v9148, %v9144
    %v9365 = vpack.c.b16 %v9149, %v9145
    %v9366 = vpack.c.b16 %v9154, %v9150
    %v9367 = vpack.c.b16 %v9155, %v9151
    %v9368 = vpack.c.b16 %v9156, %v9152
    %v9369 = vpack.c.b16 %v9157, %v9153
    %v9370 = vpack.c.b16 %v9162, %v9158
    %v9371 = vpack.c.b16 %v9163, %v9159
    %v9372 = vpack.c.b16 %v9164, %v9160
    %v9373 = vpack.c.b16 %v9165, %v9161
    %v9374 = vpack.c.b16 %v9170, %v9166
    %v9375 = vpack.c.b16 %v9171, %v9167
    %v9376 = vpack.c.b16 %v9172, %v9168
    %v9377 = vpack.c.b16 %v9173, %v9169
    %v9378 = vpack.c.b16 %v9178, %v9174
    %v9379 = vpack.c.b16 %v9179, %v9175
    %v9380 = vpack.c.b16 %v9180, %v9176
    %v9381 = vpack.c.b16 %v9181, %v9177
    %v9382 = vpack.c.b16 %v9186, %v9182
    %v9383 = vpack.c.b16 %v9187, %v9183
    %v9384 = vpack.c.b16 %v9188, %v9184
    %v9385 = vpack.c.b16 %v9189, %v9185
    %v9386 = vpack.c.b16 %v9194, %v9190
    %v9387 = vpack.c.b16 %v9195, %v9191
    %v9388 = vpack.c.b16 %v9196, %v9192
    %v9389 = vpack.c.b16 %v9197, %v9193
    %v9390 = vpack.c.b16 %v9202, %v9198
    %v9391 = vpack.c.b16 %v9203, %v9199
    %v9392 = vpack.c.b16 %v9204, %v9200
    %v9393 = vpack.c.b16 %v9205, %v9201
    %v9394 = vpack.c.b16 %v9210, %v9206
    %v9395 = vpack.c.b16 %v9211, %v9207
    %v9396 = vpack.c.b16 %v9212, %v9208
    %v9397 = vpack.c.b16 %v9213, %v9209
    %v9398 = vpack.c.b16 %v9218, %v9214
    %v9399 = vpack.c.b16 %v9219, %v9215
    %v9400 = vpack.c.b16 %v9220, %v9216
    %v9401 = vpack.c.b16 %v9221, %v9217
    %v9402 = vpack.c.b16 %v9226, %v9222
    %v9403 = vpack.c.b16 %v9227, %v9223
    %v9404 = vpack.c.b16 %v9228, %v9224
    %v9405 = vpack.c.b16 %v9229, %v9225
    %v9406 = vpack.c.b16 %v9234, %v9230
    %v9407 = vpack.c.b16 %v9235, %v9231
    %v9408 = vpack.c.b16 %v9236, %v9232
    %v9409 = vpack.c.b16 %v9237, %v9233
    %v9410 = vpack.c.b16 %v9242, %v9238
    %v9411 = vpack.c.b16 %v9243, %v9239
    %v9412 = vpack.c.b16 %v9244, %v9240
    %v9413 = vpack.c.b16 %v9245, %v9241
    %v9414 = vpack.c.b16 %v9250, %v9246
    %v9415 = vpack.c.b16 %v9251, %v9247
    %v9416 = vpack.c.b16 %v9252, %v9248
    %v9417 = vpack.c.b16 %v9253, %v9249
    %v9418 = vpack.c.b16 %v9258, %v9254
    %v9419 = vpack.c.b16 %v9259, %v9255
    %v9420 = vpack.c.b16 %v9260, %v9256
    %v9421 = vpack.c.b16 %v9261, %v9257
    %v9422 = vpack.c.b16 %v9266, %v9262
    %v9423 = vpack.c.b16 %v9267, %v9263
    %v9424 = vpack.c.b16 %v9268, %v9264
    %v9425 = vpack.c.b16 %v9269, %v9265
    %v9426 = vpack.c.b16 %v9274, %v9270
    %v9427 = vpack.c.b16 %v9275, %v9271
    %v9428 = vpack.c.b16 %v9276, %v9272
    %v9429 = vpack.c.b16 %v9277, %v9273
    %v9430 = vpack.c.b16 %v9282, %v9278
    %v9431 = vpack.c.b16 %v9283, %v9279
    %v9432 = vpack.c.b16 %v9284, %v9280
    %v9433 = vpack.c.b16 %v9285, %v9281
    %v9434 = vpack.c.b16 %v9290, %v9286
    %v9435 = vpack.c.b16 %v9291, %v9287
    %v9436 = vpack.c.b16 %v9292, %v9288
    %v9437 = vpack.c.b16 %v9293, %v9289
    %v9438 = vpack.c.b16 %v9298, %v9294
    %v9439 = vpack.c.b16 %v9299, %v9295
    %v9440 = vpack.c.b16 %v9300, %v9296
    %v9441 = vpack.c.b16 %v9301, %v9297
    %v9442 = vpack.c.b16 %v9306, %v9302
    %v9443 = vpack.c.b16 %v9307, %v9303
    %v9444 = vpack.c.b16 %v9308, %v9304
    %v9445 = vpack.c.b16 %v9309, %v9305
    %v9446 = vpack.c.b16 %v9314, %v9310
    %v9447 = vpack.c.b16 %v9315, %v9311
    %v9448 = vpack.c.b16 %v9316, %v9312
    %v9449 = vpack.c.b16 %v9317, %v9313
    %v9450 = vpack.c.b16 %v9322, %v9318
    %v9451 = vpack.c.b16 %v9323, %v9319
    %v9452 = vpack.c.b16 %v9324, %v9320
    %v9453 = vpack.c.b16 %v9325, %v9321
    %9582 = vmatprep.subr.bf16.mxu0 %v9327
    %9583 = vmatpush1.bf16.msra.mxu0 %v9326
    %9584 = vmatprep.subr.bf16.mxu0 %v9331
    %9585 = vmatpush1.bf16.msra.mxu0 %v9330
    %9586 = vmatprep.subr.bf16.mxu0 %v9335
    %9587 = vmatpush1.bf16.msra.mxu0 %v9334
    %9588 = vmatprep.subr.bf16.mxu0 %v9339
    %9589 = vmatpush1.bf16.msra.mxu0 %v9338
    %9590 = vmatprep.subr.bf16.mxu0 %v9343
    %9591 = vmatpush1.bf16.msra.mxu0 %v9342
    %9592 = vmatprep.subr.bf16.mxu0 %v9347
    %9593 = vmatpush1.bf16.msra.mxu0 %v9346
    %9594 = vmatprep.subr.bf16.mxu0 %v9351
    %9595 = vmatpush1.bf16.msra.mxu0 %v9350
    %9596 = vmatprep.subr.bf16.mxu0 %v9355
    %9597 = vmatpush1.bf16.msra.mxu0 %v9354
    %9598 = vmatprep.subr.bf16.mxu0 %v9359
    %9599 = vmatpush1.bf16.msra.mxu0 %v9358
    %9600 = vmatprep.subr.bf16.mxu0 %v9363
    %9601 = vmatpush1.bf16.msra.mxu0 %v9362
    %9602 = vmatprep.subr.bf16.mxu0 %v9367
    %9603 = vmatpush1.bf16.msra.mxu0 %v9366
    %9604 = vmatprep.subr.bf16.mxu0 %v9371
    %9605 = vmatpush1.bf16.msra.mxu0 %v9370
    %9606 = vmatprep.subr.bf16.mxu0 %v9375
    %9607 = vmatpush1.bf16.msra.mxu0 %v9374
    %9608 = vmatprep.subr.bf16.mxu0 %v9379
    %9609 = vmatpush1.bf16.msra.mxu0 %v9378
    %9610 = vmatprep.subr.bf16.mxu0 %v9383
    %9611 = vmatpush1.bf16.msra.mxu0 %v9382
    %9612 = vmatprep.subr.bf16.mxu0 %v9387
    %9613 = vmatpush1.bf16.msra.mxu0 %v9386
    %9614 = vmatprep.mubr.bf16.mxu0 %v8787
    %9615 = vmatmul.mubr.bf16.gmra.mrb[0].mxu0 %v8786
    %v9616 = vpop.f32.mrb[0].mxu0
    %v9617 = vadd.f32 %v8925, %v9616
    %v9618 = vpop.f32.mrb[0].mxu0
    %v9619 = vadd.f32 %v8929, %v9618
    %v9620 = vpop.f32.mrb[0].mxu0
    %v9621 = vpop.f32.mrb[0].mxu0
    %9622 = vdwg.mxu0
    %9623 = vmatprep.subr.bf16.mxu0 %v9391
    %9624 = vmatpush1.bf16.msra.mxu0 %v9390
    %9625 = vmatprep.subr.bf16.mxu0 %v9395
    %9626 = vmatpush1.bf16.msra.mxu0 %v9394
    %9627 = vmatprep.subr.bf16.mxu0 %v9399
    %9628 = vmatpush1.bf16.msra.mxu0 %v9398
    %9629 = vmatprep.subr.bf16.mxu0 %v9403
    %9630 = vmatpush1.bf16.msra.mxu0 %v9402
    %9631 = vmatprep.subr.bf16.mxu0 %v9407
    %9632 = vmatpush1.bf16.msra.mxu0 %v9406
    %9633 = vmatprep.subr.bf16.mxu0 %v9411
    %9634 = vmatpush1.bf16.msra.mxu0 %v9410
    %9635 = vmatprep.subr.bf16.mxu0 %v9415
    %9636 = vmatpush1.bf16.msra.mxu0 %v9414
    %9637 = vmatprep.subr.bf16.mxu0 %v9419
    %9638 = vmatpush1.bf16.msra.mxu0 %v9418
    %9639 = vmatprep.subr.bf16.mxu0 %v9423
    %9640 = vmatpush1.bf16.msra.mxu0 %v9422
    %9641 = vmatprep.subr.bf16.mxu0 %v9427
    %9642 = vmatpush1.bf16.msra.mxu0 %v9426
    %9643 = vmatprep.subr.bf16.mxu0 %v9431
    %9644 = vmatpush1.bf16.msra.mxu0 %v9430
    %9645 = vmatprep.subr.bf16.mxu0 %v9435
    %9646 = vmatpush1.bf16.msra.mxu0 %v9434
    %9647 = vmatprep.subr.bf16.mxu0 %v9439
    %9648 = vmatpush1.bf16.msra.mxu0 %v9438
    %9649 = vmatprep.subr.bf16.mxu0 %v9443
    %9650 = vmatpush1.bf16.msra.mxu0 %v9442
    %9651 = vmatprep.subr.bf16.mxu0 %v9447
    %9652 = vmatpush1.bf16.msra.mxu0 %v9446
    %9653 = vmatprep.subr.bf16.mxu0 %v9451
    %9654 = vmatpush1.bf16.msra.mxu0 %v9450
    %9655 = vmatprep.mubr.bf16.mxu0 %v8789
    %9656 = vmatmul.mubr.bf16.gmra.mrb[0].mxu0 %v8788
    %v9657 = vpop.f32.mrb[0].mxu0
    %v9658 = vadd.f32 %v9617, %v9657
    %v9659 = vpop.f32.mrb[0].mxu0
    %v9660 = vadd.f32 %v9619, %v9659
    %v9661 = vpop.f32.mrb[0].mxu0
    %v9662 = vpop.f32.mrb[0].mxu0
    %9663 = vdwg.mxu0
    %9664 = vmatprep.subr.bf16.mxu0 %v9329
    %9665 = vmatpush1.bf16.msra.mxu0 %v9328
    %9666 = vmatprep.subr.bf16.mxu0 %v9333
    %9667 = vmatpush1.bf16.msra.mxu0 %v9332
    %9668 = vmatprep.subr.bf16.mxu0 %v9337
    %9669 = vmatpush1.bf16.msra.mxu0 %v9336
    %9670 = vmatprep.subr.bf16.mxu0 %v9341
    %9671 = vmatpush1.bf16.msra.mxu0 %v9340
    %9672 = vmatprep.subr.bf16.mxu0 %v9345
    %9673 = vmatpush1.bf16.msra.mxu0 %v9344
    %9674 = vmatprep.subr.bf16.mxu0 %v9349
    %9675 = vmatpush1.bf16.msra.mxu0 %v9348
    %9676 = vmatprep.subr.bf16.mxu0 %v9353
    %9677 = vmatpush1.bf16.msra.mxu0 %v9352
    %9678 = vmatprep.subr.bf16.mxu0 %v9357
    %9679 = vmatpush1.bf16.msra.mxu0 %v9356
    %9680 = vmatprep.subr.bf16.mxu0 %v9361
    %9681 = vmatpush1.bf16.msra.mxu0 %v9360
    %9682 = vmatprep.subr.bf16.mxu0 %v9365
    %9683 = vmatpush1.bf16.msra.mxu0 %v9364
    %9684 = vmatprep.subr.bf16.mxu0 %v9369
    %9685 = vmatpush1.bf16.msra.mxu0 %v9368
    %9686 = vmatprep.subr.bf16.mxu0 %v9373
    %9687 = vmatpush1.bf16.msra.mxu0 %v9372
    %9688 = vmatprep.subr.bf16.mxu0 %v9377
    %9689 = vmatpush1.bf16.msra.mxu0 %v9376
    %9690 = vmatprep.subr.bf16.mxu0 %v9381
    %9691 = vmatpush1.bf16.msra.mxu0 %v9380
    %9692 = vmatprep.subr.bf16.mxu0 %v9385
    %9693 = vmatpush1.bf16.msra.mxu0 %v9384
    %9694 = vmatprep.subr.bf16.mxu0 %v9389
    %9695 = vmatpush1.bf16.msra.mxu0 %v9388
    %9696 = vmatprep.mubr.bf16.mxu0 %v8787
    %9697 = vmatmul.mubr.bf16.gmra.mrb[0].mxu0 %v8786
    %v9698 = vpop.f32.mrb[0].mxu0
    %v9699 = vadd.f32 %v8933, %v9698
    %v9700 = vpop.f32.mrb[0].mxu0
    %v9701 = vadd.f32 %v8937, %v9700
    %v9702 = vpop.f32.mrb[0].mxu0
    %v9703 = vpop.f32.mrb[0].mxu0
    %9704 = vdwg.mxu0
    %9705 = vmatprep.subr.bf16.mxu0 %v9393
    %9706 = vmatpush1.bf16.msra.mxu0 %v9392
    %9707 = vmatprep.subr.bf16.mxu0 %v9397
    %9708 = vmatpush1.bf16.msra.mxu0 %v9396
    %9709 = vmatprep.subr.bf16.mxu0 %v9401
    %9710 = vmatpush1.bf16.msra.mxu0 %v9400
    %9711 = vmatprep.subr.bf16.mxu0 %v9405
    %9712 = vmatpush1.bf16.msra.mxu0 %v9404
    %9713 = vmatprep.subr.bf16.mxu0 %v9409
    %9714 = vmatpush1.bf16.msra.mxu0 %v9408
    %9715 = vmatprep.subr.bf16.mxu0 %v9413
    %9716 = vmatpush1.bf16.msra.mxu0 %v9412
    %9717 = vmatprep.subr.bf16.mxu0 %v9417
    %9718 = vmatpush1.bf16.msra.mxu0 %v9416
    %9719 = vmatprep.subr.bf16.mxu0 %v9421
    %9720 = vmatpush1.bf16.msra.mxu0 %v9420
    %9721 = vmatprep.subr.bf16.mxu0 %v9425
    %9722 = vmatpush1.bf16.msra.mxu0 %v9424
    %9723 = vmatprep.subr.bf16.mxu0 %v9429
    %9724 = vmatpush1.bf16.msra.mxu0 %v9428
    %9725 = vmatprep.subr.bf16.mxu0 %v9433
    %9726 = vmatpush1.bf16.msra.mxu0 %v9432
    %9727 = vmatprep.subr.bf16.mxu0 %v9437
    %9728 = vmatpush1.bf16.msra.mxu0 %v9436
    %9729 = vmatprep.subr.bf16.mxu0 %v9441
    %9730 = vmatpush1.bf16.msra.mxu0 %v9440
    %9731 = vmatprep.subr.bf16.mxu0 %v9445
    %9732 = vmatpush1.bf16.msra.mxu0 %v9444
    %9733 = vmatprep.subr.bf16.mxu0 %v9449
    %9734 = vmatpush1.bf16.msra.mxu0 %v9448
    %9735 = vmatprep.subr.bf16.mxu0 %v9453
    %9736 = vmatpush1.bf16.msra.mxu0 %v9452
    %9737 = vmatprep.mubr.bf16.mxu0 %v8789
    %9738 = vmatmul.mubr.bf16.gmra.mrb[0].mxu0 %v8788
    %v9739 = vpop.f32.mrb[0].mxu0
    %v9740 = vadd.f32 %v9699, %v9739
    %v9741 = vpop.f32.mrb[0].mxu0
    %v9742 = vadd.f32 %v9701, %v9741
    %v9743 = vpop.f32.mrb[0].mxu0
    %v9744 = vpop.f32.mrb[0].mxu0
    %9745 = vdwg.mxu0
    %v9746 = vmul.f32 %v9658, 0.01
    %v9747 = vmul.f32 %v9660, 0.01
    %v9748 = vmul.f32 %v9740, 0.01
    %v9749 = vmul.f32 %v9742, 0.01
    %v9750 = vmax.f32 %v9658, %v9746
    %v9751 = vmax.f32 %v9660, %v9747
    %v9752 = vmax.f32 %v9740, %v9748
    %v9753 = vmax.f32 %v9742, %v9749
    %v9754 = vpack.c.bf16 %v9750, %v9750
    %v9755 = vpack.c.bf16 %v9751, %v9751
    %v9756 = vpack.c.bf16 %v9752, %v9752
    %v9757 = vpack.c.bf16 %v9753, %v9753
    %s9758 = scalar_lea.vmem [#allocation2], 10240
    %v9759 = vld [vmem:[%s9758] sm:$0xff]
    %v9760 = vld [vmem:[%s9758 + $0x8] sm:$0xff]
    %v9761 = vld [vmem:[%s9758 + $0x10] sm:$0xff]
    %v9762 = vld [vmem:[%s9758 + $0x18] sm:$0xff]
    %v9763 = vld [vmem:[%s9758 + $0x20] sm:$0xff]
    %v9764 = vld [vmem:[%s9758 + $0x28] sm:$0xff]
    %v9765 = vld [vmem:[%s9758 + $0x30] sm:$0xff]
    %v9766 = vld [vmem:[%s9758 + $0x38] sm:$0xff]
    %v9767 = vld [vmem:[%s9758 + $0x40] sm:$0xff]
    %v9768 = vld [vmem:[%s9758 + $0x48] sm:$0xff]
    %v9769 = vld [vmem:[%s9758 + $0x50] sm:$0xff]
    %v9770 = vld [vmem:[%s9758 + $0x58] sm:$0xff]
    %v9771 = vld [vmem:[%s9758 + $0x60] sm:$0xff]
    %v9772 = vld [vmem:[%s9758 + $0x68] sm:$0xff]
    %v9773 = vld [vmem:[%s9758 + $0x70] sm:$0xff]
    %v9774 = vld [vmem:[%s9758 + $0x78] sm:$0xff]
    %v9775 = vld [vmem:[%s9758 + $0x80] sm:$0xff]
    %v9776 = vld [vmem:[%s9758 + $0x88] sm:$0xff]
    %v9777 = vld [vmem:[%s9758 + $0x90] sm:$0xff]
    %v9778 = vld [vmem:[%s9758 + $0x98] sm:$0xff]
    %v9779 = vld [vmem:[%s9758 + $0xa0] sm:$0xff]
    %v9780 = vld [vmem:[%s9758 + $0xa8] sm:$0xff]
    %v9781 = vld [vmem:[%s9758 + $0xb0] sm:$0xff]
    %v9782 = vld [vmem:[%s9758 + $0xb8] sm:$0xff]
    %v9783 = vld [vmem:[%s9758 + $0xc0] sm:$0xff]
    %v9784 = vld [vmem:[%s9758 + $0xc8] sm:$0xff]
    %v9785 = vld [vmem:[%s9758 + $0xd0] sm:$0xff]
    %v9786 = vld [vmem:[%s9758 + $0xd8] sm:$0xff]
    %v9787 = vld [vmem:[%s9758 + $0xe0] sm:$0xff]
    %v9788 = vld [vmem:[%s9758 + $0xe8] sm:$0xff]
    %v9789 = vld [vmem:[%s9758 + $0xf0] sm:$0xff]
    %v9790 = vld [vmem:[%s9758 + $0xf8] sm:$0xff]
    %v9791 = vld [vmem:[%s9758 + $0x100] sm:$0xff]
    %v9792 = vld [vmem:[%s9758 + $0x108] sm:$0xff]
    %v9793 = vld [vmem:[%s9758 + $0x110] sm:$0xff]
    %v9794 = vld [vmem:[%s9758 + $0x118] sm:$0xff]
    %v9795 = vld [vmem:[%s9758 + $0x120] sm:$0xff]
    %v9796 = vld [vmem:[%s9758 + $0x128] sm:$0xff]
    %v9797 = vld [vmem:[%s9758 + $0x130] sm:$0xff]
    %v9798 = vld [vmem:[%s9758 + $0x138] sm:$0xff]
    %v9799 = vld [vmem:[%s9758 + $0x140] sm:$0xff]
    %v9800 = vld [vmem:[%s9758 + $0x148] sm:$0xff]
    %v9801 = vld [vmem:[%s9758 + $0x150] sm:$0xff]
    %v9802 = vld [vmem:[%s9758 + $0x158] sm:$0xff]
    %v9803 = vld [vmem:[%s9758 + $0x160] sm:$0xff]
    %v9804 = vld [vmem:[%s9758 + $0x168] sm:$0xff]
    %v9805 = vld [vmem:[%s9758 + $0x170] sm:$0xff]
    %v9806 = vld [vmem:[%s9758 + $0x178] sm:$0xff]
    %v9807 = vld [vmem:[%s9758 + $0x180] sm:$0xff]
    %v9808 = vld [vmem:[%s9758 + $0x188] sm:$0xff]
    %v9809 = vld [vmem:[%s9758 + $0x190] sm:$0xff]
    %v9810 = vld [vmem:[%s9758 + $0x198] sm:$0xff]
    %v9811 = vld [vmem:[%s9758 + $0x1a0] sm:$0xff]
    %v9812 = vld [vmem:[%s9758 + $0x1a8] sm:$0xff]
    %v9813 = vld [vmem:[%s9758 + $0x1b0] sm:$0xff]
    %v9814 = vld [vmem:[%s9758 + $0x1b8] sm:$0xff]
    %v9815 = vld [vmem:[%s9758 + $0x1c0] sm:$0xff]
    %v9816 = vld [vmem:[%s9758 + $0x1c8] sm:$0xff]
    %v9817 = vld [vmem:[%s9758 + $0x1d0] sm:$0xff]
    %v9818 = vld [vmem:[%s9758 + $0x1d8] sm:$0xff]
    %v9819 = vld [vmem:[%s9758 + $0x1e0] sm:$0xff]
    %v9820 = vld [vmem:[%s9758 + $0x1e8] sm:$0xff]
    %v9821 = vld [vmem:[%s9758 + $0x1f0] sm:$0xff]
    %v9822 = vld [vmem:[%s9758 + $0x1f8] sm:$0xff]
    %v9823 = vld [vmem:[%s9758 + $0x200] sm:$0xff]
    %v9824 = vld [vmem:[%s9758 + $0x208] sm:$0xff]
    %v9825 = vld [vmem:[%s9758 + $0x210] sm:$0xff]
    %v9826 = vld [vmem:[%s9758 + $0x218] sm:$0xff]
    %v9827 = vld [vmem:[%s9758 + $0x220] sm:$0xff]
    %v9828 = vld [vmem:[%s9758 + $0x228] sm:$0xff]
    %v9829 = vld [vmem:[%s9758 + $0x230] sm:$0xff]
    %v9830 = vld [vmem:[%s9758 + $0x238] sm:$0xff]
    %v9831 = vld [vmem:[%s9758 + $0x240] sm:$0xff]
    %v9832 = vld [vmem:[%s9758 + $0x248] sm:$0xff]
    %v9833 = vld [vmem:[%s9758 + $0x250] sm:$0xff]
    %v9834 = vld [vmem:[%s9758 + $0x258] sm:$0xff]
    %v9835 = vld [vmem:[%s9758 + $0x260] sm:$0xff]
    %v9836 = vld [vmem:[%s9758 + $0x268] sm:$0xff]
    %v9837 = vld [vmem:[%s9758 + $0x270] sm:$0xff]
    %v9838 = vld [vmem:[%s9758 + $0x278] sm:$0xff]
    %v9839 = vld [vmem:[%s9758 + $0x280] sm:$0xff]
    %v9840 = vld [vmem:[%s9758 + $0x288] sm:$0xff]
    %v9841 = vld [vmem:[%s9758 + $0x290] sm:$0xff]
    %v9842 = vld [vmem:[%s9758 + $0x298] sm:$0xff]
    %v9843 = vld [vmem:[%s9758 + $0x2a0] sm:$0xff]
    %v9844 = vld [vmem:[%s9758 + $0x2a8] sm:$0xff]
    %v9845 = vld [vmem:[%s9758 + $0x2b0] sm:$0xff]
    %v9846 = vld [vmem:[%s9758 + $0x2b8] sm:$0xff]
    %v9847 = vld [vmem:[%s9758 + $0x2c0] sm:$0xff]
    %v9848 = vld [vmem:[%s9758 + $0x2c8] sm:$0xff]
    %v9849 = vld [vmem:[%s9758 + $0x2d0] sm:$0xff]
    %v9850 = vld [vmem:[%s9758 + $0x2d8] sm:$0xff]
    %v9851 = vld [vmem:[%s9758 + $0x2e0] sm:$0xff]
    %v9852 = vld [vmem:[%s9758 + $0x2e8] sm:$0xff]
    %v9853 = vld [vmem:[%s9758 + $0x2f0] sm:$0xff]
    %v9854 = vld [vmem:[%s9758 + $0x2f8] sm:$0xff]
    %v9855 = vld [vmem:[%s9758 + $0x300] sm:$0xff]
    %v9856 = vld [vmem:[%s9758 + $0x308] sm:$0xff]
    %v9857 = vld [vmem:[%s9758 + $0x310] sm:$0xff]
    %v9858 = vld [vmem:[%s9758 + $0x318] sm:$0xff]
    %v9859 = vld [vmem:[%s9758 + $0x320] sm:$0xff]
    %v9860 = vld [vmem:[%s9758 + $0x328] sm:$0xff]
    %v9861 = vld [vmem:[%s9758 + $0x330] sm:$0xff]
    %v9862 = vld [vmem:[%s9758 + $0x338] sm:$0xff]
    %v9863 = vld [vmem:[%s9758 + $0x340] sm:$0xff]
    %v9864 = vld [vmem:[%s9758 + $0x348] sm:$0xff]
    %v9865 = vld [vmem:[%s9758 + $0x350] sm:$0xff]
    %v9866 = vld [vmem:[%s9758 + $0x358] sm:$0xff]
    %v9867 = vld [vmem:[%s9758 + $0x360] sm:$0xff]
    %v9868 = vld [vmem:[%s9758 + $0x368] sm:$0xff]
    %v9869 = vld [vmem:[%s9758 + $0x370] sm:$0xff]
    %v9870 = vld [vmem:[%s9758 + $0x378] sm:$0xff]
    %v9871 = vld [vmem:[%s9758 + $0x380] sm:$0xff]
    %v9872 = vld [vmem:[%s9758 + $0x388] sm:$0xff]
    %v9873 = vld [vmem:[%s9758 + $0x390] sm:$0xff]
    %v9874 = vld [vmem:[%s9758 + $0x398] sm:$0xff]
    %v9875 = vld [vmem:[%s9758 + $0x3a0] sm:$0xff]
    %v9876 = vld [vmem:[%s9758 + $0x3a8] sm:$0xff]
    %v9877 = vld [vmem:[%s9758 + $0x3b0] sm:$0xff]
    %v9878 = vld [vmem:[%s9758 + $0x3b8] sm:$0xff]
    %v9879 = vld [vmem:[%s9758 + $0x3c0] sm:$0xff]
    %v9880 = vld [vmem:[%s9758 + $0x3c8] sm:$0xff]
    %v9881 = vld [vmem:[%s9758 + $0x3d0] sm:$0xff]
    %v9882 = vld [vmem:[%s9758 + $0x3d8] sm:$0xff]
    %v9883 = vld [vmem:[%s9758 + $0x3e0] sm:$0xff]
    %v9884 = vld [vmem:[%s9758 + $0x3e8] sm:$0xff]
    %v9885 = vld [vmem:[%s9758 + $0x3f0] sm:$0xff]
    %v9886 = vld [vmem:[%s9758 + $0x3f8] sm:$0xff]
    %s9887 = scalar_lea.vmem [#allocation4], 40
    %v9888 = vld [vmem:[%s9887] sm:$0xf]
    %v9890 = vlaneseq
    %v9891 = vshrl.u32 %v9890, 7
    %v9892 = vsub.s32 0, %v9891
    %v9893 = vrot.slane %v9888, %v9892
    %v9894 = vlaneseq
    %v9895 = vshrl.u32 %v9894, 7
    %v9896 = vsub.s32 1, %v9895
    %v9897 = vrot.slane %v9888, %v9896
    %v9898 = vlaneseq
    %v9899 = vshrl.u32 %v9898, 7
    %v9900 = vsub.s32 2, %v9899
    %v9901 = vrot.slane %v9888, %v9900
    %v9902 = vlaneseq
    %v9903 = vshrl.u32 %v9902, 7
    %v9904 = vsub.s32 3, %v9903
    %v9905 = vrot.slane %v9888, %v9904
    %v10038 = vunpack.c.l.b16 %v9759
    %v10039 = vunpack.c.h.b16 %v9759
    %v10040 = vunpack.c.l.b16 %v9760
    %v10041 = vunpack.c.h.b16 %v9760
    %v10042 = vunpack.c.l.b16 %v9761
    %v10043 = vunpack.c.h.b16 %v9761
    %v10044 = vunpack.c.l.b16 %v9762
    %v10045 = vunpack.c.h.b16 %v9762
    %v10046 = vunpack.c.l.b16 %v9763
    %v10047 = vunpack.c.h.b16 %v9763
    %v10048 = vunpack.c.l.b16 %v9764
    %v10049 = vunpack.c.h.b16 %v9764
    %v10050 = vunpack.c.l.b16 %v9765
    %v10051 = vunpack.c.h.b16 %v9765
    %v10052 = vunpack.c.l.b16 %v9766
    %v10053 = vunpack.c.h.b16 %v9766
    %v10054 = vunpack.c.l.b16 %v9767
    %v10055 = vunpack.c.h.b16 %v9767
    %v10056 = vunpack.c.l.b16 %v9768
    %v10057 = vunpack.c.h.b16 %v9768
    %v10058 = vunpack.c.l.b16 %v9769
    %v10059 = vunpack.c.h.b16 %v9769
    %v10060 = vunpack.c.l.b16 %v9770
    %v10061 = vunpack.c.h.b16 %v9770
    %v10062 = vunpack.c.l.b16 %v9771
    %v10063 = vunpack.c.h.b16 %v9771
    %v10064 = vunpack.c.l.b16 %v9772
    %v10065 = vunpack.c.h.b16 %v9772
    %v10066 = vunpack.c.l.b16 %v9773
    %v10067 = vunpack.c.h.b16 %v9773
    %v10068 = vunpack.c.l.b16 %v9774
    %v10069 = vunpack.c.h.b16 %v9774
    %v10070 = vunpack.c.l.b16 %v9775
    %v10071 = vunpack.c.h.b16 %v9775
    %v10072 = vunpack.c.l.b16 %v9776
    %v10073 = vunpack.c.h.b16 %v9776
    %v10074 = vunpack.c.l.b16 %v9777
    %v10075 = vunpack.c.h.b16 %v9777
    %v10076 = vunpack.c.l.b16 %v9778
    %v10077 = vunpack.c.h.b16 %v9778
    %v10078 = vunpack.c.l.b16 %v9779
    %v10079 = vunpack.c.h.b16 %v9779
    %v10080 = vunpack.c.l.b16 %v9780
    %v10081 = vunpack.c.h.b16 %v9780
    %v10082 = vunpack.c.l.b16 %v9781
    %v10083 = vunpack.c.h.b16 %v9781
    %v10084 = vunpack.c.l.b16 %v9782
    %v10085 = vunpack.c.h.b16 %v9782
    %v10086 = vunpack.c.l.b16 %v9783
    %v10087 = vunpack.c.h.b16 %v9783
    %v10088 = vunpack.c.l.b16 %v9784
    %v10089 = vunpack.c.h.b16 %v9784
    %v10090 = vunpack.c.l.b16 %v9785
    %v10091 = vunpack.c.h.b16 %v9785
    %v10092 = vunpack.c.l.b16 %v9786
    %v10093 = vunpack.c.h.b16 %v9786
    %v10094 = vunpack.c.l.b16 %v9787
    %v10095 = vunpack.c.h.b16 %v9787
    %v10096 = vunpack.c.l.b16 %v9788
    %v10097 = vunpack.c.h.b16 %v9788
    %v10098 = vunpack.c.l.b16 %v9789
    %v10099 = vunpack.c.h.b16 %v9789
    %v10100 = vunpack.c.l.b16 %v9790
    %v10101 = vunpack.c.h.b16 %v9790
    %v10102 = vunpack.c.l.b16 %v9791
    %v10103 = vunpack.c.h.b16 %v9791
    %v10104 = vunpack.c.l.b16 %v9792
    %v10105 = vunpack.c.h.b16 %v9792
    %v10106 = vunpack.c.l.b16 %v9793
    %v10107 = vunpack.c.h.b16 %v9793
    %v10108 = vunpack.c.l.b16 %v9794
    %v10109 = vunpack.c.h.b16 %v9794
    %v10110 = vunpack.c.l.b16 %v9795
    %v10111 = vunpack.c.h.b16 %v9795
    %v10112 = vunpack.c.l.b16 %v9796
    %v10113 = vunpack.c.h.b16 %v9796
    %v10114 = vunpack.c.l.b16 %v9797
    %v10115 = vunpack.c.h.b16 %v9797
    %v10116 = vunpack.c.l.b16 %v9798
    %v10117 = vunpack.c.h.b16 %v9798
    %v10118 = vunpack.c.l.b16 %v9799
    %v10119 = vunpack.c.h.b16 %v9799
    %v10120 = vunpack.c.l.b16 %v9800
    %v10121 = vunpack.c.h.b16 %v9800
    %v10122 = vunpack.c.l.b16 %v9801
    %v10123 = vunpack.c.h.b16 %v9801
    %v10124 = vunpack.c.l.b16 %v9802
    %v10125 = vunpack.c.h.b16 %v9802
    %v10126 = vunpack.c.l.b16 %v9803
    %v10127 = vunpack.c.h.b16 %v9803
    %v10128 = vunpack.c.l.b16 %v9804
    %v10129 = vunpack.c.h.b16 %v9804
    %v10130 = vunpack.c.l.b16 %v9805
    %v10131 = vunpack.c.h.b16 %v9805
    %v10132 = vunpack.c.l.b16 %v9806
    %v10133 = vunpack.c.h.b16 %v9806
    %v10134 = vunpack.c.l.b16 %v9807
    %v10135 = vunpack.c.h.b16 %v9807
    %v10136 = vunpack.c.l.b16 %v9808
    %v10137 = vunpack.c.h.b16 %v9808
    %v10138 = vunpack.c.l.b16 %v9809
    %v10139 = vunpack.c.h.b16 %v9809
    %v10140 = vunpack.c.l.b16 %v9810
    %v10141 = vunpack.c.h.b16 %v9810
    %v10142 = vunpack.c.l.b16 %v9811
    %v10143 = vunpack.c.h.b16 %v9811
    %v10144 = vunpack.c.l.b16 %v9812
    %v10145 = vunpack.c.h.b16 %v9812
    %v10146 = vunpack.c.l.b16 %v9813
    %v10147 = vunpack.c.h.b16 %v9813
    %v10148 = vunpack.c.l.b16 %v9814
    %v10149 = vunpack.c.h.b16 %v9814
    %v10150 = vunpack.c.l.b16 %v9815
    %v10151 = vunpack.c.h.b16 %v9815
    %v10152 = vunpack.c.l.b16 %v9816
    %v10153 = vunpack.c.h.b16 %v9816
    %v10154 = vunpack.c.l.b16 %v9817
    %v10155 = vunpack.c.h.b16 %v9817
    %v10156 = vunpack.c.l.b16 %v9818
    %v10157 = vunpack.c.h.b16 %v9818
    %v10158 = vunpack.c.l.b16 %v9819
    %v10159 = vunpack.c.h.b16 %v9819
    %v10160 = vunpack.c.l.b16 %v9820
    %v10161 = vunpack.c.h.b16 %v9820
    %v10162 = vunpack.c.l.b16 %v9821
    %v10163 = vunpack.c.h.b16 %v9821
    %v10164 = vunpack.c.l.b16 %v9822
    %v10165 = vunpack.c.h.b16 %v9822
    %v10166 = vunpack.c.l.b16 %v9823
    %v10167 = vunpack.c.h.b16 %v9823
    %v10168 = vunpack.c.l.b16 %v9824
    %v10169 = vunpack.c.h.b16 %v9824
    %v10170 = vunpack.c.l.b16 %v9825
    %v10171 = vunpack.c.h.b16 %v9825
    %v10172 = vunpack.c.l.b16 %v9826
    %v10173 = vunpack.c.h.b16 %v9826
    %v10174 = vunpack.c.l.b16 %v9827
    %v10175 = vunpack.c.h.b16 %v9827
    %v10176 = vunpack.c.l.b16 %v9828
    %v10177 = vunpack.c.h.b16 %v9828
    %v10178 = vunpack.c.l.b16 %v9829
    %v10179 = vunpack.c.h.b16 %v9829
    %v10180 = vunpack.c.l.b16 %v9830
    %v10181 = vunpack.c.h.b16 %v9830
    %v10182 = vunpack.c.l.b16 %v9831
    %v10183 = vunpack.c.h.b16 %v9831
    %v10184 = vunpack.c.l.b16 %v9832
    %v10185 = vunpack.c.h.b16 %v9832
    %v10186 = vunpack.c.l.b16 %v9833
    %v10187 = vunpack.c.h.b16 %v9833
    %v10188 = vunpack.c.l.b16 %v9834
    %v10189 = vunpack.c.h.b16 %v9834
    %v10190 = vunpack.c.l.b16 %v9835
    %v10191 = vunpack.c.h.b16 %v9835
    %v10192 = vunpack.c.l.b16 %v9836
    %v10193 = vunpack.c.h.b16 %v9836
    %v10194 = vunpack.c.l.b16 %v9837
    %v10195 = vunpack.c.h.b16 %v9837
    %v10196 = vunpack.c.l.b16 %v9838
    %v10197 = vunpack.c.h.b16 %v9838
    %v10198 = vunpack.c.l.b16 %v9839
    %v10199 = vunpack.c.h.b16 %v9839
    %v10200 = vunpack.c.l.b16 %v9840
    %v10201 = vunpack.c.h.b16 %v9840
    %v10202 = vunpack.c.l.b16 %v9841
    %v10203 = vunpack.c.h.b16 %v9841
    %v10204 = vunpack.c.l.b16 %v9842
    %v10205 = vunpack.c.h.b16 %v9842
    %v10206 = vunpack.c.l.b16 %v9843
    %v10207 = vunpack.c.h.b16 %v9843
    %v10208 = vunpack.c.l.b16 %v9844
    %v10209 = vunpack.c.h.b16 %v9844
    %v10210 = vunpack.c.l.b16 %v9845
    %v10211 = vunpack.c.h.b16 %v9845
    %v10212 = vunpack.c.l.b16 %v9846
    %v10213 = vunpack.c.h.b16 %v9846
    %v10214 = vunpack.c.l.b16 %v9847
    %v10215 = vunpack.c.h.b16 %v9847
    %v10216 = vunpack.c.l.b16 %v9848
    %v10217 = vunpack.c.h.b16 %v9848
    %v10218 = vunpack.c.l.b16 %v9849
    %v10219 = vunpack.c.h.b16 %v9849
    %v10220 = vunpack.c.l.b16 %v9850
    %v10221 = vunpack.c.h.b16 %v9850
    %v10222 = vunpack.c.l.b16 %v9851
    %v10223 = vunpack.c.h.b16 %v9851
    %v10224 = vunpack.c.l.b16 %v9852
    %v10225 = vunpack.c.h.b16 %v9852
    %v10226 = vunpack.c.l.b16 %v9853
    %v10227 = vunpack.c.h.b16 %v9853
    %v10228 = vunpack.c.l.b16 %v9854
    %v10229 = vunpack.c.h.b16 %v9854
    %v10230 = vunpack.c.l.b16 %v9855
    %v10231 = vunpack.c.h.b16 %v9855
    %v10232 = vunpack.c.l.b16 %v9856
    %v10233 = vunpack.c.h.b16 %v9856
    %v10234 = vunpack.c.l.b16 %v9857
    %v10235 = vunpack.c.h.b16 %v9857
    %v10236 = vunpack.c.l.b16 %v9858
    %v10237 = vunpack.c.h.b16 %v9858
    %v10238 = vunpack.c.l.b16 %v9859
    %v10239 = vunpack.c.h.b16 %v9859
    %v10240 = vunpack.c.l.b16 %v9860
    %v10241 = vunpack.c.h.b16 %v9860
    %v10242 = vunpack.c.l.b16 %v9861
    %v10243 = vunpack.c.h.b16 %v9861
    %v10244 = vunpack.c.l.b16 %v9862
    %v10245 = vunpack.c.h.b16 %v9862
    %v10246 = vunpack.c.l.b16 %v9863
    %v10247 = vunpack.c.h.b16 %v9863
    %v10248 = vunpack.c.l.b16 %v9864
    %v10249 = vunpack.c.h.b16 %v9864
    %v10250 = vunpack.c.l.b16 %v9865
    %v10251 = vunpack.c.h.b16 %v9865
    %v10252 = vunpack.c.l.b16 %v9866
    %v10253 = vunpack.c.h.b16 %v9866
    %v10254 = vunpack.c.l.b16 %v9867
    %v10255 = vunpack.c.h.b16 %v9867
    %v10256 = vunpack.c.l.b16 %v9868
    %v10257 = vunpack.c.h.b16 %v9868
    %v10258 = vunpack.c.l.b16 %v9869
    %v10259 = vunpack.c.h.b16 %v9869
    %v10260 = vunpack.c.l.b16 %v9870
    %v10261 = vunpack.c.h.b16 %v9870
    %v10262 = vunpack.c.l.b16 %v9871
    %v10263 = vunpack.c.h.b16 %v9871
    %v10264 = vunpack.c.l.b16 %v9872
    %v10265 = vunpack.c.h.b16 %v9872
    %v10266 = vunpack.c.l.b16 %v9873
    %v10267 = vunpack.c.h.b16 %v9873
    %v10268 = vunpack.c.l.b16 %v9874
    %v10269 = vunpack.c.h.b16 %v9874
    %v10270 = vunpack.c.l.b16 %v9875
    %v10271 = vunpack.c.h.b16 %v9875
    %v10272 = vunpack.c.l.b16 %v9876
    %v10273 = vunpack.c.h.b16 %v9876
    %v10274 = vunpack.c.l.b16 %v9877
    %v10275 = vunpack.c.h.b16 %v9877
    %v10276 = vunpack.c.l.b16 %v9878
    %v10277 = vunpack.c.h.b16 %v9878
    %v10278 = vunpack.c.l.b16 %v9879
    %v10279 = vunpack.c.h.b16 %v9879
    %v10280 = vunpack.c.l.b16 %v9880
    %v10281 = vunpack.c.h.b16 %v9880
    %v10282 = vunpack.c.l.b16 %v9881
    %v10283 = vunpack.c.h.b16 %v9881
    %v10284 = vunpack.c.l.b16 %v9882
    %v10285 = vunpack.c.h.b16 %v9882
    %v10286 = vunpack.c.l.b16 %v9883
    %v10287 = vunpack.c.h.b16 %v9883
    %v10288 = vunpack.c.l.b16 %v9884
    %v10289 = vunpack.c.h.b16 %v9884
    %v10290 = vunpack.c.l.b16 %v9885
    %v10291 = vunpack.c.h.b16 %v9885
    %v10292 = vunpack.c.l.b16 %v9886
    %v10293 = vunpack.c.h.b16 %v9886
    %v10294 = vpack.c.b16 %v10042, %v10038
    %v10295 = vpack.c.b16 %v10043, %v10039
    %v10296 = vpack.c.b16 %v10044, %v10040
    %v10297 = vpack.c.b16 %v10045, %v10041
    %v10298 = vpack.c.b16 %v10050, %v10046
    %v10299 = vpack.c.b16 %v10051, %v10047
    %v10300 = vpack.c.b16 %v10052, %v10048
    %v10301 = vpack.c.b16 %v10053, %v10049
    %v10302 = vpack.c.b16 %v10058, %v10054
    %v10303 = vpack.c.b16 %v10059, %v10055
    %v10304 = vpack.c.b16 %v10060, %v10056
    %v10305 = vpack.c.b16 %v10061, %v10057
    %v10306 = vpack.c.b16 %v10066, %v10062
    %v10307 = vpack.c.b16 %v10067, %v10063
    %v10308 = vpack.c.b16 %v10068, %v10064
    %v10309 = vpack.c.b16 %v10069, %v10065
    %v10310 = vpack.c.b16 %v10074, %v10070
    %v10311 = vpack.c.b16 %v10075, %v10071
    %v10312 = vpack.c.b16 %v10076, %v10072
    %v10313 = vpack.c.b16 %v10077, %v10073
    %v10314 = vpack.c.b16 %v10082, %v10078
    %v10315 = vpack.c.b16 %v10083, %v10079
    %v10316 = vpack.c.b16 %v10084, %v10080
    %v10317 = vpack.c.b16 %v10085, %v10081
    %v10318 = vpack.c.b16 %v10090, %v10086
    %v10319 = vpack.c.b16 %v10091, %v10087
    %v10320 = vpack.c.b16 %v10092, %v10088
    %v10321 = vpack.c.b16 %v10093, %v10089
    %v10322 = vpack.c.b16 %v10098, %v10094
    %v10323 = vpack.c.b16 %v10099, %v10095
    %v10324 = vpack.c.b16 %v10100, %v10096
    %v10325 = vpack.c.b16 %v10101, %v10097
    %v10326 = vpack.c.b16 %v10106, %v10102
    %v10327 = vpack.c.b16 %v10107, %v10103
    %v10328 = vpack.c.b16 %v10108, %v10104
    %v10329 = vpack.c.b16 %v10109, %v10105
    %v10330 = vpack.c.b16 %v10114, %v10110
    %v10331 = vpack.c.b16 %v10115, %v10111
    %v10332 = vpack.c.b16 %v10116, %v10112
    %v10333 = vpack.c.b16 %v10117, %v10113
    %v10334 = vpack.c.b16 %v10122, %v10118
    %v10335 = vpack.c.b16 %v10123, %v10119
    %v10336 = vpack.c.b16 %v10124, %v10120
    %v10337 = vpack.c.b16 %v10125, %v10121
    %v10338 = vpack.c.b16 %v10130, %v10126
    %v10339 = vpack.c.b16 %v10131, %v10127
    %v10340 = vpack.c.b16 %v10132, %v10128
    %v10341 = vpack.c.b16 %v10133, %v10129
    %v10342 = vpack.c.b16 %v10138, %v10134
    %v10343 = vpack.c.b16 %v10139, %v10135
    %v10344 = vpack.c.b16 %v10140, %v10136
    %v10345 = vpack.c.b16 %v10141, %v10137
    %v10346 = vpack.c.b16 %v10146, %v10142
    %v10347 = vpack.c.b16 %v10147, %v10143
    %v10348 = vpack.c.b16 %v10148, %v10144
    %v10349 = vpack.c.b16 %v10149, %v10145
    %v10350 = vpack.c.b16 %v10154, %v10150
    %v10351 = vpack.c.b16 %v10155, %v10151
    %v10352 = vpack.c.b16 %v10156, %v10152
    %v10353 = vpack.c.b16 %v10157, %v10153
    %v10354 = vpack.c.b16 %v10162, %v10158
    %v10355 = vpack.c.b16 %v10163, %v10159
    %v10356 = vpack.c.b16 %v10164, %v10160
    %v10357 = vpack.c.b16 %v10165, %v10161
    %v10358 = vpack.c.b16 %v10170, %v10166
    %v10359 = vpack.c.b16 %v10171, %v10167
    %v10360 = vpack.c.b16 %v10172, %v10168
    %v10361 = vpack.c.b16 %v10173, %v10169
    %v10362 = vpack.c.b16 %v10178, %v10174
    %v10363 = vpack.c.b16 %v10179, %v10175
    %v10364 = vpack.c.b16 %v10180, %v10176
    %v10365 = vpack.c.b16 %v10181, %v10177
    %v10366 = vpack.c.b16 %v10186, %v10182
    %v10367 = vpack.c.b16 %v10187, %v10183
    %v10368 = vpack.c.b16 %v10188, %v10184
    %v10369 = vpack.c.b16 %v10189, %v10185
    %v10370 = vpack.c.b16 %v10194, %v10190
    %v10371 = vpack.c.b16 %v10195, %v10191
    %v10372 = vpack.c.b16 %v10196, %v10192
    %v10373 = vpack.c.b16 %v10197, %v10193
    %v10374 = vpack.c.b16 %v10202, %v10198
    %v10375 = vpack.c.b16 %v10203, %v10199
    %v10376 = vpack.c.b16 %v10204, %v10200
    %v10377 = vpack.c.b16 %v10205, %v10201
    %v10378 = vpack.c.b16 %v10210, %v10206
    %v10379 = vpack.c.b16 %v10211, %v10207
    %v10380 = vpack.c.b16 %v10212, %v10208
    %v10381 = vpack.c.b16 %v10213, %v10209
    %v10382 = vpack.c.b16 %v10218, %v10214
    %v10383 = vpack.c.b16 %v10219, %v10215
    %v10384 = vpack.c.b16 %v10220, %v10216
    %v10385 = vpack.c.b16 %v10221, %v10217
    %v10386 = vpack.c.b16 %v10226, %v10222
    %v10387 = vpack.c.b16 %v10227, %v10223
    %v10388 = vpack.c.b16 %v10228, %v10224
    %v10389 = vpack.c.b16 %v10229, %v10225
    %v10390 = vpack.c.b16 %v10234, %v10230
    %v10391 = vpack.c.b16 %v10235, %v10231
    %v10392 = vpack.c.b16 %v10236, %v10232
    %v10393 = vpack.c.b16 %v10237, %v10233
    %v10394 = vpack.c.b16 %v10242, %v10238
    %v10395 = vpack.c.b16 %v10243, %v10239
    %v10396 = vpack.c.b16 %v10244, %v10240
    %v10397 = vpack.c.b16 %v10245, %v10241
    %v10398 = vpack.c.b16 %v10250, %v10246
    %v10399 = vpack.c.b16 %v10251, %v10247
    %v10400 = vpack.c.b16 %v10252, %v10248
    %v10401 = vpack.c.b16 %v10253, %v10249
    %v10402 = vpack.c.b16 %v10258, %v10254
    %v10403 = vpack.c.b16 %v10259, %v10255
    %v10404 = vpack.c.b16 %v10260, %v10256
    %v10405 = vpack.c.b16 %v10261, %v10257
    %v10406 = vpack.c.b16 %v10266, %v10262
    %v10407 = vpack.c.b16 %v10267, %v10263
    %v10408 = vpack.c.b16 %v10268, %v10264
    %v10409 = vpack.c.b16 %v10269, %v10265
    %v10410 = vpack.c.b16 %v10274, %v10270
    %v10411 = vpack.c.b16 %v10275, %v10271
    %v10412 = vpack.c.b16 %v10276, %v10272
    %v10413 = vpack.c.b16 %v10277, %v10273
    %v10414 = vpack.c.b16 %v10282, %v10278
    %v10415 = vpack.c.b16 %v10283, %v10279
    %v10416 = vpack.c.b16 %v10284, %v10280
    %v10417 = vpack.c.b16 %v10285, %v10281
    %v10418 = vpack.c.b16 %v10290, %v10286
    %v10419 = vpack.c.b16 %v10291, %v10287
    %v10420 = vpack.c.b16 %v10292, %v10288
    %v10421 = vpack.c.b16 %v10293, %v10289
    %10550 = vmatprep.subr.bf16.mxu0 %v10295
    %10551 = vmatpush1.bf16.msra.mxu0 %v10294
    %10552 = vmatprep.subr.bf16.mxu0 %v10299
    %10553 = vmatpush1.bf16.msra.mxu0 %v10298
    %10554 = vmatprep.subr.bf16.mxu0 %v10303
    %10555 = vmatpush1.bf16.msra.mxu0 %v10302
    %10556 = vmatprep.subr.bf16.mxu0 %v10307
    %10557 = vmatpush1.bf16.msra.mxu0 %v10306
    %10558 = vmatprep.subr.bf16.mxu0 %v10311
    %10559 = vmatpush1.bf16.msra.mxu0 %v10310
    %10560 = vmatprep.subr.bf16.mxu0 %v10315
    %10561 = vmatpush1.bf16.msra.mxu0 %v10314
    %10562 = vmatprep.subr.bf16.mxu0 %v10319
    %10563 = vmatpush1.bf16.msra.mxu0 %v10318
    %10564 = vmatprep.subr.bf16.mxu0 %v10323
    %10565 = vmatpush1.bf16.msra.mxu0 %v10322
    %10566 = vmatprep.subr.bf16.mxu0 %v10327
    %10567 = vmatpush1.bf16.msra.mxu0 %v10326
    %10568 = vmatprep.subr.bf16.mxu0 %v10331
    %10569 = vmatpush1.bf16.msra.mxu0 %v10330
    %10570 = vmatprep.subr.bf16.mxu0 %v10335
    %10571 = vmatpush1.bf16.msra.mxu0 %v10334
    %10572 = vmatprep.subr.bf16.mxu0 %v10339
    %10573 = vmatpush1.bf16.msra.mxu0 %v10338
    %10574 = vmatprep.subr.bf16.mxu0 %v10343
    %10575 = vmatpush1.bf16.msra.mxu0 %v10342
    %10576 = vmatprep.subr.bf16.mxu0 %v10347
    %10577 = vmatpush1.bf16.msra.mxu0 %v10346
    %10578 = vmatprep.subr.bf16.mxu0 %v10351
    %10579 = vmatpush1.bf16.msra.mxu0 %v10350
    %10580 = vmatprep.subr.bf16.mxu0 %v10355
    %10581 = vmatpush1.bf16.msra.mxu0 %v10354
    %10582 = vmatprep.mubr.bf16.mxu0 %v9755
    %10583 = vmatmul.mubr.bf16.gmra.mrb[0].mxu0 %v9754
    %v10584 = vpop.f32.mrb[0].mxu0
    %v10585 = vadd.f32 %v9893, %v10584
    %v10586 = vpop.f32.mrb[0].mxu0
    %v10587 = vadd.f32 %v9897, %v10586
    %v10588 = vpop.f32.mrb[0].mxu0
    %v10589 = vpop.f32.mrb[0].mxu0
    %10590 = vdwg.mxu0
    %10591 = vmatprep.subr.bf16.mxu0 %v10359
    %10592 = vmatpush1.bf16.msra.mxu0 %v10358
    %10593 = vmatprep.subr.bf16.mxu0 %v10363
    %10594 = vmatpush1.bf16.msra.mxu0 %v10362
    %10595 = vmatprep.subr.bf16.mxu0 %v10367
    %10596 = vmatpush1.bf16.msra.mxu0 %v10366
    %10597 = vmatprep.subr.bf16.mxu0 %v10371
    %10598 = vmatpush1.bf16.msra.mxu0 %v10370
    %10599 = vmatprep.subr.bf16.mxu0 %v10375
    %10600 = vmatpush1.bf16.msra.mxu0 %v10374
    %10601 = vmatprep.subr.bf16.mxu0 %v10379
    %10602 = vmatpush1.bf16.msra.mxu0 %v10378
    %10603 = vmatprep.subr.bf16.mxu0 %v10383
    %10604 = vmatpush1.bf16.msra.mxu0 %v10382
    %10605 = vmatprep.subr.bf16.mxu0 %v10387
    %10606 = vmatpush1.bf16.msra.mxu0 %v10386
    %10607 = vmatprep.subr.bf16.mxu0 %v10391
    %10608 = vmatpush1.bf16.msra.mxu0 %v10390
    %10609 = vmatprep.subr.bf16.mxu0 %v10395
    %10610 = vmatpush1.bf16.msra.mxu0 %v10394
    %10611 = vmatprep.subr.bf16.mxu0 %v10399
    %10612 = vmatpush1.bf16.msra.mxu0 %v10398
    %10613 = vmatprep.subr.bf16.mxu0 %v10403
    %10614 = vmatpush1.bf16.msra.mxu0 %v10402
    %10615 = vmatprep.subr.bf16.mxu0 %v10407
    %10616 = vmatpush1.bf16.msra.mxu0 %v10406
    %10617 = vmatprep.subr.bf16.mxu0 %v10411
    %10618 = vmatpush1.bf16.msra.mxu0 %v10410
    %10619 = vmatprep.subr.bf16.mxu0 %v10415
    %10620 = vmatpush1.bf16.msra.mxu0 %v10414
    %10621 = vmatprep.subr.bf16.mxu0 %v10419
    %10622 = vmatpush1.bf16.msra.mxu0 %v10418
    %10623 = vmatprep.mubr.bf16.mxu0 %v9757
    %10624 = vmatmul.mubr.bf16.gmra.mrb[0].mxu0 %v9756
    %v10625 = vpop.f32.mrb[0].mxu0
    %v10626 = vadd.f32 %v10585, %v10625
    %v10627 = vpop.f32.mrb[0].mxu0
    %v10628 = vadd.f32 %v10587, %v10627
    %v10629 = vpop.f32.mrb[0].mxu0
    %v10630 = vpop.f32.mrb[0].mxu0
    %10631 = vdwg.mxu0
    %10632 = vmatprep.subr.bf16.mxu0 %v10297
    %10633 = vmatpush1.bf16.msra.mxu0 %v10296
    %10634 = vmatprep.subr.bf16.mxu0 %v10301
    %10635 = vmatpush1.bf16.msra.mxu0 %v10300
    %10636 = vmatprep.subr.bf16.mxu0 %v10305
    %10637 = vmatpush1.bf16.msra.mxu0 %v10304
    %10638 = vmatprep.subr.bf16.mxu0 %v10309
    %10639 = vmatpush1.bf16.msra.mxu0 %v10308
    %10640 = vmatprep.subr.bf16.mxu0 %v10313
    %10641 = vmatpush1.bf16.msra.mxu0 %v10312
    %10642 = vmatprep.subr.bf16.mxu0 %v10317
    %10643 = vmatpush1.bf16.msra.mxu0 %v10316
    %10644 = vmatprep.subr.bf16.mxu0 %v10321
    %10645 = vmatpush1.bf16.msra.mxu0 %v10320
    %10646 = vmatprep.subr.bf16.mxu0 %v10325
    %10647 = vmatpush1.bf16.msra.mxu0 %v10324
    %10648 = vmatprep.subr.bf16.mxu0 %v10329
    %10649 = vmatpush1.bf16.msra.mxu0 %v10328
    %10650 = vmatprep.subr.bf16.mxu0 %v10333
    %10651 = vmatpush1.bf16.msra.mxu0 %v10332
    %10652 = vmatprep.subr.bf16.mxu0 %v10337
    %10653 = vmatpush1.bf16.msra.mxu0 %v10336
    %10654 = vmatprep.subr.bf16.mxu0 %v10341
    %10655 = vmatpush1.bf16.msra.mxu0 %v10340
    %10656 = vmatprep.subr.bf16.mxu0 %v10345
    %10657 = vmatpush1.bf16.msra.mxu0 %v10344
    %10658 = vmatprep.subr.bf16.mxu0 %v10349
    %10659 = vmatpush1.bf16.msra.mxu0 %v10348
    %10660 = vmatprep.subr.bf16.mxu0 %v10353
    %10661 = vmatpush1.bf16.msra.mxu0 %v10352
    %10662 = vmatprep.subr.bf16.mxu0 %v10357
    %10663 = vmatpush1.bf16.msra.mxu0 %v10356
    %10664 = vmatprep.mubr.bf16.mxu0 %v9755
    %10665 = vmatmul.mubr.bf16.gmra.mrb[0].mxu0 %v9754
    %v10666 = vpop.f32.mrb[0].mxu0
    %v10667 = vadd.f32 %v9901, %v10666
    %v10668 = vpop.f32.mrb[0].mxu0
    %v10669 = vadd.f32 %v9905, %v10668
    %v10670 = vpop.f32.mrb[0].mxu0
    %v10671 = vpop.f32.mrb[0].mxu0
    %10672 = vdwg.mxu0
    %10673 = vmatprep.subr.bf16.mxu0 %v10361
    %10674 = vmatpush1.bf16.msra.mxu0 %v10360
    %10675 = vmatprep.subr.bf16.mxu0 %v10365
    %10676 = vmatpush1.bf16.msra.mxu0 %v10364
    %10677 = vmatprep.subr.bf16.mxu0 %v10369
    %10678 = vmatpush1.bf16.msra.mxu0 %v10368
    %10679 = vmatprep.subr.bf16.mxu0 %v10373
    %10680 = vmatpush1.bf16.msra.mxu0 %v10372
    %10681 = vmatprep.subr.bf16.mxu0 %v10377
    %10682 = vmatpush1.bf16.msra.mxu0 %v10376
    %10683 = vmatprep.subr.bf16.mxu0 %v10381
    %10684 = vmatpush1.bf16.msra.mxu0 %v10380
    %10685 = vmatprep.subr.bf16.mxu0 %v10385
    %10686 = vmatpush1.bf16.msra.mxu0 %v10384
    %10687 = vmatprep.subr.bf16.mxu0 %v10389
    %10688 = vmatpush1.bf16.msra.mxu0 %v10388
    %10689 = vmatprep.subr.bf16.mxu0 %v10393
    %10690 = vmatpush1.bf16.msra.mxu0 %v10392
    %10691 = vmatprep.subr.bf16.mxu0 %v10397
    %10692 = vmatpush1.bf16.msra.mxu0 %v10396
    %10693 = vmatprep.subr.bf16.mxu0 %v10401
    %10694 = vmatpush1.bf16.msra.mxu0 %v10400
    %10695 = vmatprep.subr.bf16.mxu0 %v10405
    %10696 = vmatpush1.bf16.msra.mxu0 %v10404
    %10697 = vmatprep.subr.bf16.mxu0 %v10409
    %10698 = vmatpush1.bf16.msra.mxu0 %v10408
    %10699 = vmatprep.subr.bf16.mxu0 %v10413
    %10700 = vmatpush1.bf16.msra.mxu0 %v10412
    %10701 = vmatprep.subr.bf16.mxu0 %v10417
    %10702 = vmatpush1.bf16.msra.mxu0 %v10416
    %10703 = vmatprep.subr.bf16.mxu0 %v10421
    %10704 = vmatpush1.bf16.msra.mxu0 %v10420
    %10705 = vmatprep.mubr.bf16.mxu0 %v9757
    %10706 = vmatmul.mubr.bf16.gmra.mrb[0].mxu0 %v9756
    %v10707 = vpop.f32.mrb[0].mxu0
    %v10708 = vadd.f32 %v10667, %v10707
    %v10709 = vpop.f32.mrb[0].mxu0
    %v10710 = vadd.f32 %v10669, %v10709
    %v10711 = vpop.f32.mrb[0].mxu0
    %v10712 = vpop.f32.mrb[0].mxu0
    %10713 = vdwg.mxu0
    %v10714 = vmul.f32 %v10626, 0.01
    %v10715 = vmul.f32 %v10628, 0.01
    %v10716 = vmul.f32 %v10708, 0.01
    %v10717 = vmul.f32 %v10710, 0.01
    %v10718 = vmax.f32 %v10626, %v10714
    %v10719 = vmax.f32 %v10628, %v10715
    %v10720 = vmax.f32 %v10708, %v10716
    %v10721 = vmax.f32 %v10710, %v10717
    %v10722 = vpack.c.bf16 %v10718, %v10718
    %v10723 = vpack.c.bf16 %v10719, %v10719
    %v10724 = vpack.c.bf16 %v10720, %v10720
    %v10725 = vpack.c.bf16 %v10721, %v10721
    %s10726 = scalar_lea.vmem [#allocation2], 11264
    %v10727 = vld [vmem:[%s10726] sm:$0xff]
    %v10728 = vld [vmem:[%s10726 + $0x8] sm:$0xff]
    %v10729 = vld [vmem:[%s10726 + $0x10] sm:$0xff]
    %v10730 = vld [vmem:[%s10726 + $0x18] sm:$0xff]
    %v10731 = vld [vmem:[%s10726 + $0x20] sm:$0xff]
    %v10732 = vld [vmem:[%s10726 + $0x28] sm:$0xff]
    %v10733 = vld [vmem:[%s10726 + $0x30] sm:$0xff]
    %v10734 = vld [vmem:[%s10726 + $0x38] sm:$0xff]
    %v10735 = vld [vmem:[%s10726 + $0x40] sm:$0xff]
    %v10736 = vld [vmem:[%s10726 + $0x48] sm:$0xff]
    %v10737 = vld [vmem:[%s10726 + $0x50] sm:$0xff]
    %v10738 = vld [vmem:[%s10726 + $0x58] sm:$0xff]
    %v10739 = vld [vmem:[%s10726 + $0x60] sm:$0xff]
    %v10740 = vld [vmem:[%s10726 + $0x68] sm:$0xff]
    %v10741 = vld [vmem:[%s10726 + $0x70] sm:$0xff]
    %v10742 = vld [vmem:[%s10726 + $0x78] sm:$0xff]
    %v10743 = vld [vmem:[%s10726 + $0x80] sm:$0xff]
    %v10744 = vld [vmem:[%s10726 + $0x88] sm:$0xff]
    %v10745 = vld [vmem:[%s10726 + $0x90] sm:$0xff]
    %v10746 = vld [vmem:[%s10726 + $0x98] sm:$0xff]
    %v10747 = vld [vmem:[%s10726 + $0xa0] sm:$0xff]
    %v10748 = vld [vmem:[%s10726 + $0xa8] sm:$0xff]
    %v10749 = vld [vmem:[%s10726 + $0xb0] sm:$0xff]
    %v10750 = vld [vmem:[%s10726 + $0xb8] sm:$0xff]
    %v10751 = vld [vmem:[%s10726 + $0xc0] sm:$0xff]
    %v10752 = vld [vmem:[%s10726 + $0xc8] sm:$0xff]
    %v10753 = vld [vmem:[%s10726 + $0xd0] sm:$0xff]
    %v10754 = vld [vmem:[%s10726 + $0xd8] sm:$0xff]
    %v10755 = vld [vmem:[%s10726 + $0xe0] sm:$0xff]
    %v10756 = vld [vmem:[%s10726 + $0xe8] sm:$0xff]
    %v10757 = vld [vmem:[%s10726 + $0xf0] sm:$0xff]
    %v10758 = vld [vmem:[%s10726 + $0xf8] sm:$0xff]
    %v10759 = vld [vmem:[%s10726 + $0x100] sm:$0xff]
    %v10760 = vld [vmem:[%s10726 + $0x108] sm:$0xff]
    %v10761 = vld [vmem:[%s10726 + $0x110] sm:$0xff]
    %v10762 = vld [vmem:[%s10726 + $0x118] sm:$0xff]
    %v10763 = vld [vmem:[%s10726 + $0x120] sm:$0xff]
    %v10764 = vld [vmem:[%s10726 + $0x128] sm:$0xff]
    %v10765 = vld [vmem:[%s10726 + $0x130] sm:$0xff]
    %v10766 = vld [vmem:[%s10726 + $0x138] sm:$0xff]
    %v10767 = vld [vmem:[%s10726 + $0x140] sm:$0xff]
    %v10768 = vld [vmem:[%s10726 + $0x148] sm:$0xff]
    %v10769 = vld [vmem:[%s10726 + $0x150] sm:$0xff]
    %v10770 = vld [vmem:[%s10726 + $0x158] sm:$0xff]
    %v10771 = vld [vmem:[%s10726 + $0x160] sm:$0xff]
    %v10772 = vld [vmem:[%s10726 + $0x168] sm:$0xff]
    %v10773 = vld [vmem:[%s10726 + $0x170] sm:$0xff]
    %v10774 = vld [vmem:[%s10726 + $0x178] sm:$0xff]
    %v10775 = vld [vmem:[%s10726 + $0x180] sm:$0xff]
    %v10776 = vld [vmem:[%s10726 + $0x188] sm:$0xff]
    %v10777 = vld [vmem:[%s10726 + $0x190] sm:$0xff]
    %v10778 = vld [vmem:[%s10726 + $0x198] sm:$0xff]
    %v10779 = vld [vmem:[%s10726 + $0x1a0] sm:$0xff]
    %v10780 = vld [vmem:[%s10726 + $0x1a8] sm:$0xff]
    %v10781 = vld [vmem:[%s10726 + $0x1b0] sm:$0xff]
    %v10782 = vld [vmem:[%s10726 + $0x1b8] sm:$0xff]
    %v10783 = vld [vmem:[%s10726 + $0x1c0] sm:$0xff]
    %v10784 = vld [vmem:[%s10726 + $0x1c8] sm:$0xff]
    %v10785 = vld [vmem:[%s10726 + $0x1d0] sm:$0xff]
    %v10786 = vld [vmem:[%s10726 + $0x1d8] sm:$0xff]
    %v10787 = vld [vmem:[%s10726 + $0x1e0] sm:$0xff]
    %v10788 = vld [vmem:[%s10726 + $0x1e8] sm:$0xff]
    %v10789 = vld [vmem:[%s10726 + $0x1f0] sm:$0xff]
    %v10790 = vld [vmem:[%s10726 + $0x1f8] sm:$0xff]
    %v10791 = vld [vmem:[%s10726 + $0x200] sm:$0xff]
    %v10792 = vld [vmem:[%s10726 + $0x208] sm:$0xff]
    %v10793 = vld [vmem:[%s10726 + $0x210] sm:$0xff]
    %v10794 = vld [vmem:[%s10726 + $0x218] sm:$0xff]
    %v10795 = vld [vmem:[%s10726 + $0x220] sm:$0xff]
    %v10796 = vld [vmem:[%s10726 + $0x228] sm:$0xff]
    %v10797 = vld [vmem:[%s10726 + $0x230] sm:$0xff]
    %v10798 = vld [vmem:[%s10726 + $0x238] sm:$0xff]
    %v10799 = vld [vmem:[%s10726 + $0x240] sm:$0xff]
    %v10800 = vld [vmem:[%s10726 + $0x248] sm:$0xff]
    %v10801 = vld [vmem:[%s10726 + $0x250] sm:$0xff]
    %v10802 = vld [vmem:[%s10726 + $0x258] sm:$0xff]
    %v10803 = vld [vmem:[%s10726 + $0x260] sm:$0xff]
    %v10804 = vld [vmem:[%s10726 + $0x268] sm:$0xff]
    %v10805 = vld [vmem:[%s10726 + $0x270] sm:$0xff]
    %v10806 = vld [vmem:[%s10726 + $0x278] sm:$0xff]
    %v10807 = vld [vmem:[%s10726 + $0x280] sm:$0xff]
    %v10808 = vld [vmem:[%s10726 + $0x288] sm:$0xff]
    %v10809 = vld [vmem:[%s10726 + $0x290] sm:$0xff]
    %v10810 = vld [vmem:[%s10726 + $0x298] sm:$0xff]
    %v10811 = vld [vmem:[%s10726 + $0x2a0] sm:$0xff]
    %v10812 = vld [vmem:[%s10726 + $0x2a8] sm:$0xff]
    %v10813 = vld [vmem:[%s10726 + $0x2b0] sm:$0xff]
    %v10814 = vld [vmem:[%s10726 + $0x2b8] sm:$0xff]
    %v10815 = vld [vmem:[%s10726 + $0x2c0] sm:$0xff]
    %v10816 = vld [vmem:[%s10726 + $0x2c8] sm:$0xff]
    %v10817 = vld [vmem:[%s10726 + $0x2d0] sm:$0xff]
    %v10818 = vld [vmem:[%s10726 + $0x2d8] sm:$0xff]
    %v10819 = vld [vmem:[%s10726 + $0x2e0] sm:$0xff]
    %v10820 = vld [vmem:[%s10726 + $0x2e8] sm:$0xff]
    %v10821 = vld [vmem:[%s10726 + $0x2f0] sm:$0xff]
    %v10822 = vld [vmem:[%s10726 + $0x2f8] sm:$0xff]
    %v10823 = vld [vmem:[%s10726 + $0x300] sm:$0xff]
    %v10824 = vld [vmem:[%s10726 + $0x308] sm:$0xff]
    %v10825 = vld [vmem:[%s10726 + $0x310] sm:$0xff]
    %v10826 = vld [vmem:[%s10726 + $0x318] sm:$0xff]
    %v10827 = vld [vmem:[%s10726 + $0x320] sm:$0xff]
    %v10828 = vld [vmem:[%s10726 + $0x328] sm:$0xff]
    %v10829 = vld [vmem:[%s10726 + $0x330] sm:$0xff]
    %v10830 = vld [vmem:[%s10726 + $0x338] sm:$0xff]
    %v10831 = vld [vmem:[%s10726 + $0x340] sm:$0xff]
    %v10832 = vld [vmem:[%s10726 + $0x348] sm:$0xff]
    %v10833 = vld [vmem:[%s10726 + $0x350] sm:$0xff]
    %v10834 = vld [vmem:[%s10726 + $0x358] sm:$0xff]
    %v10835 = vld [vmem:[%s10726 + $0x360] sm:$0xff]
    %v10836 = vld [vmem:[%s10726 + $0x368] sm:$0xff]
    %v10837 = vld [vmem:[%s10726 + $0x370] sm:$0xff]
    %v10838 = vld [vmem:[%s10726 + $0x378] sm:$0xff]
    %v10839 = vld [vmem:[%s10726 + $0x380] sm:$0xff]
    %v10840 = vld [vmem:[%s10726 + $0x388] sm:$0xff]
    %v10841 = vld [vmem:[%s10726 + $0x390] sm:$0xff]
    %v10842 = vld [vmem:[%s10726 + $0x398] sm:$0xff]
    %v10843 = vld [vmem:[%s10726 + $0x3a0] sm:$0xff]
    %v10844 = vld [vmem:[%s10726 + $0x3a8] sm:$0xff]
    %v10845 = vld [vmem:[%s10726 + $0x3b0] sm:$0xff]
    %v10846 = vld [vmem:[%s10726 + $0x3b8] sm:$0xff]
    %v10847 = vld [vmem:[%s10726 + $0x3c0] sm:$0xff]
    %v10848 = vld [vmem:[%s10726 + $0x3c8] sm:$0xff]
    %v10849 = vld [vmem:[%s10726 + $0x3d0] sm:$0xff]
    %v10850 = vld [vmem:[%s10726 + $0x3d8] sm:$0xff]
    %v10851 = vld [vmem:[%s10726 + $0x3e0] sm:$0xff]
    %v10852 = vld [vmem:[%s10726 + $0x3e8] sm:$0xff]
    %v10853 = vld [vmem:[%s10726 + $0x3f0] sm:$0xff]
    %v10854 = vld [vmem:[%s10726 + $0x3f8] sm:$0xff]
    %s10855 = scalar_lea.vmem [#allocation4], 44
    %v10856 = vld [vmem:[%s10855] sm:$0xf]
    %v10858 = vlaneseq
    %v10859 = vshrl.u32 %v10858, 7
    %v10860 = vsub.s32 0, %v10859
    %v10861 = vrot.slane %v10856, %v10860
    %v10862 = vlaneseq
    %v10863 = vshrl.u32 %v10862, 7
    %v10864 = vsub.s32 1, %v10863
    %v10865 = vrot.slane %v10856, %v10864
    %v10866 = vlaneseq
    %v10867 = vshrl.u32 %v10866, 7
    %v10868 = vsub.s32 2, %v10867
    %v10869 = vrot.slane %v10856, %v10868
    %v10870 = vlaneseq
    %v10871 = vshrl.u32 %v10870, 7
    %v10872 = vsub.s32 3, %v10871
    %v10873 = vrot.slane %v10856, %v10872
    %v11006 = vunpack.c.l.b16 %v10727
    %v11007 = vunpack.c.h.b16 %v10727
    %v11008 = vunpack.c.l.b16 %v10728
    %v11009 = vunpack.c.h.b16 %v10728
    %v11010 = vunpack.c.l.b16 %v10729
    %v11011 = vunpack.c.h.b16 %v10729
    %v11012 = vunpack.c.l.b16 %v10730
    %v11013 = vunpack.c.h.b16 %v10730
    %v11014 = vunpack.c.l.b16 %v10731
    %v11015 = vunpack.c.h.b16 %v10731
    %v11016 = vunpack.c.l.b16 %v10732
    %v11017 = vunpack.c.h.b16 %v10732
    %v11018 = vunpack.c.l.b16 %v10733
    %v11019 = vunpack.c.h.b16 %v10733
    %v11020 = vunpack.c.l.b16 %v10734
    %v11021 = vunpack.c.h.b16 %v10734
    %v11022 = vunpack.c.l.b16 %v10735
    %v11023 = vunpack.c.h.b16 %v10735
    %v11024 = vunpack.c.l.b16 %v10736
    %v11025 = vunpack.c.h.b16 %v10736
    %v11026 = vunpack.c.l.b16 %v10737
    %v11027 = vunpack.c.h.b16 %v10737
    %v11028 = vunpack.c.l.b16 %v10738
    %v11029 = vunpack.c.h.b16 %v10738
    %v11030 = vunpack.c.l.b16 %v10739
    %v11031 = vunpack.c.h.b16 %v10739
    %v11032 = vunpack.c.l.b16 %v10740
    %v11033 = vunpack.c.h.b16 %v10740
    %v11034 = vunpack.c.l.b16 %v10741
    %v11035 = vunpack.c.h.b16 %v10741
    %v11036 = vunpack.c.l.b16 %v10742
    %v11037 = vunpack.c.h.b16 %v10742
    %v11038 = vunpack.c.l.b16 %v10743
    %v11039 = vunpack.c.h.b16 %v10743
    %v11040 = vunpack.c.l.b16 %v10744
    %v11041 = vunpack.c.h.b16 %v10744
    %v11042 = vunpack.c.l.b16 %v10745
    %v11043 = vunpack.c.h.b16 %v10745
    %v11044 = vunpack.c.l.b16 %v10746
    %v11045 = vunpack.c.h.b16 %v10746
    %v11046 = vunpack.c.l.b16 %v10747
    %v11047 = vunpack.c.h.b16 %v10747
    %v11048 = vunpack.c.l.b16 %v10748
    %v11049 = vunpack.c.h.b16 %v10748
    %v11050 = vunpack.c.l.b16 %v10749
    %v11051 = vunpack.c.h.b16 %v10749
    %v11052 = vunpack.c.l.b16 %v10750
    %v11053 = vunpack.c.h.b16 %v10750
    %v11054 = vunpack.c.l.b16 %v10751
    %v11055 = vunpack.c.h.b16 %v10751
    %v11056 = vunpack.c.l.b16 %v10752
    %v11057 = vunpack.c.h.b16 %v10752
    %v11058 = vunpack.c.l.b16 %v10753
    %v11059 = vunpack.c.h.b16 %v10753
    %v11060 = vunpack.c.l.b16 %v10754
    %v11061 = vunpack.c.h.b16 %v10754
    %v11062 = vunpack.c.l.b16 %v10755
    %v11063 = vunpack.c.h.b16 %v10755
    %v11064 = vunpack.c.l.b16 %v10756
    %v11065 = vunpack.c.h.b16 %v10756
    %v11066 = vunpack.c.l.b16 %v10757
    %v11067 = vunpack.c.h.b16 %v10757
    %v11068 = vunpack.c.l.b16 %v10758
    %v11069 = vunpack.c.h.b16 %v10758
    %v11070 = vunpack.c.l.b16 %v10759
    %v11071 = vunpack.c.h.b16 %v10759
    %v11072 = vunpack.c.l.b16 %v10760
    %v11073 = vunpack.c.h.b16 %v10760
    %v11074 = vunpack.c.l.b16 %v10761
    %v11075 = vunpack.c.h.b16 %v10761
    %v11076 = vunpack.c.l.b16 %v10762
    %v11077 = vunpack.c.h.b16 %v10762
    %v11078 = vunpack.c.l.b16 %v10763
    %v11079 = vunpack.c.h.b16 %v10763
    %v11080 = vunpack.c.l.b16 %v10764
    %v11081 = vunpack.c.h.b16 %v10764
    %v11082 = vunpack.c.l.b16 %v10765
    %v11083 = vunpack.c.h.b16 %v10765
    %v11084 = vunpack.c.l.b16 %v10766
    %v11085 = vunpack.c.h.b16 %v10766
    %v11086 = vunpack.c.l.b16 %v10767
    %v11087 = vunpack.c.h.b16 %v10767
    %v11088 = vunpack.c.l.b16 %v10768
    %v11089 = vunpack.c.h.b16 %v10768
    %v11090 = vunpack.c.l.b16 %v10769
    %v11091 = vunpack.c.h.b16 %v10769
    %v11092 = vunpack.c.l.b16 %v10770
    %v11093 = vunpack.c.h.b16 %v10770
    %v11094 = vunpack.c.l.b16 %v10771
    %v11095 = vunpack.c.h.b16 %v10771
    %v11096 = vunpack.c.l.b16 %v10772
    %v11097 = vunpack.c.h.b16 %v10772
    %v11098 = vunpack.c.l.b16 %v10773
    %v11099 = vunpack.c.h.b16 %v10773
    %v11100 = vunpack.c.l.b16 %v10774
    %v11101 = vunpack.c.h.b16 %v10774
    %v11102 = vunpack.c.l.b16 %v10775
    %v11103 = vunpack.c.h.b16 %v10775
    %v11104 = vunpack.c.l.b16 %v10776
    %v11105 = vunpack.c.h.b16 %v10776
    %v11106 = vunpack.c.l.b16 %v10777
    %v11107 = vunpack.c.h.b16 %v10777
    %v11108 = vunpack.c.l.b16 %v10778
    %v11109 = vunpack.c.h.b16 %v10778
    %v11110 = vunpack.c.l.b16 %v10779
    %v11111 = vunpack.c.h.b16 %v10779
    %v11112 = vunpack.c.l.b16 %v10780
    %v11113 = vunpack.c.h.b16 %v10780
    %v11114 = vunpack.c.l.b16 %v10781
    %v11115 = vunpack.c.h.b16 %v10781
    %v11116 = vunpack.c.l.b16 %v10782
    %v11117 = vunpack.c.h.b16 %v10782
    %v11118 = vunpack.c.l.b16 %v10783
    %v11119 = vunpack.c.h.b16 %v10783
    %v11120 = vunpack.c.l.b16 %v10784
    %v11121 = vunpack.c.h.b16 %v10784
    %v11122 = vunpack.c.l.b16 %v10785
    %v11123 = vunpack.c.h.b16 %v10785
    %v11124 = vunpack.c.l.b16 %v10786
    %v11125 = vunpack.c.h.b16 %v10786
    %v11126 = vunpack.c.l.b16 %v10787
    %v11127 = vunpack.c.h.b16 %v10787
    %v11128 = vunpack.c.l.b16 %v10788
    %v11129 = vunpack.c.h.b16 %v10788
    %v11130 = vunpack.c.l.b16 %v10789
    %v11131 = vunpack.c.h.b16 %v10789
    %v11132 = vunpack.c.l.b16 %v10790
    %v11133 = vunpack.c.h.b16 %v10790
    %v11134 = vunpack.c.l.b16 %v10791
    %v11135 = vunpack.c.h.b16 %v10791
    %v11136 = vunpack.c.l.b16 %v10792
    %v11137 = vunpack.c.h.b16 %v10792
    %v11138 = vunpack.c.l.b16 %v10793
    %v11139 = vunpack.c.h.b16 %v10793
    %v11140 = vunpack.c.l.b16 %v10794
    %v11141 = vunpack.c.h.b16 %v10794
    %v11142 = vunpack.c.l.b16 %v10795
    %v11143 = vunpack.c.h.b16 %v10795
    %v11144 = vunpack.c.l.b16 %v10796
    %v11145 = vunpack.c.h.b16 %v10796
    %v11146 = vunpack.c.l.b16 %v10797
    %v11147 = vunpack.c.h.b16 %v10797
    %v11148 = vunpack.c.l.b16 %v10798
    %v11149 = vunpack.c.h.b16 %v10798
    %v11150 = vunpack.c.l.b16 %v10799
    %v11151 = vunpack.c.h.b16 %v10799
    %v11152 = vunpack.c.l.b16 %v10800
    %v11153 = vunpack.c.h.b16 %v10800
    %v11154 = vunpack.c.l.b16 %v10801
    %v11155 = vunpack.c.h.b16 %v10801
    %v11156 = vunpack.c.l.b16 %v10802
    %v11157 = vunpack.c.h.b16 %v10802
    %v11158 = vunpack.c.l.b16 %v10803
    %v11159 = vunpack.c.h.b16 %v10803
    %v11160 = vunpack.c.l.b16 %v10804
    %v11161 = vunpack.c.h.b16 %v10804
    %v11162 = vunpack.c.l.b16 %v10805
    %v11163 = vunpack.c.h.b16 %v10805
    %v11164 = vunpack.c.l.b16 %v10806
    %v11165 = vunpack.c.h.b16 %v10806
    %v11166 = vunpack.c.l.b16 %v10807
    %v11167 = vunpack.c.h.b16 %v10807
    %v11168 = vunpack.c.l.b16 %v10808
    %v11169 = vunpack.c.h.b16 %v10808
    %v11170 = vunpack.c.l.b16 %v10809
    %v11171 = vunpack.c.h.b16 %v10809
    %v11172 = vunpack.c.l.b16 %v10810
    %v11173 = vunpack.c.h.b16 %v10810
    %v11174 = vunpack.c.l.b16 %v10811
    %v11175 = vunpack.c.h.b16 %v10811
    %v11176 = vunpack.c.l.b16 %v10812
    %v11177 = vunpack.c.h.b16 %v10812
    %v11178 = vunpack.c.l.b16 %v10813
    %v11179 = vunpack.c.h.b16 %v10813
    %v11180 = vunpack.c.l.b16 %v10814
    %v11181 = vunpack.c.h.b16 %v10814
    %v11182 = vunpack.c.l.b16 %v10815
    %v11183 = vunpack.c.h.b16 %v10815
    %v11184 = vunpack.c.l.b16 %v10816
    %v11185 = vunpack.c.h.b16 %v10816
    %v11186 = vunpack.c.l.b16 %v10817
    %v11187 = vunpack.c.h.b16 %v10817
    %v11188 = vunpack.c.l.b16 %v10818
    %v11189 = vunpack.c.h.b16 %v10818
    %v11190 = vunpack.c.l.b16 %v10819
    %v11191 = vunpack.c.h.b16 %v10819
    %v11192 = vunpack.c.l.b16 %v10820
    %v11193 = vunpack.c.h.b16 %v10820
    %v11194 = vunpack.c.l.b16 %v10821
    %v11195 = vunpack.c.h.b16 %v10821
    %v11196 = vunpack.c.l.b16 %v10822
    %v11197 = vunpack.c.h.b16 %v10822
    %v11198 = vunpack.c.l.b16 %v10823
    %v11199 = vunpack.c.h.b16 %v10823
    %v11200 = vunpack.c.l.b16 %v10824
    %v11201 = vunpack.c.h.b16 %v10824
    %v11202 = vunpack.c.l.b16 %v10825
    %v11203 = vunpack.c.h.b16 %v10825
    %v11204 = vunpack.c.l.b16 %v10826
    %v11205 = vunpack.c.h.b16 %v10826
    %v11206 = vunpack.c.l.b16 %v10827
    %v11207 = vunpack.c.h.b16 %v10827
    %v11208 = vunpack.c.l.b16 %v10828
    %v11209 = vunpack.c.h.b16 %v10828
    %v11210 = vunpack.c.l.b16 %v10829
    %v11211 = vunpack.c.h.b16 %v10829
    %v11212 = vunpack.c.l.b16 %v10830
    %v11213 = vunpack.c.h.b16 %v10830
    %v11214 = vunpack.c.l.b16 %v10831
    %v11215 = vunpack.c.h.b16 %v10831
    %v11216 = vunpack.c.l.b16 %v10832
    %v11217 = vunpack.c.h.b16 %v10832
    %v11218 = vunpack.c.l.b16 %v10833
    %v11219 = vunpack.c.h.b16 %v10833
    %v11220 = vunpack.c.l.b16 %v10834
    %v11221 = vunpack.c.h.b16 %v10834
    %v11222 = vunpack.c.l.b16 %v10835
    %v11223 = vunpack.c.h.b16 %v10835
    %v11224 = vunpack.c.l.b16 %v10836
    %v11225 = vunpack.c.h.b16 %v10836
    %v11226 = vunpack.c.l.b16 %v10837
    %v11227 = vunpack.c.h.b16 %v10837
    %v11228 = vunpack.c.l.b16 %v10838
    %v11229 = vunpack.c.h.b16 %v10838
    %v11230 = vunpack.c.l.b16 %v10839
    %v11231 = vunpack.c.h.b16 %v10839
    %v11232 = vunpack.c.l.b16 %v10840
    %v11233 = vunpack.c.h.b16 %v10840
    %v11234 = vunpack.c.l.b16 %v10841
    %v11235 = vunpack.c.h.b16 %v10841
    %v11236 = vunpack.c.l.b16 %v10842
    %v11237 = vunpack.c.h.b16 %v10842
    %v11238 = vunpack.c.l.b16 %v10843
    %v11239 = vunpack.c.h.b16 %v10843
    %v11240 = vunpack.c.l.b16 %v10844
    %v11241 = vunpack.c.h.b16 %v10844
    %v11242 = vunpack.c.l.b16 %v10845
    %v11243 = vunpack.c.h.b16 %v10845
    %v11244 = vunpack.c.l.b16 %v10846
    %v11245 = vunpack.c.h.b16 %v10846
    %v11246 = vunpack.c.l.b16 %v10847
    %v11247 = vunpack.c.h.b16 %v10847
    %v11248 = vunpack.c.l.b16 %v10848
    %v11249 = vunpack.c.h.b16 %v10848
    %v11250 = vunpack.c.l.b16 %v10849
    %v11251 = vunpack.c.h.b16 %v10849
    %v11252 = vunpack.c.l.b16 %v10850
    %v11253 = vunpack.c.h.b16 %v10850
    %v11254 = vunpack.c.l.b16 %v10851
    %v11255 = vunpack.c.h.b16 %v10851
    %v11256 = vunpack.c.l.b16 %v10852
    %v11257 = vunpack.c.h.b16 %v10852
    %v11258 = vunpack.c.l.b16 %v10853
    %v11259 = vunpack.c.h.b16 %v10853
    %v11260 = vunpack.c.l.b16 %v10854
    %v11261 = vunpack.c.h.b16 %v10854
    %v11262 = vpack.c.b16 %v11010, %v11006
    %v11263 = vpack.c.b16 %v11011, %v11007
    %v11264 = vpack.c.b16 %v11012, %v11008
    %v11265 = vpack.c.b16 %v11013, %v11009
    %v11266 = vpack.c.b16 %v11018, %v11014
    %v11267 = vpack.c.b16 %v11019, %v11015
    %v11268 = vpack.c.b16 %v11020, %v11016
    %v11269 = vpack.c.b16 %v11021, %v11017
    %v11270 = vpack.c.b16 %v11026, %v11022
    %v11271 = vpack.c.b16 %v11027, %v11023
    %v11272 = vpack.c.b16 %v11028, %v11024
    %v11273 = vpack.c.b16 %v11029, %v11025
    %v11274 = vpack.c.b16 %v11034, %v11030
    %v11275 = vpack.c.b16 %v11035, %v11031
    %v11276 = vpack.c.b16 %v11036, %v11032
    %v11277 = vpack.c.b16 %v11037, %v11033
    %v11278 = vpack.c.b16 %v11042, %v11038
    %v11279 = vpack.c.b16 %v11043, %v11039
    %v11280 = vpack.c.b16 %v11044, %v11040
    %v11281 = vpack.c.b16 %v11045, %v11041
    %v11282 = vpack.c.b16 %v11050, %v11046
    %v11283 = vpack.c.b16 %v11051, %v11047
    %v11284 = vpack.c.b16 %v11052, %v11048
    %v11285 = vpack.c.b16 %v11053, %v11049
    %v11286 = vpack.c.b16 %v11058, %v11054
    %v11287 = vpack.c.b16 %v11059, %v11055
    %v11288 = vpack.c.b16 %v11060, %v11056
    %v11289 = vpack.c.b16 %v11061, %v11057
    %v11290 = vpack.c.b16 %v11066, %v11062
    %v11291 = vpack.c.b16 %v11067, %v11063
    %v11292 = vpack.c.b16 %v11068, %v11064
    %v11293 = vpack.c.b16 %v11069, %v11065
    %v11294 = vpack.c.b16 %v11074, %v11070
    %v11295 = vpack.c.b16 %v11075, %v11071
    %v11296 = vpack.c.b16 %v11076, %v11072
    %v11297 = vpack.c.b16 %v11077, %v11073
    %v11298 = vpack.c.b16 %v11082, %v11078
    %v11299 = vpack.c.b16 %v11083, %v11079
    %v11300 = vpack.c.b16 %v11084, %v11080
    %v11301 = vpack.c.b16 %v11085, %v11081
    %v11302 = vpack.c.b16 %v11090, %v11086
    %v11303 = vpack.c.b16 %v11091, %v11087
    %v11304 = vpack.c.b16 %v11092, %v11088
    %v11305 = vpack.c.b16 %v11093, %v11089
    %v11306 = vpack.c.b16 %v11098, %v11094
    %v11307 = vpack.c.b16 %v11099, %v11095
    %v11308 = vpack.c.b16 %v11100, %v11096
    %v11309 = vpack.c.b16 %v11101, %v11097
    %v11310 = vpack.c.b16 %v11106, %v11102
    %v11311 = vpack.c.b16 %v11107, %v11103
    %v11312 = vpack.c.b16 %v11108, %v11104
    %v11313 = vpack.c.b16 %v11109, %v11105
    %v11314 = vpack.c.b16 %v11114, %v11110
    %v11315 = vpack.c.b16 %v11115, %v11111
    %v11316 = vpack.c.b16 %v11116, %v11112
    %v11317 = vpack.c.b16 %v11117, %v11113
    %v11318 = vpack.c.b16 %v11122, %v11118
    %v11319 = vpack.c.b16 %v11123, %v11119
    %v11320 = vpack.c.b16 %v11124, %v11120
    %v11321 = vpack.c.b16 %v11125, %v11121
    %v11322 = vpack.c.b16 %v11130, %v11126
    %v11323 = vpack.c.b16 %v11131, %v11127
    %v11324 = vpack.c.b16 %v11132, %v11128
    %v11325 = vpack.c.b16 %v11133, %v11129
    %v11326 = vpack.c.b16 %v11138, %v11134
    %v11327 = vpack.c.b16 %v11139, %v11135
    %v11328 = vpack.c.b16 %v11140, %v11136
    %v11329 = vpack.c.b16 %v11141, %v11137
    %v11330 = vpack.c.b16 %v11146, %v11142
    %v11331 = vpack.c.b16 %v11147, %v11143
    %v11332 = vpack.c.b16 %v11148, %v11144
    %v11333 = vpack.c.b16 %v11149, %v11145
    %v11334 = vpack.c.b16 %v11154, %v11150
    %v11335 = vpack.c.b16 %v11155, %v11151
    %v11336 = vpack.c.b16 %v11156, %v11152
    %v11337 = vpack.c.b16 %v11157, %v11153
    %v11338 = vpack.c.b16 %v11162, %v11158
    %v11339 = vpack.c.b16 %v11163, %v11159
    %v11340 = vpack.c.b16 %v11164, %v11160
    %v11341 = vpack.c.b16 %v11165, %v11161
    %v11342 = vpack.c.b16 %v11170, %v11166
    %v11343 = vpack.c.b16 %v11171, %v11167
    %v11344 = vpack.c.b16 %v11172, %v11168
    %v11345 = vpack.c.b16 %v11173, %v11169
    %v11346 = vpack.c.b16 %v11178, %v11174
    %v11347 = vpack.c.b16 %v11179, %v11175
    %v11348 = vpack.c.b16 %v11180, %v11176
    %v11349 = vpack.c.b16 %v11181, %v11177
    %v11350 = vpack.c.b16 %v11186, %v11182
    %v11351 = vpack.c.b16 %v11187, %v11183
    %v11352 = vpack.c.b16 %v11188, %v11184
    %v11353 = vpack.c.b16 %v11189, %v11185
    %v11354 = vpack.c.b16 %v11194, %v11190
    %v11355 = vpack.c.b16 %v11195, %v11191
    %v11356 = vpack.c.b16 %v11196, %v11192
    %v11357 = vpack.c.b16 %v11197, %v11193
    %v11358 = vpack.c.b16 %v11202, %v11198
    %v11359 = vpack.c.b16 %v11203, %v11199
    %v11360 = vpack.c.b16 %v11204, %v11200
    %v11361 = vpack.c.b16 %v11205, %v11201
    %v11362 = vpack.c.b16 %v11210, %v11206
    %v11363 = vpack.c.b16 %v11211, %v11207
    %v11364 = vpack.c.b16 %v11212, %v11208
    %v11365 = vpack.c.b16 %v11213, %v11209
    %v11366 = vpack.c.b16 %v11218, %v11214
    %v11367 = vpack.c.b16 %v11219, %v11215
    %v11368 = vpack.c.b16 %v11220, %v11216
    %v11369 = vpack.c.b16 %v11221, %v11217
    %v11370 = vpack.c.b16 %v11226, %v11222
    %v11371 = vpack.c.b16 %v11227, %v11223
    %v11372 = vpack.c.b16 %v11228, %v11224
    %v11373 = vpack.c.b16 %v11229, %v11225
    %v11374 = vpack.c.b16 %v11234, %v11230
    %v11375 = vpack.c.b16 %v11235, %v11231
    %v11376 = vpack.c.b16 %v11236, %v11232
    %v11377 = vpack.c.b16 %v11237, %v11233
    %v11378 = vpack.c.b16 %v11242, %v11238
    %v11379 = vpack.c.b16 %v11243, %v11239
    %v11380 = vpack.c.b16 %v11244, %v11240
    %v11381 = vpack.c.b16 %v11245, %v11241
    %v11382 = vpack.c.b16 %v11250, %v11246
    %v11383 = vpack.c.b16 %v11251, %v11247
    %v11384 = vpack.c.b16 %v11252, %v11248
    %v11385 = vpack.c.b16 %v11253, %v11249
    %v11386 = vpack.c.b16 %v11258, %v11254
    %v11387 = vpack.c.b16 %v11259, %v11255
    %v11388 = vpack.c.b16 %v11260, %v11256
    %v11389 = vpack.c.b16 %v11261, %v11257
    %11518 = vmatprep.subr.bf16.mxu0 %v11263
    %11519 = vmatpush1.bf16.msra.mxu0 %v11262
    %11520 = vmatprep.subr.bf16.mxu0 %v11267
    %11521 = vmatpush1.bf16.msra.mxu0 %v11266
    %11522 = vmatprep.subr.bf16.mxu0 %v11271
    %11523 = vmatpush1.bf16.msra.mxu0 %v11270
    %11524 = vmatprep.subr.bf16.mxu0 %v11275
    %11525 = vmatpush1.bf16.msra.mxu0 %v11274
    %11526 = vmatprep.subr.bf16.mxu0 %v11279
    %11527 = vmatpush1.bf16.msra.mxu0 %v11278
    %11528 = vmatprep.subr.bf16.mxu0 %v11283
    %11529 = vmatpush1.bf16.msra.mxu0 %v11282
    %11530 = vmatprep.subr.bf16.mxu0 %v11287
    %11531 = vmatpush1.bf16.msra.mxu0 %v11286
    %11532 = vmatprep.subr.bf16.mxu0 %v11291
    %11533 = vmatpush1.bf16.msra.mxu0 %v11290
    %11534 = vmatprep.subr.bf16.mxu0 %v11295
    %11535 = vmatpush1.bf16.msra.mxu0 %v11294
    %11536 = vmatprep.subr.bf16.mxu0 %v11299
    %11537 = vmatpush1.bf16.msra.mxu0 %v11298
    %11538 = vmatprep.subr.bf16.mxu0 %v11303
    %11539 = vmatpush1.bf16.msra.mxu0 %v11302
    %11540 = vmatprep.subr.bf16.mxu0 %v11307
    %11541 = vmatpush1.bf16.msra.mxu0 %v11306
    %11542 = vmatprep.subr.bf16.mxu0 %v11311
    %11543 = vmatpush1.bf16.msra.mxu0 %v11310
    %11544 = vmatprep.subr.bf16.mxu0 %v11315
    %11545 = vmatpush1.bf16.msra.mxu0 %v11314
    %11546 = vmatprep.subr.bf16.mxu0 %v11319
    %11547 = vmatpush1.bf16.msra.mxu0 %v11318
    %11548 = vmatprep.subr.bf16.mxu0 %v11323
    %11549 = vmatpush1.bf16.msra.mxu0 %v11322
    %11550 = vmatprep.mubr.bf16.mxu0 %v10723
    %11551 = vmatmul.mubr.bf16.gmra.mrb[0].mxu0 %v10722
    %v11552 = vpop.f32.mrb[0].mxu0
    %v11553 = vadd.f32 %v10861, %v11552
    %v11554 = vpop.f32.mrb[0].mxu0
    %v11555 = vadd.f32 %v10865, %v11554
    %v11556 = vpop.f32.mrb[0].mxu0
    %v11557 = vpop.f32.mrb[0].mxu0
    %11558 = vdwg.mxu0
    %11559 = vmatprep.subr.bf16.mxu0 %v11327
    %11560 = vmatpush1.bf16.msra.mxu0 %v11326
    %11561 = vmatprep.subr.bf16.mxu0 %v11331
    %11562 = vmatpush1.bf16.msra.mxu0 %v11330
    %11563 = vmatprep.subr.bf16.mxu0 %v11335
    %11564 = vmatpush1.bf16.msra.mxu0 %v11334
    %11565 = vmatprep.subr.bf16.mxu0 %v11339
    %11566 = vmatpush1.bf16.msra.mxu0 %v11338
    %11567 = vmatprep.subr.bf16.mxu0 %v11343
    %11568 = vmatpush1.bf16.msra.mxu0 %v11342
    %11569 = vmatprep.subr.bf16.mxu0 %v11347
    %11570 = vmatpush1.bf16.msra.mxu0 %v11346
    %11571 = vmatprep.subr.bf16.mxu0 %v11351
    %11572 = vmatpush1.bf16.msra.mxu0 %v11350
    %11573 = vmatprep.subr.bf16.mxu0 %v11355
    %11574 = vmatpush1.bf16.msra.mxu0 %v11354
    %11575 = vmatprep.subr.bf16.mxu0 %v11359
    %11576 = vmatpush1.bf16.msra.mxu0 %v11358
    %11577 = vmatprep.subr.bf16.mxu0 %v11363
    %11578 = vmatpush1.bf16.msra.mxu0 %v11362
    %11579 = vmatprep.subr.bf16.mxu0 %v11367
    %11580 = vmatpush1.bf16.msra.mxu0 %v11366
    %11581 = vmatprep.subr.bf16.mxu0 %v11371
    %11582 = vmatpush1.bf16.msra.mxu0 %v11370
    %11583 = vmatprep.subr.bf16.mxu0 %v11375
    %11584 = vmatpush1.bf16.msra.mxu0 %v11374
    %11585 = vmatprep.subr.bf16.mxu0 %v11379
    %11586 = vmatpush1.bf16.msra.mxu0 %v11378
    %11587 = vmatprep.subr.bf16.mxu0 %v11383
    %11588 = vmatpush1.bf16.msra.mxu0 %v11382
    %11589 = vmatprep.subr.bf16.mxu0 %v11387
    %11590 = vmatpush1.bf16.msra.mxu0 %v11386
    %11591 = vmatprep.mubr.bf16.mxu0 %v10725
    %11592 = vmatmul.mubr.bf16.gmra.mrb[0].mxu0 %v10724
    %v11593 = vpop.f32.mrb[0].mxu0
    %v11594 = vadd.f32 %v11553, %v11593
    %v11595 = vpop.f32.mrb[0].mxu0
    %v11596 = vadd.f32 %v11555, %v11595
    %v11597 = vpop.f32.mrb[0].mxu0
    %v11598 = vpop.f32.mrb[0].mxu0
    %11599 = vdwg.mxu0
    %11600 = vmatprep.subr.bf16.mxu0 %v11265
    %11601 = vmatpush1.bf16.msra.mxu0 %v11264
    %11602 = vmatprep.subr.bf16.mxu0 %v11269
    %11603 = vmatpush1.bf16.msra.mxu0 %v11268
    %11604 = vmatprep.subr.bf16.mxu0 %v11273
    %11605 = vmatpush1.bf16.msra.mxu0 %v11272
    %11606 = vmatprep.subr.bf16.mxu0 %v11277
    %11607 = vmatpush1.bf16.msra.mxu0 %v11276
    %11608 = vmatprep.subr.bf16.mxu0 %v11281
    %11609 = vmatpush1.bf16.msra.mxu0 %v11280
    %11610 = vmatprep.subr.bf16.mxu0 %v11285
    %11611 = vmatpush1.bf16.msra.mxu0 %v11284
    %11612 = vmatprep.subr.bf16.mxu0 %v11289
    %11613 = vmatpush1.bf16.msra.mxu0 %v11288
    %11614 = vmatprep.subr.bf16.mxu0 %v11293
    %11615 = vmatpush1.bf16.msra.mxu0 %v11292
    %11616 = vmatprep.subr.bf16.mxu0 %v11297
    %11617 = vmatpush1.bf16.msra.mxu0 %v11296
    %11618 = vmatprep.subr.bf16.mxu0 %v11301
    %11619 = vmatpush1.bf16.msra.mxu0 %v11300
    %11620 = vmatprep.subr.bf16.mxu0 %v11305
    %11621 = vmatpush1.bf16.msra.mxu0 %v11304
    %11622 = vmatprep.subr.bf16.mxu0 %v11309
    %11623 = vmatpush1.bf16.msra.mxu0 %v11308
    %11624 = vmatprep.subr.bf16.mxu0 %v11313
    %11625 = vmatpush1.bf16.msra.mxu0 %v11312
    %11626 = vmatprep.subr.bf16.mxu0 %v11317
    %11627 = vmatpush1.bf16.msra.mxu0 %v11316
    %11628 = vmatprep.subr.bf16.mxu0 %v11321
    %11629 = vmatpush1.bf16.msra.mxu0 %v11320
    %11630 = vmatprep.subr.bf16.mxu0 %v11325
    %11631 = vmatpush1.bf16.msra.mxu0 %v11324
    %11632 = vmatprep.mubr.bf16.mxu0 %v10723
    %11633 = vmatmul.mubr.bf16.gmra.mrb[0].mxu0 %v10722
    %v11634 = vpop.f32.mrb[0].mxu0
    %v11635 = vadd.f32 %v10869, %v11634
    %v11636 = vpop.f32.mrb[0].mxu0
    %v11637 = vadd.f32 %v10873, %v11636
    %v11638 = vpop.f32.mrb[0].mxu0
    %v11639 = vpop.f32.mrb[0].mxu0
    %11640 = vdwg.mxu0
    %11641 = vmatprep.subr.bf16.mxu0 %v11329
    %11642 = vmatpush1.bf16.msra.mxu0 %v11328
    %11643 = vmatprep.subr.bf16.mxu0 %v11333
    %11644 = vmatpush1.bf16.msra.mxu0 %v11332
    %11645 = vmatprep.subr.bf16.mxu0 %v11337
    %11646 = vmatpush1.bf16.msra.mxu0 %v11336
    %11647 = vmatprep.subr.bf16.mxu0 %v11341
    %11648 = vmatpush1.bf16.msra.mxu0 %v11340
    %11649 = vmatprep.subr.bf16.mxu0 %v11345
    %11650 = vmatpush1.bf16.msra.mxu0 %v11344
    %11651 = vmatprep.subr.bf16.mxu0 %v11349
    %11652 = vmatpush1.bf16.msra.mxu0 %v11348
    %11653 = vmatprep.subr.bf16.mxu0 %v11353
    %11654 = vmatpush1.bf16.msra.mxu0 %v11352
    %11655 = vmatprep.subr.bf16.mxu0 %v11357
    %11656 = vmatpush1.bf16.msra.mxu0 %v11356
    %11657 = vmatprep.subr.bf16.mxu0 %v11361
    %11658 = vmatpush1.bf16.msra.mxu0 %v11360
    %11659 = vmatprep.subr.bf16.mxu0 %v11365
    %11660 = vmatpush1.bf16.msra.mxu0 %v11364
    %11661 = vmatprep.subr.bf16.mxu0 %v11369
    %11662 = vmatpush1.bf16.msra.mxu0 %v11368
    %11663 = vmatprep.subr.bf16.mxu0 %v11373
    %11664 = vmatpush1.bf16.msra.mxu0 %v11372
    %11665 = vmatprep.subr.bf16.mxu0 %v11377
    %11666 = vmatpush1.bf16.msra.mxu0 %v11376
    %11667 = vmatprep.subr.bf16.mxu0 %v11381
    %11668 = vmatpush1.bf16.msra.mxu0 %v11380
    %11669 = vmatprep.subr.bf16.mxu0 %v11385
    %11670 = vmatpush1.bf16.msra.mxu0 %v11384
    %11671 = vmatprep.subr.bf16.mxu0 %v11389
    %11672 = vmatpush1.bf16.msra.mxu0 %v11388
    %11673 = vmatprep.mubr.bf16.mxu0 %v10725
    %11674 = vmatmul.mubr.bf16.gmra.mrb[0].mxu0 %v10724
    %v11675 = vpop.f32.mrb[0].mxu0
    %v11676 = vadd.f32 %v11635, %v11675
    %v11677 = vpop.f32.mrb[0].mxu0
    %v11678 = vadd.f32 %v11637, %v11677
    %v11679 = vpop.f32.mrb[0].mxu0
    %v11680 = vpop.f32.mrb[0].mxu0
    %11681 = vdwg.mxu0
    %v11682 = vmul.f32 %v11594, 0.01
    %v11683 = vmul.f32 %v11596, 0.01
    %v11684 = vmul.f32 %v11676, 0.01
    %v11685 = vmul.f32 %v11678, 0.01
    %v11686 = vmax.f32 %v11594, %v11682
    %v11687 = vmax.f32 %v11596, %v11683
    %v11688 = vmax.f32 %v11676, %v11684
    %v11689 = vmax.f32 %v11678, %v11685
    %v11690 = vadd.f32 %v11686, %v10718
    %v11691 = vadd.f32 %v11687, %v10719
    %v11692 = vadd.f32 %v11688, %v10720
    %v11693 = vadd.f32 %v11689, %v10721
    %v11694 = vpack.c.bf16 %v11690, %v11690
    %v11695 = vpack.c.bf16 %v11691, %v11691
    %v11696 = vpack.c.bf16 %v11692, %v11692
    %v11697 = vpack.c.bf16 %v11693, %v11693
    %s11698 = scalar_lea.vmem [#allocation2], 12288
    %v11699 = vld [vmem:[%s11698] sm:$0xff]
    %v11700 = vld [vmem:[%s11698 + $0x8] sm:$0xff]
    %v11701 = vld [vmem:[%s11698 + $0x10] sm:$0xff]
    %v11702 = vld [vmem:[%s11698 + $0x18] sm:$0xff]
    %v11703 = vld [vmem:[%s11698 + $0x20] sm:$0xff]
    %v11704 = vld [vmem:[%s11698 + $0x28] sm:$0xff]
    %v11705 = vld [vmem:[%s11698 + $0x30] sm:$0xff]
    %v11706 = vld [vmem:[%s11698 + $0x38] sm:$0xff]
    %v11707 = vld [vmem:[%s11698 + $0x40] sm:$0xff]
    %v11708 = vld [vmem:[%s11698 + $0x48] sm:$0xff]
    %v11709 = vld [vmem:[%s11698 + $0x50] sm:$0xff]
    %v11710 = vld [vmem:[%s11698 + $0x58] sm:$0xff]
    %v11711 = vld [vmem:[%s11698 + $0x60] sm:$0xff]
    %v11712 = vld [vmem:[%s11698 + $0x68] sm:$0xff]
    %v11713 = vld [vmem:[%s11698 + $0x70] sm:$0xff]
    %v11714 = vld [vmem:[%s11698 + $0x78] sm:$0xff]
    %v11715 = vld [vmem:[%s11698 + $0x80] sm:$0xff]
    %v11716 = vld [vmem:[%s11698 + $0x88] sm:$0xff]
    %v11717 = vld [vmem:[%s11698 + $0x90] sm:$0xff]
    %v11718 = vld [vmem:[%s11698 + $0x98] sm:$0xff]
    %v11719 = vld [vmem:[%s11698 + $0xa0] sm:$0xff]
    %v11720 = vld [vmem:[%s11698 + $0xa8] sm:$0xff]
    %v11721 = vld [vmem:[%s11698 + $0xb0] sm:$0xff]
    %v11722 = vld [vmem:[%s11698 + $0xb8] sm:$0xff]
    %v11723 = vld [vmem:[%s11698 + $0xc0] sm:$0xff]
    %v11724 = vld [vmem:[%s11698 + $0xc8] sm:$0xff]
    %v11725 = vld [vmem:[%s11698 + $0xd0] sm:$0xff]
    %v11726 = vld [vmem:[%s11698 + $0xd8] sm:$0xff]
    %v11727 = vld [vmem:[%s11698 + $0xe0] sm:$0xff]
    %v11728 = vld [vmem:[%s11698 + $0xe8] sm:$0xff]
    %v11729 = vld [vmem:[%s11698 + $0xf0] sm:$0xff]
    %v11730 = vld [vmem:[%s11698 + $0xf8] sm:$0xff]
    %v11731 = vld [vmem:[%s11698 + $0x100] sm:$0xff]
    %v11732 = vld [vmem:[%s11698 + $0x108] sm:$0xff]
    %v11733 = vld [vmem:[%s11698 + $0x110] sm:$0xff]
    %v11734 = vld [vmem:[%s11698 + $0x118] sm:$0xff]
    %v11735 = vld [vmem:[%s11698 + $0x120] sm:$0xff]
    %v11736 = vld [vmem:[%s11698 + $0x128] sm:$0xff]
    %v11737 = vld [vmem:[%s11698 + $0x130] sm:$0xff]
    %v11738 = vld [vmem:[%s11698 + $0x138] sm:$0xff]
    %v11739 = vld [vmem:[%s11698 + $0x140] sm:$0xff]
    %v11740 = vld [vmem:[%s11698 + $0x148] sm:$0xff]
    %v11741 = vld [vmem:[%s11698 + $0x150] sm:$0xff]
    %v11742 = vld [vmem:[%s11698 + $0x158] sm:$0xff]
    %v11743 = vld [vmem:[%s11698 + $0x160] sm:$0xff]
    %v11744 = vld [vmem:[%s11698 + $0x168] sm:$0xff]
    %v11745 = vld [vmem:[%s11698 + $0x170] sm:$0xff]
    %v11746 = vld [vmem:[%s11698 + $0x178] sm:$0xff]
    %v11747 = vld [vmem:[%s11698 + $0x180] sm:$0xff]
    %v11748 = vld [vmem:[%s11698 + $0x188] sm:$0xff]
    %v11749 = vld [vmem:[%s11698 + $0x190] sm:$0xff]
    %v11750 = vld [vmem:[%s11698 + $0x198] sm:$0xff]
    %v11751 = vld [vmem:[%s11698 + $0x1a0] sm:$0xff]
    %v11752 = vld [vmem:[%s11698 + $0x1a8] sm:$0xff]
    %v11753 = vld [vmem:[%s11698 + $0x1b0] sm:$0xff]
    %v11754 = vld [vmem:[%s11698 + $0x1b8] sm:$0xff]
    %v11755 = vld [vmem:[%s11698 + $0x1c0] sm:$0xff]
    %v11756 = vld [vmem:[%s11698 + $0x1c8] sm:$0xff]
    %v11757 = vld [vmem:[%s11698 + $0x1d0] sm:$0xff]
    %v11758 = vld [vmem:[%s11698 + $0x1d8] sm:$0xff]
    %v11759 = vld [vmem:[%s11698 + $0x1e0] sm:$0xff]
    %v11760 = vld [vmem:[%s11698 + $0x1e8] sm:$0xff]
    %v11761 = vld [vmem:[%s11698 + $0x1f0] sm:$0xff]
    %v11762 = vld [vmem:[%s11698 + $0x1f8] sm:$0xff]
    %v11763 = vld [vmem:[%s11698 + $0x200] sm:$0xff]
    %v11764 = vld [vmem:[%s11698 + $0x208] sm:$0xff]
    %v11765 = vld [vmem:[%s11698 + $0x210] sm:$0xff]
    %v11766 = vld [vmem:[%s11698 + $0x218] sm:$0xff]
    %v11767 = vld [vmem:[%s11698 + $0x220] sm:$0xff]
    %v11768 = vld [vmem:[%s11698 + $0x228] sm:$0xff]
    %v11769 = vld [vmem:[%s11698 + $0x230] sm:$0xff]
    %v11770 = vld [vmem:[%s11698 + $0x238] sm:$0xff]
    %v11771 = vld [vmem:[%s11698 + $0x240] sm:$0xff]
    %v11772 = vld [vmem:[%s11698 + $0x248] sm:$0xff]
    %v11773 = vld [vmem:[%s11698 + $0x250] sm:$0xff]
    %v11774 = vld [vmem:[%s11698 + $0x258] sm:$0xff]
    %v11775 = vld [vmem:[%s11698 + $0x260] sm:$0xff]
    %v11776 = vld [vmem:[%s11698 + $0x268] sm:$0xff]
    %v11777 = vld [vmem:[%s11698 + $0x270] sm:$0xff]
    %v11778 = vld [vmem:[%s11698 + $0x278] sm:$0xff]
    %v11779 = vld [vmem:[%s11698 + $0x280] sm:$0xff]
    %v11780 = vld [vmem:[%s11698 + $0x288] sm:$0xff]
    %v11781 = vld [vmem:[%s11698 + $0x290] sm:$0xff]
    %v11782 = vld [vmem:[%s11698 + $0x298] sm:$0xff]
    %v11783 = vld [vmem:[%s11698 + $0x2a0] sm:$0xff]
    %v11784 = vld [vmem:[%s11698 + $0x2a8] sm:$0xff]
    %v11785 = vld [vmem:[%s11698 + $0x2b0] sm:$0xff]
    %v11786 = vld [vmem:[%s11698 + $0x2b8] sm:$0xff]
    %v11787 = vld [vmem:[%s11698 + $0x2c0] sm:$0xff]
    %v11788 = vld [vmem:[%s11698 + $0x2c8] sm:$0xff]
    %v11789 = vld [vmem:[%s11698 + $0x2d0] sm:$0xff]
    %v11790 = vld [vmem:[%s11698 + $0x2d8] sm:$0xff]
    %v11791 = vld [vmem:[%s11698 + $0x2e0] sm:$0xff]
    %v11792 = vld [vmem:[%s11698 + $0x2e8] sm:$0xff]
    %v11793 = vld [vmem:[%s11698 + $0x2f0] sm:$0xff]
    %v11794 = vld [vmem:[%s11698 + $0x2f8] sm:$0xff]
    %v11795 = vld [vmem:[%s11698 + $0x300] sm:$0xff]
    %v11796 = vld [vmem:[%s11698 + $0x308] sm:$0xff]
    %v11797 = vld [vmem:[%s11698 + $0x310] sm:$0xff]
    %v11798 = vld [vmem:[%s11698 + $0x318] sm:$0xff]
    %v11799 = vld [vmem:[%s11698 + $0x320] sm:$0xff]
    %v11800 = vld [vmem:[%s11698 + $0x328] sm:$0xff]
    %v11801 = vld [vmem:[%s11698 + $0x330] sm:$0xff]
    %v11802 = vld [vmem:[%s11698 + $0x338] sm:$0xff]
    %v11803 = vld [vmem:[%s11698 + $0x340] sm:$0xff]
    %v11804 = vld [vmem:[%s11698 + $0x348] sm:$0xff]
    %v11805 = vld [vmem:[%s11698 + $0x350] sm:$0xff]
    %v11806 = vld [vmem:[%s11698 + $0x358] sm:$0xff]
    %v11807 = vld [vmem:[%s11698 + $0x360] sm:$0xff]
    %v11808 = vld [vmem:[%s11698 + $0x368] sm:$0xff]
    %v11809 = vld [vmem:[%s11698 + $0x370] sm:$0xff]
    %v11810 = vld [vmem:[%s11698 + $0x378] sm:$0xff]
    %v11811 = vld [vmem:[%s11698 + $0x380] sm:$0xff]
    %v11812 = vld [vmem:[%s11698 + $0x388] sm:$0xff]
    %v11813 = vld [vmem:[%s11698 + $0x390] sm:$0xff]
    %v11814 = vld [vmem:[%s11698 + $0x398] sm:$0xff]
    %v11815 = vld [vmem:[%s11698 + $0x3a0] sm:$0xff]
    %v11816 = vld [vmem:[%s11698 + $0x3a8] sm:$0xff]
    %v11817 = vld [vmem:[%s11698 + $0x3b0] sm:$0xff]
    %v11818 = vld [vmem:[%s11698 + $0x3b8] sm:$0xff]
    %v11819 = vld [vmem:[%s11698 + $0x3c0] sm:$0xff]
    %v11820 = vld [vmem:[%s11698 + $0x3c8] sm:$0xff]
    %v11821 = vld [vmem:[%s11698 + $0x3d0] sm:$0xff]
    %v11822 = vld [vmem:[%s11698 + $0x3d8] sm:$0xff]
    %v11823 = vld [vmem:[%s11698 + $0x3e0] sm:$0xff]
    %v11824 = vld [vmem:[%s11698 + $0x3e8] sm:$0xff]
    %v11825 = vld [vmem:[%s11698 + $0x3f0] sm:$0xff]
    %v11826 = vld [vmem:[%s11698 + $0x3f8] sm:$0xff]
    %s11827 = scalar_lea.vmem [#allocation4], 48
    %v11828 = vld [vmem:[%s11827] sm:$0xf]
    %v11830 = vlaneseq
    %v11831 = vshrl.u32 %v11830, 7
    %v11832 = vsub.s32 0, %v11831
    %v11833 = vrot.slane %v11828, %v11832
    %v11834 = vlaneseq
    %v11835 = vshrl.u32 %v11834, 7
    %v11836 = vsub.s32 1, %v11835
    %v11837 = vrot.slane %v11828, %v11836
    %v11838 = vlaneseq
    %v11839 = vshrl.u32 %v11838, 7
    %v11840 = vsub.s32 2, %v11839
    %v11841 = vrot.slane %v11828, %v11840
    %v11842 = vlaneseq
    %v11843 = vshrl.u32 %v11842, 7
    %v11844 = vsub.s32 3, %v11843
    %v11845 = vrot.slane %v11828, %v11844
    %v11978 = vunpack.c.l.b16 %v11699
    %v11979 = vunpack.c.h.b16 %v11699
    %v11980 = vunpack.c.l.b16 %v11700
    %v11981 = vunpack.c.h.b16 %v11700
    %v11982 = vunpack.c.l.b16 %v11701
    %v11983 = vunpack.c.h.b16 %v11701
    %v11984 = vunpack.c.l.b16 %v11702
    %v11985 = vunpack.c.h.b16 %v11702
    %v11986 = vunpack.c.l.b16 %v11703
    %v11987 = vunpack.c.h.b16 %v11703
    %v11988 = vunpack.c.l.b16 %v11704
    %v11989 = vunpack.c.h.b16 %v11704
    %v11990 = vunpack.c.l.b16 %v11705
    %v11991 = vunpack.c.h.b16 %v11705
    %v11992 = vunpack.c.l.b16 %v11706
    %v11993 = vunpack.c.h.b16 %v11706
    %v11994 = vunpack.c.l.b16 %v11707
    %v11995 = vunpack.c.h.b16 %v11707
    %v11996 = vunpack.c.l.b16 %v11708
    %v11997 = vunpack.c.h.b16 %v11708
    %v11998 = vunpack.c.l.b16 %v11709
    %v11999 = vunpack.c.h.b16 %v11709
    %v12000 = vunpack.c.l.b16 %v11710
    %v12001 = vunpack.c.h.b16 %v11710
    %v12002 = vunpack.c.l.b16 %v11711
    %v12003 = vunpack.c.h.b16 %v11711
    %v12004 = vunpack.c.l.b16 %v11712
    %v12005 = vunpack.c.h.b16 %v11712
    %v12006 = vunpack.c.l.b16 %v11713
    %v12007 = vunpack.c.h.b16 %v11713
    %v12008 = vunpack.c.l.b16 %v11714
    %v12009 = vunpack.c.h.b16 %v11714
    %v12010 = vunpack.c.l.b16 %v11715
    %v12011 = vunpack.c.h.b16 %v11715
    %v12012 = vunpack.c.l.b16 %v11716
    %v12013 = vunpack.c.h.b16 %v11716
    %v12014 = vunpack.c.l.b16 %v11717
    %v12015 = vunpack.c.h.b16 %v11717
    %v12016 = vunpack.c.l.b16 %v11718
    %v12017 = vunpack.c.h.b16 %v11718
    %v12018 = vunpack.c.l.b16 %v11719
    %v12019 = vunpack.c.h.b16 %v11719
    %v12020 = vunpack.c.l.b16 %v11720
    %v12021 = vunpack.c.h.b16 %v11720
    %v12022 = vunpack.c.l.b16 %v11721
    %v12023 = vunpack.c.h.b16 %v11721
    %v12024 = vunpack.c.l.b16 %v11722
    %v12025 = vunpack.c.h.b16 %v11722
    %v12026 = vunpack.c.l.b16 %v11723
    %v12027 = vunpack.c.h.b16 %v11723
    %v12028 = vunpack.c.l.b16 %v11724
    %v12029 = vunpack.c.h.b16 %v11724
    %v12030 = vunpack.c.l.b16 %v11725
    %v12031 = vunpack.c.h.b16 %v11725
    %v12032 = vunpack.c.l.b16 %v11726
    %v12033 = vunpack.c.h.b16 %v11726
    %v12034 = vunpack.c.l.b16 %v11727
    %v12035 = vunpack.c.h.b16 %v11727
    %v12036 = vunpack.c.l.b16 %v11728
    %v12037 = vunpack.c.h.b16 %v11728
    %v12038 = vunpack.c.l.b16 %v11729
    %v12039 = vunpack.c.h.b16 %v11729
    %v12040 = vunpack.c.l.b16 %v11730
    %v12041 = vunpack.c.h.b16 %v11730
    %v12042 = vunpack.c.l.b16 %v11731
    %v12043 = vunpack.c.h.b16 %v11731
    %v12044 = vunpack.c.l.b16 %v11732
    %v12045 = vunpack.c.h.b16 %v11732
    %v12046 = vunpack.c.l.b16 %v11733
    %v12047 = vunpack.c.h.b16 %v11733
    %v12048 = vunpack.c.l.b16 %v11734
    %v12049 = vunpack.c.h.b16 %v11734
    %v12050 = vunpack.c.l.b16 %v11735
    %v12051 = vunpack.c.h.b16 %v11735
    %v12052 = vunpack.c.l.b16 %v11736
    %v12053 = vunpack.c.h.b16 %v11736
    %v12054 = vunpack.c.l.b16 %v11737
    %v12055 = vunpack.c.h.b16 %v11737
    %v12056 = vunpack.c.l.b16 %v11738
    %v12057 = vunpack.c.h.b16 %v11738
    %v12058 = vunpack.c.l.b16 %v11739
    %v12059 = vunpack.c.h.b16 %v11739
    %v12060 = vunpack.c.l.b16 %v11740
    %v12061 = vunpack.c.h.b16 %v11740
    %v12062 = vunpack.c.l.b16 %v11741
    %v12063 = vunpack.c.h.b16 %v11741
    %v12064 = vunpack.c.l.b16 %v11742
    %v12065 = vunpack.c.h.b16 %v11742
    %v12066 = vunpack.c.l.b16 %v11743
    %v12067 = vunpack.c.h.b16 %v11743
    %v12068 = vunpack.c.l.b16 %v11744
    %v12069 = vunpack.c.h.b16 %v11744
    %v12070 = vunpack.c.l.b16 %v11745
    %v12071 = vunpack.c.h.b16 %v11745
    %v12072 = vunpack.c.l.b16 %v11746
    %v12073 = vunpack.c.h.b16 %v11746
    %v12074 = vunpack.c.l.b16 %v11747
    %v12075 = vunpack.c.h.b16 %v11747
    %v12076 = vunpack.c.l.b16 %v11748
    %v12077 = vunpack.c.h.b16 %v11748
    %v12078 = vunpack.c.l.b16 %v11749
    %v12079 = vunpack.c.h.b16 %v11749
    %v12080 = vunpack.c.l.b16 %v11750
    %v12081 = vunpack.c.h.b16 %v11750
    %v12082 = vunpack.c.l.b16 %v11751
    %v12083 = vunpack.c.h.b16 %v11751
    %v12084 = vunpack.c.l.b16 %v11752
    %v12085 = vunpack.c.h.b16 %v11752
    %v12086 = vunpack.c.l.b16 %v11753
    %v12087 = vunpack.c.h.b16 %v11753
    %v12088 = vunpack.c.l.b16 %v11754
    %v12089 = vunpack.c.h.b16 %v11754
    %v12090 = vunpack.c.l.b16 %v11755
    %v12091 = vunpack.c.h.b16 %v11755
    %v12092 = vunpack.c.l.b16 %v11756
    %v12093 = vunpack.c.h.b16 %v11756
    %v12094 = vunpack.c.l.b16 %v11757
    %v12095 = vunpack.c.h.b16 %v11757
    %v12096 = vunpack.c.l.b16 %v11758
    %v12097 = vunpack.c.h.b16 %v11758
    %v12098 = vunpack.c.l.b16 %v11759
    %v12099 = vunpack.c.h.b16 %v11759
    %v12100 = vunpack.c.l.b16 %v11760
    %v12101 = vunpack.c.h.b16 %v11760
    %v12102 = vunpack.c.l.b16 %v11761
    %v12103 = vunpack.c.h.b16 %v11761
    %v12104 = vunpack.c.l.b16 %v11762
    %v12105 = vunpack.c.h.b16 %v11762
    %v12106 = vunpack.c.l.b16 %v11763
    %v12107 = vunpack.c.h.b16 %v11763
    %v12108 = vunpack.c.l.b16 %v11764
    %v12109 = vunpack.c.h.b16 %v11764
    %v12110 = vunpack.c.l.b16 %v11765
    %v12111 = vunpack.c.h.b16 %v11765
    %v12112 = vunpack.c.l.b16 %v11766
    %v12113 = vunpack.c.h.b16 %v11766
    %v12114 = vunpack.c.l.b16 %v11767
    %v12115 = vunpack.c.h.b16 %v11767
    %v12116 = vunpack.c.l.b16 %v11768
    %v12117 = vunpack.c.h.b16 %v11768
    %v12118 = vunpack.c.l.b16 %v11769
    %v12119 = vunpack.c.h.b16 %v11769
    %v12120 = vunpack.c.l.b16 %v11770
    %v12121 = vunpack.c.h.b16 %v11770
    %v12122 = vunpack.c.l.b16 %v11771
    %v12123 = vunpack.c.h.b16 %v11771
    %v12124 = vunpack.c.l.b16 %v11772
    %v12125 = vunpack.c.h.b16 %v11772
    %v12126 = vunpack.c.l.b16 %v11773
    %v12127 = vunpack.c.h.b16 %v11773
    %v12128 = vunpack.c.l.b16 %v11774
    %v12129 = vunpack.c.h.b16 %v11774
    %v12130 = vunpack.c.l.b16 %v11775
    %v12131 = vunpack.c.h.b16 %v11775
    %v12132 = vunpack.c.l.b16 %v11776
    %v12133 = vunpack.c.h.b16 %v11776
    %v12134 = vunpack.c.l.b16 %v11777
    %v12135 = vunpack.c.h.b16 %v11777
    %v12136 = vunpack.c.l.b16 %v11778
    %v12137 = vunpack.c.h.b16 %v11778
    %v12138 = vunpack.c.l.b16 %v11779
    %v12139 = vunpack.c.h.b16 %v11779
    %v12140 = vunpack.c.l.b16 %v11780
    %v12141 = vunpack.c.h.b16 %v11780
    %v12142 = vunpack.c.l.b16 %v11781
    %v12143 = vunpack.c.h.b16 %v11781
    %v12144 = vunpack.c.l.b16 %v11782
    %v12145 = vunpack.c.h.b16 %v11782
    %v12146 = vunpack.c.l.b16 %v11783
    %v12147 = vunpack.c.h.b16 %v11783
    %v12148 = vunpack.c.l.b16 %v11784
    %v12149 = vunpack.c.h.b16 %v11784
    %v12150 = vunpack.c.l.b16 %v11785
    %v12151 = vunpack.c.h.b16 %v11785
    %v12152 = vunpack.c.l.b16 %v11786
    %v12153 = vunpack.c.h.b16 %v11786
    %v12154 = vunpack.c.l.b16 %v11787
    %v12155 = vunpack.c.h.b16 %v11787
    %v12156 = vunpack.c.l.b16 %v11788
    %v12157 = vunpack.c.h.b16 %v11788
    %v12158 = vunpack.c.l.b16 %v11789
    %v12159 = vunpack.c.h.b16 %v11789
    %v12160 = vunpack.c.l.b16 %v11790
    %v12161 = vunpack.c.h.b16 %v11790
    %v12162 = vunpack.c.l.b16 %v11791
    %v12163 = vunpack.c.h.b16 %v11791
    %v12164 = vunpack.c.l.b16 %v11792
    %v12165 = vunpack.c.h.b16 %v11792
    %v12166 = vunpack.c.l.b16 %v11793
    %v12167 = vunpack.c.h.b16 %v11793
    %v12168 = vunpack.c.l.b16 %v11794
    %v12169 = vunpack.c.h.b16 %v11794
    %v12170 = vunpack.c.l.b16 %v11795
    %v12171 = vunpack.c.h.b16 %v11795
    %v12172 = vunpack.c.l.b16 %v11796
    %v12173 = vunpack.c.h.b16 %v11796
    %v12174 = vunpack.c.l.b16 %v11797
    %v12175 = vunpack.c.h.b16 %v11797
    %v12176 = vunpack.c.l.b16 %v11798
    %v12177 = vunpack.c.h.b16 %v11798
    %v12178 = vunpack.c.l.b16 %v11799
    %v12179 = vunpack.c.h.b16 %v11799
    %v12180 = vunpack.c.l.b16 %v11800
    %v12181 = vunpack.c.h.b16 %v11800
    %v12182 = vunpack.c.l.b16 %v11801
    %v12183 = vunpack.c.h.b16 %v11801
    %v12184 = vunpack.c.l.b16 %v11802
    %v12185 = vunpack.c.h.b16 %v11802
    %v12186 = vunpack.c.l.b16 %v11803
    %v12187 = vunpack.c.h.b16 %v11803
    %v12188 = vunpack.c.l.b16 %v11804
    %v12189 = vunpack.c.h.b16 %v11804
    %v12190 = vunpack.c.l.b16 %v11805
    %v12191 = vunpack.c.h.b16 %v11805
    %v12192 = vunpack.c.l.b16 %v11806
    %v12193 = vunpack.c.h.b16 %v11806
    %v12194 = vunpack.c.l.b16 %v11807
    %v12195 = vunpack.c.h.b16 %v11807
    %v12196 = vunpack.c.l.b16 %v11808
    %v12197 = vunpack.c.h.b16 %v11808
    %v12198 = vunpack.c.l.b16 %v11809
    %v12199 = vunpack.c.h.b16 %v11809
    %v12200 = vunpack.c.l.b16 %v11810
    %v12201 = vunpack.c.h.b16 %v11810
    %v12202 = vunpack.c.l.b16 %v11811
    %v12203 = vunpack.c.h.b16 %v11811
    %v12204 = vunpack.c.l.b16 %v11812
    %v12205 = vunpack.c.h.b16 %v11812
    %v12206 = vunpack.c.l.b16 %v11813
    %v12207 = vunpack.c.h.b16 %v11813
    %v12208 = vunpack.c.l.b16 %v11814
    %v12209 = vunpack.c.h.b16 %v11814
    %v12210 = vunpack.c.l.b16 %v11815
    %v12211 = vunpack.c.h.b16 %v11815
    %v12212 = vunpack.c.l.b16 %v11816
    %v12213 = vunpack.c.h.b16 %v11816
    %v12214 = vunpack.c.l.b16 %v11817
    %v12215 = vunpack.c.h.b16 %v11817
    %v12216 = vunpack.c.l.b16 %v11818
    %v12217 = vunpack.c.h.b16 %v11818
    %v12218 = vunpack.c.l.b16 %v11819
    %v12219 = vunpack.c.h.b16 %v11819
    %v12220 = vunpack.c.l.b16 %v11820
    %v12221 = vunpack.c.h.b16 %v11820
    %v12222 = vunpack.c.l.b16 %v11821
    %v12223 = vunpack.c.h.b16 %v11821
    %v12224 = vunpack.c.l.b16 %v11822
    %v12225 = vunpack.c.h.b16 %v11822
    %v12226 = vunpack.c.l.b16 %v11823
    %v12227 = vunpack.c.h.b16 %v11823
    %v12228 = vunpack.c.l.b16 %v11824
    %v12229 = vunpack.c.h.b16 %v11824
    %v12230 = vunpack.c.l.b16 %v11825
    %v12231 = vunpack.c.h.b16 %v11825
    %v12232 = vunpack.c.l.b16 %v11826
    %v12233 = vunpack.c.h.b16 %v11826
    %v12234 = vpack.c.b16 %v11982, %v11978
    %v12235 = vpack.c.b16 %v11983, %v11979
    %v12236 = vpack.c.b16 %v11984, %v11980
    %v12237 = vpack.c.b16 %v11985, %v11981
    %v12238 = vpack.c.b16 %v11990, %v11986
    %v12239 = vpack.c.b16 %v11991, %v11987
    %v12240 = vpack.c.b16 %v11992, %v11988
    %v12241 = vpack.c.b16 %v11993, %v11989
    %v12242 = vpack.c.b16 %v11998, %v11994
    %v12243 = vpack.c.b16 %v11999, %v11995
    %v12244 = vpack.c.b16 %v12000, %v11996
    %v12245 = vpack.c.b16 %v12001, %v11997
    %v12246 = vpack.c.b16 %v12006, %v12002
    %v12247 = vpack.c.b16 %v12007, %v12003
    %v12248 = vpack.c.b16 %v12008, %v12004
    %v12249 = vpack.c.b16 %v12009, %v12005
    %v12250 = vpack.c.b16 %v12014, %v12010
    %v12251 = vpack.c.b16 %v12015, %v12011
    %v12252 = vpack.c.b16 %v12016, %v12012
    %v12253 = vpack.c.b16 %v12017, %v12013
    %v12254 = vpack.c.b16 %v12022, %v12018
    %v12255 = vpack.c.b16 %v12023, %v12019
    %v12256 = vpack.c.b16 %v12024, %v12020
    %v12257 = vpack.c.b16 %v12025, %v12021
    %v12258 = vpack.c.b16 %v12030, %v12026
    %v12259 = vpack.c.b16 %v12031, %v12027
    %v12260 = vpack.c.b16 %v12032, %v12028
    %v12261 = vpack.c.b16 %v12033, %v12029
    %v12262 = vpack.c.b16 %v12038, %v12034
    %v12263 = vpack.c.b16 %v12039, %v12035
    %v12264 = vpack.c.b16 %v12040, %v12036
    %v12265 = vpack.c.b16 %v12041, %v12037
    %v12266 = vpack.c.b16 %v12046, %v12042
    %v12267 = vpack.c.b16 %v12047, %v12043
    %v12268 = vpack.c.b16 %v12048, %v12044
    %v12269 = vpack.c.b16 %v12049, %v12045
    %v12270 = vpack.c.b16 %v12054, %v12050
    %v12271 = vpack.c.b16 %v12055, %v12051
    %v12272 = vpack.c.b16 %v12056, %v12052
    %v12273 = vpack.c.b16 %v12057, %v12053
    %v12274 = vpack.c.b16 %v12062, %v12058
    %v12275 = vpack.c.b16 %v12063, %v12059
    %v12276 = vpack.c.b16 %v12064, %v12060
    %v12277 = vpack.c.b16 %v12065, %v12061
    %v12278 = vpack.c.b16 %v12070, %v12066
    %v12279 = vpack.c.b16 %v12071, %v12067
    %v12280 = vpack.c.b16 %v12072, %v12068
    %v12281 = vpack.c.b16 %v12073, %v12069
    %v12282 = vpack.c.b16 %v12078, %v12074
    %v12283 = vpack.c.b16 %v12079, %v12075
    %v12284 = vpack.c.b16 %v12080, %v12076
    %v12285 = vpack.c.b16 %v12081, %v12077
    %v12286 = vpack.c.b16 %v12086, %v12082
    %v12287 = vpack.c.b16 %v12087, %v12083
    %v12288 = vpack.c.b16 %v12088, %v12084
    %v12289 = vpack.c.b16 %v12089, %v12085
    %v12290 = vpack.c.b16 %v12094, %v12090
    %v12291 = vpack.c.b16 %v12095, %v12091
    %v12292 = vpack.c.b16 %v12096, %v12092
    %v12293 = vpack.c.b16 %v12097, %v12093
    %v12294 = vpack.c.b16 %v12102, %v12098
    %v12295 = vpack.c.b16 %v12103, %v12099
    %v12296 = vpack.c.b16 %v12104, %v12100
    %v12297 = vpack.c.b16 %v12105, %v12101
    %v12298 = vpack.c.b16 %v12110, %v12106
    %v12299 = vpack.c.b16 %v12111, %v12107
    %v12300 = vpack.c.b16 %v12112, %v12108
    %v12301 = vpack.c.b16 %v12113, %v12109
    %v12302 = vpack.c.b16 %v12118, %v12114
    %v12303 = vpack.c.b16 %v12119, %v12115
    %v12304 = vpack.c.b16 %v12120, %v12116
    %v12305 = vpack.c.b16 %v12121, %v12117
    %v12306 = vpack.c.b16 %v12126, %v12122
    %v12307 = vpack.c.b16 %v12127, %v12123
    %v12308 = vpack.c.b16 %v12128, %v12124
    %v12309 = vpack.c.b16 %v12129, %v12125
    %v12310 = vpack.c.b16 %v12134, %v12130
    %v12311 = vpack.c.b16 %v12135, %v12131
    %v12312 = vpack.c.b16 %v12136, %v12132
    %v12313 = vpack.c.b16 %v12137, %v12133
    %v12314 = vpack.c.b16 %v12142, %v12138
    %v12315 = vpack.c.b16 %v12143, %v12139
    %v12316 = vpack.c.b16 %v12144, %v12140
    %v12317 = vpack.c.b16 %v12145, %v12141
    %v12318 = vpack.c.b16 %v12150, %v12146
    %v12319 = vpack.c.b16 %v12151, %v12147
    %v12320 = vpack.c.b16 %v12152, %v12148
    %v12321 = vpack.c.b16 %v12153, %v12149
    %v12322 = vpack.c.b16 %v12158, %v12154
    %v12323 = vpack.c.b16 %v12159, %v12155
    %v12324 = vpack.c.b16 %v12160, %v12156
    %v12325 = vpack.c.b16 %v12161, %v12157
    %v12326 = vpack.c.b16 %v12166, %v12162
    %v12327 = vpack.c.b16 %v12167, %v12163
    %v12328 = vpack.c.b16 %v12168, %v12164
    %v12329 = vpack.c.b16 %v12169, %v12165
    %v12330 = vpack.c.b16 %v12174, %v12170
    %v12331 = vpack.c.b16 %v12175, %v12171
    %v12332 = vpack.c.b16 %v12176, %v12172
    %v12333 = vpack.c.b16 %v12177, %v12173
    %v12334 = vpack.c.b16 %v12182, %v12178
    %v12335 = vpack.c.b16 %v12183, %v12179
    %v12336 = vpack.c.b16 %v12184, %v12180
    %v12337 = vpack.c.b16 %v12185, %v12181
    %v12338 = vpack.c.b16 %v12190, %v12186
    %v12339 = vpack.c.b16 %v12191, %v12187
    %v12340 = vpack.c.b16 %v12192, %v12188
    %v12341 = vpack.c.b16 %v12193, %v12189
    %v12342 = vpack.c.b16 %v12198, %v12194
    %v12343 = vpack.c.b16 %v12199, %v12195
    %v12344 = vpack.c.b16 %v12200, %v12196
    %v12345 = vpack.c.b16 %v12201, %v12197
    %v12346 = vpack.c.b16 %v12206, %v12202
    %v12347 = vpack.c.b16 %v12207, %v12203
    %v12348 = vpack.c.b16 %v12208, %v12204
    %v12349 = vpack.c.b16 %v12209, %v12205
    %v12350 = vpack.c.b16 %v12214, %v12210
    %v12351 = vpack.c.b16 %v12215, %v12211
    %v12352 = vpack.c.b16 %v12216, %v12212
    %v12353 = vpack.c.b16 %v12217, %v12213
    %v12354 = vpack.c.b16 %v12222, %v12218
    %v12355 = vpack.c.b16 %v12223, %v12219
    %v12356 = vpack.c.b16 %v12224, %v12220
    %v12357 = vpack.c.b16 %v12225, %v12221
    %v12358 = vpack.c.b16 %v12230, %v12226
    %v12359 = vpack.c.b16 %v12231, %v12227
    %v12360 = vpack.c.b16 %v12232, %v12228
    %v12361 = vpack.c.b16 %v12233, %v12229
    %12490 = vmatprep.subr.bf16.mxu0 %v12235
    %12491 = vmatpush1.bf16.msra.mxu0 %v12234
    %12492 = vmatprep.subr.bf16.mxu0 %v12239
    %12493 = vmatpush1.bf16.msra.mxu0 %v12238
    %12494 = vmatprep.subr.bf16.mxu0 %v12243
    %12495 = vmatpush1.bf16.msra.mxu0 %v12242
    %12496 = vmatprep.subr.bf16.mxu0 %v12247
    %12497 = vmatpush1.bf16.msra.mxu0 %v12246
    %12498 = vmatprep.subr.bf16.mxu0 %v12251
    %12499 = vmatpush1.bf16.msra.mxu0 %v12250
    %12500 = vmatprep.subr.bf16.mxu0 %v12255
    %12501 = vmatpush1.bf16.msra.mxu0 %v12254
    %12502 = vmatprep.subr.bf16.mxu0 %v12259
    %12503 = vmatpush1.bf16.msra.mxu0 %v12258
    %12504 = vmatprep.subr.bf16.mxu0 %v12263
    %12505 = vmatpush1.bf16.msra.mxu0 %v12262
    %12506 = vmatprep.subr.bf16.mxu0 %v12267
    %12507 = vmatpush1.bf16.msra.mxu0 %v12266
    %12508 = vmatprep.subr.bf16.mxu0 %v12271
    %12509 = vmatpush1.bf16.msra.mxu0 %v12270
    %12510 = vmatprep.subr.bf16.mxu0 %v12275
    %12511 = vmatpush1.bf16.msra.mxu0 %v12274
    %12512 = vmatprep.subr.bf16.mxu0 %v12279
    %12513 = vmatpush1.bf16.msra.mxu0 %v12278
    %12514 = vmatprep.subr.bf16.mxu0 %v12283
    %12515 = vmatpush1.bf16.msra.mxu0 %v12282
    %12516 = vmatprep.subr.bf16.mxu0 %v12287
    %12517 = vmatpush1.bf16.msra.mxu0 %v12286
    %12518 = vmatprep.subr.bf16.mxu0 %v12291
    %12519 = vmatpush1.bf16.msra.mxu0 %v12290
    %12520 = vmatprep.subr.bf16.mxu0 %v12295
    %12521 = vmatpush1.bf16.msra.mxu0 %v12294
    %12522 = vmatprep.mubr.bf16.mxu0 %v11695
    %12523 = vmatmul.mubr.bf16.gmra.mrb[0].mxu0 %v11694
    %v12524 = vpop.f32.mrb[0].mxu0
    %v12525 = vadd.f32 %v11833, %v12524
    %v12526 = vpop.f32.mrb[0].mxu0
    %v12527 = vadd.f32 %v11837, %v12526
    %v12528 = vpop.f32.mrb[0].mxu0
    %v12529 = vpop.f32.mrb[0].mxu0
    %12530 = vdwg.mxu0
    %12531 = vmatprep.subr.bf16.mxu0 %v12299
    %12532 = vmatpush1.bf16.msra.mxu0 %v12298
    %12533 = vmatprep.subr.bf16.mxu0 %v12303
    %12534 = vmatpush1.bf16.msra.mxu0 %v12302
    %12535 = vmatprep.subr.bf16.mxu0 %v12307
    %12536 = vmatpush1.bf16.msra.mxu0 %v12306
    %12537 = vmatprep.subr.bf16.mxu0 %v12311
    %12538 = vmatpush1.bf16.msra.mxu0 %v12310
    %12539 = vmatprep.subr.bf16.mxu0 %v12315
    %12540 = vmatpush1.bf16.msra.mxu0 %v12314
    %12541 = vmatprep.subr.bf16.mxu0 %v12319
    %12542 = vmatpush1.bf16.msra.mxu0 %v12318
    %12543 = vmatprep.subr.bf16.mxu0 %v12323
    %12544 = vmatpush1.bf16.msra.mxu0 %v12322
    %12545 = vmatprep.subr.bf16.mxu0 %v12327
    %12546 = vmatpush1.bf16.msra.mxu0 %v12326
    %12547 = vmatprep.subr.bf16.mxu0 %v12331
    %12548 = vmatpush1.bf16.msra.mxu0 %v12330
    %12549 = vmatprep.subr.bf16.mxu0 %v12335
    %12550 = vmatpush1.bf16.msra.mxu0 %v12334
    %12551 = vmatprep.subr.bf16.mxu0 %v12339
    %12552 = vmatpush1.bf16.msra.mxu0 %v12338
    %12553 = vmatprep.subr.bf16.mxu0 %v12343
    %12554 = vmatpush1.bf16.msra.mxu0 %v12342
    %12555 = vmatprep.subr.bf16.mxu0 %v12347
    %12556 = vmatpush1.bf16.msra.mxu0 %v12346
    %12557 = vmatprep.subr.bf16.mxu0 %v12351
    %12558 = vmatpush1.bf16.msra.mxu0 %v12350
    %12559 = vmatprep.subr.bf16.mxu0 %v12355
    %12560 = vmatpush1.bf16.msra.mxu0 %v12354
    %12561 = vmatprep.subr.bf16.mxu0 %v12359
    %12562 = vmatpush1.bf16.msra.mxu0 %v12358
    %12563 = vmatprep.mubr.bf16.mxu0 %v11697
    %12564 = vmatmul.mubr.bf16.gmra.mrb[0].mxu0 %v11696
    %v12565 = vpop.f32.mrb[0].mxu0
    %v12566 = vadd.f32 %v12525, %v12565
    %v12567 = vpop.f32.mrb[0].mxu0
    %v12568 = vadd.f32 %v12527, %v12567
    %v12569 = vpop.f32.mrb[0].mxu0
    %v12570 = vpop.f32.mrb[0].mxu0
    %12571 = vdwg.mxu0
    %12572 = vmatprep.subr.bf16.mxu0 %v12237
    %12573 = vmatpush1.bf16.msra.mxu0 %v12236
    %12574 = vmatprep.subr.bf16.mxu0 %v12241
    %12575 = vmatpush1.bf16.msra.mxu0 %v12240
    %12576 = vmatprep.subr.bf16.mxu0 %v12245
    %12577 = vmatpush1.bf16.msra.mxu0 %v12244
    %12578 = vmatprep.subr.bf16.mxu0 %v12249
    %12579 = vmatpush1.bf16.msra.mxu0 %v12248
    %12580 = vmatprep.subr.bf16.mxu0 %v12253
    %12581 = vmatpush1.bf16.msra.mxu0 %v12252
    %12582 = vmatprep.subr.bf16.mxu0 %v12257
    %12583 = vmatpush1.bf16.msra.mxu0 %v12256
    %12584 = vmatprep.subr.bf16.mxu0 %v12261
    %12585 = vmatpush1.bf16.msra.mxu0 %v12260
    %12586 = vmatprep.subr.bf16.mxu0 %v12265
    %12587 = vmatpush1.bf16.msra.mxu0 %v12264
    %12588 = vmatprep.subr.bf16.mxu0 %v12269
    %12589 = vmatpush1.bf16.msra.mxu0 %v12268
    %12590 = vmatprep.subr.bf16.mxu0 %v12273
    %12591 = vmatpush1.bf16.msra.mxu0 %v12272
    %12592 = vmatprep.subr.bf16.mxu0 %v12277
    %12593 = vmatpush1.bf16.msra.mxu0 %v12276
    %12594 = vmatprep.subr.bf16.mxu0 %v12281
    %12595 = vmatpush1.bf16.msra.mxu0 %v12280
    %12596 = vmatprep.subr.bf16.mxu0 %v12285
    %12597 = vmatpush1.bf16.msra.mxu0 %v12284
    %12598 = vmatprep.subr.bf16.mxu0 %v12289
    %12599 = vmatpush1.bf16.msra.mxu0 %v12288
    %12600 = vmatprep.subr.bf16.mxu0 %v12293
    %12601 = vmatpush1.bf16.msra.mxu0 %v12292
    %12602 = vmatprep.subr.bf16.mxu0 %v12297
    %12603 = vmatpush1.bf16.msra.mxu0 %v12296
    %12604 = vmatprep.mubr.bf16.mxu0 %v11695
    %12605 = vmatmul.mubr.bf16.gmra.mrb[0].mxu0 %v11694
    %v12606 = vpop.f32.mrb[0].mxu0
    %v12607 = vadd.f32 %v11841, %v12606
    %v12608 = vpop.f32.mrb[0].mxu0
    %v12609 = vadd.f32 %v11845, %v12608
    %v12610 = vpop.f32.mrb[0].mxu0
    %v12611 = vpop.f32.mrb[0].mxu0
    %12612 = vdwg.mxu0
    %12613 = vmatprep.subr.bf16.mxu0 %v12301
    %12614 = vmatpush1.bf16.msra.mxu0 %v12300
    %12615 = vmatprep.subr.bf16.mxu0 %v12305
    %12616 = vmatpush1.bf16.msra.mxu0 %v12304
    %12617 = vmatprep.subr.bf16.mxu0 %v12309
    %12618 = vmatpush1.bf16.msra.mxu0 %v12308
    %12619 = vmatprep.subr.bf16.mxu0 %v12313
    %12620 = vmatpush1.bf16.msra.mxu0 %v12312
    %12621 = vmatprep.subr.bf16.mxu0 %v12317
    %12622 = vmatpush1.bf16.msra.mxu0 %v12316
    %12623 = vmatprep.subr.bf16.mxu0 %v12321
    %12624 = vmatpush1.bf16.msra.mxu0 %v12320
    %12625 = vmatprep.subr.bf16.mxu0 %v12325
    %12626 = vmatpush1.bf16.msra.mxu0 %v12324
    %12627 = vmatprep.subr.bf16.mxu0 %v12329
    %12628 = vmatpush1.bf16.msra.mxu0 %v12328
    %12629 = vmatprep.subr.bf16.mxu0 %v12333
    %12630 = vmatpush1.bf16.msra.mxu0 %v12332
    %12631 = vmatprep.subr.bf16.mxu0 %v12337
    %12632 = vmatpush1.bf16.msra.mxu0 %v12336
    %12633 = vmatprep.subr.bf16.mxu0 %v12341
    %12634 = vmatpush1.bf16.msra.mxu0 %v12340
    %12635 = vmatprep.subr.bf16.mxu0 %v12345
    %12636 = vmatpush1.bf16.msra.mxu0 %v12344
    %12637 = vmatprep.subr.bf16.mxu0 %v12349
    %12638 = vmatpush1.bf16.msra.mxu0 %v12348
    %12639 = vmatprep.subr.bf16.mxu0 %v12353
    %12640 = vmatpush1.bf16.msra.mxu0 %v12352
    %12641 = vmatprep.subr.bf16.mxu0 %v12357
    %12642 = vmatpush1.bf16.msra.mxu0 %v12356
    %12643 = vmatprep.subr.bf16.mxu0 %v12361
    %12644 = vmatpush1.bf16.msra.mxu0 %v12360
    %12645 = vmatprep.mubr.bf16.mxu0 %v11697
    %12646 = vmatmul.mubr.bf16.gmra.mrb[0].mxu0 %v11696
    %v12647 = vpop.f32.mrb[0].mxu0
    %v12648 = vadd.f32 %v12607, %v12647
    %v12649 = vpop.f32.mrb[0].mxu0
    %v12650 = vadd.f32 %v12609, %v12649
    %v12651 = vpop.f32.mrb[0].mxu0
    %v12652 = vpop.f32.mrb[0].mxu0
    %12653 = vdwg.mxu0
    %v12654 = vmul.f32 %v12566, 0.01
    %v12655 = vmul.f32 %v12568, 0.01
    %v12656 = vmul.f32 %v12648, 0.01
    %v12657 = vmul.f32 %v12650, 0.01
    %v12658 = vmax.f32 %v12566, %v12654
    %v12659 = vmax.f32 %v12568, %v12655
    %v12660 = vmax.f32 %v12648, %v12656
    %v12661 = vmax.f32 %v12650, %v12657
    %v12662 = vadd.f32 %v12658, %v11690
    %v12663 = vadd.f32 %v12659, %v11691
    %v12664 = vadd.f32 %v12660, %v11692
    %v12665 = vadd.f32 %v12661, %v11693
    %v12666 = vpack.c.bf16 %v12662, %v12662
    %v12667 = vpack.c.bf16 %v12663, %v12663
    %v12668 = vpack.c.bf16 %v12664, %v12664
    %v12669 = vpack.c.bf16 %v12665, %v12665
    %s12670 = scalar_lea.vmem [#allocation2], 13312
    %v12671 = vld [vmem:[%s12670] sm:$0xff]
    %v12672 = vld [vmem:[%s12670 + $0x8] sm:$0xff]
    %v12673 = vld [vmem:[%s12670 + $0x10] sm:$0xff]
    %v12674 = vld [vmem:[%s12670 + $0x18] sm:$0xff]
    %v12675 = vld [vmem:[%s12670 + $0x20] sm:$0xff]
    %v12676 = vld [vmem:[%s12670 + $0x28] sm:$0xff]
    %v12677 = vld [vmem:[%s12670 + $0x30] sm:$0xff]
    %v12678 = vld [vmem:[%s12670 + $0x38] sm:$0xff]
    %v12679 = vld [vmem:[%s12670 + $0x40] sm:$0xff]
    %v12680 = vld [vmem:[%s12670 + $0x48] sm:$0xff]
    %v12681 = vld [vmem:[%s12670 + $0x50] sm:$0xff]
    %v12682 = vld [vmem:[%s12670 + $0x58] sm:$0xff]
    %v12683 = vld [vmem:[%s12670 + $0x60] sm:$0xff]
    %v12684 = vld [vmem:[%s12670 + $0x68] sm:$0xff]
    %v12685 = vld [vmem:[%s12670 + $0x70] sm:$0xff]
    %v12686 = vld [vmem:[%s12670 + $0x78] sm:$0xff]
    %v12687 = vld [vmem:[%s12670 + $0x80] sm:$0xff]
    %v12688 = vld [vmem:[%s12670 + $0x88] sm:$0xff]
    %v12689 = vld [vmem:[%s12670 + $0x90] sm:$0xff]
    %v12690 = vld [vmem:[%s12670 + $0x98] sm:$0xff]
    %v12691 = vld [vmem:[%s12670 + $0xa0] sm:$0xff]
    %v12692 = vld [vmem:[%s12670 + $0xa8] sm:$0xff]
    %v12693 = vld [vmem:[%s12670 + $0xb0] sm:$0xff]
    %v12694 = vld [vmem:[%s12670 + $0xb8] sm:$0xff]
    %v12695 = vld [vmem:[%s12670 + $0xc0] sm:$0xff]
    %v12696 = vld [vmem:[%s12670 + $0xc8] sm:$0xff]
    %v12697 = vld [vmem:[%s12670 + $0xd0] sm:$0xff]
    %v12698 = vld [vmem:[%s12670 + $0xd8] sm:$0xff]
    %v12699 = vld [vmem:[%s12670 + $0xe0] sm:$0xff]
    %v12700 = vld [vmem:[%s12670 + $0xe8] sm:$0xff]
    %v12701 = vld [vmem:[%s12670 + $0xf0] sm:$0xff]
    %v12702 = vld [vmem:[%s12670 + $0xf8] sm:$0xff]
    %v12703 = vld [vmem:[%s12670 + $0x100] sm:$0xff]
    %v12704 = vld [vmem:[%s12670 + $0x108] sm:$0xff]
    %v12705 = vld [vmem:[%s12670 + $0x110] sm:$0xff]
    %v12706 = vld [vmem:[%s12670 + $0x118] sm:$0xff]
    %v12707 = vld [vmem:[%s12670 + $0x120] sm:$0xff]
    %v12708 = vld [vmem:[%s12670 + $0x128] sm:$0xff]
    %v12709 = vld [vmem:[%s12670 + $0x130] sm:$0xff]
    %v12710 = vld [vmem:[%s12670 + $0x138] sm:$0xff]
    %v12711 = vld [vmem:[%s12670 + $0x140] sm:$0xff]
    %v12712 = vld [vmem:[%s12670 + $0x148] sm:$0xff]
    %v12713 = vld [vmem:[%s12670 + $0x150] sm:$0xff]
    %v12714 = vld [vmem:[%s12670 + $0x158] sm:$0xff]
    %v12715 = vld [vmem:[%s12670 + $0x160] sm:$0xff]
    %v12716 = vld [vmem:[%s12670 + $0x168] sm:$0xff]
    %v12717 = vld [vmem:[%s12670 + $0x170] sm:$0xff]
    %v12718 = vld [vmem:[%s12670 + $0x178] sm:$0xff]
    %v12719 = vld [vmem:[%s12670 + $0x180] sm:$0xff]
    %v12720 = vld [vmem:[%s12670 + $0x188] sm:$0xff]
    %v12721 = vld [vmem:[%s12670 + $0x190] sm:$0xff]
    %v12722 = vld [vmem:[%s12670 + $0x198] sm:$0xff]
    %v12723 = vld [vmem:[%s12670 + $0x1a0] sm:$0xff]
    %v12724 = vld [vmem:[%s12670 + $0x1a8] sm:$0xff]
    %v12725 = vld [vmem:[%s12670 + $0x1b0] sm:$0xff]
    %v12726 = vld [vmem:[%s12670 + $0x1b8] sm:$0xff]
    %v12727 = vld [vmem:[%s12670 + $0x1c0] sm:$0xff]
    %v12728 = vld [vmem:[%s12670 + $0x1c8] sm:$0xff]
    %v12729 = vld [vmem:[%s12670 + $0x1d0] sm:$0xff]
    %v12730 = vld [vmem:[%s12670 + $0x1d8] sm:$0xff]
    %v12731 = vld [vmem:[%s12670 + $0x1e0] sm:$0xff]
    %v12732 = vld [vmem:[%s12670 + $0x1e8] sm:$0xff]
    %v12733 = vld [vmem:[%s12670 + $0x1f0] sm:$0xff]
    %v12734 = vld [vmem:[%s12670 + $0x1f8] sm:$0xff]
    %v12735 = vld [vmem:[%s12670 + $0x200] sm:$0xff]
    %v12736 = vld [vmem:[%s12670 + $0x208] sm:$0xff]
    %v12737 = vld [vmem:[%s12670 + $0x210] sm:$0xff]
    %v12738 = vld [vmem:[%s12670 + $0x218] sm:$0xff]
    %v12739 = vld [vmem:[%s12670 + $0x220] sm:$0xff]
    %v12740 = vld [vmem:[%s12670 + $0x228] sm:$0xff]
    %v12741 = vld [vmem:[%s12670 + $0x230] sm:$0xff]
    %v12742 = vld [vmem:[%s12670 + $0x238] sm:$0xff]
    %v12743 = vld [vmem:[%s12670 + $0x240] sm:$0xff]
    %v12744 = vld [vmem:[%s12670 + $0x248] sm:$0xff]
    %v12745 = vld [vmem:[%s12670 + $0x250] sm:$0xff]
    %v12746 = vld [vmem:[%s12670 + $0x258] sm:$0xff]
    %v12747 = vld [vmem:[%s12670 + $0x260] sm:$0xff]
    %v12748 = vld [vmem:[%s12670 + $0x268] sm:$0xff]
    %v12749 = vld [vmem:[%s12670 + $0x270] sm:$0xff]
    %v12750 = vld [vmem:[%s12670 + $0x278] sm:$0xff]
    %v12751 = vld [vmem:[%s12670 + $0x280] sm:$0xff]
    %v12752 = vld [vmem:[%s12670 + $0x288] sm:$0xff]
    %v12753 = vld [vmem:[%s12670 + $0x290] sm:$0xff]
    %v12754 = vld [vmem:[%s12670 + $0x298] sm:$0xff]
    %v12755 = vld [vmem:[%s12670 + $0x2a0] sm:$0xff]
    %v12756 = vld [vmem:[%s12670 + $0x2a8] sm:$0xff]
    %v12757 = vld [vmem:[%s12670 + $0x2b0] sm:$0xff]
    %v12758 = vld [vmem:[%s12670 + $0x2b8] sm:$0xff]
    %v12759 = vld [vmem:[%s12670 + $0x2c0] sm:$0xff]
    %v12760 = vld [vmem:[%s12670 + $0x2c8] sm:$0xff]
    %v12761 = vld [vmem:[%s12670 + $0x2d0] sm:$0xff]
    %v12762 = vld [vmem:[%s12670 + $0x2d8] sm:$0xff]
    %v12763 = vld [vmem:[%s12670 + $0x2e0] sm:$0xff]
    %v12764 = vld [vmem:[%s12670 + $0x2e8] sm:$0xff]
    %v12765 = vld [vmem:[%s12670 + $0x2f0] sm:$0xff]
    %v12766 = vld [vmem:[%s12670 + $0x2f8] sm:$0xff]
    %v12767 = vld [vmem:[%s12670 + $0x300] sm:$0xff]
    %v12768 = vld [vmem:[%s12670 + $0x308] sm:$0xff]
    %v12769 = vld [vmem:[%s12670 + $0x310] sm:$0xff]
    %v12770 = vld [vmem:[%s12670 + $0x318] sm:$0xff]
    %v12771 = vld [vmem:[%s12670 + $0x320] sm:$0xff]
    %v12772 = vld [vmem:[%s12670 + $0x328] sm:$0xff]
    %v12773 = vld [vmem:[%s12670 + $0x330] sm:$0xff]
    %v12774 = vld [vmem:[%s12670 + $0x338] sm:$0xff]
    %v12775 = vld [vmem:[%s12670 + $0x340] sm:$0xff]
    %v12776 = vld [vmem:[%s12670 + $0x348] sm:$0xff]
    %v12777 = vld [vmem:[%s12670 + $0x350] sm:$0xff]
    %v12778 = vld [vmem:[%s12670 + $0x358] sm:$0xff]
    %v12779 = vld [vmem:[%s12670 + $0x360] sm:$0xff]
    %v12780 = vld [vmem:[%s12670 + $0x368] sm:$0xff]
    %v12781 = vld [vmem:[%s12670 + $0x370] sm:$0xff]
    %v12782 = vld [vmem:[%s12670 + $0x378] sm:$0xff]
    %v12783 = vld [vmem:[%s12670 + $0x380] sm:$0xff]
    %v12784 = vld [vmem:[%s12670 + $0x388] sm:$0xff]
    %v12785 = vld [vmem:[%s12670 + $0x390] sm:$0xff]
    %v12786 = vld [vmem:[%s12670 + $0x398] sm:$0xff]
    %v12787 = vld [vmem:[%s12670 + $0x3a0] sm:$0xff]
    %v12788 = vld [vmem:[%s12670 + $0x3a8] sm:$0xff]
    %v12789 = vld [vmem:[%s12670 + $0x3b0] sm:$0xff]
    %v12790 = vld [vmem:[%s12670 + $0x3b8] sm:$0xff]
    %v12791 = vld [vmem:[%s12670 + $0x3c0] sm:$0xff]
    %v12792 = vld [vmem:[%s12670 + $0x3c8] sm:$0xff]
    %v12793 = vld [vmem:[%s12670 + $0x3d0] sm:$0xff]
    %v12794 = vld [vmem:[%s12670 + $0x3d8] sm:$0xff]
    %v12795 = vld [vmem:[%s12670 + $0x3e0] sm:$0xff]
    %v12796 = vld [vmem:[%s12670 + $0x3e8] sm:$0xff]
    %v12797 = vld [vmem:[%s12670 + $0x3f0] sm:$0xff]
    %v12798 = vld [vmem:[%s12670 + $0x3f8] sm:$0xff]
    %s12799 = scalar_lea.vmem [#allocation4], 52
    %v12800 = vld [vmem:[%s12799] sm:$0xf]
    %v12802 = vlaneseq
    %v12803 = vshrl.u32 %v12802, 7
    %v12804 = vsub.s32 0, %v12803
    %v12805 = vrot.slane %v12800, %v12804
    %v12806 = vlaneseq
    %v12807 = vshrl.u32 %v12806, 7
    %v12808 = vsub.s32 1, %v12807
    %v12809 = vrot.slane %v12800, %v12808
    %v12810 = vlaneseq
    %v12811 = vshrl.u32 %v12810, 7
    %v12812 = vsub.s32 2, %v12811
    %v12813 = vrot.slane %v12800, %v12812
    %v12814 = vlaneseq
    %v12815 = vshrl.u32 %v12814, 7
    %v12816 = vsub.s32 3, %v12815
    %v12817 = vrot.slane %v12800, %v12816
    %v12950 = vunpack.c.l.b16 %v12671
    %v12951 = vunpack.c.h.b16 %v12671
    %v12952 = vunpack.c.l.b16 %v12672
    %v12953 = vunpack.c.h.b16 %v12672
    %v12954 = vunpack.c.l.b16 %v12673
    %v12955 = vunpack.c.h.b16 %v12673
    %v12956 = vunpack.c.l.b16 %v12674
    %v12957 = vunpack.c.h.b16 %v12674
    %v12958 = vunpack.c.l.b16 %v12675
    %v12959 = vunpack.c.h.b16 %v12675
    %v12960 = vunpack.c.l.b16 %v12676
    %v12961 = vunpack.c.h.b16 %v12676
    %v12962 = vunpack.c.l.b16 %v12677
    %v12963 = vunpack.c.h.b16 %v12677
    %v12964 = vunpack.c.l.b16 %v12678
    %v12965 = vunpack.c.h.b16 %v12678
    %v12966 = vunpack.c.l.b16 %v12679
    %v12967 = vunpack.c.h.b16 %v12679
    %v12968 = vunpack.c.l.b16 %v12680
    %v12969 = vunpack.c.h.b16 %v12680
    %v12970 = vunpack.c.l.b16 %v12681
    %v12971 = vunpack.c.h.b16 %v12681
    %v12972 = vunpack.c.l.b16 %v12682
    %v12973 = vunpack.c.h.b16 %v12682
    %v12974 = vunpack.c.l.b16 %v12683
    %v12975 = vunpack.c.h.b16 %v12683
    %v12976 = vunpack.c.l.b16 %v12684
    %v12977 = vunpack.c.h.b16 %v12684
    %v12978 = vunpack.c.l.b16 %v12685
    %v12979 = vunpack.c.h.b16 %v12685
    %v12980 = vunpack.c.l.b16 %v12686
    %v12981 = vunpack.c.h.b16 %v12686
    %v12982 = vunpack.c.l.b16 %v12687
    %v12983 = vunpack.c.h.b16 %v12687
    %v12984 = vunpack.c.l.b16 %v12688
    %v12985 = vunpack.c.h.b16 %v12688
    %v12986 = vunpack.c.l.b16 %v12689
    %v12987 = vunpack.c.h.b16 %v12689
    %v12988 = vunpack.c.l.b16 %v12690
    %v12989 = vunpack.c.h.b16 %v12690
    %v12990 = vunpack.c.l.b16 %v12691
    %v12991 = vunpack.c.h.b16 %v12691
    %v12992 = vunpack.c.l.b16 %v12692
    %v12993 = vunpack.c.h.b16 %v12692
    %v12994 = vunpack.c.l.b16 %v12693
    %v12995 = vunpack.c.h.b16 %v12693
    %v12996 = vunpack.c.l.b16 %v12694
    %v12997 = vunpack.c.h.b16 %v12694
    %v12998 = vunpack.c.l.b16 %v12695
    %v12999 = vunpack.c.h.b16 %v12695
    %v13000 = vunpack.c.l.b16 %v12696
    %v13001 = vunpack.c.h.b16 %v12696
    %v13002 = vunpack.c.l.b16 %v12697
    %v13003 = vunpack.c.h.b16 %v12697
    %v13004 = vunpack.c.l.b16 %v12698
    %v13005 = vunpack.c.h.b16 %v12698
    %v13006 = vunpack.c.l.b16 %v12699
    %v13007 = vunpack.c.h.b16 %v12699
    %v13008 = vunpack.c.l.b16 %v12700
    %v13009 = vunpack.c.h.b16 %v12700
    %v13010 = vunpack.c.l.b16 %v12701
    %v13011 = vunpack.c.h.b16 %v12701
    %v13012 = vunpack.c.l.b16 %v12702
    %v13013 = vunpack.c.h.b16 %v12702
    %v13014 = vunpack.c.l.b16 %v12703
    %v13015 = vunpack.c.h.b16 %v12703
    %v13016 = vunpack.c.l.b16 %v12704
    %v13017 = vunpack.c.h.b16 %v12704
    %v13018 = vunpack.c.l.b16 %v12705
    %v13019 = vunpack.c.h.b16 %v12705
    %v13020 = vunpack.c.l.b16 %v12706
    %v13021 = vunpack.c.h.b16 %v12706
    %v13022 = vunpack.c.l.b16 %v12707
    %v13023 = vunpack.c.h.b16 %v12707
    %v13024 = vunpack.c.l.b16 %v12708
    %v13025 = vunpack.c.h.b16 %v12708
    %v13026 = vunpack.c.l.b16 %v12709
    %v13027 = vunpack.c.h.b16 %v12709
    %v13028 = vunpack.c.l.b16 %v12710
    %v13029 = vunpack.c.h.b16 %v12710
    %v13030 = vunpack.c.l.b16 %v12711
    %v13031 = vunpack.c.h.b16 %v12711
    %v13032 = vunpack.c.l.b16 %v12712
    %v13033 = vunpack.c.h.b16 %v12712
    %v13034 = vunpack.c.l.b16 %v12713
    %v13035 = vunpack.c.h.b16 %v12713
    %v13036 = vunpack.c.l.b16 %v12714
    %v13037 = vunpack.c.h.b16 %v12714
    %v13038 = vunpack.c.l.b16 %v12715
    %v13039 = vunpack.c.h.b16 %v12715
    %v13040 = vunpack.c.l.b16 %v12716
    %v13041 = vunpack.c.h.b16 %v12716
    %v13042 = vunpack.c.l.b16 %v12717
    %v13043 = vunpack.c.h.b16 %v12717
    %v13044 = vunpack.c.l.b16 %v12718
    %v13045 = vunpack.c.h.b16 %v12718
    %v13046 = vunpack.c.l.b16 %v12719
    %v13047 = vunpack.c.h.b16 %v12719
    %v13048 = vunpack.c.l.b16 %v12720
    %v13049 = vunpack.c.h.b16 %v12720
    %v13050 = vunpack.c.l.b16 %v12721
    %v13051 = vunpack.c.h.b16 %v12721
    %v13052 = vunpack.c.l.b16 %v12722
    %v13053 = vunpack.c.h.b16 %v12722
    %v13054 = vunpack.c.l.b16 %v12723
    %v13055 = vunpack.c.h.b16 %v12723
    %v13056 = vunpack.c.l.b16 %v12724
    %v13057 = vunpack.c.h.b16 %v12724
    %v13058 = vunpack.c.l.b16 %v12725
    %v13059 = vunpack.c.h.b16 %v12725
    %v13060 = vunpack.c.l.b16 %v12726
    %v13061 = vunpack.c.h.b16 %v12726
    %v13062 = vunpack.c.l.b16 %v12727
    %v13063 = vunpack.c.h.b16 %v12727
    %v13064 = vunpack.c.l.b16 %v12728
    %v13065 = vunpack.c.h.b16 %v12728
    %v13066 = vunpack.c.l.b16 %v12729
    %v13067 = vunpack.c.h.b16 %v12729
    %v13068 = vunpack.c.l.b16 %v12730
    %v13069 = vunpack.c.h.b16 %v12730
    %v13070 = vunpack.c.l.b16 %v12731
    %v13071 = vunpack.c.h.b16 %v12731
    %v13072 = vunpack.c.l.b16 %v12732
    %v13073 = vunpack.c.h.b16 %v12732
    %v13074 = vunpack.c.l.b16 %v12733
    %v13075 = vunpack.c.h.b16 %v12733
    %v13076 = vunpack.c.l.b16 %v12734
    %v13077 = vunpack.c.h.b16 %v12734
    %v13078 = vunpack.c.l.b16 %v12735
    %v13079 = vunpack.c.h.b16 %v12735
    %v13080 = vunpack.c.l.b16 %v12736
    %v13081 = vunpack.c.h.b16 %v12736
    %v13082 = vunpack.c.l.b16 %v12737
    %v13083 = vunpack.c.h.b16 %v12737
    %v13084 = vunpack.c.l.b16 %v12738
    %v13085 = vunpack.c.h.b16 %v12738
    %v13086 = vunpack.c.l.b16 %v12739
    %v13087 = vunpack.c.h.b16 %v12739
    %v13088 = vunpack.c.l.b16 %v12740
    %v13089 = vunpack.c.h.b16 %v12740
    %v13090 = vunpack.c.l.b16 %v12741
    %v13091 = vunpack.c.h.b16 %v12741
    %v13092 = vunpack.c.l.b16 %v12742
    %v13093 = vunpack.c.h.b16 %v12742
    %v13094 = vunpack.c.l.b16 %v12743
    %v13095 = vunpack.c.h.b16 %v12743
    %v13096 = vunpack.c.l.b16 %v12744
    %v13097 = vunpack.c.h.b16 %v12744
    %v13098 = vunpack.c.l.b16 %v12745
    %v13099 = vunpack.c.h.b16 %v12745
    %v13100 = vunpack.c.l.b16 %v12746
    %v13101 = vunpack.c.h.b16 %v12746
    %v13102 = vunpack.c.l.b16 %v12747
    %v13103 = vunpack.c.h.b16 %v12747
    %v13104 = vunpack.c.l.b16 %v12748
    %v13105 = vunpack.c.h.b16 %v12748
    %v13106 = vunpack.c.l.b16 %v12749
    %v13107 = vunpack.c.h.b16 %v12749
    %v13108 = vunpack.c.l.b16 %v12750
    %v13109 = vunpack.c.h.b16 %v12750
    %v13110 = vunpack.c.l.b16 %v12751
    %v13111 = vunpack.c.h.b16 %v12751
    %v13112 = vunpack.c.l.b16 %v12752
    %v13113 = vunpack.c.h.b16 %v12752
    %v13114 = vunpack.c.l.b16 %v12753
    %v13115 = vunpack.c.h.b16 %v12753
    %v13116 = vunpack.c.l.b16 %v12754
    %v13117 = vunpack.c.h.b16 %v12754
    %v13118 = vunpack.c.l.b16 %v12755
    %v13119 = vunpack.c.h.b16 %v12755
    %v13120 = vunpack.c.l.b16 %v12756
    %v13121 = vunpack.c.h.b16 %v12756
    %v13122 = vunpack.c.l.b16 %v12757
    %v13123 = vunpack.c.h.b16 %v12757
    %v13124 = vunpack.c.l.b16 %v12758
    %v13125 = vunpack.c.h.b16 %v12758
    %v13126 = vunpack.c.l.b16 %v12759
    %v13127 = vunpack.c.h.b16 %v12759
    %v13128 = vunpack.c.l.b16 %v12760
    %v13129 = vunpack.c.h.b16 %v12760
    %v13130 = vunpack.c.l.b16 %v12761
    %v13131 = vunpack.c.h.b16 %v12761
    %v13132 = vunpack.c.l.b16 %v12762
    %v13133 = vunpack.c.h.b16 %v12762
    %v13134 = vunpack.c.l.b16 %v12763
    %v13135 = vunpack.c.h.b16 %v12763
    %v13136 = vunpack.c.l.b16 %v12764
    %v13137 = vunpack.c.h.b16 %v12764
    %v13138 = vunpack.c.l.b16 %v12765
    %v13139 = vunpack.c.h.b16 %v12765
    %v13140 = vunpack.c.l.b16 %v12766
    %v13141 = vunpack.c.h.b16 %v12766
    %v13142 = vunpack.c.l.b16 %v12767
    %v13143 = vunpack.c.h.b16 %v12767
    %v13144 = vunpack.c.l.b16 %v12768
    %v13145 = vunpack.c.h.b16 %v12768
    %v13146 = vunpack.c.l.b16 %v12769
    %v13147 = vunpack.c.h.b16 %v12769
    %v13148 = vunpack.c.l.b16 %v12770
    %v13149 = vunpack.c.h.b16 %v12770
    %v13150 = vunpack.c.l.b16 %v12771
    %v13151 = vunpack.c.h.b16 %v12771
    %v13152 = vunpack.c.l.b16 %v12772
    %v13153 = vunpack.c.h.b16 %v12772
    %v13154 = vunpack.c.l.b16 %v12773
    %v13155 = vunpack.c.h.b16 %v12773
    %v13156 = vunpack.c.l.b16 %v12774
    %v13157 = vunpack.c.h.b16 %v12774
    %v13158 = vunpack.c.l.b16 %v12775
    %v13159 = vunpack.c.h.b16 %v12775
    %v13160 = vunpack.c.l.b16 %v12776
    %v13161 = vunpack.c.h.b16 %v12776
    %v13162 = vunpack.c.l.b16 %v12777
    %v13163 = vunpack.c.h.b16 %v12777
    %v13164 = vunpack.c.l.b16 %v12778
    %v13165 = vunpack.c.h.b16 %v12778
    %v13166 = vunpack.c.l.b16 %v12779
    %v13167 = vunpack.c.h.b16 %v12779
    %v13168 = vunpack.c.l.b16 %v12780
    %v13169 = vunpack.c.h.b16 %v12780
    %v13170 = vunpack.c.l.b16 %v12781
    %v13171 = vunpack.c.h.b16 %v12781
    %v13172 = vunpack.c.l.b16 %v12782
    %v13173 = vunpack.c.h.b16 %v12782
    %v13174 = vunpack.c.l.b16 %v12783
    %v13175 = vunpack.c.h.b16 %v12783
    %v13176 = vunpack.c.l.b16 %v12784
    %v13177 = vunpack.c.h.b16 %v12784
    %v13178 = vunpack.c.l.b16 %v12785
    %v13179 = vunpack.c.h.b16 %v12785
    %v13180 = vunpack.c.l.b16 %v12786
    %v13181 = vunpack.c.h.b16 %v12786
    %v13182 = vunpack.c.l.b16 %v12787
    %v13183 = vunpack.c.h.b16 %v12787
    %v13184 = vunpack.c.l.b16 %v12788
    %v13185 = vunpack.c.h.b16 %v12788
    %v13186 = vunpack.c.l.b16 %v12789
    %v13187 = vunpack.c.h.b16 %v12789
    %v13188 = vunpack.c.l.b16 %v12790
    %v13189 = vunpack.c.h.b16 %v12790
    %v13190 = vunpack.c.l.b16 %v12791
    %v13191 = vunpack.c.h.b16 %v12791
    %v13192 = vunpack.c.l.b16 %v12792
    %v13193 = vunpack.c.h.b16 %v12792
    %v13194 = vunpack.c.l.b16 %v12793
    %v13195 = vunpack.c.h.b16 %v12793
    %v13196 = vunpack.c.l.b16 %v12794
    %v13197 = vunpack.c.h.b16 %v12794
    %v13198 = vunpack.c.l.b16 %v12795
    %v13199 = vunpack.c.h.b16 %v12795
    %v13200 = vunpack.c.l.b16 %v12796
    %v13201 = vunpack.c.h.b16 %v12796
    %v13202 = vunpack.c.l.b16 %v12797
    %v13203 = vunpack.c.h.b16 %v12797
    %v13204 = vunpack.c.l.b16 %v12798
    %v13205 = vunpack.c.h.b16 %v12798
    %v13206 = vpack.c.b16 %v12954, %v12950
    %v13207 = vpack.c.b16 %v12955, %v12951
    %v13208 = vpack.c.b16 %v12956, %v12952
    %v13209 = vpack.c.b16 %v12957, %v12953
    %v13210 = vpack.c.b16 %v12962, %v12958
    %v13211 = vpack.c.b16 %v12963, %v12959
    %v13212 = vpack.c.b16 %v12964, %v12960
    %v13213 = vpack.c.b16 %v12965, %v12961
    %v13214 = vpack.c.b16 %v12970, %v12966
    %v13215 = vpack.c.b16 %v12971, %v12967
    %v13216 = vpack.c.b16 %v12972, %v12968
    %v13217 = vpack.c.b16 %v12973, %v12969
    %v13218 = vpack.c.b16 %v12978, %v12974
    %v13219 = vpack.c.b16 %v12979, %v12975
    %v13220 = vpack.c.b16 %v12980, %v12976
    %v13221 = vpack.c.b16 %v12981, %v12977
    %v13222 = vpack.c.b16 %v12986, %v12982
    %v13223 = vpack.c.b16 %v12987, %v12983
    %v13224 = vpack.c.b16 %v12988, %v12984
    %v13225 = vpack.c.b16 %v12989, %v12985
    %v13226 = vpack.c.b16 %v12994, %v12990
    %v13227 = vpack.c.b16 %v12995, %v12991
    %v13228 = vpack.c.b16 %v12996, %v12992
    %v13229 = vpack.c.b16 %v12997, %v12993
    %v13230 = vpack.c.b16 %v13002, %v12998
    %v13231 = vpack.c.b16 %v13003, %v12999
    %v13232 = vpack.c.b16 %v13004, %v13000
    %v13233 = vpack.c.b16 %v13005, %v13001
    %v13234 = vpack.c.b16 %v13010, %v13006
    %v13235 = vpack.c.b16 %v13011, %v13007
    %v13236 = vpack.c.b16 %v13012, %v13008
    %v13237 = vpack.c.b16 %v13013, %v13009
    %v13238 = vpack.c.b16 %v13018, %v13014
    %v13239 = vpack.c.b16 %v13019, %v13015
    %v13240 = vpack.c.b16 %v13020, %v13016
    %v13241 = vpack.c.b16 %v13021, %v13017
    %v13242 = vpack.c.b16 %v13026, %v13022
    %v13243 = vpack.c.b16 %v13027, %v13023
    %v13244 = vpack.c.b16 %v13028, %v13024
    %v13245 = vpack.c.b16 %v13029, %v13025
    %v13246 = vpack.c.b16 %v13034, %v13030
    %v13247 = vpack.c.b16 %v13035, %v13031
    %v13248 = vpack.c.b16 %v13036, %v13032
    %v13249 = vpack.c.b16 %v13037, %v13033
    %v13250 = vpack.c.b16 %v13042, %v13038
    %v13251 = vpack.c.b16 %v13043, %v13039
    %v13252 = vpack.c.b16 %v13044, %v13040
    %v13253 = vpack.c.b16 %v13045, %v13041
    %v13254 = vpack.c.b16 %v13050, %v13046
    %v13255 = vpack.c.b16 %v13051, %v13047
    %v13256 = vpack.c.b16 %v13052, %v13048
    %v13257 = vpack.c.b16 %v13053, %v13049
    %v13258 = vpack.c.b16 %v13058, %v13054
    %v13259 = vpack.c.b16 %v13059, %v13055
    %v13260 = vpack.c.b16 %v13060, %v13056
    %v13261 = vpack.c.b16 %v13061, %v13057
    %v13262 = vpack.c.b16 %v13066, %v13062
    %v13263 = vpack.c.b16 %v13067, %v13063
    %v13264 = vpack.c.b16 %v13068, %v13064
    %v13265 = vpack.c.b16 %v13069, %v13065
    %v13266 = vpack.c.b16 %v13074, %v13070
    %v13267 = vpack.c.b16 %v13075, %v13071
    %v13268 = vpack.c.b16 %v13076, %v13072
    %v13269 = vpack.c.b16 %v13077, %v13073
    %v13270 = vpack.c.b16 %v13082, %v13078
    %v13271 = vpack.c.b16 %v13083, %v13079
    %v13272 = vpack.c.b16 %v13084, %v13080
    %v13273 = vpack.c.b16 %v13085, %v13081
    %v13274 = vpack.c.b16 %v13090, %v13086
    %v13275 = vpack.c.b16 %v13091, %v13087
    %v13276 = vpack.c.b16 %v13092, %v13088
    %v13277 = vpack.c.b16 %v13093, %v13089
    %v13278 = vpack.c.b16 %v13098, %v13094
    %v13279 = vpack.c.b16 %v13099, %v13095
    %v13280 = vpack.c.b16 %v13100, %v13096
    %v13281 = vpack.c.b16 %v13101, %v13097
    %v13282 = vpack.c.b16 %v13106, %v13102
    %v13283 = vpack.c.b16 %v13107, %v13103
    %v13284 = vpack.c.b16 %v13108, %v13104
    %v13285 = vpack.c.b16 %v13109, %v13105
    %v13286 = vpack.c.b16 %v13114, %v13110
    %v13287 = vpack.c.b16 %v13115, %v13111
    %v13288 = vpack.c.b16 %v13116, %v13112
    %v13289 = vpack.c.b16 %v13117, %v13113
    %v13290 = vpack.c.b16 %v13122, %v13118
    %v13291 = vpack.c.b16 %v13123, %v13119
    %v13292 = vpack.c.b16 %v13124, %v13120
    %v13293 = vpack.c.b16 %v13125, %v13121
    %v13294 = vpack.c.b16 %v13130, %v13126
    %v13295 = vpack.c.b16 %v13131, %v13127
    %v13296 = vpack.c.b16 %v13132, %v13128
    %v13297 = vpack.c.b16 %v13133, %v13129
    %v13298 = vpack.c.b16 %v13138, %v13134
    %v13299 = vpack.c.b16 %v13139, %v13135
    %v13300 = vpack.c.b16 %v13140, %v13136
    %v13301 = vpack.c.b16 %v13141, %v13137
    %v13302 = vpack.c.b16 %v13146, %v13142
    %v13303 = vpack.c.b16 %v13147, %v13143
    %v13304 = vpack.c.b16 %v13148, %v13144
    %v13305 = vpack.c.b16 %v13149, %v13145
    %v13306 = vpack.c.b16 %v13154, %v13150
    %v13307 = vpack.c.b16 %v13155, %v13151
    %v13308 = vpack.c.b16 %v13156, %v13152
    %v13309 = vpack.c.b16 %v13157, %v13153
    %v13310 = vpack.c.b16 %v13162, %v13158
    %v13311 = vpack.c.b16 %v13163, %v13159
    %v13312 = vpack.c.b16 %v13164, %v13160
    %v13313 = vpack.c.b16 %v13165, %v13161
    %v13314 = vpack.c.b16 %v13170, %v13166
    %v13315 = vpack.c.b16 %v13171, %v13167
    %v13316 = vpack.c.b16 %v13172, %v13168
    %v13317 = vpack.c.b16 %v13173, %v13169
    %v13318 = vpack.c.b16 %v13178, %v13174
    %v13319 = vpack.c.b16 %v13179, %v13175
    %v13320 = vpack.c.b16 %v13180, %v13176
    %v13321 = vpack.c.b16 %v13181, %v13177
    %v13322 = vpack.c.b16 %v13186, %v13182
    %v13323 = vpack.c.b16 %v13187, %v13183
    %v13324 = vpack.c.b16 %v13188, %v13184
    %v13325 = vpack.c.b16 %v13189, %v13185
    %v13326 = vpack.c.b16 %v13194, %v13190
    %v13327 = vpack.c.b16 %v13195, %v13191
    %v13328 = vpack.c.b16 %v13196, %v13192
    %v13329 = vpack.c.b16 %v13197, %v13193
    %v13330 = vpack.c.b16 %v13202, %v13198
    %v13331 = vpack.c.b16 %v13203, %v13199
    %v13332 = vpack.c.b16 %v13204, %v13200
    %v13333 = vpack.c.b16 %v13205, %v13201
    %13462 = vmatprep.subr.bf16.mxu0 %v13207
    %13463 = vmatpush1.bf16.msra.mxu0 %v13206
    %13464 = vmatprep.subr.bf16.mxu0 %v13211
    %13465 = vmatpush1.bf16.msra.mxu0 %v13210
    %13466 = vmatprep.subr.bf16.mxu0 %v13215
    %13467 = vmatpush1.bf16.msra.mxu0 %v13214
    %13468 = vmatprep.subr.bf16.mxu0 %v13219
    %13469 = vmatpush1.bf16.msra.mxu0 %v13218
    %13470 = vmatprep.subr.bf16.mxu0 %v13223
    %13471 = vmatpush1.bf16.msra.mxu0 %v13222
    %13472 = vmatprep.subr.bf16.mxu0 %v13227
    %13473 = vmatpush1.bf16.msra.mxu0 %v13226
    %13474 = vmatprep.subr.bf16.mxu0 %v13231
    %13475 = vmatpush1.bf16.msra.mxu0 %v13230
    %13476 = vmatprep.subr.bf16.mxu0 %v13235
    %13477 = vmatpush1.bf16.msra.mxu0 %v13234
    %13478 = vmatprep.subr.bf16.mxu0 %v13239
    %13479 = vmatpush1.bf16.msra.mxu0 %v13238
    %13480 = vmatprep.subr.bf16.mxu0 %v13243
    %13481 = vmatpush1.bf16.msra.mxu0 %v13242
    %13482 = vmatprep.subr.bf16.mxu0 %v13247
    %13483 = vmatpush1.bf16.msra.mxu0 %v13246
    %13484 = vmatprep.subr.bf16.mxu0 %v13251
    %13485 = vmatpush1.bf16.msra.mxu0 %v13250
    %13486 = vmatprep.subr.bf16.mxu0 %v13255
    %13487 = vmatpush1.bf16.msra.mxu0 %v13254
    %13488 = vmatprep.subr.bf16.mxu0 %v13259
    %13489 = vmatpush1.bf16.msra.mxu0 %v13258
    %13490 = vmatprep.subr.bf16.mxu0 %v13263
    %13491 = vmatpush1.bf16.msra.mxu0 %v13262
    %13492 = vmatprep.subr.bf16.mxu0 %v13267
    %13493 = vmatpush1.bf16.msra.mxu0 %v13266
    %13494 = vmatprep.mubr.bf16.mxu0 %v12667
    %13495 = vmatmul.mubr.bf16.gmra.mrb[0].mxu0 %v12666
    %v13496 = vpop.f32.mrb[0].mxu0
    %v13497 = vadd.f32 %v12805, %v13496
    %v13498 = vpop.f32.mrb[0].mxu0
    %v13499 = vadd.f32 %v12809, %v13498
    %v13500 = vpop.f32.mrb[0].mxu0
    %v13501 = vpop.f32.mrb[0].mxu0
    %13502 = vdwg.mxu0
    %13503 = vmatprep.subr.bf16.mxu0 %v13271
    %13504 = vmatpush1.bf16.msra.mxu0 %v13270
    %13505 = vmatprep.subr.bf16.mxu0 %v13275
    %13506 = vmatpush1.bf16.msra.mxu0 %v13274
    %13507 = vmatprep.subr.bf16.mxu0 %v13279
    %13508 = vmatpush1.bf16.msra.mxu0 %v13278
    %13509 = vmatprep.subr.bf16.mxu0 %v13283
    %13510 = vmatpush1.bf16.msra.mxu0 %v13282
    %13511 = vmatprep.subr.bf16.mxu0 %v13287
    %13512 = vmatpush1.bf16.msra.mxu0 %v13286
    %13513 = vmatprep.subr.bf16.mxu0 %v13291
    %13514 = vmatpush1.bf16.msra.mxu0 %v13290
    %13515 = vmatprep.subr.bf16.mxu0 %v13295
    %13516 = vmatpush1.bf16.msra.mxu0 %v13294
    %13517 = vmatprep.subr.bf16.mxu0 %v13299
    %13518 = vmatpush1.bf16.msra.mxu0 %v13298
    %13519 = vmatprep.subr.bf16.mxu0 %v13303
    %13520 = vmatpush1.bf16.msra.mxu0 %v13302
    %13521 = vmatprep.subr.bf16.mxu0 %v13307
    %13522 = vmatpush1.bf16.msra.mxu0 %v13306
    %13523 = vmatprep.subr.bf16.mxu0 %v13311
    %13524 = vmatpush1.bf16.msra.mxu0 %v13310
    %13525 = vmatprep.subr.bf16.mxu0 %v13315
    %13526 = vmatpush1.bf16.msra.mxu0 %v13314
    %13527 = vmatprep.subr.bf16.mxu0 %v13319
    %13528 = vmatpush1.bf16.msra.mxu0 %v13318
    %13529 = vmatprep.subr.bf16.mxu0 %v13323
    %13530 = vmatpush1.bf16.msra.mxu0 %v13322
    %13531 = vmatprep.subr.bf16.mxu0 %v13327
    %13532 = vmatpush1.bf16.msra.mxu0 %v13326
    %13533 = vmatprep.subr.bf16.mxu0 %v13331
    %13534 = vmatpush1.bf16.msra.mxu0 %v13330
    %13535 = vmatprep.mubr.bf16.mxu0 %v12669
    %13536 = vmatmul.mubr.bf16.gmra.mrb[0].mxu0 %v12668
    %v13537 = vpop.f32.mrb[0].mxu0
    %v13538 = vadd.f32 %v13497, %v13537
    %v13539 = vpop.f32.mrb[0].mxu0
    %v13540 = vadd.f32 %v13499, %v13539
    %v13541 = vpop.f32.mrb[0].mxu0
    %v13542 = vpop.f32.mrb[0].mxu0
    %13543 = vdwg.mxu0
    %13544 = vmatprep.subr.bf16.mxu0 %v13209
    %13545 = vmatpush1.bf16.msra.mxu0 %v13208
    %13546 = vmatprep.subr.bf16.mxu0 %v13213
    %13547 = vmatpush1.bf16.msra.mxu0 %v13212
    %13548 = vmatprep.subr.bf16.mxu0 %v13217
    %13549 = vmatpush1.bf16.msra.mxu0 %v13216
    %13550 = vmatprep.subr.bf16.mxu0 %v13221
    %13551 = vmatpush1.bf16.msra.mxu0 %v13220
    %13552 = vmatprep.subr.bf16.mxu0 %v13225
    %13553 = vmatpush1.bf16.msra.mxu0 %v13224
    %13554 = vmatprep.subr.bf16.mxu0 %v13229
    %13555 = vmatpush1.bf16.msra.mxu0 %v13228
    %13556 = vmatprep.subr.bf16.mxu0 %v13233
    %13557 = vmatpush1.bf16.msra.mxu0 %v13232
    %13558 = vmatprep.subr.bf16.mxu0 %v13237
    %13559 = vmatpush1.bf16.msra.mxu0 %v13236
    %13560 = vmatprep.subr.bf16.mxu0 %v13241
    %13561 = vmatpush1.bf16.msra.mxu0 %v13240
    %13562 = vmatprep.subr.bf16.mxu0 %v13245
    %13563 = vmatpush1.bf16.msra.mxu0 %v13244
    %13564 = vmatprep.subr.bf16.mxu0 %v13249
    %13565 = vmatpush1.bf16.msra.mxu0 %v13248
    %13566 = vmatprep.subr.bf16.mxu0 %v13253
    %13567 = vmatpush1.bf16.msra.mxu0 %v13252
    %13568 = vmatprep.subr.bf16.mxu0 %v13257
    %13569 = vmatpush1.bf16.msra.mxu0 %v13256
    %13570 = vmatprep.subr.bf16.mxu0 %v13261
    %13571 = vmatpush1.bf16.msra.mxu0 %v13260
    %13572 = vmatprep.subr.bf16.mxu0 %v13265
    %13573 = vmatpush1.bf16.msra.mxu0 %v13264
    %13574 = vmatprep.subr.bf16.mxu0 %v13269
    %13575 = vmatpush1.bf16.msra.mxu0 %v13268
    %13576 = vmatprep.mubr.bf16.mxu0 %v12667
    %13577 = vmatmul.mubr.bf16.gmra.mrb[0].mxu0 %v12666
    %v13578 = vpop.f32.mrb[0].mxu0
    %v13579 = vadd.f32 %v12813, %v13578
    %v13580 = vpop.f32.mrb[0].mxu0
    %v13581 = vadd.f32 %v12817, %v13580
    %v13582 = vpop.f32.mrb[0].mxu0
    %v13583 = vpop.f32.mrb[0].mxu0
    %13584 = vdwg.mxu0
    %13585 = vmatprep.subr.bf16.mxu0 %v13273
    %13586 = vmatpush1.bf16.msra.mxu0 %v13272
    %13587 = vmatprep.subr.bf16.mxu0 %v13277
    %13588 = vmatpush1.bf16.msra.mxu0 %v13276
    %13589 = vmatprep.subr.bf16.mxu0 %v13281
    %13590 = vmatpush1.bf16.msra.mxu0 %v13280
    %13591 = vmatprep.subr.bf16.mxu0 %v13285
    %13592 = vmatpush1.bf16.msra.mxu0 %v13284
    %13593 = vmatprep.subr.bf16.mxu0 %v13289
    %13594 = vmatpush1.bf16.msra.mxu0 %v13288
    %13595 = vmatprep.subr.bf16.mxu0 %v13293
    %13596 = vmatpush1.bf16.msra.mxu0 %v13292
    %13597 = vmatprep.subr.bf16.mxu0 %v13297
    %13598 = vmatpush1.bf16.msra.mxu0 %v13296
    %13599 = vmatprep.subr.bf16.mxu0 %v13301
    %13600 = vmatpush1.bf16.msra.mxu0 %v13300
    %13601 = vmatprep.subr.bf16.mxu0 %v13305
    %13602 = vmatpush1.bf16.msra.mxu0 %v13304
    %13603 = vmatprep.subr.bf16.mxu0 %v13309
    %13604 = vmatpush1.bf16.msra.mxu0 %v13308
    %13605 = vmatprep.subr.bf16.mxu0 %v13313
    %13606 = vmatpush1.bf16.msra.mxu0 %v13312
    %13607 = vmatprep.subr.bf16.mxu0 %v13317
    %13608 = vmatpush1.bf16.msra.mxu0 %v13316
    %13609 = vmatprep.subr.bf16.mxu0 %v13321
    %13610 = vmatpush1.bf16.msra.mxu0 %v13320
    %13611 = vmatprep.subr.bf16.mxu0 %v13325
    %13612 = vmatpush1.bf16.msra.mxu0 %v13324
    %13613 = vmatprep.subr.bf16.mxu0 %v13329
    %13614 = vmatpush1.bf16.msra.mxu0 %v13328
    %13615 = vmatprep.subr.bf16.mxu0 %v13333
    %13616 = vmatpush1.bf16.msra.mxu0 %v13332
    %13617 = vmatprep.mubr.bf16.mxu0 %v12669
    %13618 = vmatmul.mubr.bf16.gmra.mrb[0].mxu0 %v12668
    %v13619 = vpop.f32.mrb[0].mxu0
    %v13620 = vadd.f32 %v13579, %v13619
    %v13621 = vpop.f32.mrb[0].mxu0
    %v13622 = vadd.f32 %v13581, %v13621
    %v13623 = vpop.f32.mrb[0].mxu0
    %v13624 = vpop.f32.mrb[0].mxu0
    %13625 = vdwg.mxu0
    %v13626 = vmul.f32 %v13538, 0.01
    %v13627 = vmul.f32 %v13540, 0.01
    %v13628 = vmul.f32 %v13620, 0.01
    %v13629 = vmul.f32 %v13622, 0.01
    %v13630 = vmax.f32 %v13538, %v13626
    %v13631 = vmax.f32 %v13540, %v13627
    %v13632 = vmax.f32 %v13620, %v13628
    %v13633 = vmax.f32 %v13622, %v13629
    %v13634 = vadd.f32 %v13630, %v12662
    %v13635 = vadd.f32 %v13631, %v12663
    %v13636 = vadd.f32 %v13632, %v12664
    %v13637 = vadd.f32 %v13633, %v12665
    %v13638 = vpack.c.bf16 %v13634, %v13634
    %v13639 = vpack.c.bf16 %v13635, %v13635
    %v13640 = vpack.c.bf16 %v13636, %v13636
    %v13641 = vpack.c.bf16 %v13637, %v13637
    %s13642 = scalar_lea.vmem [#allocation2], 14336
    %v13643 = vld [vmem:[%s13642] sm:$0xff]
    %v13644 = vld [vmem:[%s13642 + $0x8] sm:$0xff]
    %v13645 = vld [vmem:[%s13642 + $0x10] sm:$0xff]
    %v13646 = vld [vmem:[%s13642 + $0x18] sm:$0xff]
    %v13647 = vld [vmem:[%s13642 + $0x20] sm:$0xff]
    %v13648 = vld [vmem:[%s13642 + $0x28] sm:$0xff]
    %v13649 = vld [vmem:[%s13642 + $0x30] sm:$0xff]
    %v13650 = vld [vmem:[%s13642 + $0x38] sm:$0xff]
    %v13651 = vld [vmem:[%s13642 + $0x40] sm:$0xff]
    %v13652 = vld [vmem:[%s13642 + $0x48] sm:$0xff]
    %v13653 = vld [vmem:[%s13642 + $0x50] sm:$0xff]
    %v13654 = vld [vmem:[%s13642 + $0x58] sm:$0xff]
    %v13655 = vld [vmem:[%s13642 + $0x60] sm:$0xff]
    %v13656 = vld [vmem:[%s13642 + $0x68] sm:$0xff]
    %v13657 = vld [vmem:[%s13642 + $0x70] sm:$0xff]
    %v13658 = vld [vmem:[%s13642 + $0x78] sm:$0xff]
    %v13659 = vld [vmem:[%s13642 + $0x80] sm:$0xff]
    %v13660 = vld [vmem:[%s13642 + $0x88] sm:$0xff]
    %v13661 = vld [vmem:[%s13642 + $0x90] sm:$0xff]
    %v13662 = vld [vmem:[%s13642 + $0x98] sm:$0xff]
    %v13663 = vld [vmem:[%s13642 + $0xa0] sm:$0xff]
    %v13664 = vld [vmem:[%s13642 + $0xa8] sm:$0xff]
    %v13665 = vld [vmem:[%s13642 + $0xb0] sm:$0xff]
    %v13666 = vld [vmem:[%s13642 + $0xb8] sm:$0xff]
    %v13667 = vld [vmem:[%s13642 + $0xc0] sm:$0xff]
    %v13668 = vld [vmem:[%s13642 + $0xc8] sm:$0xff]
    %v13669 = vld [vmem:[%s13642 + $0xd0] sm:$0xff]
    %v13670 = vld [vmem:[%s13642 + $0xd8] sm:$0xff]
    %v13671 = vld [vmem:[%s13642 + $0xe0] sm:$0xff]
    %v13672 = vld [vmem:[%s13642 + $0xe8] sm:$0xff]
    %v13673 = vld [vmem:[%s13642 + $0xf0] sm:$0xff]
    %v13674 = vld [vmem:[%s13642 + $0xf8] sm:$0xff]
    %v13675 = vld [vmem:[%s13642 + $0x100] sm:$0xff]
    %v13676 = vld [vmem:[%s13642 + $0x108] sm:$0xff]
    %v13677 = vld [vmem:[%s13642 + $0x110] sm:$0xff]
    %v13678 = vld [vmem:[%s13642 + $0x118] sm:$0xff]
    %v13679 = vld [vmem:[%s13642 + $0x120] sm:$0xff]
    %v13680 = vld [vmem:[%s13642 + $0x128] sm:$0xff]
    %v13681 = vld [vmem:[%s13642 + $0x130] sm:$0xff]
    %v13682 = vld [vmem:[%s13642 + $0x138] sm:$0xff]
    %v13683 = vld [vmem:[%s13642 + $0x140] sm:$0xff]
    %v13684 = vld [vmem:[%s13642 + $0x148] sm:$0xff]
    %v13685 = vld [vmem:[%s13642 + $0x150] sm:$0xff]
    %v13686 = vld [vmem:[%s13642 + $0x158] sm:$0xff]
    %v13687 = vld [vmem:[%s13642 + $0x160] sm:$0xff]
    %v13688 = vld [vmem:[%s13642 + $0x168] sm:$0xff]
    %v13689 = vld [vmem:[%s13642 + $0x170] sm:$0xff]
    %v13690 = vld [vmem:[%s13642 + $0x178] sm:$0xff]
    %v13691 = vld [vmem:[%s13642 + $0x180] sm:$0xff]
    %v13692 = vld [vmem:[%s13642 + $0x188] sm:$0xff]
    %v13693 = vld [vmem:[%s13642 + $0x190] sm:$0xff]
    %v13694 = vld [vmem:[%s13642 + $0x198] sm:$0xff]
    %v13695 = vld [vmem:[%s13642 + $0x1a0] sm:$0xff]
    %v13696 = vld [vmem:[%s13642 + $0x1a8] sm:$0xff]
    %v13697 = vld [vmem:[%s13642 + $0x1b0] sm:$0xff]
    %v13698 = vld [vmem:[%s13642 + $0x1b8] sm:$0xff]
    %v13699 = vld [vmem:[%s13642 + $0x1c0] sm:$0xff]
    %v13700 = vld [vmem:[%s13642 + $0x1c8] sm:$0xff]
    %v13701 = vld [vmem:[%s13642 + $0x1d0] sm:$0xff]
    %v13702 = vld [vmem:[%s13642 + $0x1d8] sm:$0xff]
    %v13703 = vld [vmem:[%s13642 + $0x1e0] sm:$0xff]
    %v13704 = vld [vmem:[%s13642 + $0x1e8] sm:$0xff]
    %v13705 = vld [vmem:[%s13642 + $0x1f0] sm:$0xff]
    %v13706 = vld [vmem:[%s13642 + $0x1f8] sm:$0xff]
    %v13707 = vld [vmem:[%s13642 + $0x200] sm:$0xff]
    %v13708 = vld [vmem:[%s13642 + $0x208] sm:$0xff]
    %v13709 = vld [vmem:[%s13642 + $0x210] sm:$0xff]
    %v13710 = vld [vmem:[%s13642 + $0x218] sm:$0xff]
    %v13711 = vld [vmem:[%s13642 + $0x220] sm:$0xff]
    %v13712 = vld [vmem:[%s13642 + $0x228] sm:$0xff]
    %v13713 = vld [vmem:[%s13642 + $0x230] sm:$0xff]
    %v13714 = vld [vmem:[%s13642 + $0x238] sm:$0xff]
    %v13715 = vld [vmem:[%s13642 + $0x240] sm:$0xff]
    %v13716 = vld [vmem:[%s13642 + $0x248] sm:$0xff]
    %v13717 = vld [vmem:[%s13642 + $0x250] sm:$0xff]
    %v13718 = vld [vmem:[%s13642 + $0x258] sm:$0xff]
    %v13719 = vld [vmem:[%s13642 + $0x260] sm:$0xff]
    %v13720 = vld [vmem:[%s13642 + $0x268] sm:$0xff]
    %v13721 = vld [vmem:[%s13642 + $0x270] sm:$0xff]
    %v13722 = vld [vmem:[%s13642 + $0x278] sm:$0xff]
    %v13723 = vld [vmem:[%s13642 + $0x280] sm:$0xff]
    %v13724 = vld [vmem:[%s13642 + $0x288] sm:$0xff]
    %v13725 = vld [vmem:[%s13642 + $0x290] sm:$0xff]
    %v13726 = vld [vmem:[%s13642 + $0x298] sm:$0xff]
    %v13727 = vld [vmem:[%s13642 + $0x2a0] sm:$0xff]
    %v13728 = vld [vmem:[%s13642 + $0x2a8] sm:$0xff]
    %v13729 = vld [vmem:[%s13642 + $0x2b0] sm:$0xff]
    %v13730 = vld [vmem:[%s13642 + $0x2b8] sm:$0xff]
    %v13731 = vld [vmem:[%s13642 + $0x2c0] sm:$0xff]
    %v13732 = vld [vmem:[%s13642 + $0x2c8] sm:$0xff]
    %v13733 = vld [vmem:[%s13642 + $0x2d0] sm:$0xff]
    %v13734 = vld [vmem:[%s13642 + $0x2d8] sm:$0xff]
    %v13735 = vld [vmem:[%s13642 + $0x2e0] sm:$0xff]
    %v13736 = vld [vmem:[%s13642 + $0x2e8] sm:$0xff]
    %v13737 = vld [vmem:[%s13642 + $0x2f0] sm:$0xff]
    %v13738 = vld [vmem:[%s13642 + $0x2f8] sm:$0xff]
    %v13739 = vld [vmem:[%s13642 + $0x300] sm:$0xff]
    %v13740 = vld [vmem:[%s13642 + $0x308] sm:$0xff]
    %v13741 = vld [vmem:[%s13642 + $0x310] sm:$0xff]
    %v13742 = vld [vmem:[%s13642 + $0x318] sm:$0xff]
    %v13743 = vld [vmem:[%s13642 + $0x320] sm:$0xff]
    %v13744 = vld [vmem:[%s13642 + $0x328] sm:$0xff]
    %v13745 = vld [vmem:[%s13642 + $0x330] sm:$0xff]
    %v13746 = vld [vmem:[%s13642 + $0x338] sm:$0xff]
    %v13747 = vld [vmem:[%s13642 + $0x340] sm:$0xff]
    %v13748 = vld [vmem:[%s13642 + $0x348] sm:$0xff]
    %v13749 = vld [vmem:[%s13642 + $0x350] sm:$0xff]
    %v13750 = vld [vmem:[%s13642 + $0x358] sm:$0xff]
    %v13751 = vld [vmem:[%s13642 + $0x360] sm:$0xff]
    %v13752 = vld [vmem:[%s13642 + $0x368] sm:$0xff]
    %v13753 = vld [vmem:[%s13642 + $0x370] sm:$0xff]
    %v13754 = vld [vmem:[%s13642 + $0x378] sm:$0xff]
    %v13755 = vld [vmem:[%s13642 + $0x380] sm:$0xff]
    %v13756 = vld [vmem:[%s13642 + $0x388] sm:$0xff]
    %v13757 = vld [vmem:[%s13642 + $0x390] sm:$0xff]
    %v13758 = vld [vmem:[%s13642 + $0x398] sm:$0xff]
    %v13759 = vld [vmem:[%s13642 + $0x3a0] sm:$0xff]
    %v13760 = vld [vmem:[%s13642 + $0x3a8] sm:$0xff]
    %v13761 = vld [vmem:[%s13642 + $0x3b0] sm:$0xff]
    %v13762 = vld [vmem:[%s13642 + $0x3b8] sm:$0xff]
    %v13763 = vld [vmem:[%s13642 + $0x3c0] sm:$0xff]
    %v13764 = vld [vmem:[%s13642 + $0x3c8] sm:$0xff]
    %v13765 = vld [vmem:[%s13642 + $0x3d0] sm:$0xff]
    %v13766 = vld [vmem:[%s13642 + $0x3d8] sm:$0xff]
    %v13767 = vld [vmem:[%s13642 + $0x3e0] sm:$0xff]
    %v13768 = vld [vmem:[%s13642 + $0x3e8] sm:$0xff]
    %v13769 = vld [vmem:[%s13642 + $0x3f0] sm:$0xff]
    %v13770 = vld [vmem:[%s13642 + $0x3f8] sm:$0xff]
    %s13771 = scalar_lea.vmem [#allocation4], 56
    %v13772 = vld [vmem:[%s13771] sm:$0xf]
    %v13774 = vlaneseq
    %v13775 = vshrl.u32 %v13774, 7
    %v13776 = vsub.s32 0, %v13775
    %v13777 = vrot.slane %v13772, %v13776
    %v13778 = vlaneseq
    %v13779 = vshrl.u32 %v13778, 7
    %v13780 = vsub.s32 1, %v13779
    %v13781 = vrot.slane %v13772, %v13780
    %v13782 = vlaneseq
    %v13783 = vshrl.u32 %v13782, 7
    %v13784 = vsub.s32 2, %v13783
    %v13785 = vrot.slane %v13772, %v13784
    %v13786 = vlaneseq
    %v13787 = vshrl.u32 %v13786, 7
    %v13788 = vsub.s32 3, %v13787
    %v13789 = vrot.slane %v13772, %v13788
    %v13922 = vunpack.c.l.b16 %v13643
    %v13923 = vunpack.c.h.b16 %v13643
    %v13924 = vunpack.c.l.b16 %v13644
    %v13925 = vunpack.c.h.b16 %v13644
    %v13926 = vunpack.c.l.b16 %v13645
    %v13927 = vunpack.c.h.b16 %v13645
    %v13928 = vunpack.c.l.b16 %v13646
    %v13929 = vunpack.c.h.b16 %v13646
    %v13930 = vunpack.c.l.b16 %v13647
    %v13931 = vunpack.c.h.b16 %v13647
    %v13932 = vunpack.c.l.b16 %v13648
    %v13933 = vunpack.c.h.b16 %v13648
    %v13934 = vunpack.c.l.b16 %v13649
    %v13935 = vunpack.c.h.b16 %v13649
    %v13936 = vunpack.c.l.b16 %v13650
    %v13937 = vunpack.c.h.b16 %v13650
    %v13938 = vunpack.c.l.b16 %v13651
    %v13939 = vunpack.c.h.b16 %v13651
    %v13940 = vunpack.c.l.b16 %v13652
    %v13941 = vunpack.c.h.b16 %v13652
    %v13942 = vunpack.c.l.b16 %v13653
    %v13943 = vunpack.c.h.b16 %v13653
    %v13944 = vunpack.c.l.b16 %v13654
    %v13945 = vunpack.c.h.b16 %v13654
    %v13946 = vunpack.c.l.b16 %v13655
    %v13947 = vunpack.c.h.b16 %v13655
    %v13948 = vunpack.c.l.b16 %v13656
    %v13949 = vunpack.c.h.b16 %v13656
    %v13950 = vunpack.c.l.b16 %v13657
    %v13951 = vunpack.c.h.b16 %v13657
    %v13952 = vunpack.c.l.b16 %v13658
    %v13953 = vunpack.c.h.b16 %v13658
    %v13954 = vunpack.c.l.b16 %v13659
    %v13955 = vunpack.c.h.b16 %v13659
    %v13956 = vunpack.c.l.b16 %v13660
    %v13957 = vunpack.c.h.b16 %v13660
    %v13958 = vunpack.c.l.b16 %v13661
    %v13959 = vunpack.c.h.b16 %v13661
    %v13960 = vunpack.c.l.b16 %v13662
    %v13961 = vunpack.c.h.b16 %v13662
    %v13962 = vunpack.c.l.b16 %v13663
    %v13963 = vunpack.c.h.b16 %v13663
    %v13964 = vunpack.c.l.b16 %v13664
    %v13965 = vunpack.c.h.b16 %v13664
    %v13966 = vunpack.c.l.b16 %v13665
    %v13967 = vunpack.c.h.b16 %v13665
    %v13968 = vunpack.c.l.b16 %v13666
    %v13969 = vunpack.c.h.b16 %v13666
    %v13970 = vunpack.c.l.b16 %v13667
    %v13971 = vunpack.c.h.b16 %v13667
    %v13972 = vunpack.c.l.b16 %v13668
    %v13973 = vunpack.c.h.b16 %v13668
    %v13974 = vunpack.c.l.b16 %v13669
    %v13975 = vunpack.c.h.b16 %v13669
    %v13976 = vunpack.c.l.b16 %v13670
    %v13977 = vunpack.c.h.b16 %v13670
    %v13978 = vunpack.c.l.b16 %v13671
    %v13979 = vunpack.c.h.b16 %v13671
    %v13980 = vunpack.c.l.b16 %v13672
    %v13981 = vunpack.c.h.b16 %v13672
    %v13982 = vunpack.c.l.b16 %v13673
    %v13983 = vunpack.c.h.b16 %v13673
    %v13984 = vunpack.c.l.b16 %v13674
    %v13985 = vunpack.c.h.b16 %v13674
    %v13986 = vunpack.c.l.b16 %v13675
    %v13987 = vunpack.c.h.b16 %v13675
    %v13988 = vunpack.c.l.b16 %v13676
    %v13989 = vunpack.c.h.b16 %v13676
    %v13990 = vunpack.c.l.b16 %v13677
    %v13991 = vunpack.c.h.b16 %v13677
    %v13992 = vunpack.c.l.b16 %v13678
    %v13993 = vunpack.c.h.b16 %v13678
    %v13994 = vunpack.c.l.b16 %v13679
    %v13995 = vunpack.c.h.b16 %v13679
    %v13996 = vunpack.c.l.b16 %v13680
    %v13997 = vunpack.c.h.b16 %v13680
    %v13998 = vunpack.c.l.b16 %v13681
    %v13999 = vunpack.c.h.b16 %v13681
    %v14000 = vunpack.c.l.b16 %v13682
    %v14001 = vunpack.c.h.b16 %v13682
    %v14002 = vunpack.c.l.b16 %v13683
    %v14003 = vunpack.c.h.b16 %v13683
    %v14004 = vunpack.c.l.b16 %v13684
    %v14005 = vunpack.c.h.b16 %v13684
    %v14006 = vunpack.c.l.b16 %v13685
    %v14007 = vunpack.c.h.b16 %v13685
    %v14008 = vunpack.c.l.b16 %v13686
    %v14009 = vunpack.c.h.b16 %v13686
    %v14010 = vunpack.c.l.b16 %v13687
    %v14011 = vunpack.c.h.b16 %v13687
    %v14012 = vunpack.c.l.b16 %v13688
    %v14013 = vunpack.c.h.b16 %v13688
    %v14014 = vunpack.c.l.b16 %v13689
    %v14015 = vunpack.c.h.b16 %v13689
    %v14016 = vunpack.c.l.b16 %v13690
    %v14017 = vunpack.c.h.b16 %v13690
    %v14018 = vunpack.c.l.b16 %v13691
    %v14019 = vunpack.c.h.b16 %v13691
    %v14020 = vunpack.c.l.b16 %v13692
    %v14021 = vunpack.c.h.b16 %v13692
    %v14022 = vunpack.c.l.b16 %v13693
    %v14023 = vunpack.c.h.b16 %v13693
    %v14024 = vunpack.c.l.b16 %v13694
    %v14025 = vunpack.c.h.b16 %v13694
    %v14026 = vunpack.c.l.b16 %v13695
    %v14027 = vunpack.c.h.b16 %v13695
    %v14028 = vunpack.c.l.b16 %v13696
    %v14029 = vunpack.c.h.b16 %v13696
    %v14030 = vunpack.c.l.b16 %v13697
    %v14031 = vunpack.c.h.b16 %v13697
    %v14032 = vunpack.c.l.b16 %v13698
    %v14033 = vunpack.c.h.b16 %v13698
    %v14034 = vunpack.c.l.b16 %v13699
    %v14035 = vunpack.c.h.b16 %v13699
    %v14036 = vunpack.c.l.b16 %v13700
    %v14037 = vunpack.c.h.b16 %v13700
    %v14038 = vunpack.c.l.b16 %v13701
    %v14039 = vunpack.c.h.b16 %v13701
    %v14040 = vunpack.c.l.b16 %v13702
    %v14041 = vunpack.c.h.b16 %v13702
    %v14042 = vunpack.c.l.b16 %v13703
    %v14043 = vunpack.c.h.b16 %v13703
    %v14044 = vunpack.c.l.b16 %v13704
    %v14045 = vunpack.c.h.b16 %v13704
    %v14046 = vunpack.c.l.b16 %v13705
    %v14047 = vunpack.c.h.b16 %v13705
    %v14048 = vunpack.c.l.b16 %v13706
    %v14049 = vunpack.c.h.b16 %v13706
    %v14050 = vunpack.c.l.b16 %v13707
    %v14051 = vunpack.c.h.b16 %v13707
    %v14052 = vunpack.c.l.b16 %v13708
    %v14053 = vunpack.c.h.b16 %v13708
    %v14054 = vunpack.c.l.b16 %v13709
    %v14055 = vunpack.c.h.b16 %v13709
    %v14056 = vunpack.c.l.b16 %v13710
    %v14057 = vunpack.c.h.b16 %v13710
    %v14058 = vunpack.c.l.b16 %v13711
    %v14059 = vunpack.c.h.b16 %v13711
    %v14060 = vunpack.c.l.b16 %v13712
    %v14061 = vunpack.c.h.b16 %v13712
    %v14062 = vunpack.c.l.b16 %v13713
    %v14063 = vunpack.c.h.b16 %v13713
    %v14064 = vunpack.c.l.b16 %v13714
    %v14065 = vunpack.c.h.b16 %v13714
    %v14066 = vunpack.c.l.b16 %v13715
    %v14067 = vunpack.c.h.b16 %v13715
    %v14068 = vunpack.c.l.b16 %v13716
    %v14069 = vunpack.c.h.b16 %v13716
    %v14070 = vunpack.c.l.b16 %v13717
    %v14071 = vunpack.c.h.b16 %v13717
    %v14072 = vunpack.c.l.b16 %v13718
    %v14073 = vunpack.c.h.b16 %v13718
    %v14074 = vunpack.c.l.b16 %v13719
    %v14075 = vunpack.c.h.b16 %v13719
    %v14076 = vunpack.c.l.b16 %v13720
    %v14077 = vunpack.c.h.b16 %v13720
    %v14078 = vunpack.c.l.b16 %v13721
    %v14079 = vunpack.c.h.b16 %v13721
    %v14080 = vunpack.c.l.b16 %v13722
    %v14081 = vunpack.c.h.b16 %v13722
    %v14082 = vunpack.c.l.b16 %v13723
    %v14083 = vunpack.c.h.b16 %v13723
    %v14084 = vunpack.c.l.b16 %v13724
    %v14085 = vunpack.c.h.b16 %v13724
    %v14086 = vunpack.c.l.b16 %v13725
    %v14087 = vunpack.c.h.b16 %v13725
    %v14088 = vunpack.c.l.b16 %v13726
    %v14089 = vunpack.c.h.b16 %v13726
    %v14090 = vunpack.c.l.b16 %v13727
    %v14091 = vunpack.c.h.b16 %v13727
    %v14092 = vunpack.c.l.b16 %v13728
    %v14093 = vunpack.c.h.b16 %v13728
    %v14094 = vunpack.c.l.b16 %v13729
    %v14095 = vunpack.c.h.b16 %v13729
    %v14096 = vunpack.c.l.b16 %v13730
    %v14097 = vunpack.c.h.b16 %v13730
    %v14098 = vunpack.c.l.b16 %v13731
    %v14099 = vunpack.c.h.b16 %v13731
    %v14100 = vunpack.c.l.b16 %v13732
    %v14101 = vunpack.c.h.b16 %v13732
    %v14102 = vunpack.c.l.b16 %v13733
    %v14103 = vunpack.c.h.b16 %v13733
    %v14104 = vunpack.c.l.b16 %v13734
    %v14105 = vunpack.c.h.b16 %v13734
    %v14106 = vunpack.c.l.b16 %v13735
    %v14107 = vunpack.c.h.b16 %v13735
    %v14108 = vunpack.c.l.b16 %v13736
    %v14109 = vunpack.c.h.b16 %v13736
    %v14110 = vunpack.c.l.b16 %v13737
    %v14111 = vunpack.c.h.b16 %v13737
    %v14112 = vunpack.c.l.b16 %v13738
    %v14113 = vunpack.c.h.b16 %v13738
    %v14114 = vunpack.c.l.b16 %v13739
    %v14115 = vunpack.c.h.b16 %v13739
    %v14116 = vunpack.c.l.b16 %v13740
    %v14117 = vunpack.c.h.b16 %v13740
    %v14118 = vunpack.c.l.b16 %v13741
    %v14119 = vunpack.c.h.b16 %v13741
    %v14120 = vunpack.c.l.b16 %v13742
    %v14121 = vunpack.c.h.b16 %v13742
    %v14122 = vunpack.c.l.b16 %v13743
    %v14123 = vunpack.c.h.b16 %v13743
    %v14124 = vunpack.c.l.b16 %v13744
    %v14125 = vunpack.c.h.b16 %v13744
    %v14126 = vunpack.c.l.b16 %v13745
    %v14127 = vunpack.c.h.b16 %v13745
    %v14128 = vunpack.c.l.b16 %v13746
    %v14129 = vunpack.c.h.b16 %v13746
    %v14130 = vunpack.c.l.b16 %v13747
    %v14131 = vunpack.c.h.b16 %v13747
    %v14132 = vunpack.c.l.b16 %v13748
    %v14133 = vunpack.c.h.b16 %v13748
    %v14134 = vunpack.c.l.b16 %v13749
    %v14135 = vunpack.c.h.b16 %v13749
    %v14136 = vunpack.c.l.b16 %v13750
    %v14137 = vunpack.c.h.b16 %v13750
    %v14138 = vunpack.c.l.b16 %v13751
    %v14139 = vunpack.c.h.b16 %v13751
    %v14140 = vunpack.c.l.b16 %v13752
    %v14141 = vunpack.c.h.b16 %v13752
    %v14142 = vunpack.c.l.b16 %v13753
    %v14143 = vunpack.c.h.b16 %v13753
    %v14144 = vunpack.c.l.b16 %v13754
    %v14145 = vunpack.c.h.b16 %v13754
    %v14146 = vunpack.c.l.b16 %v13755
    %v14147 = vunpack.c.h.b16 %v13755
    %v14148 = vunpack.c.l.b16 %v13756
    %v14149 = vunpack.c.h.b16 %v13756
    %v14150 = vunpack.c.l.b16 %v13757
    %v14151 = vunpack.c.h.b16 %v13757
    %v14152 = vunpack.c.l.b16 %v13758
    %v14153 = vunpack.c.h.b16 %v13758
    %v14154 = vunpack.c.l.b16 %v13759
    %v14155 = vunpack.c.h.b16 %v13759
    %v14156 = vunpack.c.l.b16 %v13760
    %v14157 = vunpack.c.h.b16 %v13760
    %v14158 = vunpack.c.l.b16 %v13761
    %v14159 = vunpack.c.h.b16 %v13761
    %v14160 = vunpack.c.l.b16 %v13762
    %v14161 = vunpack.c.h.b16 %v13762
    %v14162 = vunpack.c.l.b16 %v13763
    %v14163 = vunpack.c.h.b16 %v13763
    %v14164 = vunpack.c.l.b16 %v13764
    %v14165 = vunpack.c.h.b16 %v13764
    %v14166 = vunpack.c.l.b16 %v13765
    %v14167 = vunpack.c.h.b16 %v13765
    %v14168 = vunpack.c.l.b16 %v13766
    %v14169 = vunpack.c.h.b16 %v13766
    %v14170 = vunpack.c.l.b16 %v13767
    %v14171 = vunpack.c.h.b16 %v13767
    %v14172 = vunpack.c.l.b16 %v13768
    %v14173 = vunpack.c.h.b16 %v13768
    %v14174 = vunpack.c.l.b16 %v13769
    %v14175 = vunpack.c.h.b16 %v13769
    %v14176 = vunpack.c.l.b16 %v13770
    %v14177 = vunpack.c.h.b16 %v13770
    %v14178 = vpack.c.b16 %v13926, %v13922
    %v14179 = vpack.c.b16 %v13927, %v13923
    %v14180 = vpack.c.b16 %v13928, %v13924
    %v14181 = vpack.c.b16 %v13929, %v13925
    %v14182 = vpack.c.b16 %v13934, %v13930
    %v14183 = vpack.c.b16 %v13935, %v13931
    %v14184 = vpack.c.b16 %v13936, %v13932
    %v14185 = vpack.c.b16 %v13937, %v13933
    %v14186 = vpack.c.b16 %v13942, %v13938
    %v14187 = vpack.c.b16 %v13943, %v13939
    %v14188 = vpack.c.b16 %v13944, %v13940
    %v14189 = vpack.c.b16 %v13945, %v13941
    %v14190 = vpack.c.b16 %v13950, %v13946
    %v14191 = vpack.c.b16 %v13951, %v13947
    %v14192 = vpack.c.b16 %v13952, %v13948
    %v14193 = vpack.c.b16 %v13953, %v13949
    %v14194 = vpack.c.b16 %v13958, %v13954
    %v14195 = vpack.c.b16 %v13959, %v13955
    %v14196 = vpack.c.b16 %v13960, %v13956
    %v14197 = vpack.c.b16 %v13961, %v13957
    %v14198 = vpack.c.b16 %v13966, %v13962
    %v14199 = vpack.c.b16 %v13967, %v13963
    %v14200 = vpack.c.b16 %v13968, %v13964
    %v14201 = vpack.c.b16 %v13969, %v13965
    %v14202 = vpack.c.b16 %v13974, %v13970
    %v14203 = vpack.c.b16 %v13975, %v13971
    %v14204 = vpack.c.b16 %v13976, %v13972
    %v14205 = vpack.c.b16 %v13977, %v13973
    %v14206 = vpack.c.b16 %v13982, %v13978
    %v14207 = vpack.c.b16 %v13983, %v13979
    %v14208 = vpack.c.b16 %v13984, %v13980
    %v14209 = vpack.c.b16 %v13985, %v13981
    %v14210 = vpack.c.b16 %v13990, %v13986
    %v14211 = vpack.c.b16 %v13991, %v13987
    %v14212 = vpack.c.b16 %v13992, %v13988
    %v14213 = vpack.c.b16 %v13993, %v13989
    %v14214 = vpack.c.b16 %v13998, %v13994
    %v14215 = vpack.c.b16 %v13999, %v13995
    %v14216 = vpack.c.b16 %v14000, %v13996
    %v14217 = vpack.c.b16 %v14001, %v13997
    %v14218 = vpack.c.b16 %v14006, %v14002
    %v14219 = vpack.c.b16 %v14007, %v14003
    %v14220 = vpack.c.b16 %v14008, %v14004
    %v14221 = vpack.c.b16 %v14009, %v14005
    %v14222 = vpack.c.b16 %v14014, %v14010
    %v14223 = vpack.c.b16 %v14015, %v14011
    %v14224 = vpack.c.b16 %v14016, %v14012
    %v14225 = vpack.c.b16 %v14017, %v14013
    %v14226 = vpack.c.b16 %v14022, %v14018
    %v14227 = vpack.c.b16 %v14023, %v14019
    %v14228 = vpack.c.b16 %v14024, %v14020
    %v14229 = vpack.c.b16 %v14025, %v14021
    %v14230 = vpack.c.b16 %v14030, %v14026
    %v14231 = vpack.c.b16 %v14031, %v14027
    %v14232 = vpack.c.b16 %v14032, %v14028
    %v14233 = vpack.c.b16 %v14033, %v14029
    %v14234 = vpack.c.b16 %v14038, %v14034
    %v14235 = vpack.c.b16 %v14039, %v14035
    %v14236 = vpack.c.b16 %v14040, %v14036
    %v14237 = vpack.c.b16 %v14041, %v14037
    %v14238 = vpack.c.b16 %v14046, %v14042
    %v14239 = vpack.c.b16 %v14047, %v14043
    %v14240 = vpack.c.b16 %v14048, %v14044
    %v14241 = vpack.c.b16 %v14049, %v14045
    %v14242 = vpack.c.b16 %v14054, %v14050
    %v14243 = vpack.c.b16 %v14055, %v14051
    %v14244 = vpack.c.b16 %v14056, %v14052
    %v14245 = vpack.c.b16 %v14057, %v14053
    %v14246 = vpack.c.b16 %v14062, %v14058
    %v14247 = vpack.c.b16 %v14063, %v14059
    %v14248 = vpack.c.b16 %v14064, %v14060
    %v14249 = vpack.c.b16 %v14065, %v14061
    %v14250 = vpack.c.b16 %v14070, %v14066
    %v14251 = vpack.c.b16 %v14071, %v14067
    %v14252 = vpack.c.b16 %v14072, %v14068
    %v14253 = vpack.c.b16 %v14073, %v14069
    %v14254 = vpack.c.b16 %v14078, %v14074
    %v14255 = vpack.c.b16 %v14079, %v14075
    %v14256 = vpack.c.b16 %v14080, %v14076
    %v14257 = vpack.c.b16 %v14081, %v14077
    %v14258 = vpack.c.b16 %v14086, %v14082
    %v14259 = vpack.c.b16 %v14087, %v14083
    %v14260 = vpack.c.b16 %v14088, %v14084
    %v14261 = vpack.c.b16 %v14089, %v14085
    %v14262 = vpack.c.b16 %v14094, %v14090
    %v14263 = vpack.c.b16 %v14095, %v14091
    %v14264 = vpack.c.b16 %v14096, %v14092
    %v14265 = vpack.c.b16 %v14097, %v14093
    %v14266 = vpack.c.b16 %v14102, %v14098
    %v14267 = vpack.c.b16 %v14103, %v14099
    %v14268 = vpack.c.b16 %v14104, %v14100
    %v14269 = vpack.c.b16 %v14105, %v14101
    %v14270 = vpack.c.b16 %v14110, %v14106
    %v14271 = vpack.c.b16 %v14111, %v14107
    %v14272 = vpack.c.b16 %v14112, %v14108
    %v14273 = vpack.c.b16 %v14113, %v14109
    %v14274 = vpack.c.b16 %v14118, %v14114
    %v14275 = vpack.c.b16 %v14119, %v14115
    %v14276 = vpack.c.b16 %v14120, %v14116
    %v14277 = vpack.c.b16 %v14121, %v14117
    %v14278 = vpack.c.b16 %v14126, %v14122
    %v14279 = vpack.c.b16 %v14127, %v14123
    %v14280 = vpack.c.b16 %v14128, %v14124
    %v14281 = vpack.c.b16 %v14129, %v14125
    %v14282 = vpack.c.b16 %v14134, %v14130
    %v14283 = vpack.c.b16 %v14135, %v14131
    %v14284 = vpack.c.b16 %v14136, %v14132
    %v14285 = vpack.c.b16 %v14137, %v14133
    %v14286 = vpack.c.b16 %v14142, %v14138
    %v14287 = vpack.c.b16 %v14143, %v14139
    %v14288 = vpack.c.b16 %v14144, %v14140
    %v14289 = vpack.c.b16 %v14145, %v14141
    %v14290 = vpack.c.b16 %v14150, %v14146
    %v14291 = vpack.c.b16 %v14151, %v14147
    %v14292 = vpack.c.b16 %v14152, %v14148
    %v14293 = vpack.c.b16 %v14153, %v14149
    %v14294 = vpack.c.b16 %v14158, %v14154
    %v14295 = vpack.c.b16 %v14159, %v14155
    %v14296 = vpack.c.b16 %v14160, %v14156
    %v14297 = vpack.c.b16 %v14161, %v14157
    %v14298 = vpack.c.b16 %v14166, %v14162
    %v14299 = vpack.c.b16 %v14167, %v14163
    %v14300 = vpack.c.b16 %v14168, %v14164
    %v14301 = vpack.c.b16 %v14169, %v14165
    %v14302 = vpack.c.b16 %v14174, %v14170
    %v14303 = vpack.c.b16 %v14175, %v14171
    %v14304 = vpack.c.b16 %v14176, %v14172
    %v14305 = vpack.c.b16 %v14177, %v14173
    %14434 = vmatprep.subr.bf16.mxu0 %v14179
    %14435 = vmatpush1.bf16.msra.mxu0 %v14178
    %14436 = vmatprep.subr.bf16.mxu0 %v14183
    %14437 = vmatpush1.bf16.msra.mxu0 %v14182
    %14438 = vmatprep.subr.bf16.mxu0 %v14187
    %14439 = vmatpush1.bf16.msra.mxu0 %v14186
    %14440 = vmatprep.subr.bf16.mxu0 %v14191
    %14441 = vmatpush1.bf16.msra.mxu0 %v14190
    %14442 = vmatprep.subr.bf16.mxu0 %v14195
    %14443 = vmatpush1.bf16.msra.mxu0 %v14194
    %14444 = vmatprep.subr.bf16.mxu0 %v14199
    %14445 = vmatpush1.bf16.msra.mxu0 %v14198
    %14446 = vmatprep.subr.bf16.mxu0 %v14203
    %14447 = vmatpush1.bf16.msra.mxu0 %v14202
    %14448 = vmatprep.subr.bf16.mxu0 %v14207
    %14449 = vmatpush1.bf16.msra.mxu0 %v14206
    %14450 = vmatprep.subr.bf16.mxu0 %v14211
    %14451 = vmatpush1.bf16.msra.mxu0 %v14210
    %14452 = vmatprep.subr.bf16.mxu0 %v14215
    %14453 = vmatpush1.bf16.msra.mxu0 %v14214
    %14454 = vmatprep.subr.bf16.mxu0 %v14219
    %14455 = vmatpush1.bf16.msra.mxu0 %v14218
    %14456 = vmatprep.subr.bf16.mxu0 %v14223
    %14457 = vmatpush1.bf16.msra.mxu0 %v14222
    %14458 = vmatprep.subr.bf16.mxu0 %v14227
    %14459 = vmatpush1.bf16.msra.mxu0 %v14226
    %14460 = vmatprep.subr.bf16.mxu0 %v14231
    %14461 = vmatpush1.bf16.msra.mxu0 %v14230
    %14462 = vmatprep.subr.bf16.mxu0 %v14235
    %14463 = vmatpush1.bf16.msra.mxu0 %v14234
    %14464 = vmatprep.subr.bf16.mxu0 %v14239
    %14465 = vmatpush1.bf16.msra.mxu0 %v14238
    %14466 = vmatprep.mubr.bf16.mxu0 %v13639
    %14467 = vmatmul.mubr.bf16.gmra.mrb[0].mxu0 %v13638
    %v14468 = vpop.f32.mrb[0].mxu0
    %v14469 = vadd.f32 %v13777, %v14468
    %v14470 = vpop.f32.mrb[0].mxu0
    %v14471 = vadd.f32 %v13781, %v14470
    %v14472 = vpop.f32.mrb[0].mxu0
    %v14473 = vpop.f32.mrb[0].mxu0
    %14474 = vdwg.mxu0
    %14475 = vmatprep.subr.bf16.mxu0 %v14243
    %14476 = vmatpush1.bf16.msra.mxu0 %v14242
    %14477 = vmatprep.subr.bf16.mxu0 %v14247
    %14478 = vmatpush1.bf16.msra.mxu0 %v14246
    %14479 = vmatprep.subr.bf16.mxu0 %v14251
    %14480 = vmatpush1.bf16.msra.mxu0 %v14250
    %14481 = vmatprep.subr.bf16.mxu0 %v14255
    %14482 = vmatpush1.bf16.msra.mxu0 %v14254
    %14483 = vmatprep.subr.bf16.mxu0 %v14259
    %14484 = vmatpush1.bf16.msra.mxu0 %v14258
    %14485 = vmatprep.subr.bf16.mxu0 %v14263
    %14486 = vmatpush1.bf16.msra.mxu0 %v14262
    %14487 = vmatprep.subr.bf16.mxu0 %v14267
    %14488 = vmatpush1.bf16.msra.mxu0 %v14266
    %14489 = vmatprep.subr.bf16.mxu0 %v14271
    %14490 = vmatpush1.bf16.msra.mxu0 %v14270
    %14491 = vmatprep.subr.bf16.mxu0 %v14275
    %14492 = vmatpush1.bf16.msra.mxu0 %v14274
    %14493 = vmatprep.subr.bf16.mxu0 %v14279
    %14494 = vmatpush1.bf16.msra.mxu0 %v14278
    %14495 = vmatprep.subr.bf16.mxu0 %v14283
    %14496 = vmatpush1.bf16.msra.mxu0 %v14282
    %14497 = vmatprep.subr.bf16.mxu0 %v14287
    %14498 = vmatpush1.bf16.msra.mxu0 %v14286
    %14499 = vmatprep.subr.bf16.mxu0 %v14291
    %14500 = vmatpush1.bf16.msra.mxu0 %v14290
    %14501 = vmatprep.subr.bf16.mxu0 %v14295
    %14502 = vmatpush1.bf16.msra.mxu0 %v14294
    %14503 = vmatprep.subr.bf16.mxu0 %v14299
    %14504 = vmatpush1.bf16.msra.mxu0 %v14298
    %14505 = vmatprep.subr.bf16.mxu0 %v14303
    %14506 = vmatpush1.bf16.msra.mxu0 %v14302
    %14507 = vmatprep.mubr.bf16.mxu0 %v13641
    %14508 = vmatmul.mubr.bf16.gmra.mrb[0].mxu0 %v13640
    %v14509 = vpop.f32.mrb[0].mxu0
    %v14510 = vadd.f32 %v14469, %v14509
    %v14511 = vpop.f32.mrb[0].mxu0
    %v14512 = vadd.f32 %v14471, %v14511
    %v14513 = vpop.f32.mrb[0].mxu0
    %v14514 = vpop.f32.mrb[0].mxu0
    %14515 = vdwg.mxu0
    %14516 = vmatprep.subr.bf16.mxu0 %v14181
    %14517 = vmatpush1.bf16.msra.mxu0 %v14180
    %14518 = vmatprep.subr.bf16.mxu0 %v14185
    %14519 = vmatpush1.bf16.msra.mxu0 %v14184
    %14520 = vmatprep.subr.bf16.mxu0 %v14189
    %14521 = vmatpush1.bf16.msra.mxu0 %v14188
    %14522 = vmatprep.subr.bf16.mxu0 %v14193
    %14523 = vmatpush1.bf16.msra.mxu0 %v14192
    %14524 = vmatprep.subr.bf16.mxu0 %v14197
    %14525 = vmatpush1.bf16.msra.mxu0 %v14196
    %14526 = vmatprep.subr.bf16.mxu0 %v14201
    %14527 = vmatpush1.bf16.msra.mxu0 %v14200
    %14528 = vmatprep.subr.bf16.mxu0 %v14205
    %14529 = vmatpush1.bf16.msra.mxu0 %v14204
    %14530 = vmatprep.subr.bf16.mxu0 %v14209
    %14531 = vmatpush1.bf16.msra.mxu0 %v14208
    %14532 = vmatprep.subr.bf16.mxu0 %v14213
    %14533 = vmatpush1.bf16.msra.mxu0 %v14212
    %14534 = vmatprep.subr.bf16.mxu0 %v14217
    %14535 = vmatpush1.bf16.msra.mxu0 %v14216
    %14536 = vmatprep.subr.bf16.mxu0 %v14221
    %14537 = vmatpush1.bf16.msra.mxu0 %v14220
    %14538 = vmatprep.subr.bf16.mxu0 %v14225
    %14539 = vmatpush1.bf16.msra.mxu0 %v14224
    %14540 = vmatprep.subr.bf16.mxu0 %v14229
    %14541 = vmatpush1.bf16.msra.mxu0 %v14228
    %14542 = vmatprep.subr.bf16.mxu0 %v14233
    %14543 = vmatpush1.bf16.msra.mxu0 %v14232
    %14544 = vmatprep.subr.bf16.mxu0 %v14237
    %14545 = vmatpush1.bf16.msra.mxu0 %v14236
    %14546 = vmatprep.subr.bf16.mxu0 %v14241
    %14547 = vmatpush1.bf16.msra.mxu0 %v14240
    %14548 = vmatprep.mubr.bf16.mxu0 %v13639
    %14549 = vmatmul.mubr.bf16.gmra.mrb[0].mxu0 %v13638
    %v14550 = vpop.f32.mrb[0].mxu0
    %v14551 = vadd.f32 %v13785, %v14550
    %v14552 = vpop.f32.mrb[0].mxu0
    %v14553 = vadd.f32 %v13789, %v14552
    %v14554 = vpop.f32.mrb[0].mxu0
    %v14555 = vpop.f32.mrb[0].mxu0
    %14556 = vdwg.mxu0
    %14557 = vmatprep.subr.bf16.mxu0 %v14245
    %14558 = vmatpush1.bf16.msra.mxu0 %v14244
    %14559 = vmatprep.subr.bf16.mxu0 %v14249
    %14560 = vmatpush1.bf16.msra.mxu0 %v14248
    %14561 = vmatprep.subr.bf16.mxu0 %v14253
    %14562 = vmatpush1.bf16.msra.mxu0 %v14252
    %14563 = vmatprep.subr.bf16.mxu0 %v14257
    %14564 = vmatpush1.bf16.msra.mxu0 %v14256
    %14565 = vmatprep.subr.bf16.mxu0 %v14261
    %14566 = vmatpush1.bf16.msra.mxu0 %v14260
    %14567 = vmatprep.subr.bf16.mxu0 %v14265
    %14568 = vmatpush1.bf16.msra.mxu0 %v14264
    %14569 = vmatprep.subr.bf16.mxu0 %v14269
    %14570 = vmatpush1.bf16.msra.mxu0 %v14268
    %14571 = vmatprep.subr.bf16.mxu0 %v14273
    %14572 = vmatpush1.bf16.msra.mxu0 %v14272
    %14573 = vmatprep.subr.bf16.mxu0 %v14277
    %14574 = vmatpush1.bf16.msra.mxu0 %v14276
    %14575 = vmatprep.subr.bf16.mxu0 %v14281
    %14576 = vmatpush1.bf16.msra.mxu0 %v14280
    %14577 = vmatprep.subr.bf16.mxu0 %v14285
    %14578 = vmatpush1.bf16.msra.mxu0 %v14284
    %14579 = vmatprep.subr.bf16.mxu0 %v14289
    %14580 = vmatpush1.bf16.msra.mxu0 %v14288
    %14581 = vmatprep.subr.bf16.mxu0 %v14293
    %14582 = vmatpush1.bf16.msra.mxu0 %v14292
    %14583 = vmatprep.subr.bf16.mxu0 %v14297
    %14584 = vmatpush1.bf16.msra.mxu0 %v14296
    %14585 = vmatprep.subr.bf16.mxu0 %v14301
    %14586 = vmatpush1.bf16.msra.mxu0 %v14300
    %14587 = vmatprep.subr.bf16.mxu0 %v14305
    %14588 = vmatpush1.bf16.msra.mxu0 %v14304
    %14589 = vmatprep.mubr.bf16.mxu0 %v13641
    %14590 = vmatmul.mubr.bf16.gmra.mrb[0].mxu0 %v13640
    %v14591 = vpop.f32.mrb[0].mxu0
    %v14592 = vadd.f32 %v14551, %v14591
    %v14593 = vpop.f32.mrb[0].mxu0
    %v14594 = vadd.f32 %v14553, %v14593
    %v14595 = vpop.f32.mrb[0].mxu0
    %v14596 = vpop.f32.mrb[0].mxu0
    %14597 = vdwg.mxu0
    %14598 = vst [vmem:[%s4] sm:$0xff] %v14510
    %14599 = vst [vmem:[%s4 + $0x8] sm:$0xff] %v14512
    %14600 = vst [vmem:[%s4 + $0x10] sm:$0xff] %v14592
    %14601 = vst [vmem:[%s4 + $0x18] sm:$0xff] %v14594
    %14602 = vst [vmem:[%s5] sm:$0xff] %v6750
    %14603 = vst [vmem:[%s5 + $0x8] sm:$0xff] %v6752
    %14604 = vst [vmem:[%s5 + $0x10] sm:$0xff] %v6832
    %14605 = vst [vmem:[%s5 + $0x18] sm:$0xff] %v6834
    %14606 = vst [vmem:[%s6] sm:$0xff] %v7706
    %14607 = vst [vmem:[%s6 + $0x8] sm:$0xff] %v7708
    %14608 = vst [vmem:[%s6 + $0x10] sm:$0xff] %v7788
    %14609 = vst [vmem:[%s6 + $0x18] sm:$0xff] %v7790
    // Predicated region
    $region26: #{network_forward.1} parent=1 // pred_check
      _
    $region27: #{network_forward.1} parent=1 // pred_check_branch
      %14611 = sbr.rel (0) target = $region29
    $region28: #{network_forward.1} parent=1 // pred_region
      _
    $region29: #{network_forward.1} parent=1 // pred_fallthru
      _
    // Predicated region
    $region30: #{network_forward.1} parent=1 // pred_check
      _
    $region31: #{network_forward.1} parent=1 // pred_check_branch
      %14613 = sbr.rel (0) target = $region33
    $region32: #{network_forward.1} parent=1 // pred_region
      _
    $region33: #{network_forward.1} parent=1 // pred_fallthru
      _
    // Predicated region
    $region34: #{network_forward.1} parent=1 // pred_check
      _
    $region35: #{network_forward.1} parent=1 // pred_check_branch
      %14615 = sbr.rel (0) target = $region37
    $region36: #{network_forward.1} parent=1 // pred_region
      _
    $region37: #{network_forward.1} parent=1 // pred_fallthru
      _
    // Predicated region
    $region38: #{network_forward.1} parent=1 // pred_check
      _
    $region39: #{network_forward.1} parent=1 // pred_check_branch
      %14617 = sbr.rel (0) target = $region41
    $region40: #{network_forward.1} parent=1 // pred_region
      _
    $region41: #{network_forward.1} parent=1 // pred_fallthru
      _
    // Predicated region
    $region42: #{network_forward.1} parent=1 // pred_check
      _
    $region43: #{network_forward.1} parent=1 // pred_check_branch
      %14619 = sbr.rel (0) target = $region45
    $region44: #{network_forward.1} parent=1 // pred_region
      _
    $region45: #{network_forward.1} parent=1 // pred_fallthru
      _
    // Predicated region
    $region46: #{network_forward.1} parent=1 // pred_check
      _
    $region47: #{network_forward.1} parent=1 // pred_check_branch
      %14621 = sbr.rel (0) target = $region49
    $region48: #{network_forward.1} parent=1 // pred_region
      _
    $region49: #{network_forward.1} parent=1 // pred_fallthru
      _
    %14622 = vsyncpa [#allocation3], 1
    %14623 = vsyncpa [#allocation5], 1

</llo_original>
